<compile_context>
chip_gen: v5e
topology: v5e:2x2
jax: 0.10.0
libtpu: 0.0.40
codegen_flags: <defaults>
</compile_context>

<pallas_src>
import functools

import jax
import jax.numpy as jnp
from jax.experimental import pallas as pl
from jax.experimental.pallas import tpu as pltpu

# ---- model hyper-parameters (consistent with the PyTorch __init__) ----
NODE_DIM = 8          # node_feature_dim
NUM_TARGETS = 3
HIDDEN = 32           # hidden_dim
LAYERS = 3            # num_gnn_layers
HEADS = 4             # num_attention_heads
MLP_HIDDEN = 64       # mlp_hidden_dim
EDGE_DIM = HIDDEN // 4
HC = HIDDEN * HEADS   # per-layer concat output width (128, lane-dense)
B_PAD = 8             # padded graph-batch rows for the tail kernel
NT_PAD = 8            # padded target width for the final store
# dropout_rate=0.2 is inactive  # TODO(synk): dropout skipped (eval-mode semantics)


# ------------------------------ in-kernel helpers ------------------------------
def _elu(y):
    return jnp.where(y > 0, y, jnp.exp(y) - 1.0)


def _layernorm(y, g, b, eps=1e-5):
    mean = jnp.mean(y, axis=-1, keepdims=True)
    yc = y - mean
    var = jnp.mean(yc * yc, axis=-1, keepdims=True)
    return yc * jax.lax.rsqrt(var + eps) * g + b


# ------------------------------ Pallas kernels ---------------------------------
def _edge_prep_kernel(e_raw_ref, adjn_ref, w1_ref, b1_ref, w2_ref, b2_ref, o_ref):
    """Fused edge-encoder MLP over all (target, source) pairs + PyG add_self_loops
    with fill_value='mean' (self-loop attr = mean of encoded incoming-edge attrs)."""
    adjn = adjn_ref[...]                                              # [N, N] (no self loops)
    n = adjn.shape[0]
    e_raw = e_raw_ref[...]                                            # [N*N, 1]
    # 1->16 layer as a broadcast multiply (avoids a K=1 matmul), then 16->8 on MXU
    e1 = jnp.maximum(e_raw * w1_ref[...] + b1_ref[...], 0.0)          # [N*N, HIDDEN//2]
    e_enc = jnp.dot(e1, w2_ref[...],
                    preferred_element_type=jnp.float32) + b2_ref[...]  # [N*N, EDGE_DIM]
    e3 = e_enc.reshape(n, n, EDGE_DIM)

    deg = jnp.maximum(jnp.sum(adjn, axis=1, keepdims=True), 1.0)      # [N, 1]
    mean_in = jnp.sum(adjn[:, :, None] * e3, axis=1) / deg            # [N, EDGE_DIM]
    rows = jax.lax.broadcasted_iota(jnp.int32, (n, n), 0)
    cols = jax.lax.broadcasted_iota(jnp.int32, (n, n), 1)
    eye = (rows == cols).astype(jnp.float32)
    e3 = e3 * (1.0 - eye)[:, :, None] + eye[:, :, None] * mean_in[:, None, :]
    o_ref[...] = e3.reshape(n * n, EDGE_DIM)


def _gat_layer_kernel(*refs, n_prev):
    """One fused GATv2 layer: [w_l|w_r] projection (single matmul), in-kernel edge
    projection, per-head masked softmax attention (heads by static lane slicing),
    conv bias, LayerNorm + ELU, and (if n_prev > 0) the skip linear + ELU."""
    (h_ref, e_ref, adj_ref, wlr_ref, blr_ref, we_ref, att_ref,
     cb_ref, g_ref, b_ref) = refs[:10]
    pos = 10
    prev_refs = refs[pos:pos + n_prev]
    pos += n_prev
    n_sw = (n_prev + 2) if n_prev > 0 else 0
    sw_refs = refs[pos:pos + n_sw]
    pos += n_sw
    sb_ref = refs[pos] if n_prev > 0 else None
    o_ref = refs[-1]

    h_in = h_ref[...]                                                 # [N, in_dim]
    adj = adj_ref[...]                                                # [N, N] incl. self loops
    n = adj.shape[0]
    c = HIDDEN

    # fused source/target projections: one MXU matmul for concat(w_l, w_r)
    xlr = jnp.dot(h_in, wlr_ref[...],
                  preferred_element_type=jnp.float32) + blr_ref[...]  # [N, 2*HC]
    xl, xr = xlr[:, :HC], xlr[:, HC:]
    # edge projection computed in VMEM; never materialized in HBM
    ep = jnp.dot(e_ref[...], we_ref[...],
                 preferred_element_type=jnp.float32)                  # [N*N, HC]
    att = att_ref[...]                                                # [HEADS, HIDDEN]

    outs = []
    for h in range(HEADS):                         # unrolled; heads via lane slices
        xl_h = xl[:, h * c:(h + 1) * c]                               # [N, C]
        xr_h = xr[:, h * c:(h + 1) * c]
        ep_h = ep[:, h * c:(h + 1) * c].reshape(n, n, c)
        m = xr_h[:, None, :] + xl_h[None, :, :] + ep_h                # [N, N, C]
        m = jnp.where(m > 0, m, 0.2 * m)                              # leaky_relu(0.2)
        s = jnp.sum(m * att[h:h + 1, :][None, :, :], axis=-1)         # [N, N]
        s = jnp.where(adj > 0, s, -1e30)
        p = jnp.exp(s - jnp.max(s, axis=1, keepdims=True)) * adj
        denom = jnp.maximum(jnp.sum(p, axis=1, keepdims=True), 1e-20)
        alpha = p / denom                                             # segment softmax
        outs.append(jnp.dot(alpha, xl_h, preferred_element_type=jnp.float32))
    y = jnp.concatenate(outs, axis=1) + cb_ref[...]                   # [N, HC]

    # LayerNorm + ELU (dropout is a no-op in eval mode)
    y = _elu(_layernorm(y, g_ref[...], b_ref[...]))

    # skip connection: cat(layer_outputs + [y]) @ skip_w == sum of per-chunk matmuls
    if n_prev > 0:
        chunks = [r[...] for r in prev_refs] + [h_in, y]
        acc = sb_ref[...]
        for ch, wr in zip(chunks, sw_refs):
            acc = acc + jnp.dot(ch, wr[...], preferred_element_type=jnp.float32)
        y = _elu(acc)

    o_ref[...] = y


def _tail_kernel(h_ref, asg_ref, si_ref, fpw_ref, fpb_ref, gaw_ref, gab_ref,
                 w1g_ref, w1s_ref, b1_ref, g1_ref, be1_ref,
                 w2_ref, b2_ref, g2_ref, be2_ref, w3_ref, b3_ref, o_ref):
    """Fused tail: final projection, global attention (tanh + softmax over ALL
    nodes, dim=0 as in the reference), add-pool per graph, and the 3-layer MLP."""
    hp = jnp.dot(h_ref[...], fpw_ref[...],
                 preferred_element_type=jnp.float32) + fpb_ref[...]   # [N, HIDDEN]
    s = jnp.tanh(jnp.sum(hp * gaw_ref[...], axis=1, keepdims=True)
                 + gab_ref[...])                                      # [N, 1]
    p = jnp.exp(s - jnp.max(s, axis=0, keepdims=True))
    alpha = p / jnp.sum(p, axis=0, keepdims=True)                     # softmax over nodes
    ge = jnp.dot(asg_ref[...], hp * alpha,
                 preferred_element_type=jnp.float32)                  # [B_PAD, HIDDEN]
    # first MLP layer: combined = [graph_emb | strategy | io_type] via split matmul
    y = (jnp.dot(ge, w1g_ref[...], preferred_element_type=jnp.float32)
         + jnp.dot(si_ref[...], w1s_ref[...], preferred_element_type=jnp.float32)
         + b1_ref[...])                                               # [B_PAD, 64]
    y = jnp.maximum(_layernorm(y, g1_ref[...], be1_ref[...]), 0.0)
    y = jnp.dot(y, w2_ref[...], preferred_element_type=jnp.float32) + b2_ref[...]
    y = jnp.maximum(_layernorm(y, g2_ref[...], be2_ref[...]), 0.0)
    o_ref[...] = jnp.dot(y, w3_ref[...],
                         preferred_element_type=jnp.float32) + b3_ref[...]


# ------------------------------ Pallas wrappers ---------------------------------
def _fused_call(kernel, out_shape, *args):
    """Grid-less pallas_call with all operands resident as whole-array VMEM blocks."""
    return pl.pallas_call(
        kernel,
        out_shape=out_shape,
        in_specs=[pl.BlockSpec(memory_space=pltpu.MemorySpace.VMEM) for _ in args],
        out_specs=pl.BlockSpec(memory_space=pltpu.MemorySpace.VMEM),
    )(*args)


def gat_layer(h_in, prev_list, e_flat, adj, cp, ln_g, ln_b, skip_w=None, skip_b=None):
    n = h_in.shape[0]
    n_prev = len(prev_list)
    w_lr = jnp.concatenate([cp["w_l"], cp["w_r"]], axis=1)            # [in_dim, 2*HC]
    b_lr = jnp.concatenate([cp["b_l"], cp["b_r"]])[None, :]           # [1, 2*HC]
    args = [h_in, e_flat, adj, w_lr, b_lr, cp["w_edge"], cp["att"],
            cp["bias"][None, :], ln_g[None, :], ln_b[None, :]]
    if n_prev > 0:
        args += list(prev_list)
        dims = [p.shape[1] for p in prev_list] + [h_in.shape[1], HC]
        off = 0
        for d in dims:                                                # split skip weight
            args.append(skip_w[off:off + d, :])
            off += d
        args.append(skip_b[None, :])
    return _fused_call(
        functools.partial(_gat_layer_kernel, n_prev=n_prev),
        jax.ShapeDtypeStruct((n, HC), jnp.float32),
        *args)


# ------------------------------ full forward ------------------------------------
def fpga_gnn_forward(params, x, adj_noself, assign, strategy, io_type):
    n = x.shape[0]
    b = assign.shape[0]

    # raw edge features | ||x_i|| - ||x_j|| |  (tiny, plain JAX) and dense adjacency
    norms = jnp.sqrt(jnp.sum(x * x, axis=1))
    e_raw = jnp.abs(norms[:, None] - norms[None, :]).reshape(n * n, 1)
    adj = jnp.minimum(adj_noself + jnp.eye(n, dtype=jnp.float32), 1.0)

    # kernel 1: edge encoder + self-loop 'mean' fill (encoded attrs, as in PyG)
    e_flat = _fused_call(
        _edge_prep_kernel,
        jax.ShapeDtypeStruct((n * n, EDGE_DIM), jnp.float32),
        e_raw, adj_noself,
        params["ee_w1"], params["ee_b1"][None, :],
        params["ee_w2"], params["ee_b2"][None, :])

    # kernels 2-4: fused GATv2 layers (conv + norm + elu + optional skip linear)
    layer_outputs = [x]
    h = x
    for i in range(LAYERS):
        h = gat_layer(
            h, layer_outputs[:-1], e_flat, adj, params["convs"][i],
            params["norm_g"][i], params["norm_b"][i],
            params["skip_w"][i - 1] if i > 0 else None,
            params["skip_b"][i - 1] if i > 0 else None)
        layer_outputs.append(h)

    # kernel 5: final projection + attention pooling + MLP head
    si = jnp.concatenate([strategy, io_type], axis=1)                 # [B, 4]
    si_p = jnp.pad(si, ((0, B_PAD - b), (0, 8 - si.shape[1])))
    assign_p = jnp.pad(assign, ((0, B_PAD - b), (0, 0)))
    w1g = params["mlp_w1"][:HIDDEN, :]
    w1s = jnp.pad(params["mlp_w1"][HIDDEN:, :], ((0, 8 - 4), (0, 0)))
    w3p = jnp.pad(params["mlp_w3"], ((0, 0), (0, NT_PAD - NUM_TARGETS)))
    b3p = jnp.pad(params["mlp_b3"], (0, NT_PAD - NUM_TARGETS))[None, :]
    out = _fused_call(
        _tail_kernel,
        jax.ShapeDtypeStruct((B_PAD, NT_PAD), jnp.float32),
        h, assign_p, si_p,
        params["fp_w"], params["fp_b"][None, :],
        params["ga_w"].reshape(1, HIDDEN), params["ga_b"].reshape(1, 1),
        w1g, w1s,
        params["mlp_b1"][None, :], params["mlp_g1"][None, :], params["mlp_be1"][None, :],
        params["mlp_w2"], params["mlp_b2"][None, :],
        params["mlp_g2"][None, :], params["mlp_be2"][None, :],
        w3p, b3p)
    return out[:b, :NUM_TARGETS]


# ------------------------------ parameter init ----------------------------------
def init_params(key):
    keys = iter(jax.random.split(key, 64))

    def w(shape, scale=0.1):
        return jax.random.normal(next(keys), shape, jnp.float32) * scale

    p = {
        "ee_w1": w((1, HIDDEN // 2)), "ee_b1": w((HIDDEN // 2,), 0.01),
        "ee_w2": w((HIDDEN // 2, EDGE_DIM)), "ee_b2": w((EDGE_DIM,), 0.01),
        "convs": [], "norm_g": [], "norm_b": [], "skip_w": [], "skip_b": [],
    }
    in_dim = NODE_DIM
    skip_dims = [in_dim]
    for i in range(LAYERS):
        p["convs"].append({
            "w_l": w((in_dim, HC)), "b_l": w((HC,), 0.01),
            "w_r": w((in_dim, HC)), "b_r": w((HC,), 0.01),
            "w_edge": w((EDGE_DIM, HC)),
            "att": w((HEADS, HIDDEN)),
            "bias": w((HC,), 0.01),
        })
        in_dim = HC
        skip_dims.append(in_dim)
        p["norm_g"].append(jnp.ones((HC,), jnp.float32))
        p["norm_b"].append(jnp.zeros((HC,), jnp.float32))
        if i > 0:
            sd = sum(skip_dims[:i + 1]) + HC
            p["skip_w"].append(w((sd, HC)))
            p["skip_b"].append(w((HC,), 0.01))
    p["fp_w"] = w((HC, HIDDEN)); p["fp_b"] = w((HIDDEN,), 0.01)
    p["ga_w"] = w((HIDDEN, 1)); p["ga_b"] = w((1,), 0.01)
    p["mlp_w1"] = w((HIDDEN + 4, MLP_HIDDEN)); p["mlp_b1"] = w((MLP_HIDDEN,), 0.01)
    p["mlp_g1"] = jnp.ones((MLP_HIDDEN,), jnp.float32)
    p["mlp_be1"] = jnp.zeros((MLP_HIDDEN,), jnp.float32)
    p["mlp_w2"] = w((MLP_HIDDEN, MLP_HIDDEN // 2)); p["mlp_b2"] = w((MLP_HIDDEN // 2,), 0.01)
    p["mlp_g2"] = jnp.ones((MLP_HIDDEN // 2,), jnp.float32)
    p["mlp_be2"] = jnp.zeros((MLP_HIDDEN // 2,), jnp.float32)
    p["mlp_w3"] = w((MLP_HIDDEN // 2, NUM_TARGETS)); p["mlp_b3"] = w((NUM_TARGETS,), 0.01)
    return p


# ------------------------------ main ---------------------------------------------
if __name__ == "__main__":
    key = jax.random.PRNGKey(0)
    pkey, xkey, skey, ikey = jax.random.split(key, 4)
    params = init_params(pkey)

    G, N_PER = 2, 8           # 2 graphs, 8 nodes each
    N = G * N_PER
    x = jax.random.normal(xkey, (N, NODE_DIM), jnp.float32)

    # edge_index: bidirectional ring within each graph (no cross-graph edges)
    src, dst = [], []
    for g in range(G):
        base = g * N_PER
        for k in range(N_PER):
            a, bb = base + k, base + (k + 1) % N_PER
            src += [a, bb]
            dst += [bb, a]
    src = jnp.array(src, jnp.int32)
    dst = jnp.array(dst, jnp.int32)
    # dense adjacency: adj[target, source] = 1
    adj_noself = jnp.zeros((N, N), jnp.float32).at[dst, src].set(1.0)

    batch = jnp.repeat(jnp.arange(G), N_PER)
    assign = (batch[None, :] == jnp.arange(G)[:, None]).astype(jnp.float32)  # [G, N]

    strategy = jax.random.normal(skey, (G, 2), jnp.float32)
    io_type = jax.random.normal(ikey, (G, 2), jnp.float32)

    fwd = jax.jit(fpga_gnn_forward)
    out = fwd(params, x, adj_noself, assign, strategy, io_type)
    out = jax.block_until_ready(out)
    assert out.shape == (G, NUM_TARGETS)
    print("KERNEL_OK")
</pallas_src>

<mosaic_0001>
module attributes {stable_mosaic.version = 11 : i64} {
  func.func @_edge_prep_kernel(%arg0: memref<256x1xf32, #tpu.memory_space<vmem>>, %arg1: memref<16x16xf32, #tpu.memory_space<vmem>>, %arg2: memref<1x16xf32, #tpu.memory_space<vmem>>, %arg3: memref<1x16xf32, #tpu.memory_space<vmem>>, %arg4: memref<16x8xf32, #tpu.memory_space<vmem>>, %arg5: memref<1x8xf32, #tpu.memory_space<vmem>>, %arg6: memref<256x8xf32, #tpu.memory_space<vmem>>) attributes {dimension_semantics = [], scalar_prefetch = 0 : i64, scratch_operands = 0 : i64, tpu.core_type = #tpu.core_type<tc>} {
    %c0 = arith.constant 0 : index
    %c0_0 = arith.constant 0 : index
    %0 = vector.load %arg1[%c0, %c0_0] : memref<16x16xf32, #tpu.memory_space<vmem>>, vector<16x16xf32>
    %c0_1 = arith.constant 0 : index
    %c0_2 = arith.constant 0 : index
    %1 = vector.load %arg0[%c0_1, %c0_2] : memref<256x1xf32, #tpu.memory_space<vmem>>, vector<256x1xf32>
    %c0_3 = arith.constant 0 : index
    %c0_4 = arith.constant 0 : index
    %2 = vector.load %arg2[%c0_3, %c0_4] : memref<1x16xf32, #tpu.memory_space<vmem>>, vector<1x16xf32>
    %3 = vector.broadcast %1 : vector<256x1xf32> to vector<256x16xf32>
    %4 = vector.broadcast %2 : vector<1x16xf32> to vector<256x16xf32>
    %5 = arith.mulf %3, %4 : vector<256x16xf32>
    %c0_5 = arith.constant 0 : index
    %c0_6 = arith.constant 0 : index
    %6 = vector.load %arg3[%c0_5, %c0_6] : memref<1x16xf32, #tpu.memory_space<vmem>>, vector<1x16xf32>
    %7 = vector.broadcast %6 : vector<1x16xf32> to vector<256x16xf32>
    %8 = arith.addf %5, %7 : vector<256x16xf32>
    %cst = arith.constant 0.000000e+00 : f32
    %9 = vector.broadcast %cst : f32 to vector<256x16xf32>
    %10 = arith.maximumf %8, %9 : vector<256x16xf32>
    %c0_7 = arith.constant 0 : index
    %c0_8 = arith.constant 0 : index
    %11 = vector.load %arg4[%c0_7, %c0_8] : memref<16x8xf32, #tpu.memory_space<vmem>>, vector<16x8xf32>
    %cst_9 = arith.constant dense<0.000000e+00> : vector<256x8xf32>
    %12 = tpu.matmul %10, %11, %cst_9 {dimension_numbers = #tpu.dot_dimension_numbers<[1], [0], [0], [1], [0, 0, 1, 1], [], []>} : vector<256x16xf32>, vector<16x8xf32>, vector<256x8xf32> -> vector<256x8xf32>
    %c0_10 = arith.constant 0 : index
    %c0_11 = arith.constant 0 : index
    %13 = vector.load %arg5[%c0_10, %c0_11] : memref<1x8xf32, #tpu.memory_space<vmem>>, vector<1x8xf32>
    %14 = vector.broadcast %13 : vector<1x8xf32> to vector<256x8xf32>
    %15 = arith.addf %12, %14 : vector<256x8xf32>
    %16 = vector.shape_cast %15 : vector<256x8xf32> to vector<16x16x8xf32>
    %cst_12 = arith.constant dense<0.000000e+00> : vector<16xf32>
    %17 = vector.multi_reduction <add>, %0, %cst_12 [1] : vector<16x16xf32> to vector<16xf32>
    %18 = vector.shape_cast %17 : vector<16xf32> to vector<16x1xf32>
    %cst_13 = arith.constant 1.000000e+00 : f32
    %19 = vector.broadcast %cst_13 : f32 to vector<16x1xf32>
    %20 = arith.maximumf %18, %19 : vector<16x1xf32>
    %21 = vector.shape_cast %0 : vector<16x16xf32> to vector<16x16x1xf32>
    %22 = vector.broadcast %21 : vector<16x16x1xf32> to vector<16x16x8xf32>
    %23 = arith.mulf %22, %16 : vector<16x16x8xf32>
    %cst_14 = arith.constant dense<0.000000e+00> : vector<16x8xf32>
    %24 = vector.multi_reduction <add>, %23, %cst_14 [1] : vector<16x16x8xf32> to vector<16x8xf32>
    %25 = vector.broadcast %20 : vector<16x1xf32> to vector<16x8xf32>
    %26 = arith.divf %24, %25 : vector<16x8xf32>
    %27 = tpu.iota {dimensions = array<i32: 0>} : vector<16x16xi32>
    %28 = tpu.iota {dimensions = array<i32: 1>} : vector<16x16xi32>
    %29 = arith.cmpi eq, %27, %28 : vector<16x16xi32>
    %30 = arith.extui %29 : vector<16x16xi1> to vector<16x16xi32>
    %31 = arith.sitofp %30 : vector<16x16xi32> to vector<16x16xf32>
    %cst_15 = arith.constant 1.000000e+00 : f32
    %32 = vector.broadcast %cst_15 : f32 to vector<16x16xf32>
    %33 = arith.subf %32, %31 : vector<16x16xf32>
    %34 = vector.shape_cast %33 : vector<16x16xf32> to vector<16x16x1xf32>
    %35 = vector.broadcast %34 : vector<16x16x1xf32> to vector<16x16x8xf32>
    %36 = arith.mulf %16, %35 : vector<16x16x8xf32>
    %37 = vector.shape_cast %31 : vector<16x16xf32> to vector<16x16x1xf32>
    %38 = vector.shape_cast %26 : vector<16x8xf32> to vector<16x1x8xf32>
    %39 = vector.broadcast %37 : vector<16x16x1xf32> to vector<16x16x8xf32>
    %40 = vector.broadcast %38 : vector<16x1x8xf32> to vector<16x16x8xf32>
    %41 = arith.mulf %39, %40 : vector<16x16x8xf32>
    %42 = arith.addf %36, %41 : vector<16x16x8xf32>
    %43 = vector.shape_cast %42 : vector<16x16x8xf32> to vector<256x8xf32>
    %c0_16 = arith.constant 0 : index
    %c0_17 = arith.constant 0 : index
    %44 = vector.load %arg6[%c0_16, %c0_17] : memref<256x8xf32, #tpu.memory_space<vmem>>, vector<256x8xf32>
    tpu.vector_store %arg6[%c0_16, %c0_17], %43 {strides = array<i32>} : memref<256x8xf32, #tpu.memory_space<vmem>>, vector<256x8xf32>,
    return
  }
}

module attributes {stable_mosaic.version = 11 : i64} {
  func.func @_gat_layer_kernel(%arg0: memref<16x8xf32, #tpu.memory_space<vmem>>, %arg1: memref<256x8xf32, #tpu.memory_space<vmem>>, %arg2: memref<16x16xf32, #tpu.memory_space<vmem>>, %arg3: memref<8x256xf32, #tpu.memory_space<vmem>>, %arg4: memref<1x256xf32, #tpu.memory_space<vmem>>, %arg5: memref<8x128xf32, #tpu.memory_space<vmem>>, %arg6: memref<4x32xf32, #tpu.memory_space<vmem>>, %arg7: memref<1x128xf32, #tpu.memory_space<vmem>>, %arg8: memref<1x128xf32, #tpu.memory_space<vmem>>, %arg9: memref<1x128xf32, #tpu.memory_space<vmem>>, %arg10: memref<16x128xf32, #tpu.memory_space<vmem>>) attributes {dimension_semantics = [], scalar_prefetch = 0 : i64, scratch_operands = 0 : i64, tpu.core_type = #tpu.core_type<tc>} {
    %c0 = arith.constant 0 : index
    %c0_0 = arith.constant 0 : index
    %0 = vector.load %arg0[%c0, %c0_0] : memref<16x8xf32, #tpu.memory_space<vmem>>, vector<16x8xf32>
    %c0_1 = arith.constant 0 : index
    %c0_2 = arith.constant 0 : index
    %1 = vector.load %arg2[%c0_1, %c0_2] : memref<16x16xf32, #tpu.memory_space<vmem>>, vector<16x16xf32>
    %c0_3 = arith.constant 0 : index
    %c0_4 = arith.constant 0 : index
    %2 = vector.load %arg3[%c0_3, %c0_4] : memref<8x256xf32, #tpu.memory_space<vmem>>, vector<8x256xf32>
    %cst = arith.constant dense<0.000000e+00> : vector<16x256xf32>
    %3 = tpu.matmul %0, %2, %cst {dimension_numbers = #tpu.dot_dimension_numbers<[1], [0], [0], [1], [0, 0, 1, 1], [], []>} : vector<16x8xf32>, vector<8x256xf32>, vector<16x256xf32> -> vector<16x256xf32>
    %c0_5 = arith.constant 0 : index
    %c0_6 = arith.constant 0 : index
    %4 = vector.load %arg4[%c0_5, %c0_6] : memref<1x256xf32, #tpu.memory_space<vmem>>, vector<1x256xf32>
    %5 = vector.broadcast %4 : vector<1x256xf32> to vector<16x256xf32>
    %6 = arith.addf %3, %5 : vector<16x256xf32>
    %7 = vector.extract_strided_slice %6 {offsets = [0, 0], sizes = [16, 128], strides = [1, 1]} : vector<16x256xf32> to vector<16x128xf32>
    %8 = vector.extract_strided_slice %6 {offsets = [0, 128], sizes = [16, 128], strides = [1, 1]} : vector<16x256xf32> to vector<16x128xf32>
    %c0_7 = arith.constant 0 : index
    %c0_8 = arith.constant 0 : index
    %9 = vector.load %arg1[%c0_7, %c0_8] : memref<256x8xf32, #tpu.memory_space<vmem>>, vector<256x8xf32>
    %c0_9 = arith.constant 0 : index
    %c0_10 = arith.constant 0 : index
    %10 = vector.load %arg5[%c0_9, %c0_10] : memref<8x128xf32, #tpu.memory_space<vmem>>, vector<8x128xf32>
    %cst_11 = arith.constant dense<0.000000e+00> : vector<256x128xf32>
    %11 = tpu.matmul %9, %10, %cst_11 {dimension_numbers = #tpu.dot_dimension_numbers<[1], [0], [0], [1], [0, 0, 1, 1], [], []>} : vector<256x8xf32>, vector<8x128xf32>, vector<256x128xf32> -> vector<256x128xf32>
    %c0_12 = arith.constant 0 : index
    %c0_13 = arith.constant 0 : index
    %12 = vector.load %arg6[%c0_12, %c0_13] : memref<4x32xf32, #tpu.memory_space<vmem>>, vector<4x32xf32>
    %13 = vector.extract_strided_slice %7 {offsets = [0, 0], sizes = [16, 32], strides = [1, 1]} : vector<16x128xf32> to vector<16x32xf32>
    %14 = vector.extract_strided_slice %8 {offsets = [0, 0], sizes = [16, 32], strides = [1, 1]} : vector<16x128xf32> to vector<16x32xf32>
    %15 = vector.extract_strided_slice %11 {offsets = [0, 0], sizes = [256, 32], strides = [1, 1]} : vector<256x128xf32> to vector<256x32xf32>
    %16 = vector.shape_cast %15 : vector<256x32xf32> to vector<16x16x32xf32>
    %17 = vector.shape_cast %14 : vector<16x32xf32> to vector<16x1x32xf32>
    %18 = vector.shape_cast %13 : vector<16x32xf32> to vector<1x16x32xf32>
    %19 = vector.broadcast %17 : vector<16x1x32xf32> to vector<16x16x32xf32>
    %20 = vector.broadcast %18 : vector<1x16x32xf32> to vector<16x16x32xf32>
    %21 = arith.addf %19, %20 : vector<16x16x32xf32>
    %22 = arith.addf %21, %16 : vector<16x16x32xf32>
    %cst_14 = arith.constant 0.000000e+00 : f32
    %23 = vector.broadcast %cst_14 : f32 to vector<16x16x32xf32>
    %24 = arith.cmpf ogt, %22, %23 : vector<16x16x32xf32>
    %cst_15 = arith.constant 2.000000e-01 : f32
    %25 = vector.broadcast %cst_15 : f32 to vector<16x16x32xf32>
    %26 = arith.mulf %25, %22 : vector<16x16x32xf32>
    %27 = arith.select %24, %22, %26 : vector<16x16x32xi1>, vector<16x16x32xf32>
    %28 = vector.extract_strided_slice %12 {offsets = [0, 0], sizes = [1, 32], strides = [1, 1]} : vector<4x32xf32> to vector<1x32xf32>
    %29 = vector.shape_cast %28 : vector<1x32xf32> to vector<1x1x32xf32>
    %30 = vector.broadcast %29 : vector<1x1x32xf32> to vector<16x16x32xf32>
    %31 = arith.mulf %27, %30 : vector<16x16x32xf32>
    %cst_16 = arith.constant dense<0.000000e+00> : vector<16x16xf32>
    %32 = vector.multi_reduction <add>, %31, %cst_16 [2] : vector<16x16x32xf32> to vector<16x16xf32>
    %cst_17 = arith.constant 0.000000e+00 : f32
    %33 = vector.broadcast %cst_17 : f32 to vector<16x16xf32>
    %34 = arith.cmpf ogt, %1, %33 : vector<16x16xf32>
    %cst_18 = arith.constant -1.000000e+30 : f32
    %35 = vector.broadcast %cst_18 : f32 to vector<16x16xf32>
    %36 = arith.select %34, %32, %35 : vector<16x16xi1>, vector<16x16xf32>
    %cst_19 = arith.constant dense<0xFF800000> : vector<16xf32>
    %37 = vector.multi_reduction <maximumf>, %36, %cst_19 [1] : vector<16x16xf32> to vector<16xf32>
    %38 = vector.shape_cast %37 : vector<16xf32> to vector<16x1xf32>
    %39 = vector.broadcast %38 : vector<16x1xf32> to vector<16x16xf32>
    %40 = arith.subf %36, %39 : vector<16x16xf32>
    %41 = math.exp %40 : vector<16x16xf32>
    %42 = arith.mulf %41, %1 : vector<16x16xf32>
    %cst_20 = arith.constant dense<0.000000e+00> : vector<16xf32>
    %43 = vector.multi_reduction <add>, %42, %cst_20 [1] : vector<16x16xf32> to vector<16xf32>
    %44 = vector.shape_cast %43 : vector<16xf32> to vector<16x1xf32>
    %cst_21 = arith.constant 9.99999968E-21 : f32
    %45 = vector.broadcast %cst_21 : f32 to vector<16x1xf32>
    %46 = arith.maximumf %44, %45 : vector<16x1xf32>
    %47 = vector.broadcast %46 : vector<16x1xf32> to vector<16x16xf32>
    %48 = arith.divf %42, %47 : vector<16x16xf32>
    %cst_22 = arith.constant dense<0.000000e+00> : vector<16x32xf32>
    %49 = tpu.matmul %48, %13, %cst_22 {dimension_numbers = #tpu.dot_dimension_numbers<[1], [0], [0], [1], [0, 0, 1, 1], [], []>} : vector<16x16xf32>, vector<16x32xf32>, vector<16x32xf32> -> vector<16x32xf32>
    %50 = vector.extract_strided_slice %7 {offsets = [0, 32], sizes = [16, 32], strides = [1, 1]} : vector<16x128xf32> to vector<16x32xf32>
    %51 = vector.extract_strided_slice %8 {offsets = [0, 32], sizes = [16, 32], strides = [1, 1]} : vector<16x128xf32> to vector<16x32xf32>
    %52 = vector.extract_strided_slice %11 {offsets = [0, 32], sizes = [256, 32], strides = [1, 1]} : vector<256x128xf32> to vector<256x32xf32>
    %53 = vector.shape_cast %52 : vector<256x32xf32> to vector<16x16x32xf32>
    %54 = vector.shape_cast %51 : vector<16x32xf32> to vector<16x1x32xf32>
    %55 = vector.shape_cast %50 : vector<16x32xf32> to vector<1x16x32xf32>
    %56 = vector.broadcast %54 : vector<16x1x32xf32> to vector<16x16x32xf32>
    %57 = vector.broadcast %55 : vector<1x16x32xf32> to vector<16x16x32xf32>
    %58 = arith.addf %56, %57 : vector<16x16x32xf32>
    %59 = arith.addf %58, %53 : vector<16x16x32xf32>
    %cst_23 = arith.constant 0.000000e+00 : f32
    %60 = vector.broadcast %cst_23 : f32 to vector<16x16x32xf32>
    %61 = arith.cmpf ogt, %59, %60 : vector<16x16x32xf32>
    %cst_24 = arith.constant 2.000000e-01 : f32
    %62 = vector.broadcast %cst_24 : f32 to vector<16x16x32xf32>
    %63 = arith.mulf %62, %59 : vector<16x16x32xf32>
    %64 = arith.select %61, %59, %63 : vector<16x16x32xi1>, vector<16x16x32xf32>
    %65 = vector.extract_strided_slice %12 {offsets = [1, 0], sizes = [1, 32], strides = [1, 1]} : vector<4x32xf32> to vector<1x32xf32>
    %66 = vector.shape_cast %65 : vector<1x32xf32> to vector<1x1x32xf32>
    %67 = vector.broadcast %66 : vector<1x1x32xf32> to vector<16x16x32xf32>
    %68 = arith.mulf %64, %67 : vector<16x16x32xf32>
    %cst_25 = arith.constant dense<0.000000e+00> : vector<16x16xf32>
    %69 = vector.multi_reduction <add>, %68, %cst_25 [2] : vector<16x16x32xf32> to vector<16x16xf32>
    %cst_26 = arith.constant 0.000000e+00 : f32
    %70 = vector.broadcast %cst_26 : f32 to vector<16x16xf32>
    %71 = arith.cmpf ogt, %1, %70 : vector<16x16xf32>
    %cst_27 = arith.constant -1.000000e+30 : f32
    %72 = vector.broadcast %cst_27 : f32 to vector<16x16xf32>
    %73 = arith.select %71, %69, %72 : vector<16x16xi1>, vector<16x16xf32>
    %cst_28 = arith.constant dense<0xFF800000> : vector<16xf32>
    %74 = vector.multi_reduction <maximumf>, %73, %cst_28 [1] : vector<16x16xf32> to vector<16xf32>
    %75 = vector.shape_cast %74 : vector<16xf32> to vector<16x1xf32>
    %76 = vector.broadcast %75 : vector<16x1xf32> to vector<16x16xf32>
    %77 = arith.subf %73, %76 : vector<16x16xf32>
    %78 = math.exp %77 : vector<16x16xf32>
    %79 = arith.mulf %78, %1 : vector<16x16xf32>
    %cst_29 = arith.constant dense<0.000000e+00> : vector<16xf32>
    %80 = vector.multi_reduction <add>, %79, %cst_29 [1] : vector<16x16xf32> to vector<16xf32>
    %81 = vector.shape_cast %80 : vector<16xf32> to vector<16x1xf32>
    %cst_30 = arith.constant 9.99999968E-21 : f32
    %82 = vector.broadcast %cst_30 : f32 to vector<16x1xf32>
    %83 = arith.maximumf %81, %82 : vector<16x1xf32>
    %84 = vector.broadcast %83 : vector<16x1xf32> to vector<16x16xf32>
    %85 = arith.divf %79, %84 : vector<16x16xf32>
    %cst_31 = arith.constant dense<0.000000e+00> : vector<16x32xf32>
    %86 = tpu.matmul %85, %50, %cst_31 {dimension_numbers = #tpu.dot_dimension_numbers<[1], [0], [0], [1], [0, 0, 1, 1], [], []>} : vector<16x16xf32>, vector<16x32xf32>, vector<16x32xf32> -> vector<16x32xf32>
    %87 = vector.extract_strided_slice %7 {offsets = [0, 64], sizes = [16, 32], strides = [1, 1]} : vector<16x128xf32> to vector<16x32xf32>
    %88 = vector.extract_strided_slice %8 {offsets = [0, 64], sizes = [16, 32], strides = [1, 1]} : vector<16x128xf32> to vector<16x32xf32>
    %89 = vector.extract_strided_slice %11 {offsets = [0, 64], sizes = [256, 32], strides = [1, 1]} : vector<256x128xf32> to vector<256x32xf32>
    %90 = vector.shape_cast %89 : vector<256x32xf32> to vector<16x16x32xf32>
    %91 = vector.shape_cast %88 : vector<16x32xf32> to vector<16x1x32xf32>
    %92 = vector.shape_cast %87 : vector<16x32xf32> to vector<1x16x32xf32>
    %93 = vector.broadcast %91 : vector<16x1x32xf32> to vector<16x16x32xf32>
    %94 = vector.broadcast %92 : vector<1x16x32xf32> to vector<16x16x32xf32>
    %95 = arith.addf %93, %94 : vector<16x16x32xf32>
    %96 = arith.addf %95, %90 : vector<16x16x32xf32>
    %cst_32 = arith.constant 0.000000e+00 : f32
    %97 = vector.broadcast %cst_32 : f32 to vector<16x16x32xf32>
    %98 = arith.cmpf ogt, %96, %97 : vector<16x16x32xf32>
    %cst_33 = arith.constant 2.000000e-01 : f32
    %99 = vector.broadcast %cst_33 : f32 to vector<16x16x32xf32>
    %100 = arith.mulf %99, %96 : vector<16x16x32xf32>
    %101 = arith.select %98, %96, %100 : vector<16x16x32xi1>, vector<16x16x32xf32>
    %102 = vector.extract_strided_slice %12 {offsets = [2, 0], sizes = [1, 32], strides = [1, 1]} : vector<4x32xf32> to vector<1x32xf32>
    %103 = vector.shape_cast %102 : vector<1x32xf32> to vector<1x1x32xf32>
    %104 = vector.broadcast %103 : vector<1x1x32xf32> to vector<16x16x32xf32>
    %105 = arith.mulf %101, %104 : vector<16x16x32xf32>
    %cst_34 = arith.constant dense<0.000000e+00> : vector<16x16xf32>
    %106 = vector.multi_reduction <add>, %105, %cst_34 [2] : vector<16x16x32xf32> to vector<16x16xf32>
    %cst_35 = arith.constant 0.000000e+00 : f32
    %107 = vector.broadcast %cst_35 : f32 to vector<16x16xf32>
    %108 = arith.cmpf ogt, %1, %107 : vector<16x16xf32>
    %cst_36 = arith.constant -1.000000e+30 : f32
    %109 = vector.broadcast %cst_36 : f32 to vector<16x16xf32>
    %110 = arith.select %108, %106, %109 : vector<16x16xi1>, vector<16x16xf32>
    %cst_37 = arith.constant dense<0xFF800000> : vector<16xf32>
    %111 = vector.multi_reduction <maximumf>, %110, %cst_37 [1] : vector<16x16xf32> to vector<16xf32>
    %112 = vector.shape_cast %111 : vector<16xf32> to vector<16x1xf32>
    %113 = vector.broadcast %112 : vector<16x1xf32> to vector<16x16xf32>
    %114 = arith.subf %110, %113 : vector<16x16xf32>
    %115 = math.exp %114 : vector<16x16xf32>
    %116 = arith.mulf %115, %1 : vector<16x16xf32>
    %cst_38 = arith.constant dense<0.000000e+00> : vector<16xf32>
    %117 = vector.multi_reduction <add>, %116, %cst_38 [1] : vector<16x16xf32> to vector<16xf32>
    %118 = vector.shape_cast %117 : vector<16xf32> to vector<16x1xf32>
    %cst_39 = arith.constant 9.99999968E-21 : f32
    %119 = vector.broadcast %cst_39 : f32 to vector<16x1xf32>
    %120 = arith.maximumf %118, %119 : vector<16x1xf32>
    %121 = vector.broadcast %120 : vector<16x1xf32> to vector<16x16xf32>
    %122 = arith.divf %116, %121 : vector<16x16xf32>
    %cst_40 = arith.constant dense<0.000000e+00> : vector<16x32xf32>
    %123 = tpu.matmul %122, %87, %cst_40 {dimension_numbers = #tpu.dot_dimension_numbers<[1], [0], [0], [1], [0, 0, 1, 1], [], []>} : vector<16x16xf32>, vector<16x32xf32>, vector<16x32xf32> -> vector<16x32xf32>
    %124 = vector.extract_strided_slice %7 {offsets = [0, 96], sizes = [16, 32], strides = [1, 1]} : vector<16x128xf32> to vector<16x32xf32>
    %125 = vector.extract_strided_slice %8 {offsets = [0, 96], sizes = [16, 32], strides = [1, 1]} : vector<16x128xf32> to vector<16x32xf32>
    %126 = vector.extract_strided_slice %11 {offsets = [0, 96], sizes = [256, 32], strides = [1, 1]} : vector<256x128xf32> to vector<256x32xf32>
    %127 = vector.shape_cast %126 : vector<256x32xf32> to vector<16x16x32xf32>
    %128 = vector.shape_cast %125 : vector<16x32xf32> to vector<16x1x32xf32>
    %129 = vector.shape_cast %124 : vector<16x32xf32> to vector<1x16x32xf32>
    %130 = vector.broadcast %128 : vector<16x1x32xf32> to vector<16x16x32xf32>
    %131 = vector.broadcast %129 : vector<1x16x32xf32> to vector<16x16x32xf32>
    %132 = arith.addf %130, %131 : vector<16x16x32xf32>
    %133 = arith.addf %132, %127 : vector<16x16x32xf32>
    %cst_41 = arith.constant 0.000000e+00 : f32
    %134 = vector.broadcast %cst_41 : f32 to vector<16x16x32xf32>
    %135 = arith.cmpf ogt, %133, %134 : vector<16x16x32xf32>
    %cst_42 = arith.constant 2.000000e-01 : f32
    %136 = vector.broadcast %cst_42 : f32 to vector<16x16x32xf32>
    %137 = arith.mulf %136, %133 : vector<16x16x32xf32>
    %138 = arith.select %135, %133, %137 : vector<16x16x32xi1>, vector<16x16x32xf32>
    %139 = vector.extract_strided_slice %12 {offsets = [3, 0], sizes = [1, 32], strides = [1, 1]} : vector<4x32xf32> to vector<1x32xf32>
    %140 = vector.shape_cast %139 : vector<1x32xf32> to vector<1x1x32xf32>
    %141 = vector.broadcast %140 : vector<1x1x32xf32> to vector<16x16x32xf32>
    %142 = arith.mulf %138, %141 : vector<16x16x32xf32>
    %cst_43 = arith.constant dense<0.000000e+00> : vector<16x16xf32>
    %143 = vector.multi_reduction <add>, %142, %cst_43 [2] : vector<16x16x32xf32> to vector<16x16xf32>
    %cst_44 = arith.constant 0.000000e+00 : f32
    %144 = vector.broadcast %cst_44 : f32 to vector<16x16xf32>
    %145 = arith.cmpf ogt, %1, %144 : vector<16x16xf32>
    %cst_45 = arith.constant -1.000000e+30 : f32
    %146 = vector.broadcast %cst_45 : f32 to vector<16x16xf32>
    %147 = arith.select %145, %143, %146 : vector<16x16xi1>, vector<16x16xf32>
    %cst_46 = arith.constant dense<0xFF800000> : vector<16xf32>
    %148 = vector.multi_reduction <maximumf>, %147, %cst_46 [1] : vector<16x16xf32> to vector<16xf32>
    %149 = vector.shape_cast %148 : vector<16xf32> to vector<16x1xf32>
    %150 = vector.broadcast %149 : vector<16x1xf32> to vector<16x16xf32>
    %151 = arith.subf %147, %150 : vector<16x16xf32>
    %152 = math.exp %151 : vector<16x16xf32>
    %153 = arith.mulf %152, %1 : vector<16x16xf32>
    %cst_47 = arith.constant dense<0.000000e+00> : vector<16xf32>
    %154 = vector.multi_reduction <add>, %153, %cst_47 [1] : vector<16x16xf32> to vector<16xf32>
    %155 = vector.shape_cast %154 : vector<16xf32> to vector<16x1xf32>
    %cst_48 = arith.constant 9.99999968E-21 : f32
    %156 = vector.broadcast %cst_48 : f32 to vector<16x1xf32>
    %157 = arith.maximumf %155, %156 : vector<16x1xf32>
    %158 = vector.broadcast %157 : vector<16x1xf32> to vector<16x16xf32>
    %159 = arith.divf %153, %158 : vector<16x16xf32>
    %cst_49 = arith.constant dense<0.000000e+00> : vector<16x32xf32>
    %160 = tpu.matmul %159, %124, %cst_49 {dimension_numbers = #tpu.dot_dimension_numbers<[1], [0], [0], [1], [0, 0, 1, 1], [], []>} : vector<16x16xf32>, vector<16x32xf32>, vector<16x32xf32> -> vector<16x32xf32>
    %161 = tpu.concatenate %49, %86, %123, %160 in 1 : vector<16x32xf32>, vector<16x32xf32>, vector<16x32xf32>, vector<16x32xf32> -> vector<16x128xf32>
    %c0_50 = arith.constant 0 : index
    %c0_51 = arith.constant 0 : index
    %162 = vector.load %arg7[%c0_50, %c0_51] : memref<1x128xf32, #tpu.memory_space<vmem>>, vector<1x128xf32>
    %163 = vector.broadcast %162 : vector<1x128xf32> to vector<16x128xf32>
    %164 = arith.addf %161, %163 : vector<16x128xf32>
    %c0_52 = arith.constant 0 : index
    %c0_53 = arith.constant 0 : index
    %165 = vector.load %arg8[%c0_52, %c0_53] : memref<1x128xf32, #tpu.memory_space<vmem>>, vector<1x128xf32>
    %c0_54 = arith.constant 0 : index
    %c0_55 = arith.constant 0 : index
    %166 = vector.load %arg9[%c0_54, %c0_55] : memref<1x128xf32, #tpu.memory_space<vmem>>, vector<1x128xf32>
    %cst_56 = arith.constant dense<0.000000e+00> : vector<16xf32>
    %167 = vector.multi_reduction <add>, %164, %cst_56 [1] : vector<16x128xf32> to vector<16xf32>
    %168 = vector.shape_cast %167 : vector<16xf32> to vector<16x1xf32>
    %cst_57 = arith.constant 1.280000e+02 : f32
    %169 = vector.broadcast %cst_57 : f32 to vector<16x1xf32>
    %170 = arith.divf %168, %169 : vector<16x1xf32>
    %171 = vector.broadcast %170 : vector<16x1xf32> to vector<16x128xf32>
    %172 = arith.subf %164, %171 : vector<16x128xf32>
    %173 = arith.mulf %172, %172 : vector<16x128xf32>
    %cst_58 = arith.constant dense<0.000000e+00> : vector<16xf32>
    %174 = vector.multi_reduction <add>, %173, %cst_58 [1] : vector<16x128xf32> to vector<16xf32>
    %175 = vector.shape_cast %174 : vector<16xf32> to vector<16x1xf32>
    %cst_59 = arith.constant 1.280000e+02 : f32
    %176 = vector.broadcast %cst_59 : f32 to vector<16x1xf32>
    %177 = arith.divf %175, %176 : vector<16x1xf32>
    %cst_60 = arith.constant 9.99999974E-6 : f32
    %178 = vector.broadcast %cst_60 : f32 to vector<16x1xf32>
    %179 = arith.addf %177, %178 : vector<16x1xf32>
    %180 = math.rsqrt %179 : vector<16x1xf32>
    %181 = vector.broadcast %180 : vector<16x1xf32> to vector<16x128xf32>
    %182 = arith.mulf %172, %181 : vector<16x128xf32>
    %183 = vector.broadcast %165 : vector<1x128xf32> to vector<16x128xf32>
    %184 = arith.mulf %182, %183 : vector<16x128xf32>
    %185 = vector.broadcast %166 : vector<1x128xf32> to vector<16x128xf32>
    %186 = arith.addf %184, %185 : vector<16x128xf32>
    %cst_61 = arith.constant 0.000000e+00 : f32
    %187 = vector.broadcast %cst_61 : f32 to vector<16x128xf32>
    %188 = arith.cmpf ogt, %186, %187 : vector<16x128xf32>
    %189 = math.exp %186 : vector<16x128xf32>
    %cst_62 = arith.constant 1.000000e+00 : f32
    %190 = vector.broadcast %cst_62 : f32 to vector<16x128xf32>
    %191 = arith.subf %189, %190 : vector<16x128xf32>
    %192 = arith.select %188, %186, %191 : vector<16x128xi1>, vector<16x128xf32>
    %c0_63 = arith.constant 0 : index
    %c0_64 = arith.constant 0 : index
    %193 = vector.load %arg10[%c0_63, %c0_64] : memref<16x128xf32, #tpu.memory_space<vmem>>, vector<16x128xf32>
    tpu.vector_store %arg10[%c0_63, %c0_64], %192 {strides = array<i32>} : memref<16x128xf32, #tpu.memory_space<vmem>>, vector<16x128xf32>,
    return
  }
}

module attributes {stable_mosaic.version = 11 : i64} {
  func.func @_gat_layer_kernel(%arg0: memref<16x128xf32, #tpu.memory_space<vmem>>, %arg1: memref<256x8xf32, #tpu.memory_space<vmem>>, %arg2: memref<16x16xf32, #tpu.memory_space<vmem>>, %arg3: memref<128x256xf32, #tpu.memory_space<vmem>>, %arg4: memref<1x256xf32, #tpu.memory_space<vmem>>, %arg5: memref<8x128xf32, #tpu.memory_space<vmem>>, %arg6: memref<4x32xf32, #tpu.memory_space<vmem>>, %arg7: memref<1x128xf32, #tpu.memory_space<vmem>>, %arg8: memref<1x128xf32, #tpu.memory_space<vmem>>, %arg9: memref<1x128xf32, #tpu.memory_space<vmem>>, %arg10: memref<16x8xf32, #tpu.memory_space<vmem>>, %arg11: memref<16x128xf32, #tpu.memory_space<vmem>>, %arg12: memref<8x128xf32, #tpu.memory_space<vmem>>, %arg13: memref<128x128xf32, #tpu.memory_space<vmem>>, %arg14: memref<128x128xf32, #tpu.memory_space<vmem>>, %arg15: memref<128x128xf32, #tpu.memory_space<vmem>>, %arg16: memref<1x128xf32, #tpu.memory_space<vmem>>, %arg17: memref<16x128xf32, #tpu.memory_space<vmem>>) attributes {dimension_semantics = [], scalar_prefetch = 0 : i64, scratch_operands = 0 : i64, tpu.core_type = #tpu.core_type<tc>} {
    %c0 = arith.constant 0 : index
    %c0_0 = arith.constant 0 : index
    %0 = vector.load %arg0[%c0, %c0_0] : memref<16x128xf32, #tpu.memory_space<vmem>>, vector<16x128xf32>
    %c0_1 = arith.constant 0 : index
    %c0_2 = arith.constant 0 : index
    %1 = vector.load %arg2[%c0_1, %c0_2] : memref<16x16xf32, #tpu.memory_space<vmem>>, vector<16x16xf32>
    %c0_3 = arith.constant 0 : index
    %c0_4 = arith.constant 0 : index
    %2 = vector.load %arg3[%c0_3, %c0_4] : memref<128x256xf32, #tpu.memory_space<vmem>>, vector<128x256xf32>
    %cst = arith.constant dense<0.000000e+00> : vector<16x256xf32>
    %3 = tpu.matmul %0, %2, %cst {dimension_numbers = #tpu.dot_dimension_numbers<[1], [0], [0], [1], [0, 0, 1, 1], [], []>} : vector<16x128xf32>, vector<128x256xf32>, vector<16x256xf32> -> vector<16x256xf32>
    %c0_5 = arith.constant 0 : index
    %c0_6 = arith.constant 0 : index
    %4 = vector.load %arg4[%c0_5, %c0_6] : memref<1x256xf32, #tpu.memory_space<vmem>>, vector<1x256xf32>
    %5 = vector.broadcast %4 : vector<1x256xf32> to vector<16x256xf32>
    %6 = arith.addf %3, %5 : vector<16x256xf32>
    %7 = vector.extract_strided_slice %6 {offsets = [0, 0], sizes = [16, 128], strides = [1, 1]} : vector<16x256xf32> to vector<16x128xf32>
    %8 = vector.extract_strided_slice %6 {offsets = [0, 128], sizes = [16, 128], strides = [1, 1]} : vector<16x256xf32> to vector<16x128xf32>
    %c0_7 = arith.constant 0 : index
    %c0_8 = arith.constant 0 : index
    %9 = vector.load %arg1[%c0_7, %c0_8] : memref<256x8xf32, #tpu.memory_space<vmem>>, vector<256x8xf32>
    %c0_9 = arith.constant 0 : index
    %c0_10 = arith.constant 0 : index
    %10 = vector.load %arg5[%c0_9, %c0_10] : memref<8x128xf32, #tpu.memory_space<vmem>>, vector<8x128xf32>
    %cst_11 = arith.constant dense<0.000000e+00> : vector<256x128xf32>
    %11 = tpu.matmul %9, %10, %cst_11 {dimension_numbers = #tpu.dot_dimension_numbers<[1], [0], [0], [1], [0, 0, 1, 1], [], []>} : vector<256x8xf32>, vector<8x128xf32>, vector<256x128xf32> -> vector<256x128xf32>
    %c0_12 = arith.constant 0 : index
    %c0_13 = arith.constant 0 : index
    %12 = vector.load %arg6[%c0_12, %c0_13] : memref<4x32xf32, #tpu.memory_space<vmem>>, vector<4x32xf32>
    %13 = vector.extract_strided_slice %7 {offsets = [0, 0], sizes = [16, 32], strides = [1, 1]} : vector<16x128xf32> to vector<16x32xf32>
    %14 = vector.extract_strided_slice %8 {offsets = [0, 0], sizes = [16, 32], strides = [1, 1]} : vector<16x128xf32> to vector<16x32xf32>
    %15 = vector.extract_strided_slice %11 {offsets = [0, 0], sizes = [256, 32], strides = [1, 1]} : vector<256x128xf32> to vector<256x32xf32>
    %16 = vector.shape_cast %15 : vector<256x32xf32> to vector<16x16x32xf32>
    %17 = vector.shape_cast %14 : vector<16x32xf32> to vector<16x1x32xf32>
    %18 = vector.shape_cast %13 : vector<16x32xf32> to vector<1x16x32xf32>
    %19 = vector.broadcast %17 : vector<16x1x32xf32> to vector<16x16x32xf32>
    %20 = vector.broadcast %18 : vector<1x16x32xf32> to vector<16x16x32xf32>
    %21 = arith.addf %19, %20 : vector<16x16x32xf32>
    %22 = arith.addf %21, %16 : vector<16x16x32xf32>
    %cst_14 = arith.constant 0.000000e+00 : f32
    %23 = vector.broadcast %cst_14 : f32 to vector<16x16x32xf32>
    %24 = arith.cmpf ogt, %22, %23 : vector<16x16x32xf32>
    %cst_15 = arith.constant 2.000000e-01 : f32
    %25 = vector.broadcast %cst_15 : f32 to vector<16x16x32xf32>
    %26 = arith.mulf %25, %22 : vector<16x16x32xf32>
    %27 = arith.select %24, %22, %26 : vector<16x16x32xi1>, vector<16x16x32xf32>
    %28 = vector.extract_strided_slice %12 {offsets = [0, 0], sizes = [1, 32], strides = [1, 1]} : vector<4x32xf32> to vector<1x32xf32>
    %29 = vector.shape_cast %28 : vector<1x32xf32> to vector<1x1x32xf32>
    %30 = vector.broadcast %29 : vector<1x1x32xf32> to vector<16x16x32xf32>
    %31 = arith.mulf %27, %30 : vector<16x16x32xf32>
    %cst_16 = arith.constant dense<0.000000e+00> : vector<16x16xf32>
    %32 = vector.multi_reduction <add>, %31, %cst_16 [2] : vector<16x16x32xf32> to vector<16x16xf32>
    %cst_17 = arith.constant 0.000000e+00 : f32
    %33 = vector.broadcast %cst_17 : f32 to vector<16x16xf32>
    %34 = arith.cmpf ogt, %1, %33 : vector<16x16xf32>
    %cst_18 = arith.constant -1.000000e+30 : f32
    %35 = vector.broadcast %cst_18 : f32 to vector<16x16xf32>
    %36 = arith.select %34, %32, %35 : vector<16x16xi1>, vector<16x16xf32>
    %cst_19 = arith.constant dense<0xFF800000> : vector<16xf32>
    %37 = vector.multi_reduction <maximumf>, %36, %cst_19 [1] : vector<16x16xf32> to vector<16xf32>
    %38 = vector.shape_cast %37 : vector<16xf32> to vector<16x1xf32>
    %39 = vector.broadcast %38 : vector<16x1xf32> to vector<16x16xf32>
    %40 = arith.subf %36, %39 : vector<16x16xf32>
    %41 = math.exp %40 : vector<16x16xf32>
    %42 = arith.mulf %41, %1 : vector<16x16xf32>
    %cst_20 = arith.constant dense<0.000000e+00> : vector<16xf32>
    %43 = vector.multi_reduction <add>, %42, %cst_20 [1] : vector<16x16xf32> to vector<16xf32>
    %44 = vector.shape_cast %43 : vector<16xf32> to vector<16x1xf32>
    %cst_21 = arith.constant 9.99999968E-21 : f32
    %45 = vector.broadcast %cst_21 : f32 to vector<16x1xf32>
    %46 = arith.maximumf %44, %45 : vector<16x1xf32>
    %47 = vector.broadcast %46 : vector<16x1xf32> to vector<16x16xf32>
    %48 = arith.divf %42, %47 : vector<16x16xf32>
    %cst_22 = arith.constant dense<0.000000e+00> : vector<16x32xf32>
    %49 = tpu.matmul %48, %13, %cst_22 {dimension_numbers = #tpu.dot_dimension_numbers<[1], [0], [0], [1], [0, 0, 1, 1], [], []>} : vector<16x16xf32>, vector<16x32xf32>, vector<16x32xf32> -> vector<16x32xf32>
    %50 = vector.extract_strided_slice %7 {offsets = [0, 32], sizes = [16, 32], strides = [1, 1]} : vector<16x128xf32> to vector<16x32xf32>
    %51 = vector.extract_strided_slice %8 {offsets = [0, 32], sizes = [16, 32], strides = [1, 1]} : vector<16x128xf32> to vector<16x32xf32>
    %52 = vector.extract_strided_slice %11 {offsets = [0, 32], sizes = [256, 32], strides = [1, 1]} : vector<256x128xf32> to vector<256x32xf32>
    %53 = vector.shape_cast %52 : vector<256x32xf32> to vector<16x16x32xf32>
    %54 = vector.shape_cast %51 : vector<16x32xf32> to vector<16x1x32xf32>
    %55 = vector.shape_cast %50 : vector<16x32xf32> to vector<1x16x32xf32>
    %56 = vector.broadcast %54 : vector<16x1x32xf32> to vector<16x16x32xf32>
    %57 = vector.broadcast %55 : vector<1x16x32xf32> to vector<16x16x32xf32>
    %58 = arith.addf %56, %57 : vector<16x16x32xf32>
    %59 = arith.addf %58, %53 : vector<16x16x32xf32>
    %cst_23 = arith.constant 0.000000e+00 : f32
    %60 = vector.broadcast %cst_23 : f32 to vector<16x16x32xf32>
    %61 = arith.cmpf ogt, %59, %60 : vector<16x16x32xf32>
    %cst_24 = arith.constant 2.000000e-01 : f32
    %62 = vector.broadcast %cst_24 : f32 to vector<16x16x32xf32>
    %63 = arith.mulf %62, %59 : vector<16x16x32xf32>
    %64 = arith.select %61, %59, %63 : vector<16x16x32xi1>, vector<16x16x32xf32>
    %65 = vector.extract_strided_slice %12 {offsets = [1, 0], sizes = [1, 32], strides = [1, 1]} : vector<4x32xf32> to vector<1x32xf32>
    %66 = vector.shape_cast %65 : vector<1x32xf32> to vector<1x1x32xf32>
    %67 = vector.broadcast %66 : vector<1x1x32xf32> to vector<16x16x32xf32>
    %68 = arith.mulf %64, %67 : vector<16x16x32xf32>
    %cst_25 = arith.constant dense<0.000000e+00> : vector<16x16xf32>
    %69 = vector.multi_reduction <add>, %68, %cst_25 [2] : vector<16x16x32xf32> to vector<16x16xf32>
    %cst_26 = arith.constant 0.000000e+00 : f32
    %70 = vector.broadcast %cst_26 : f32 to vector<16x16xf32>
    %71 = arith.cmpf ogt, %1, %70 : vector<16x16xf32>
    %cst_27 = arith.constant -1.000000e+30 : f32
    %72 = vector.broadcast %cst_27 : f32 to vector<16x16xf32>
    %73 = arith.select %71, %69, %72 : vector<16x16xi1>, vector<16x16xf32>
    %cst_28 = arith.constant dense<0xFF800000> : vector<16xf32>
    %74 = vector.multi_reduction <maximumf>, %73, %cst_28 [1] : vector<16x16xf32> to vector<16xf32>
    %75 = vector.shape_cast %74 : vector<16xf32> to vector<16x1xf32>
    %76 = vector.broadcast %75 : vector<16x1xf32> to vector<16x16xf32>
    %77 = arith.subf %73, %76 : vector<16x16xf32>
    %78 = math.exp %77 : vector<16x16xf32>
    %79 = arith.mulf %78, %1 : vector<16x16xf32>
    %cst_29 = arith.constant dense<0.000000e+00> : vector<16xf32>
    %80 = vector.multi_reduction <add>, %79, %cst_29 [1] : vector<16x16xf32> to vector<16xf32>
    %81 = vector.shape_cast %80 : vector<16xf32> to vector<16x1xf32>
    %cst_30 = arith.constant 9.99999968E-21 : f32
    %82 = vector.broadcast %cst_30 : f32 to vector<16x1xf32>
    %83 = arith.maximumf %81, %82 : vector<16x1xf32>
    %84 = vector.broadcast %83 : vector<16x1xf32> to vector<16x16xf32>
    %85 = arith.divf %79, %84 : vector<16x16xf32>
    %cst_31 = arith.constant dense<0.000000e+00> : vector<16x32xf32>
    %86 = tpu.matmul %85, %50, %cst_31 {dimension_numbers = #tpu.dot_dimension_numbers<[1], [0], [0], [1], [0, 0, 1, 1], [], []>} : vector<16x16xf32>, vector<16x32xf32>, vector<16x32xf32> -> vector<16x32xf32>
    %87 = vector.extract_strided_slice %7 {offsets = [0, 64], sizes = [16, 32], strides = [1, 1]} : vector<16x128xf32> to vector<16x32xf32>
    %88 = vector.extract_strided_slice %8 {offsets = [0, 64], sizes = [16, 32], strides = [1, 1]} : vector<16x128xf32> to vector<16x32xf32>
    %89 = vector.extract_strided_slice %11 {offsets = [0, 64], sizes = [256, 32], strides = [1, 1]} : vector<256x128xf32> to vector<256x32xf32>
    %90 = vector.shape_cast %89 : vector<256x32xf32> to vector<16x16x32xf32>
    %91 = vector.shape_cast %88 : vector<16x32xf32> to vector<16x1x32xf32>
    %92 = vector.shape_cast %87 : vector<16x32xf32> to vector<1x16x32xf32>
    %93 = vector.broadcast %91 : vector<16x1x32xf32> to vector<16x16x32xf32>
    %94 = vector.broadcast %92 : vector<1x16x32xf32> to vector<16x16x32xf32>
    %95 = arith.addf %93, %94 : vector<16x16x32xf32>
    %96 = arith.addf %95, %90 : vector<16x16x32xf32>
    %cst_32 = arith.constant 0.000000e+00 : f32
    %97 = vector.broadcast %cst_32 : f32 to vector<16x16x32xf32>
    %98 = arith.cmpf ogt, %96, %97 : vector<16x16x32xf32>
    %cst_33 = arith.constant 2.000000e-01 : f32
    %99 = vector.broadcast %cst_33 : f32 to vector<16x16x32xf32>
    %100 = arith.mulf %99, %96 : vector<16x16x32xf32>
    %101 = arith.select %98, %96, %100 : vector<16x16x32xi1>, vector<16x16x32xf32>
    %102 = vector.extract_strided_slice %12 {offsets = [2, 0], sizes = [1, 32], strides = [1, 1]} : vector<4x32xf32> to vector<1x32xf32>
    %103 = vector.shape_cast %102 : vector<1x32xf32> to vector<1x1x32xf32>
    %104 = vector.broadcast %103 : vector<1x1x32xf32> to vector<16x16x32xf32>
    %105 = arith.mulf %101, %104 : vector<16x16x32xf32>
    %cst_34 = arith.constant dense<0.000000e+00> : vector<16x16xf32>
    %106 = vector.multi_reduction <add>, %105, %cst_34 [2] : vector<16x16x32xf32> to vector<16x16xf32>
    %cst_35 = arith.constant 0.000000e+00 : f32
    %107 = vector.broadcast %cst_35 : f32 to vector<16x16xf32>
    %108 = arith.cmpf ogt, %1, %107 : vector<16x16xf32>
    %cst_36 = arith.constant -1.000000e+30 : f32
    %109 = vector.broadcast %cst_36 : f32 to vector<16x16xf32>
    %110 = arith.select %108, %106, %109 : vector<16x16xi1>, vector<16x16xf32>
    %cst_37 = arith.constant dense<0xFF800000> : vector<16xf32>
    %111 = vector.multi_reduction <maximumf>, %110, %cst_37 [1] : vector<16x16xf32> to vector<16xf32>
    %112 = vector.shape_cast %111 : vector<16xf32> to vector<16x1xf32>
    %113 = vector.broadcast %112 : vector<16x1xf32> to vector<16x16xf32>
    %114 = arith.subf %110, %113 : vector<16x16xf32>
    %115 = math.exp %114 : vector<16x16xf32>
    %116 = arith.mulf %115, %1 : vector<16x16xf32>
    %cst_38 = arith.constant dense<0.000000e+00> : vector<16xf32>
    %117 = vector.multi_reduction <add>, %116, %cst_38 [1] : vector<16x16xf32> to vector<16xf32>
    %118 = vector.shape_cast %117 : vector<16xf32> to vector<16x1xf32>
    %cst_39 = arith.constant 9.99999968E-21 : f32
    %119 = vector.broadcast %cst_39 : f32 to vector<16x1xf32>
    %120 = arith.maximumf %118, %119 : vector<16x1xf32>
    %121 = vector.broadcast %120 : vector<16x1xf32> to vector<16x16xf32>
    %122 = arith.divf %116, %121 : vector<16x16xf32>
    %cst_40 = arith.constant dense<0.000000e+00> : vector<16x32xf32>
    %123 = tpu.matmul %122, %87, %cst_40 {dimension_numbers = #tpu.dot_dimension_numbers<[1], [0], [0], [1], [0, 0, 1, 1], [], []>} : vector<16x16xf32>, vector<16x32xf32>, vector<16x32xf32> -> vector<16x32xf32>
    %124 = vector.extract_strided_slice %7 {offsets = [0, 96], sizes = [16, 32], strides = [1, 1]} : vector<16x128xf32> to vector<16x32xf32>
    %125 = vector.extract_strided_slice %8 {offsets = [0, 96], sizes = [16, 32], strides = [1, 1]} : vector<16x128xf32> to vector<16x32xf32>
    %126 = vector.extract_strided_slice %11 {offsets = [0, 96], sizes = [256, 32], strides = [1, 1]} : vector<256x128xf32> to vector<256x32xf32>
    %127 = vector.shape_cast %126 : vector<256x32xf32> to vector<16x16x32xf32>
    %128 = vector.shape_cast %125 : vector<16x32xf32> to vector<16x1x32xf32>
    %129 = vector.shape_cast %124 : vector<16x32xf32> to vector<1x16x32xf32>
    %130 = vector.broadcast %128 : vector<16x1x32xf32> to vector<16x16x32xf32>
    %131 = vector.broadcast %129 : vector<1x16x32xf32> to vector<16x16x32xf32>
    %132 = arith.addf %130, %131 : vector<16x16x32xf32>
    %133 = arith.addf %132, %127 : vector<16x16x32xf32>
    %cst_41 = arith.constant 0.000000e+00 : f32
    %134 = vector.broadcast %cst_41 : f32 to vector<16x16x32xf32>
    %135 = arith.cmpf ogt, %133, %134 : vector<16x16x32xf32>
    %cst_42 = arith.constant 2.000000e-01 : f32
    %136 = vector.broadcast %cst_42 : f32 to vector<16x16x32xf32>
    %137 = arith.mulf %136, %133 : vector<16x16x32xf32>
    %138 = arith.select %135, %133, %137 : vector<16x16x32xi1>, vector<16x16x32xf32>
    %139 = vector.extract_strided_slice %12 {offsets = [3, 0], sizes = [1, 32], strides = [1, 1]} : vector<4x32xf32> to vector<1x32xf32>
    %140 = vector.shape_cast %139 : vector<1x32xf32> to vector<1x1x32xf32>
    %141 = vector.broadcast %140 : vector<1x1x32xf32> to vector<16x16x32xf32>
    %142 = arith.mulf %138, %141 : vector<16x16x32xf32>
    %cst_43 = arith.constant dense<0.000000e+00> : vector<16x16xf32>
    %143 = vector.multi_reduction <add>, %142, %cst_43 [2] : vector<16x16x32xf32> to vector<16x16xf32>
    %cst_44 = arith.constant 0.000000e+00 : f32
    %144 = vector.broadcast %cst_44 : f32 to vector<16x16xf32>
    %145 = arith.cmpf ogt, %1, %144 : vector<16x16xf32>
    %cst_45 = arith.constant -1.000000e+30 : f32
    %146 = vector.broadcast %cst_45 : f32 to vector<16x16xf32>
    %147 = arith.select %145, %143, %146 : vector<16x16xi1>, vector<16x16xf32>
    %cst_46 = arith.constant dense<0xFF800000> : vector<16xf32>
    %148 = vector.multi_reduction <maximumf>, %147, %cst_46 [1] : vector<16x16xf32> to vector<16xf32>
    %149 = vector.shape_cast %148 : vector<16xf32> to vector<16x1xf32>
    %150 = vector.broadcast %149 : vector<16x1xf32> to vector<16x16xf32>
    %151 = arith.subf %147, %150 : vector<16x16xf32>
    %152 = math.exp %151 : vector<16x16xf32>
    %153 = arith.mulf %152, %1 : vector<16x16xf32>
    %cst_47 = arith.constant dense<0.000000e+00> : vector<16xf32>
    %154 = vector.multi_reduction <add>, %153, %cst_47 [1] : vector<16x16xf32> to vector<16xf32>
    %155 = vector.shape_cast %154 : vector<16xf32> to vector<16x1xf32>
    %cst_48 = arith.constant 9.99999968E-21 : f32
    %156 = vector.broadcast %cst_48 : f32 to vector<16x1xf32>
    %157 = arith.maximumf %155, %156 : vector<16x1xf32>
    %158 = vector.broadcast %157 : vector<16x1xf32> to vector<16x16xf32>
    %159 = arith.divf %153, %158 : vector<16x16xf32>
    %cst_49 = arith.constant dense<0.000000e+00> : vector<16x32xf32>
    %160 = tpu.matmul %159, %124, %cst_49 {dimension_numbers = #tpu.dot_dimension_numbers<[1], [0], [0], [1], [0, 0, 1, 1], [], []>} : vector<16x16xf32>, vector<16x32xf32>, vector<16x32xf32> -> vector<16x32xf32>
    %161 = tpu.concatenate %49, %86, %123, %160 in 1 : vector<16x32xf32>, vector<16x32xf32>, vector<16x32xf32>, vector<16x32xf32> -> vector<16x128xf32>
    %c0_50 = arith.constant 0 : index
    %c0_51 = arith.constant 0 : index
    %162 = vector.load %arg7[%c0_50, %c0_51] : memref<1x128xf32, #tpu.memory_space<vmem>>, vector<1x128xf32>
    %163 = vector.broadcast %162 : vector<1x128xf32> to vector<16x128xf32>
    %164 = arith.addf %161, %163 : vector<16x128xf32>
    %c0_52 = arith.constant 0 : index
    %c0_53 = arith.constant 0 : index
    %165 = vector.load %arg8[%c0_52, %c0_53] : memref<1x128xf32, #tpu.memory_space<vmem>>, vector<1x128xf32>
    %c0_54 = arith.constant 0 : index
    %c0_55 = arith.constant 0 : index
    %166 = vector.load %arg9[%c0_54, %c0_55] : memref<1x128xf32, #tpu.memory_space<vmem>>, vector<1x128xf32>
    %cst_56 = arith.constant dense<0.000000e+00> : vector<16xf32>
    %167 = vector.multi_reduction <add>, %164, %cst_56 [1] : vector<16x128xf32> to vector<16xf32>
    %168 = vector.shape_cast %167 : vector<16xf32> to vector<16x1xf32>
    %cst_57 = arith.constant 1.280000e+02 : f32
    %169 = vector.broadcast %cst_57 : f32 to vector<16x1xf32>
    %170 = arith.divf %168, %169 : vector<16x1xf32>
    %171 = vector.broadcast %170 : vector<16x1xf32> to vector<16x128xf32>
    %172 = arith.subf %164, %171 : vector<16x128xf32>
    %173 = arith.mulf %172, %172 : vector<16x128xf32>
    %cst_58 = arith.constant dense<0.000000e+00> : vector<16xf32>
    %174 = vector.multi_reduction <add>, %173, %cst_58 [1] : vector<16x128xf32> to vector<16xf32>
    %175 = vector.shape_cast %174 : vector<16xf32> to vector<16x1xf32>
    %cst_59 = arith.constant 1.280000e+02 : f32
    %176 = vector.broadcast %cst_59 : f32 to vector<16x1xf32>
    %177 = arith.divf %175, %176 : vector<16x1xf32>
    %cst_60 = arith.constant 9.99999974E-6 : f32
    %178 = vector.broadcast %cst_60 : f32 to vector<16x1xf32>
    %179 = arith.addf %177, %178 : vector<16x1xf32>
    %180 = math.rsqrt %179 : vector<16x1xf32>
    %181 = vector.broadcast %180 : vector<16x1xf32> to vector<16x128xf32>
    %182 = arith.mulf %172, %181 : vector<16x128xf32>
    %183 = vector.broadcast %165 : vector<1x128xf32> to vector<16x128xf32>
    %184 = arith.mulf %182, %183 : vector<16x128xf32>
    %185 = vector.broadcast %166 : vector<1x128xf32> to vector<16x128xf32>
    %186 = arith.addf %184, %185 : vector<16x128xf32>
    %cst_61 = arith.constant 0.000000e+00 : f32
    %187 = vector.broadcast %cst_61 : f32 to vector<16x128xf32>
    %188 = arith.cmpf ogt, %186, %187 : vector<16x128xf32>
    %189 = math.exp %186 : vector<16x128xf32>
    %cst_62 = arith.constant 1.000000e+00 : f32
    %190 = vector.broadcast %cst_62 : f32 to vector<16x128xf32>
    %191 = arith.subf %189, %190 : vector<16x128xf32>
    %192 = arith.select %188, %186, %191 : vector<16x128xi1>, vector<16x128xf32>
    %c0_63 = arith.constant 0 : index
    %c0_64 = arith.constant 0 : index
    %193 = vector.load %arg10[%c0_63, %c0_64] : memref<16x8xf32, #tpu.memory_space<vmem>>, vector<16x8xf32>
    %c0_65 = arith.constant 0 : index
    %c0_66 = arith.constant 0 : index
    %194 = vector.load %arg11[%c0_65, %c0_66] : memref<16x128xf32, #tpu.memory_space<vmem>>, vector<16x128xf32>
    %c0_67 = arith.constant 0 : index
    %c0_68 = arith.constant 0 : index
    %195 = vector.load %arg16[%c0_67, %c0_68] : memref<1x128xf32, #tpu.memory_space<vmem>>, vector<1x128xf32>
    %c0_69 = arith.constant 0 : index
    %c0_70 = arith.constant 0 : index
    %196 = vector.load %arg12[%c0_69, %c0_70] : memref<8x128xf32, #tpu.memory_space<vmem>>, vector<8x128xf32>
    %cst_71 = arith.constant dense<0.000000e+00> : vector<16x128xf32>
    %197 = tpu.matmul %193, %196, %cst_71 {dimension_numbers = #tpu.dot_dimension_numbers<[1], [0], [0], [1], [0, 0, 1, 1], [], []>} : vector<16x8xf32>, vector<8x128xf32>, vector<16x128xf32> -> vector<16x128xf32>
    %198 = vector.broadcast %195 : vector<1x128xf32> to vector<16x128xf32>
    %199 = arith.addf %198, %197 : vector<16x128xf32>
    %c0_72 = arith.constant 0 : index
    %c0_73 = arith.constant 0 : index
    %200 = vector.load %arg13[%c0_72, %c0_73] : memref<128x128xf32, #tpu.memory_space<vmem>>, vector<128x128xf32>
    %cst_74 = arith.constant dense<0.000000e+00> : vector<16x128xf32>
    %201 = tpu.matmul %194, %200, %cst_74 {dimension_numbers = #tpu.dot_dimension_numbers<[1], [0], [0], [1], [0, 0, 1, 1], [], []>} : vector<16x128xf32>, vector<128x128xf32>, vector<16x128xf32> -> vector<16x128xf32>
    %202 = arith.addf %199, %201 : vector<16x128xf32>
    %c0_75 = arith.constant 0 : index
    %c0_76 = arith.constant 0 : index
    %203 = vector.load %arg14[%c0_75, %c0_76] : memref<128x128xf32, #tpu.memory_space<vmem>>, vector<128x128xf32>
    %cst_77 = arith.constant dense<0.000000e+00> : vector<16x128xf32>
    %204 = tpu.matmul %0, %203, %cst_77 {dimension_numbers = #tpu.dot_dimension_numbers<[1], [0], [0], [1], [0, 0, 1, 1], [], []>} : vector<16x128xf32>, vector<128x128xf32>, vector<16x128xf32> -> vector<16x128xf32>
    %205 = arith.addf %202, %204 : vector<16x128xf32>
    %c0_78 = arith.constant 0 : index
    %c0_79 = arith.constant 0 : index
    %206 = vector.load %arg15[%c0_78, %c0_79] : memref<128x128xf32, #tpu.memory_space<vmem>>, vector<128x128xf32>
    %cst_80 = arith.constant dense<0.000000e+00> : vector<16x128xf32>
    %207 = tpu.matmul %192, %206, %cst_80 {dimension_numbers = #tpu.dot_dimension_numbers<[1], [0], [0], [1], [0, 0, 1, 1], [], []>} : vector<16x128xf32>, vector<128x128xf32>, vector<16x128xf32> -> vector<16x128xf32>
    %208 = arith.addf %205, %207 : vector<16x128xf32>
    %cst_81 = arith.constant 0.000000e+00 : f32
    %209 = vector.broadcast %cst_81 : f32 to vector<16x128xf32>
    %210 = arith.cmpf ogt, %208, %209 : vector<16x128xf32>
    %211 = math.exp %208 : vector<16x128xf32>
    %cst_82 = arith.constant 1.000000e+00 : f32
    %212 = vector.broadcast %cst_82 : f32 to vector<16x128xf32>
    %213 = arith.subf %211, %212 : vector<16x128xf32>
    %214 = arith.select %210, %208, %213 : vector<16x128xi1>, vector<16x128xf32>
    %c0_83 = arith.constant 0 : index
    %c0_84 = arith.constant 0 : index
    %215 = vector.load %arg17[%c0_83, %c0_84] : memref<16x128xf32, #tpu.memory_space<vmem>>, vector<16x128xf32>
    tpu.vector_store %arg17[%c0_83, %c0_84], %214 {strides = array<i32>} : memref<16x128xf32, #tpu.memory_space<vmem>>, vector<16x128xf32>,
    return
  }
}

module attributes {stable_mosaic.version = 11 : i64} {
  func.func @_gat_layer_kernel(%arg0: memref<16x128xf32, #tpu.memory_space<vmem>>, %arg1: memref<256x8xf32, #tpu.memory_space<vmem>>, %arg2: memref<16x16xf32, #tpu.memory_space<vmem>>, %arg3: memref<128x256xf32, #tpu.memory_space<vmem>>, %arg4: memref<1x256xf32, #tpu.memory_space<vmem>>, %arg5: memref<8x128xf32, #tpu.memory_space<vmem>>, %arg6: memref<4x32xf32, #tpu.memory_space<vmem>>, %arg7: memref<1x128xf32, #tpu.memory_space<vmem>>, %arg8: memref<1x128xf32, #tpu.memory_space<vmem>>, %arg9: memref<1x128xf32, #tpu.memory_space<vmem>>, %arg10: memref<16x8xf32, #tpu.memory_space<vmem>>, %arg11: memref<8x128xf32, #tpu.memory_space<vmem>>, %arg12: memref<128x128xf32, #tpu.memory_space<vmem>>, %arg13: memref<128x128xf32, #tpu.memory_space<vmem>>, %arg14: memref<1x128xf32, #tpu.memory_space<vmem>>, %arg15: memref<16x128xf32, #tpu.memory_space<vmem>>) attributes {dimension_semantics = [], scalar_prefetch = 0 : i64, scratch_operands = 0 : i64, tpu.core_type = #tpu.core_type<tc>} {
    %c0 = arith.constant 0 : index
    %c0_0 = arith.constant 0 : index
    %0 = vector.load %arg0[%c0, %c0_0] : memref<16x128xf32, #tpu.memory_space<vmem>>, vector<16x128xf32>
    %c0_1 = arith.constant 0 : index
    %c0_2 = arith.constant 0 : index
    %1 = vector.load %arg2[%c0_1, %c0_2] : memref<16x16xf32, #tpu.memory_space<vmem>>, vector<16x16xf32>
    %c0_3 = arith.constant 0 : index
    %c0_4 = arith.constant 0 : index
    %2 = vector.load %arg3[%c0_3, %c0_4] : memref<128x256xf32, #tpu.memory_space<vmem>>, vector<128x256xf32>
    %cst = arith.constant dense<0.000000e+00> : vector<16x256xf32>
    %3 = tpu.matmul %0, %2, %cst {dimension_numbers = #tpu.dot_dimension_numbers<[1], [0], [0], [1], [0, 0, 1, 1], [], []>} : vector<16x128xf32>, vector<128x256xf32>, vector<16x256xf32> -> vector<16x256xf32>
    %c0_5 = arith.constant 0 : index
    %c0_6 = arith.constant 0 : index
    %4 = vector.load %arg4[%c0_5, %c0_6] : memref<1x256xf32, #tpu.memory_space<vmem>>, vector<1x256xf32>
    %5 = vector.broadcast %4 : vector<1x256xf32> to vector<16x256xf32>
    %6 = arith.addf %3, %5 : vector<16x256xf32>
    %7 = vector.extract_strided_slice %6 {offsets = [0, 0], sizes = [16, 128], strides = [1, 1]} : vector<16x256xf32> to vector<16x128xf32>
    %8 = vector.extract_strided_slice %6 {offsets = [0, 128], sizes = [16, 128], strides = [1, 1]} : vector<16x256xf32> to vector<16x128xf32>
    %c0_7 = arith.constant 0 : index
    %c0_8 = arith.constant 0 : index
    %9 = vector.load %arg1[%c0_7, %c0_8] : memref<256x8xf32, #tpu.memory_space<vmem>>, vector<256x8xf32>
    %c0_9 = arith.constant 0 : index
    %c0_10 = arith.constant 0 : index
    %10 = vector.load %arg5[%c0_9, %c0_10] : memref<8x128xf32, #tpu.memory_space<vmem>>, vector<8x128xf32>
    %cst_11 = arith.constant dense<0.000000e+00> : vector<256x128xf32>
    %11 = tpu.matmul %9, %10, %cst_11 {dimension_numbers = #tpu.dot_dimension_numbers<[1], [0], [0], [1], [0, 0, 1, 1], [], []>} : vector<256x8xf32>, vector<8x128xf32>, vector<256x128xf32> -> vector<256x128xf32>
    %c0_12 = arith.constant 0 : index
    %c0_13 = arith.constant 0 : index
    %12 = vector.load %arg6[%c0_12, %c0_13] : memref<4x32xf32, #tpu.memory_space<vmem>>, vector<4x32xf32>
    %13 = vector.extract_strided_slice %7 {offsets = [0, 0], sizes = [16, 32], strides = [1, 1]} : vector<16x128xf32> to vector<16x32xf32>
    %14 = vector.extract_strided_slice %8 {offsets = [0, 0], sizes = [16, 32], strides = [1, 1]} : vector<16x128xf32> to vector<16x32xf32>
    %15 = vector.extract_strided_slice %11 {offsets = [0, 0], sizes = [256, 32], strides = [1, 1]} : vector<256x128xf32> to vector<256x32xf32>
    %16 = vector.shape_cast %15 : vector<256x32xf32> to vector<16x16x32xf32>
    %17 = vector.shape_cast %14 : vector<16x32xf32> to vector<16x1x32xf32>
    %18 = vector.shape_cast %13 : vector<16x32xf32> to vector<1x16x32xf32>
    %19 = vector.broadcast %17 : vector<16x1x32xf32> to vector<16x16x32xf32>
    %20 = vector.broadcast %18 : vector<1x16x32xf32> to vector<16x16x32xf32>
    %21 = arith.addf %19, %20 : vector<16x16x32xf32>
    %22 = arith.addf %21, %16 : vector<16x16x32xf32>
    %cst_14 = arith.constant 0.000000e+00 : f32
    %23 = vector.broadcast %cst_14 : f32 to vector<16x16x32xf32>
    %24 = arith.cmpf ogt, %22, %23 : vector<16x16x32xf32>
    %cst_15 = arith.constant 2.000000e-01 : f32
    %25 = vector.broadcast %cst_15 : f32 to vector<16x16x32xf32>
    %26 = arith.mulf %25, %22 : vector<16x16x32xf32>
    %27 = arith.select %24, %22, %26 : vector<16x16x32xi1>, vector<16x16x32xf32>
    %28 = vector.extract_strided_slice %12 {offsets = [0, 0], sizes = [1, 32], strides = [1, 1]} : vector<4x32xf32> to vector<1x32xf32>
    %29 = vector.shape_cast %28 : vector<1x32xf32> to vector<1x1x32xf32>
    %30 = vector.broadcast %29 : vector<1x1x32xf32> to vector<16x16x32xf32>
    %31 = arith.mulf %27, %30 : vector<16x16x32xf32>
    %cst_16 = arith.constant dense<0.000000e+00> : vector<16x16xf32>
    %32 = vector.multi_reduction <add>, %31, %cst_16 [2] : vector<16x16x32xf32> to vector<16x16xf32>
    %cst_17 = arith.constant 0.000000e+00 : f32
    %33 = vector.broadcast %cst_17 : f32 to vector<16x16xf32>
    %34 = arith.cmpf ogt, %1, %33 : vector<16x16xf32>
    %cst_18 = arith.constant -1.000000e+30 : f32
    %35 = vector.broadcast %cst_18 : f32 to vector<16x16xf32>
    %36 = arith.select %34, %32, %35 : vector<16x16xi1>, vector<16x16xf32>
    %cst_19 = arith.constant dense<0xFF800000> : vector<16xf32>
    %37 = vector.multi_reduction <maximumf>, %36, %cst_19 [1] : vector<16x16xf32> to vector<16xf32>
    %38 = vector.shape_cast %37 : vector<16xf32> to vector<16x1xf32>
    %39 = vector.broadcast %38 : vector<16x1xf32> to vector<16x16xf32>
    %40 = arith.subf %36, %39 : vector<16x16xf32>
    %41 = math.exp %40 : vector<16x16xf32>
    %42 = arith.mulf %41, %1 : vector<16x16xf32>
    %cst_20 = arith.constant dense<0.000000e+00> : vector<16xf32>
    %43 = vector.multi_reduction <add>, %42, %cst_20 [1] : vector<16x16xf32> to vector<16xf32>
    %44 = vector.shape_cast %43 : vector<16xf32> to vector<16x1xf32>
    %cst_21 = arith.constant 9.99999968E-21 : f32
    %45 = vector.broadcast %cst_21 : f32 to vector<16x1xf32>
    %46 = arith.maximumf %44, %45 : vector<16x1xf32>
    %47 = vector.broadcast %46 : vector<16x1xf32> to vector<16x16xf32>
    %48 = arith.divf %42, %47 : vector<16x16xf32>
    %cst_22 = arith.constant dense<0.000000e+00> : vector<16x32xf32>
    %49 = tpu.matmul %48, %13, %cst_22 {dimension_numbers = #tpu.dot_dimension_numbers<[1], [0], [0], [1], [0, 0, 1, 1], [], []>} : vector<16x16xf32>, vector<16x32xf32>, vector<16x32xf32> -> vector<16x32xf32>
    %50 = vector.extract_strided_slice %7 {offsets = [0, 32], sizes = [16, 32], strides = [1, 1]} : vector<16x128xf32> to vector<16x32xf32>
    %51 = vector.extract_strided_slice %8 {offsets = [0, 32], sizes = [16, 32], strides = [1, 1]} : vector<16x128xf32> to vector<16x32xf32>
    %52 = vector.extract_strided_slice %11 {offsets = [0, 32], sizes = [256, 32], strides = [1, 1]} : vector<256x128xf32> to vector<256x32xf32>
    %53 = vector.shape_cast %52 : vector<256x32xf32> to vector<16x16x32xf32>
    %54 = vector.shape_cast %51 : vector<16x32xf32> to vector<16x1x32xf32>
    %55 = vector.shape_cast %50 : vector<16x32xf32> to vector<1x16x32xf32>
    %56 = vector.broadcast %54 : vector<16x1x32xf32> to vector<16x16x32xf32>
    %57 = vector.broadcast %55 : vector<1x16x32xf32> to vector<16x16x32xf32>
    %58 = arith.addf %56, %57 : vector<16x16x32xf32>
    %59 = arith.addf %58, %53 : vector<16x16x32xf32>
    %cst_23 = arith.constant 0.000000e+00 : f32
    %60 = vector.broadcast %cst_23 : f32 to vector<16x16x32xf32>
    %61 = arith.cmpf ogt, %59, %60 : vector<16x16x32xf32>
    %cst_24 = arith.constant 2.000000e-01 : f32
    %62 = vector.broadcast %cst_24 : f32 to vector<16x16x32xf32>
    %63 = arith.mulf %62, %59 : vector<16x16x32xf32>
    %64 = arith.select %61, %59, %63 : vector<16x16x32xi1>, vector<16x16x32xf32>
    %65 = vector.extract_strided_slice %12 {offsets = [1, 0], sizes = [1, 32], strides = [1, 1]} : vector<4x32xf32> to vector<1x32xf32>
    %66 = vector.shape_cast %65 : vector<1x32xf32> to vector<1x1x32xf32>
    %67 = vector.broadcast %66 : vector<1x1x32xf32> to vector<16x16x32xf32>
    %68 = arith.mulf %64, %67 : vector<16x16x32xf32>
    %cst_25 = arith.constant dense<0.000000e+00> : vector<16x16xf32>
    %69 = vector.multi_reduction <add>, %68, %cst_25 [2] : vector<16x16x32xf32> to vector<16x16xf32>
    %cst_26 = arith.constant 0.000000e+00 : f32
    %70 = vector.broadcast %cst_26 : f32 to vector<16x16xf32>
    %71 = arith.cmpf ogt, %1, %70 : vector<16x16xf32>
    %cst_27 = arith.constant -1.000000e+30 : f32
    %72 = vector.broadcast %cst_27 : f32 to vector<16x16xf32>
    %73 = arith.select %71, %69, %72 : vector<16x16xi1>, vector<16x16xf32>
    %cst_28 = arith.constant dense<0xFF800000> : vector<16xf32>
    %74 = vector.multi_reduction <maximumf>, %73, %cst_28 [1] : vector<16x16xf32> to vector<16xf32>
    %75 = vector.shape_cast %74 : vector<16xf32> to vector<16x1xf32>
    %76 = vector.broadcast %75 : vector<16x1xf32> to vector<16x16xf32>
    %77 = arith.subf %73, %76 : vector<16x16xf32>
    %78 = math.exp %77 : vector<16x16xf32>
    %79 = arith.mulf %78, %1 : vector<16x16xf32>
    %cst_29 = arith.constant dense<0.000000e+00> : vector<16xf32>
    %80 = vector.multi_reduction <add>, %79, %cst_29 [1] : vector<16x16xf32> to vector<16xf32>
    %81 = vector.shape_cast %80 : vector<16xf32> to vector<16x1xf32>
    %cst_30 = arith.constant 9.99999968E-21 : f32
    %82 = vector.broadcast %cst_30 : f32 to vector<16x1xf32>
    %83 = arith.maximumf %81, %82 : vector<16x1xf32>
    %84 = vector.broadcast %83 : vector<16x1xf32> to vector<16x16xf32>
    %85 = arith.divf %79, %84 : vector<16x16xf32>
    %cst_31 = arith.constant dense<0.000000e+00> : vector<16x32xf32>
    %86 = tpu.matmul %85, %50, %cst_31 {dimension_numbers = #tpu.dot_dimension_numbers<[1], [0], [0], [1], [0, 0, 1, 1], [], []>} : vector<16x16xf32>, vector<16x32xf32>, vector<16x32xf32> -> vector<16x32xf32>
    %87 = vector.extract_strided_slice %7 {offsets = [0, 64], sizes = [16, 32], strides = [1, 1]} : vector<16x128xf32> to vector<16x32xf32>
    %88 = vector.extract_strided_slice %8 {offsets = [0, 64], sizes = [16, 32], strides = [1, 1]} : vector<16x128xf32> to vector<16x32xf32>
    %89 = vector.extract_strided_slice %11 {offsets = [0, 64], sizes = [256, 32], strides = [1, 1]} : vector<256x128xf32> to vector<256x32xf32>
    %90 = vector.shape_cast %89 : vector<256x32xf32> to vector<16x16x32xf32>
    %91 = vector.shape_cast %88 : vector<16x32xf32> to vector<16x1x32xf32>
    %92 = vector.shape_cast %87 : vector<16x32xf32> to vector<1x16x32xf32>
    %93 = vector.broadcast %91 : vector<16x1x32xf32> to vector<16x16x32xf32>
    %94 = vector.broadcast %92 : vector<1x16x32xf32> to vector<16x16x32xf32>
    %95 = arith.addf %93, %94 : vector<16x16x32xf32>
    %96 = arith.addf %95, %90 : vector<16x16x32xf32>
    %cst_32 = arith.constant 0.000000e+00 : f32
    %97 = vector.broadcast %cst_32 : f32 to vector<16x16x32xf32>
    %98 = arith.cmpf ogt, %96, %97 : vector<16x16x32xf32>
    %cst_33 = arith.constant 2.000000e-01 : f32
    %99 = vector.broadcast %cst_33 : f32 to vector<16x16x32xf32>
    %100 = arith.mulf %99, %96 : vector<16x16x32xf32>
    %101 = arith.select %98, %96, %100 : vector<16x16x32xi1>, vector<16x16x32xf32>
    %102 = vector.extract_strided_slice %12 {offsets = [2, 0], sizes = [1, 32], strides = [1, 1]} : vector<4x32xf32> to vector<1x32xf32>
    %103 = vector.shape_cast %102 : vector<1x32xf32> to vector<1x1x32xf32>
    %104 = vector.broadcast %103 : vector<1x1x32xf32> to vector<16x16x32xf32>
    %105 = arith.mulf %101, %104 : vector<16x16x32xf32>
    %cst_34 = arith.constant dense<0.000000e+00> : vector<16x16xf32>
    %106 = vector.multi_reduction <add>, %105, %cst_34 [2] : vector<16x16x32xf32> to vector<16x16xf32>
    %cst_35 = arith.constant 0.000000e+00 : f32
    %107 = vector.broadcast %cst_35 : f32 to vector<16x16xf32>
    %108 = arith.cmpf ogt, %1, %107 : vector<16x16xf32>
    %cst_36 = arith.constant -1.000000e+30 : f32
    %109 = vector.broadcast %cst_36 : f32 to vector<16x16xf32>
    %110 = arith.select %108, %106, %109 : vector<16x16xi1>, vector<16x16xf32>
    %cst_37 = arith.constant dense<0xFF800000> : vector<16xf32>
    %111 = vector.multi_reduction <maximumf>, %110, %cst_37 [1] : vector<16x16xf32> to vector<16xf32>
    %112 = vector.shape_cast %111 : vector<16xf32> to vector<16x1xf32>
    %113 = vector.broadcast %112 : vector<16x1xf32> to vector<16x16xf32>
    %114 = arith.subf %110, %113 : vector<16x16xf32>
    %115 = math.exp %114 : vector<16x16xf32>
    %116 = arith.mulf %115, %1 : vector<16x16xf32>
    %cst_38 = arith.constant dense<0.000000e+00> : vector<16xf32>
    %117 = vector.multi_reduction <add>, %116, %cst_38 [1] : vector<16x16xf32> to vector<16xf32>
    %118 = vector.shape_cast %117 : vector<16xf32> to vector<16x1xf32>
    %cst_39 = arith.constant 9.99999968E-21 : f32
    %119 = vector.broadcast %cst_39 : f32 to vector<16x1xf32>
    %120 = arith.maximumf %118, %119 : vector<16x1xf32>
    %121 = vector.broadcast %120 : vector<16x1xf32> to vector<16x16xf32>
    %122 = arith.divf %116, %121 : vector<16x16xf32>
    %cst_40 = arith.constant dense<0.000000e+00> : vector<16x32xf32>
    %123 = tpu.matmul %122, %87, %cst_40 {dimension_numbers = #tpu.dot_dimension_numbers<[1], [0], [0], [1], [0, 0, 1, 1], [], []>} : vector<16x16xf32>, vector<16x32xf32>, vector<16x32xf32> -> vector<16x32xf32>
    %124 = vector.extract_strided_slice %7 {offsets = [0, 96], sizes = [16, 32], strides = [1, 1]} : vector<16x128xf32> to vector<16x32xf32>
    %125 = vector.extract_strided_slice %8 {offsets = [0, 96], sizes = [16, 32], strides = [1, 1]} : vector<16x128xf32> to vector<16x32xf32>
    %126 = vector.extract_strided_slice %11 {offsets = [0, 96], sizes = [256, 32], strides = [1, 1]} : vector<256x128xf32> to vector<256x32xf32>
    %127 = vector.shape_cast %126 : vector<256x32xf32> to vector<16x16x32xf32>
    %128 = vector.shape_cast %125 : vector<16x32xf32> to vector<16x1x32xf32>
    %129 = vector.shape_cast %124 : vector<16x32xf32> to vector<1x16x32xf32>
    %130 = vector.broadcast %128 : vector<16x1x32xf32> to vector<16x16x32xf32>
    %131 = vector.broadcast %129 : vector<1x16x32xf32> to vector<16x16x32xf32>
    %132 = arith.addf %130, %131 : vector<16x16x32xf32>
    %133 = arith.addf %132, %127 : vector<16x16x32xf32>
    %cst_41 = arith.constant 0.000000e+00 : f32
    %134 = vector.broadcast %cst_41 : f32 to vector<16x16x32xf32>
    %135 = arith.cmpf ogt, %133, %134 : vector<16x16x32xf32>
    %cst_42 = arith.constant 2.000000e-01 : f32
    %136 = vector.broadcast %cst_42 : f32 to vector<16x16x32xf32>
    %137 = arith.mulf %136, %133 : vector<16x16x32xf32>
    %138 = arith.select %135, %133, %137 : vector<16x16x32xi1>, vector<16x16x32xf32>
    %139 = vector.extract_strided_slice %12 {offsets = [3, 0], sizes = [1, 32], strides = [1, 1]} : vector<4x32xf32> to vector<1x32xf32>
    %140 = vector.shape_cast %139 : vector<1x32xf32> to vector<1x1x32xf32>
    %141 = vector.broadcast %140 : vector<1x1x32xf32> to vector<16x16x32xf32>
    %142 = arith.mulf %138, %141 : vector<16x16x32xf32>
    %cst_43 = arith.constant dense<0.000000e+00> : vector<16x16xf32>
    %143 = vector.multi_reduction <add>, %142, %cst_43 [2] : vector<16x16x32xf32> to vector<16x16xf32>
    %cst_44 = arith.constant 0.000000e+00 : f32
    %144 = vector.broadcast %cst_44 : f32 to vector<16x16xf32>
    %145 = arith.cmpf ogt, %1, %144 : vector<16x16xf32>
    %cst_45 = arith.constant -1.000000e+30 : f32
    %146 = vector.broadcast %cst_45 : f32 to vector<16x16xf32>
    %147 = arith.select %145, %143, %146 : vector<16x16xi1>, vector<16x16xf32>
    %cst_46 = arith.constant dense<0xFF800000> : vector<16xf32>
    %148 = vector.multi_reduction <maximumf>, %147, %cst_46 [1] : vector<16x16xf32> to vector<16xf32>
    %149 = vector.shape_cast %148 : vector<16xf32> to vector<16x1xf32>
    %150 = vector.broadcast %149 : vector<16x1xf32> to vector<16x16xf32>
    %151 = arith.subf %147, %150 : vector<16x16xf32>
    %152 = math.exp %151 : vector<16x16xf32>
    %153 = arith.mulf %152, %1 : vector<16x16xf32>
    %cst_47 = arith.constant dense<0.000000e+00> : vector<16xf32>
    %154 = vector.multi_reduction <add>, %153, %cst_47 [1] : vector<16x16xf32> to vector<16xf32>
    %155 = vector.shape_cast %154 : vector<16xf32> to vector<16x1xf32>
    %cst_48 = arith.constant 9.99999968E-21 : f32
    %156 = vector.broadcast %cst_48 : f32 to vector<16x1xf32>
    %157 = arith.maximumf %155, %156 : vector<16x1xf32>
    %158 = vector.broadcast %157 : vector<16x1xf32> to vector<16x16xf32>
    %159 = arith.divf %153, %158 : vector<16x16xf32>
    %cst_49 = arith.constant dense<0.000000e+00> : vector<16x32xf32>
    %160 = tpu.matmul %159, %124, %cst_49 {dimension_numbers = #tpu.dot_dimension_numbers<[1], [0], [0], [1], [0, 0, 1, 1], [], []>} : vector<16x16xf32>, vector<16x32xf32>, vector<16x32xf32> -> vector<16x32xf32>
    %161 = tpu.concatenate %49, %86, %123, %160 in 1 : vector<16x32xf32>, vector<16x32xf32>, vector<16x32xf32>, vector<16x32xf32> -> vector<16x128xf32>
    %c0_50 = arith.constant 0 : index
    %c0_51 = arith.constant 0 : index
    %162 = vector.load %arg7[%c0_50, %c0_51] : memref<1x128xf32, #tpu.memory_space<vmem>>, vector<1x128xf32>
    %163 = vector.broadcast %162 : vector<1x128xf32> to vector<16x128xf32>
    %164 = arith.addf %161, %163 : vector<16x128xf32>
    %c0_52 = arith.constant 0 : index
    %c0_53 = arith.constant 0 : index
    %165 = vector.load %arg8[%c0_52, %c0_53] : memref<1x128xf32, #tpu.memory_space<vmem>>, vector<1x128xf32>
    %c0_54 = arith.constant 0 : index
    %c0_55 = arith.constant 0 : index
    %166 = vector.load %arg9[%c0_54, %c0_55] : memref<1x128xf32, #tpu.memory_space<vmem>>, vector<1x128xf32>
    %cst_56 = arith.constant dense<0.000000e+00> : vector<16xf32>
    %167 = vector.multi_reduction <add>, %164, %cst_56 [1] : vector<16x128xf32> to vector<16xf32>
    %168 = vector.shape_cast %167 : vector<16xf32> to vector<16x1xf32>
    %cst_57 = arith.constant 1.280000e+02 : f32
    %169 = vector.broadcast %cst_57 : f32 to vector<16x1xf32>
    %170 = arith.divf %168, %169 : vector<16x1xf32>
    %171 = vector.broadcast %170 : vector<16x1xf32> to vector<16x128xf32>
    %172 = arith.subf %164, %171 : vector<16x128xf32>
    %173 = arith.mulf %172, %172 : vector<16x128xf32>
    %cst_58 = arith.constant dense<0.000000e+00> : vector<16xf32>
    %174 = vector.multi_reduction <add>, %173, %cst_58 [1] : vector<16x128xf32> to vector<16xf32>
    %175 = vector.shape_cast %174 : vector<16xf32> to vector<16x1xf32>
    %cst_59 = arith.constant 1.280000e+02 : f32
    %176 = vector.broadcast %cst_59 : f32 to vector<16x1xf32>
    %177 = arith.divf %175, %176 : vector<16x1xf32>
    %cst_60 = arith.constant 9.99999974E-6 : f32
    %178 = vector.broadcast %cst_60 : f32 to vector<16x1xf32>
    %179 = arith.addf %177, %178 : vector<16x1xf32>
    %180 = math.rsqrt %179 : vector<16x1xf32>
    %181 = vector.broadcast %180 : vector<16x1xf32> to vector<16x128xf32>
    %182 = arith.mulf %172, %181 : vector<16x128xf32>
    %183 = vector.broadcast %165 : vector<1x128xf32> to vector<16x128xf32>
    %184 = arith.mulf %182, %183 : vector<16x128xf32>
    %185 = vector.broadcast %166 : vector<1x128xf32> to vector<16x128xf32>
    %186 = arith.addf %184, %185 : vector<16x128xf32>
    %cst_61 = arith.constant 0.000000e+00 : f32
    %187 = vector.broadcast %cst_61 : f32 to vector<16x128xf32>
    %188 = arith.cmpf ogt, %186, %187 : vector<16x128xf32>
    %189 = math.exp %186 : vector<16x128xf32>
    %cst_62 = arith.constant 1.000000e+00 : f32
    %190 = vector.broadcast %cst_62 : f32 to vector<16x128xf32>
    %191 = arith.subf %189, %190 : vector<16x128xf32>
    %192 = arith.select %188, %186, %191 : vector<16x128xi1>, vector<16x128xf32>
    %c0_63 = arith.constant 0 : index
    %c0_64 = arith.constant 0 : index
    %193 = vector.load %arg10[%c0_63, %c0_64] : memref<16x8xf32, #tpu.memory_space<vmem>>, vector<16x8xf32>
    %c0_65 = arith.constant 0 : index
    %c0_66 = arith.constant 0 : index
    %194 = vector.load %arg14[%c0_65, %c0_66] : memref<1x128xf32, #tpu.memory_space<vmem>>, vector<1x128xf32>
    %c0_67 = arith.constant 0 : index
    %c0_68 = arith.constant 0 : index
    %195 = vector.load %arg11[%c0_67, %c0_68] : memref<8x128xf32, #tpu.memory_space<vmem>>, vector<8x128xf32>
    %cst_69 = arith.constant dense<0.000000e+00> : vector<16x128xf32>
    %196 = tpu.matmul %193, %195, %cst_69 {dimension_numbers = #tpu.dot_dimension_numbers<[1], [0], [0], [1], [0, 0, 1, 1], [], []>} : vector<16x8xf32>, vector<8x128xf32>, vector<16x128xf32> -> vector<16x128xf32>
    %197 = vector.broadcast %194 : vector<1x128xf32> to vector<16x128xf32>
    %198 = arith.addf %197, %196 : vector<16x128xf32>
    %c0_70 = arith.constant 0 : index
    %c0_71 = arith.constant 0 : index
    %199 = vector.load %arg12[%c0_70, %c0_71] : memref<128x128xf32, #tpu.memory_space<vmem>>, vector<128x128xf32>
    %cst_72 = arith.constant dense<0.000000e+00> : vector<16x128xf32>
    %200 = tpu.matmul %0, %199, %cst_72 {dimension_numbers = #tpu.dot_dimension_numbers<[1], [0], [0], [1], [0, 0, 1, 1], [], []>} : vector<16x128xf32>, vector<128x128xf32>, vector<16x128xf32> -> vector<16x128xf32>
    %201 = arith.addf %198, %200 : vector<16x128xf32>
    %c0_73 = arith.constant 0 : index
    %c0_74 = arith.constant 0 : index
    %202 = vector.load %arg13[%c0_73, %c0_74] : memref<128x128xf32, #tpu.memory_space<vmem>>, vector<128x128xf32>
    %cst_75 = arith.constant dense<0.000000e+00> : vector<16x128xf32>
    %203 = tpu.matmul %192, %202, %cst_75 {dimension_numbers = #tpu.dot_dimension_numbers<[1], [0], [0], [1], [0, 0, 1, 1], [], []>} : vector<16x128xf32>, vector<128x128xf32>, vector<16x128xf32> -> vector<16x128xf32>
    %204 = arith.addf %201, %203 : vector<16x128xf32>
    %cst_76 = arith.constant 0.000000e+00 : f32
    %205 = vector.broadcast %cst_76 : f32 to vector<16x128xf32>
    %206 = arith.cmpf ogt, %204, %205 : vector<16x128xf32>
    %207 = math.exp %204 : vector<16x128xf32>
    %cst_77 = arith.constant 1.000000e+00 : f32
    %208 = vector.broadcast %cst_77 : f32 to vector<16x128xf32>
    %209 = arith.subf %207, %208 : vector<16x128xf32>
    %210 = arith.select %206, %204, %209 : vector<16x128xi1>, vector<16x128xf32>
    %c0_78 = arith.constant 0 : index
    %c0_79 = arith.constant 0 : index
    %211 = vector.load %arg15[%c0_78, %c0_79] : memref<16x128xf32, #tpu.memory_space<vmem>>, vector<16x128xf32>
    tpu.vector_store %arg15[%c0_78, %c0_79], %210 {strides = array<i32>} : memref<16x128xf32, #tpu.memory_space<vmem>>, vector<16x128xf32>,
    return
  }
}

module attributes {stable_mosaic.version = 11 : i64} {
  func.func @_tail_kernel(%arg0: memref<16x128xf32, #tpu.memory_space<vmem>>, %arg1: memref<8x16xf32, #tpu.memory_space<vmem>>, %arg2: memref<8x8xf32, #tpu.memory_space<vmem>>, %arg3: memref<128x32xf32, #tpu.memory_space<vmem>>, %arg4: memref<1x32xf32, #tpu.memory_space<vmem>>, %arg5: memref<1x32xf32, #tpu.memory_space<vmem>>, %arg6: memref<1x1xf32, #tpu.memory_space<vmem>>, %arg7: memref<32x64xf32, #tpu.memory_space<vmem>>, %arg8: memref<8x64xf32, #tpu.memory_space<vmem>>, %arg9: memref<1x64xf32, #tpu.memory_space<vmem>>, %arg10: memref<1x64xf32, #tpu.memory_space<vmem>>, %arg11: memref<1x64xf32, #tpu.memory_space<vmem>>, %arg12: memref<64x32xf32, #tpu.memory_space<vmem>>, %arg13: memref<1x32xf32, #tpu.memory_space<vmem>>, %arg14: memref<1x32xf32, #tpu.memory_space<vmem>>, %arg15: memref<1x32xf32, #tpu.memory_space<vmem>>, %arg16: memref<32x8xf32, #tpu.memory_space<vmem>>, %arg17: memref<1x8xf32, #tpu.memory_space<vmem>>, %arg18: memref<8x8xf32, #tpu.memory_space<vmem>>) attributes {dimension_semantics = [], scalar_prefetch = 0 : i64, scratch_operands = 0 : i64, tpu.core_type = #tpu.core_type<tc>} {
    %c0 = arith.constant 0 : index
    %c0_0 = arith.constant 0 : index
    %0 = vector.load %arg0[%c0, %c0_0] : memref<16x128xf32, #tpu.memory_space<vmem>>, vector<16x128xf32>
    %c0_1 = arith.constant 0 : index
    %c0_2 = arith.constant 0 : index
    %1 = vector.load %arg3[%c0_1, %c0_2] : memref<128x32xf32, #tpu.memory_space<vmem>>, vector<128x32xf32>
    %cst = arith.constant dense<0.000000e+00> : vector<16x32xf32>
    %2 = tpu.matmul %0, %1, %cst {dimension_numbers = #tpu.dot_dimension_numbers<[1], [0], [0], [1], [0, 0, 1, 1], [], []>} : vector<16x128xf32>, vector<128x32xf32>, vector<16x32xf32> -> vector<16x32xf32>
    %c0_3 = arith.constant 0 : index
    %c0_4 = arith.constant 0 : index
    %3 = vector.load %arg4[%c0_3, %c0_4] : memref<1x32xf32, #tpu.memory_space<vmem>>, vector<1x32xf32>
    %4 = vector.broadcast %3 : vector<1x32xf32> to vector<16x32xf32>
    %5 = arith.addf %2, %4 : vector<16x32xf32>
    %c0_5 = arith.constant 0 : index
    %c0_6 = arith.constant 0 : index
    %6 = vector.load %arg5[%c0_5, %c0_6] : memref<1x32xf32, #tpu.memory_space<vmem>>, vector<1x32xf32>
    %7 = vector.broadcast %6 : vector<1x32xf32> to vector<16x32xf32>
    %8 = arith.mulf %5, %7 : vector<16x32xf32>
    %cst_7 = arith.constant dense<0.000000e+00> : vector<16xf32>
    %9 = vector.multi_reduction <add>, %8, %cst_7 [1] : vector<16x32xf32> to vector<16xf32>
    %10 = vector.shape_cast %9 : vector<16xf32> to vector<16x1xf32>
    %c0_8 = arith.constant 0 : index
    %c0_9 = arith.constant 0 : index
    %11 = vector.load %arg6[%c0_8, %c0_9] : memref<1x1xf32, #tpu.memory_space<vmem>>, vector<1x1xf32>
    %12 = vector.broadcast %11 : vector<1x1xf32> to vector<16x1xf32>
    %13 = arith.addf %10, %12 : vector<16x1xf32>
    %14 = math.tanh %13 : vector<16x1xf32>
    %cst_10 = arith.constant dense<0xFF800000> : vector<1xf32>
    %15 = vector.multi_reduction <maximumf>, %14, %cst_10 [0] : vector<16x1xf32> to vector<1xf32>
    %16 = vector.shape_cast %15 : vector<1xf32> to vector<1x1xf32>
    %17 = vector.broadcast %16 : vector<1x1xf32> to vector<16x1xf32>
    %18 = arith.subf %14, %17 : vector<16x1xf32>
    %19 = math.exp %18 : vector<16x1xf32>
    %cst_11 = arith.constant dense<0.000000e+00> : vector<1xf32>
    %20 = vector.multi_reduction <add>, %19, %cst_11 [0] : vector<16x1xf32> to vector<1xf32>
    %21 = vector.shape_cast %20 : vector<1xf32> to vector<1x1xf32>
    %22 = vector.broadcast %21 : vector<1x1xf32> to vector<16x1xf32>
    %23 = arith.divf %19, %22 : vector<16x1xf32>
    %c0_12 = arith.constant 0 : index
    %c0_13 = arith.constant 0 : index
    %24 = vector.load %arg1[%c0_12, %c0_13] : memref<8x16xf32, #tpu.memory_space<vmem>>, vector<8x16xf32>
    %25 = vector.broadcast %23 : vector<16x1xf32> to vector<16x32xf32>
    %26 = arith.mulf %5, %25 : vector<16x32xf32>
    %cst_14 = arith.constant dense<0.000000e+00> : vector<8x32xf32>
    %27 = tpu.matmul %24, %26, %cst_14 {dimension_numbers = #tpu.dot_dimension_numbers<[1], [0], [0], [1], [0, 0, 1, 1], [], []>} : vector<8x16xf32>, vector<16x32xf32>, vector<8x32xf32> -> vector<8x32xf32>
    %c0_15 = arith.constant 0 : index
    %c0_16 = arith.constant 0 : index
    %28 = vector.load %arg7[%c0_15, %c0_16] : memref<32x64xf32, #tpu.memory_space<vmem>>, vector<32x64xf32>
    %cst_17 = arith.constant dense<0.000000e+00> : vector<8x64xf32>
    %29 = tpu.matmul %27, %28, %cst_17 {dimension_numbers = #tpu.dot_dimension_numbers<[1], [0], [0], [1], [0, 0, 1, 1], [], []>} : vector<8x32xf32>, vector<32x64xf32>, vector<8x64xf32> -> vector<8x64xf32>
    %c0_18 = arith.constant 0 : index
    %c0_19 = arith.constant 0 : index
    %30 = vector.load %arg2[%c0_18, %c0_19] : memref<8x8xf32, #tpu.memory_space<vmem>>, vector<8x8xf32>
    %c0_20 = arith.constant 0 : index
    %c0_21 = arith.constant 0 : index
    %31 = vector.load %arg8[%c0_20, %c0_21] : memref<8x64xf32, #tpu.memory_space<vmem>>, vector<8x64xf32>
    %cst_22 = arith.constant dense<0.000000e+00> : vector<8x64xf32>
    %32 = tpu.matmul %30, %31, %cst_22 {dimension_numbers = #tpu.dot_dimension_numbers<[1], [0], [0], [1], [0, 0, 1, 1], [], []>} : vector<8x8xf32>, vector<8x64xf32>, vector<8x64xf32> -> vector<8x64xf32>
    %33 = arith.addf %29, %32 : vector<8x64xf32>
    %c0_23 = arith.constant 0 : index
    %c0_24 = arith.constant 0 : index
    %34 = vector.load %arg9[%c0_23, %c0_24] : memref<1x64xf32, #tpu.memory_space<vmem>>, vector<1x64xf32>
    %35 = vector.broadcast %34 : vector<1x64xf32> to vector<8x64xf32>
    %36 = arith.addf %33, %35 : vector<8x64xf32>
    %c0_25 = arith.constant 0 : index
    %c0_26 = arith.constant 0 : index
    %37 = vector.load %arg10[%c0_25, %c0_26] : memref<1x64xf32, #tpu.memory_space<vmem>>, vector<1x64xf32>
    %c0_27 = arith.constant 0 : index
    %c0_28 = arith.constant 0 : index
    %38 = vector.load %arg11[%c0_27, %c0_28] : memref<1x64xf32, #tpu.memory_space<vmem>>, vector<1x64xf32>
    %cst_29 = arith.constant dense<0.000000e+00> : vector<8xf32>
    %39 = vector.multi_reduction <add>, %36, %cst_29 [1] : vector<8x64xf32> to vector<8xf32>
    %40 = vector.shape_cast %39 : vector<8xf32> to vector<8x1xf32>
    %cst_30 = arith.constant 6.400000e+01 : f32
    %41 = vector.broadcast %cst_30 : f32 to vector<8x1xf32>
    %42 = arith.divf %40, %41 : vector<8x1xf32>
    %43 = vector.broadcast %42 : vector<8x1xf32> to vector<8x64xf32>
    %44 = arith.subf %36, %43 : vector<8x64xf32>
    %45 = arith.mulf %44, %44 : vector<8x64xf32>
    %cst_31 = arith.constant dense<0.000000e+00> : vector<8xf32>
    %46 = vector.multi_reduction <add>, %45, %cst_31 [1] : vector<8x64xf32> to vector<8xf32>
    %47 = vector.shape_cast %46 : vector<8xf32> to vector<8x1xf32>
    %cst_32 = arith.constant 6.400000e+01 : f32
    %48 = vector.broadcast %cst_32 : f32 to vector<8x1xf32>
    %49 = arith.divf %47, %48 : vector<8x1xf32>
    %cst_33 = arith.constant 9.99999974E-6 : f32
    %50 = vector.broadcast %cst_33 : f32 to vector<8x1xf32>
    %51 = arith.addf %49, %50 : vector<8x1xf32>
    %52 = math.rsqrt %51 : vector<8x1xf32>
    %53 = vector.broadcast %52 : vector<8x1xf32> to vector<8x64xf32>
    %54 = arith.mulf %44, %53 : vector<8x64xf32>
    %55 = vector.broadcast %37 : vector<1x64xf32> to vector<8x64xf32>
    %56 = arith.mulf %54, %55 : vector<8x64xf32>
    %57 = vector.broadcast %38 : vector<1x64xf32> to vector<8x64xf32>
    %58 = arith.addf %56, %57 : vector<8x64xf32>
    %cst_34 = arith.constant 0.000000e+00 : f32
    %59 = vector.broadcast %cst_34 : f32 to vector<8x64xf32>
    %60 = arith.maximumf %58, %59 : vector<8x64xf32>
    %c0_35 = arith.constant 0 : index
    %c0_36 = arith.constant 0 : index
    %61 = vector.load %arg12[%c0_35, %c0_36] : memref<64x32xf32, #tpu.memory_space<vmem>>, vector<64x32xf32>
    %cst_37 = arith.constant dense<0.000000e+00> : vector<8x32xf32>
    %62 = tpu.matmul %60, %61, %cst_37 {dimension_numbers = #tpu.dot_dimension_numbers<[1], [0], [0], [1], [0, 0, 1, 1], [], []>} : vector<8x64xf32>, vector<64x32xf32>, vector<8x32xf32> -> vector<8x32xf32>
    %c0_38 = arith.constant 0 : index
    %c0_39 = arith.constant 0 : index
    %63 = vector.load %arg13[%c0_38, %c0_39] : memref<1x32xf32, #tpu.memory_space<vmem>>, vector<1x32xf32>
    %64 = vector.broadcast %63 : vector<1x32xf32> to vector<8x32xf32>
    %65 = arith.addf %62, %64 : vector<8x32xf32>
    %c0_40 = arith.constant 0 : index
    %c0_41 = arith.constant 0 : index
    %66 = vector.load %arg14[%c0_40, %c0_41] : memref<1x32xf32, #tpu.memory_space<vmem>>, vector<1x32xf32>
    %c0_42 = arith.constant 0 : index
    %c0_43 = arith.constant 0 : index
    %67 = vector.load %arg15[%c0_42, %c0_43] : memref<1x32xf32, #tpu.memory_space<vmem>>, vector<1x32xf32>
    %cst_44 = arith.constant dense<0.000000e+00> : vector<8xf32>
    %68 = vector.multi_reduction <add>, %65, %cst_44 [1] : vector<8x32xf32> to vector<8xf32>
    %69 = vector.shape_cast %68 : vector<8xf32> to vector<8x1xf32>
    %cst_45 = arith.constant 3.200000e+01 : f32
    %70 = vector.broadcast %cst_45 : f32 to vector<8x1xf32>
    %71 = arith.divf %69, %70 : vector<8x1xf32>
    %72 = vector.broadcast %71 : vector<8x1xf32> to vector<8x32xf32>
    %73 = arith.subf %65, %72 : vector<8x32xf32>
    %74 = arith.mulf %73, %73 : vector<8x32xf32>
    %cst_46 = arith.constant dense<0.000000e+00> : vector<8xf32>
    %75 = vector.multi_reduction <add>, %74, %cst_46 [1] : vector<8x32xf32> to vector<8xf32>
    %76 = vector.shape_cast %75 : vector<8xf32> to vector<8x1xf32>
    %cst_47 = arith.constant 3.200000e+01 : f32
    %77 = vector.broadcast %cst_47 : f32 to vector<8x1xf32>
    %78 = arith.divf %76, %77 : vector<8x1xf32>
    %cst_48 = arith.constant 9.99999974E-6 : f32
    %79 = vector.broadcast %cst_48 : f32 to vector<8x1xf32>
    %80 = arith.addf %78, %79 : vector<8x1xf32>
    %81 = math.rsqrt %80 : vector<8x1xf32>
    %82 = vector.broadcast %81 : vector<8x1xf32> to vector<8x32xf32>
    %83 = arith.mulf %73, %82 : vector<8x32xf32>
    %84 = vector.broadcast %66 : vector<1x32xf32> to vector<8x32xf32>
    %85 = arith.mulf %83, %84 : vector<8x32xf32>
    %86 = vector.broadcast %67 : vector<1x32xf32> to vector<8x32xf32>
    %87 = arith.addf %85, %86 : vector<8x32xf32>
    %cst_49 = arith.constant 0.000000e+00 : f32
    %88 = vector.broadcast %cst_49 : f32 to vector<8x32xf32>
    %89 = arith.maximumf %87, %88 : vector<8x32xf32>
    %c0_50 = arith.constant 0 : index
    %c0_51 = arith.constant 0 : index
    %90 = vector.load %arg16[%c0_50, %c0_51] : memref<32x8xf32, #tpu.memory_space<vmem>>, vector<32x8xf32>
    %cst_52 = arith.constant dense<0.000000e+00> : vector<8x8xf32>
    %91 = tpu.matmul %89, %90, %cst_52 {dimension_numbers = #tpu.dot_dimension_numbers<[1], [0], [0], [1], [0, 0, 1, 1], [], []>} : vector<8x32xf32>, vector<32x8xf32>, vector<8x8xf32> -> vector<8x8xf32>
    %c0_53 = arith.constant 0 : index
    %c0_54 = arith.constant 0 : index
    %92 = vector.load %arg17[%c0_53, %c0_54] : memref<1x8xf32, #tpu.memory_space<vmem>>, vector<1x8xf32>
    %93 = vector.broadcast %92 : vector<1x8xf32> to vector<8x8xf32>
    %94 = arith.addf %91, %93 : vector<8x8xf32>
    %c0_55 = arith.constant 0 : index
    %c0_56 = arith.constant 0 : index
    %95 = vector.load %arg18[%c0_55, %c0_56] : memref<8x8xf32, #tpu.memory_space<vmem>>, vector<8x8xf32>
    tpu.vector_store %arg18[%c0_55, %c0_56], %94 {strides = array<i32>} : memref<8x8xf32, #tpu.memory_space<vmem>>, vector<8x8xf32>,
    return
  }
}

</mosaic_0001>

<llo_original>
// kernel: fpga_gnn_forward.5
$region0: #{fpga_gnn_forward.5}
  #allocation0 [shape = 'u32[]', space=smem, size = 0x4, offset = 0x4, fixed_abs, tag = 'smem constant byte address 0x4 - core index']
  #allocation1 [shape = 'u32[72,128]{1,0:T(1,128)}', space=vmem, size = 0x9000, scoped, tag = 'internal scratch']
  %s0 = inlined_call_operand.vmem [shape: f32[256,1], index: 0, kind: input, shape index: {}]
  %s1 = inlined_call_operand.vmem [shape: f32[16,16], index: 1, kind: input, shape index: {}]
  %s2 = inlined_call_operand.vmem [shape: f32[1,16], index: 2, kind: input, shape index: {}]
  %s3 = inlined_call_operand.vmem [shape: f32[1,16], index: 3, kind: input, shape index: {}]
  %s4 = inlined_call_operand.vmem [shape: f32[16,8], index: 4, kind: input, shape index: {}]
  %s5 = inlined_call_operand.vmem [shape: f32[1,8], index: 5, kind: input, shape index: {}]
  %s6 = inlined_call_operand.vmem [shape: f32[256,8], index: 6, kind: output, shape index: {}]
  %s7 = sld [smem:[#allocation0]]
  $region34: #{fpga_gnn_forward.5} parent=0
    _
  %s9 = ssub.s32 1, %s7
  %s10 = scalar_select 0, %s9, %s7
  // Predicated region
  $region2: #{fpga_gnn_forward.5} parent=0 // pred_check
    _
  $region3: #{fpga_gnn_forward.5} parent=0 // pred_check_branch
    %12 = sbr.rel (0) target = $region5
  $region4: #{fpga_gnn_forward.5} parent=0 // pred_region
    _
  $region5: #{fpga_gnn_forward.5} parent=0 // pred_fallthru
    _
  // Predicated region
  $region6: #{fpga_gnn_forward.5} parent=0 // pred_check
    _
  $region7: #{fpga_gnn_forward.5} parent=0 // pred_check_branch
    %14 = sbr.rel (0) target = $region9
  $region8: #{fpga_gnn_forward.5} parent=0 // pred_region
    _
  $region9: #{fpga_gnn_forward.5} parent=0 // pred_fallthru
    _
  // Predicated region
  $region10: #{fpga_gnn_forward.5} parent=0 // pred_check
    _
  $region11: #{fpga_gnn_forward.5} parent=0 // pred_check_branch
    %16 = sbr.rel (0) target = $region13
  $region12: #{fpga_gnn_forward.5} parent=0 // pred_region
    _
  $region13: #{fpga_gnn_forward.5} parent=0 // pred_fallthru
    _
  // Predicated region
  $region14: #{fpga_gnn_forward.5} parent=0 // pred_check
    _
  $region15: #{fpga_gnn_forward.5} parent=0 // pred_check_branch
    %18 = sbr.rel (0) target = $region17
  $region16: #{fpga_gnn_forward.5} parent=0 // pred_region
    _
  $region17: #{fpga_gnn_forward.5} parent=0 // pred_fallthru
    _
  // Predicated region
  $region18: #{fpga_gnn_forward.5} parent=0 // pred_check
    _
  $region19: #{fpga_gnn_forward.5} parent=0 // pred_check_branch
    %20 = sbr.rel (0) target = $region21
  $region20: #{fpga_gnn_forward.5} parent=0 // pred_region
    _
  $region21: #{fpga_gnn_forward.5} parent=0 // pred_fallthru
    _
  // Predicated region
  $region22: #{fpga_gnn_forward.5} parent=0 // pred_check
    _
  $region23: #{fpga_gnn_forward.5} parent=0 // pred_check_branch
    %22 = sbr.rel (0) target = $region25
  $region24: #{fpga_gnn_forward.5} parent=0 // pred_region
    _
  $region25: #{fpga_gnn_forward.5} parent=0 // pred_fallthru
    _
  %v23 = vld [vmem:[%s1] sm:$0xff]
  %v24 = vld [vmem:[%s1 + $0x8] sm:$0xff]
  %v25 = vld [vmem:[%s0] sm:$0xff]
  %v26 = vld [vmem:[%s0 + $0x8] sm:$0xff]
  %v27 = vld [vmem:[%s0 + $0x10] sm:$0xff]
  %v28 = vld [vmem:[%s0 + $0x18] sm:$0xff]
  %v29 = vld [vmem:[%s0 + $0x20] sm:$0xff]
  %v30 = vld [vmem:[%s0 + $0x28] sm:$0xff]
  %v31 = vld [vmem:[%s0 + $0x30] sm:$0xff]
  %v32 = vld [vmem:[%s0 + $0x38] sm:$0xff]
  %v33 = vld [vmem:[%s0 + $0x40] sm:$0xff]
  %v34 = vld [vmem:[%s0 + $0x48] sm:$0xff]
  %v35 = vld [vmem:[%s0 + $0x50] sm:$0xff]
  %v36 = vld [vmem:[%s0 + $0x58] sm:$0xff]
  %v37 = vld [vmem:[%s0 + $0x60] sm:$0xff]
  %v38 = vld [vmem:[%s0 + $0x68] sm:$0xff]
  %v39 = vld [vmem:[%s0 + $0x70] sm:$0xff]
  %v40 = vld [vmem:[%s0 + $0x78] sm:$0xff]
  %v41 = vld [vmem:[%s0 + $0x80] sm:$0xff]
  %v42 = vld [vmem:[%s0 + $0x88] sm:$0xff]
  %v43 = vld [vmem:[%s0 + $0x90] sm:$0xff]
  %v44 = vld [vmem:[%s0 + $0x98] sm:$0xff]
  %v45 = vld [vmem:[%s0 + $0xa0] sm:$0xff]
  %v46 = vld [vmem:[%s0 + $0xa8] sm:$0xff]
  %v47 = vld [vmem:[%s0 + $0xb0] sm:$0xff]
  %v48 = vld [vmem:[%s0 + $0xb8] sm:$0xff]
  %v49 = vld [vmem:[%s0 + $0xc0] sm:$0xff]
  %v50 = vld [vmem:[%s0 + $0xc8] sm:$0xff]
  %v51 = vld [vmem:[%s0 + $0xd0] sm:$0xff]
  %v52 = vld [vmem:[%s0 + $0xd8] sm:$0xff]
  %v53 = vld [vmem:[%s0 + $0xe0] sm:$0xff]
  %v54 = vld [vmem:[%s0 + $0xe8] sm:$0xff]
  %v55 = vld [vmem:[%s0 + $0xf0] sm:$0xff]
  %v56 = vld [vmem:[%s0 + $0xf8] sm:$0xff]
  %v57 = vld [vmem:[%s2] sm:$0x1]
  %59 = vset.pattern.permute.xlu0 0
  %60 = vperm.xlu0 %59, %v25
  %v61 = vpop.permute.xlu0 %60
  %64 = vset.pattern.permute.xlu0 0
  %65 = vperm.xlu0 %64, %v26
  %v66 = vpop.permute.xlu0 %65
  %69 = vset.pattern.permute.xlu0 0
  %70 = vperm.xlu0 %69, %v27
  %v71 = vpop.permute.xlu0 %70
  %74 = vset.pattern.permute.xlu0 0
  %75 = vperm.xlu0 %74, %v28
  %v76 = vpop.permute.xlu0 %75
  %79 = vset.pattern.permute.xlu0 0
  %80 = vperm.xlu0 %79, %v29
  %v81 = vpop.permute.xlu0 %80
  %84 = vset.pattern.permute.xlu0 0
  %85 = vperm.xlu0 %84, %v30
  %v86 = vpop.permute.xlu0 %85
  %89 = vset.pattern.permute.xlu0 0
  %90 = vperm.xlu0 %89, %v31
  %v91 = vpop.permute.xlu0 %90
  %94 = vset.pattern.permute.xlu0 0
  %95 = vperm.xlu0 %94, %v32
  %v96 = vpop.permute.xlu0 %95
  %99 = vset.pattern.permute.xlu0 0
  %100 = vperm.xlu0 %99, %v33
  %v101 = vpop.permute.xlu0 %100
  %104 = vset.pattern.permute.xlu0 0
  %105 = vperm.xlu0 %104, %v34
  %v106 = vpop.permute.xlu0 %105
  %109 = vset.pattern.permute.xlu0 0
  %110 = vperm.xlu0 %109, %v35
  %v111 = vpop.permute.xlu0 %110
  %114 = vset.pattern.permute.xlu0 0
  %115 = vperm.xlu0 %114, %v36
  %v116 = vpop.permute.xlu0 %115
  %119 = vset.pattern.permute.xlu0 0
  %120 = vperm.xlu0 %119, %v37
  %v121 = vpop.permute.xlu0 %120
  %124 = vset.pattern.permute.xlu0 0
  %125 = vperm.xlu0 %124, %v38
  %v126 = vpop.permute.xlu0 %125
  %129 = vset.pattern.permute.xlu0 0
  %130 = vperm.xlu0 %129, %v39
  %v131 = vpop.permute.xlu0 %130
  %134 = vset.pattern.permute.xlu0 0
  %135 = vperm.xlu0 %134, %v40
  %v136 = vpop.permute.xlu0 %135
  %139 = vset.pattern.permute.xlu0 0
  %140 = vperm.xlu0 %139, %v41
  %v141 = vpop.permute.xlu0 %140
  %144 = vset.pattern.permute.xlu0 0
  %145 = vperm.xlu0 %144, %v42
  %v146 = vpop.permute.xlu0 %145
  %149 = vset.pattern.permute.xlu0 0
  %150 = vperm.xlu0 %149, %v43
  %v151 = vpop.permute.xlu0 %150
  %154 = vset.pattern.permute.xlu0 0
  %155 = vperm.xlu0 %154, %v44
  %v156 = vpop.permute.xlu0 %155
  %159 = vset.pattern.permute.xlu0 0
  %160 = vperm.xlu0 %159, %v45
  %v161 = vpop.permute.xlu0 %160
  %164 = vset.pattern.permute.xlu0 0
  %165 = vperm.xlu0 %164, %v46
  %v166 = vpop.permute.xlu0 %165
  %169 = vset.pattern.permute.xlu0 0
  %170 = vperm.xlu0 %169, %v47
  %v171 = vpop.permute.xlu0 %170
  %174 = vset.pattern.permute.xlu0 0
  %175 = vperm.xlu0 %174, %v48
  %v176 = vpop.permute.xlu0 %175
  %179 = vset.pattern.permute.xlu0 0
  %180 = vperm.xlu0 %179, %v49
  %v181 = vpop.permute.xlu0 %180
  %184 = vset.pattern.permute.xlu0 0
  %185 = vperm.xlu0 %184, %v50
  %v186 = vpop.permute.xlu0 %185
  %189 = vset.pattern.permute.xlu0 0
  %190 = vperm.xlu0 %189, %v51
  %v191 = vpop.permute.xlu0 %190
  %194 = vset.pattern.permute.xlu0 0
  %195 = vperm.xlu0 %194, %v52
  %v196 = vpop.permute.xlu0 %195
  %199 = vset.pattern.permute.xlu0 0
  %200 = vperm.xlu0 %199, %v53
  %v201 = vpop.permute.xlu0 %200
  %204 = vset.pattern.permute.xlu0 0
  %205 = vperm.xlu0 %204, %v54
  %v206 = vpop.permute.xlu0 %205
  %209 = vset.pattern.permute.xlu0 0
  %210 = vperm.xlu0 %209, %v55
  %v211 = vpop.permute.xlu0 %210
  %214 = vset.pattern.permute.xlu0 0
  %215 = vperm.xlu0 %214, %v56
  %v216 = vpop.permute.xlu0 %215
  %v219 = vperm.slane %v57, 0
  %v221 = vmul.f32 %v61, %v219
  %v222 = vmul.f32 %v66, %v219
  %v223 = vmul.f32 %v71, %v219
  %v224 = vmul.f32 %v76, %v219
  %v225 = vmul.f32 %v81, %v219
  %v226 = vmul.f32 %v86, %v219
  %v227 = vmul.f32 %v91, %v219
  %v228 = vmul.f32 %v96, %v219
  %v229 = vmul.f32 %v101, %v219
  %v230 = vmul.f32 %v106, %v219
  %v231 = vmul.f32 %v111, %v219
  %v232 = vmul.f32 %v116, %v219
  %v233 = vmul.f32 %v121, %v219
  %v234 = vmul.f32 %v126, %v219
  %v235 = vmul.f32 %v131, %v219
  %v236 = vmul.f32 %v136, %v219
  %v237 = vmul.f32 %v141, %v219
  %v238 = vmul.f32 %v146, %v219
  %v239 = vmul.f32 %v151, %v219
  %v240 = vmul.f32 %v156, %v219
  %v241 = vmul.f32 %v161, %v219
  %v242 = vmul.f32 %v166, %v219
  %v243 = vmul.f32 %v171, %v219
  %v244 = vmul.f32 %v176, %v219
  %v245 = vmul.f32 %v181, %v219
  %v246 = vmul.f32 %v186, %v219
  %v247 = vmul.f32 %v191, %v219
  %v248 = vmul.f32 %v196, %v219
  %v249 = vmul.f32 %v201, %v219
  %v250 = vmul.f32 %v206, %v219
  %v251 = vmul.f32 %v211, %v219
  %v252 = vmul.f32 %v216, %v219
  %v253 = vld [vmem:[%s3] sm:$0x1]
  %v255 = vperm.slane %v253, 0
  %v257 = vadd.f32 %v221, %v255
  %v258 = vadd.f32 %v222, %v255
  %v259 = vadd.f32 %v223, %v255
  %v260 = vadd.f32 %v224, %v255
  %v261 = vadd.f32 %v225, %v255
  %v262 = vadd.f32 %v226, %v255
  %v263 = vadd.f32 %v227, %v255
  %v264 = vadd.f32 %v228, %v255
  %v265 = vadd.f32 %v229, %v255
  %v266 = vadd.f32 %v230, %v255
  %v267 = vadd.f32 %v231, %v255
  %v268 = vadd.f32 %v232, %v255
  %v269 = vadd.f32 %v233, %v255
  %v270 = vadd.f32 %v234, %v255
  %v271 = vadd.f32 %v235, %v255
  %v272 = vadd.f32 %v236, %v255
  %v273 = vadd.f32 %v237, %v255
  %v274 = vadd.f32 %v238, %v255
  %v275 = vadd.f32 %v239, %v255
  %v276 = vadd.f32 %v240, %v255
  %v277 = vadd.f32 %v241, %v255
  %v278 = vadd.f32 %v242, %v255
  %v279 = vadd.f32 %v243, %v255
  %v280 = vadd.f32 %v244, %v255
  %v281 = vadd.f32 %v245, %v255
  %v282 = vadd.f32 %v246, %v255
  %v283 = vadd.f32 %v247, %v255
  %v284 = vadd.f32 %v248, %v255
  %v285 = vadd.f32 %v249, %v255
  %v286 = vadd.f32 %v250, %v255
  %v287 = vadd.f32 %v251, %v255
  %v288 = vadd.f32 %v252, %v255
  %v289 = vmax.f32 %v257, 0.0
  %v290 = vmax.f32 %v258, 0.0
  %v291 = vmax.f32 %v259, 0.0
  %v292 = vmax.f32 %v260, 0.0
  %v293 = vmax.f32 %v261, 0.0
  %v294 = vmax.f32 %v262, 0.0
  %v295 = vmax.f32 %v263, 0.0
  %v296 = vmax.f32 %v264, 0.0
  %v297 = vmax.f32 %v265, 0.0
  %v298 = vmax.f32 %v266, 0.0
  %v299 = vmax.f32 %v267, 0.0
  %v300 = vmax.f32 %v268, 0.0
  %v301 = vmax.f32 %v269, 0.0
  %v302 = vmax.f32 %v270, 0.0
  %v303 = vmax.f32 %v271, 0.0
  %v304 = vmax.f32 %v272, 0.0
  %v305 = vmax.f32 %v273, 0.0
  %v306 = vmax.f32 %v274, 0.0
  %v307 = vmax.f32 %v275, 0.0
  %v308 = vmax.f32 %v276, 0.0
  %v309 = vmax.f32 %v277, 0.0
  %v310 = vmax.f32 %v278, 0.0
  %v311 = vmax.f32 %v279, 0.0
  %v312 = vmax.f32 %v280, 0.0
  %v313 = vmax.f32 %v281, 0.0
  %v314 = vmax.f32 %v282, 0.0
  %v315 = vmax.f32 %v283, 0.0
  %v316 = vmax.f32 %v284, 0.0
  %v317 = vmax.f32 %v285, 0.0
  %v318 = vmax.f32 %v286, 0.0
  %v319 = vmax.f32 %v287, 0.0
  %v320 = vmax.f32 %v288, 0.0
  %v321 = vld [vmem:[%s4] sm:$0xff]
  %v322 = vld [vmem:[%s4 + $0x8] sm:$0xff]
  %v323 = vld [vmem:[%s5] sm:$0x1]
  %v325 = vperm.slane %v323, 0
  %vm327 = vcmask 130048
  %v329 = vsel %vm327, %v289, 0
  %v332 = vsel %vm327, %v290, 0
  %v335 = vsel %vm327, %v291, 0
  %v338 = vsel %vm327, %v292, 0
  %v341 = vsel %vm327, %v293, 0
  %v344 = vsel %vm327, %v294, 0
  %v347 = vsel %vm327, %v295, 0
  %v350 = vsel %vm327, %v296, 0
  %v353 = vsel %vm327, %v297, 0
  %v356 = vsel %vm327, %v298, 0
  %v359 = vsel %vm327, %v299, 0
  %v362 = vsel %vm327, %v300, 0
  %v365 = vsel %vm327, %v301, 0
  %v368 = vsel %vm327, %v302, 0
  %v371 = vsel %vm327, %v303, 0
  %v374 = vsel %vm327, %v304, 0
  %v377 = vsel %vm327, %v305, 0
  %v380 = vsel %vm327, %v306, 0
  %v383 = vsel %vm327, %v307, 0
  %v386 = vsel %vm327, %v308, 0
  %v389 = vsel %vm327, %v309, 0
  %v392 = vsel %vm327, %v310, 0
  %v395 = vsel %vm327, %v311, 0
  %v398 = vsel %vm327, %v312, 0
  %v401 = vsel %vm327, %v313, 0
  %v404 = vsel %vm327, %v314, 0
  %v407 = vsel %vm327, %v315, 0
  %v410 = vsel %vm327, %v316, 0
  %v413 = vsel %vm327, %v317, 0
  %v416 = vsel %vm327, %v318, 0
  %v419 = vsel %vm327, %v319, 0
  %v422 = vsel %vm327, %v320, 0
  %424 = vmatpush.msra.mxu0 0.0
  %425 = vmatpush.msra.mxu0 0.0
  %426 = vmatpush.msra.mxu0 0.0
  %427 = vmatpush.msra.mxu0 0.0
  %428 = vmatpush.msra.mxu0 0.0
  %429 = vmatpush.msra.mxu0 0.0
  %430 = vmatpush.msra.mxu0 0.0
  %431 = vmatpush.msra.mxu0 0.0
  %432 = vmatpush.msra.mxu0 0.0
  %433 = vmatpush.msra.mxu0 0.0
  %434 = vmatpush.msra.mxu0 0.0
  %435 = vmatpush.msra.mxu0 0.0
  %436 = vmatpush.msra.mxu0 0.0
  %437 = vmatpush.msra.mxu0 0.0
  %438 = vmatpush.msra.mxu0 %v322
  %439 = vmatpush.msra.mxu0 %v321
  %440 = vmatmul.f32.gmra.mxu0 %v329
  %v441 = vpop.f32.mrf.mxu0
  %v442 = vadd.f32 %v325, %v441
  %443 = vmatmul.f32.gmra.mxu0 %v332
  %v444 = vpop.f32.mrf.mxu0
  %v445 = vadd.f32 %v325, %v444
  %446 = vmatmul.f32.gmra.mxu0 %v335
  %v447 = vpop.f32.mrf.mxu0
  %v448 = vadd.f32 %v325, %v447
  %449 = vmatmul.f32.gmra.mxu0 %v338
  %v450 = vpop.f32.mrf.mxu0
  %v451 = vadd.f32 %v325, %v450
  %452 = vmatmul.f32.gmra.mxu0 %v341
  %v453 = vpop.f32.mrf.mxu0
  %v454 = vadd.f32 %v325, %v453
  %455 = vmatmul.f32.gmra.mxu0 %v344
  %v456 = vpop.f32.mrf.mxu0
  %v457 = vadd.f32 %v325, %v456
  %458 = vmatmul.f32.gmra.mxu0 %v347
  %v459 = vpop.f32.mrf.mxu0
  %v460 = vadd.f32 %v325, %v459
  %461 = vmatmul.f32.gmra.mxu0 %v350
  %v462 = vpop.f32.mrf.mxu0
  %v463 = vadd.f32 %v325, %v462
  %464 = vmatmul.f32.gmra.mxu0 %v353
  %v465 = vpop.f32.mrf.mxu0
  %v466 = vadd.f32 %v325, %v465
  %467 = vmatmul.f32.gmra.mxu0 %v356
  %v468 = vpop.f32.mrf.mxu0
  %v469 = vadd.f32 %v325, %v468
  %470 = vmatmul.f32.gmra.mxu0 %v359
  %v471 = vpop.f32.mrf.mxu0
  %v472 = vadd.f32 %v325, %v471
  %473 = vmatmul.f32.gmra.mxu0 %v362
  %v474 = vpop.f32.mrf.mxu0
  %v475 = vadd.f32 %v325, %v474
  %476 = vmatmul.f32.gmra.mxu0 %v365
  %v477 = vpop.f32.mrf.mxu0
  %v478 = vadd.f32 %v325, %v477
  %479 = vmatmul.f32.gmra.mxu0 %v368
  %v480 = vpop.f32.mrf.mxu0
  %v481 = vadd.f32 %v325, %v480
  %482 = vmatmul.f32.gmra.mxu0 %v371
  %v483 = vpop.f32.mrf.mxu0
  %v484 = vadd.f32 %v325, %v483
  %485 = vmatmul.f32.gmra.mxu0 %v374
  %v486 = vpop.f32.mrf.mxu0
  %v487 = vadd.f32 %v325, %v486
  %488 = vmatmul.f32.gmra.mxu0 %v377
  %v489 = vpop.f32.mrf.mxu0
  %v490 = vadd.f32 %v325, %v489
  %491 = vmatmul.f32.gmra.mxu0 %v380
  %v492 = vpop.f32.mrf.mxu0
  %v493 = vadd.f32 %v325, %v492
  %494 = vmatmul.f32.gmra.mxu0 %v383
  %v495 = vpop.f32.mrf.mxu0
  %v496 = vadd.f32 %v325, %v495
  %497 = vmatmul.f32.gmra.mxu0 %v386
  %v498 = vpop.f32.mrf.mxu0
  %v499 = vadd.f32 %v325, %v498
  %500 = vmatmul.f32.gmra.mxu0 %v389
  %v501 = vpop.f32.mrf.mxu0
  %v502 = vadd.f32 %v325, %v501
  %503 = vmatmul.f32.gmra.mxu0 %v392
  %v504 = vpop.f32.mrf.mxu0
  %v505 = vadd.f32 %v325, %v504
  %506 = vmatmul.f32.gmra.mxu0 %v395
  %v507 = vpop.f32.mrf.mxu0
  %v508 = vadd.f32 %v325, %v507
  %509 = vmatmul.f32.gmra.mxu0 %v398
  %v510 = vpop.f32.mrf.mxu0
  %v511 = vadd.f32 %v325, %v510
  %512 = vmatmul.f32.gmra.mxu0 %v401
  %v513 = vpop.f32.mrf.mxu0
  %v514 = vadd.f32 %v325, %v513
  %515 = vmatmul.f32.gmra.mxu0 %v404
  %v516 = vpop.f32.mrf.mxu0
  %v517 = vadd.f32 %v325, %v516
  %518 = vmatmul.f32.gmra.mxu0 %v407
  %v519 = vpop.f32.mrf.mxu0
  %v520 = vadd.f32 %v325, %v519
  %521 = vmatmul.f32.gmra.mxu0 %v410
  %v522 = vpop.f32.mrf.mxu0
  %v523 = vadd.f32 %v325, %v522
  %524 = vmatmul.f32.gmra.mxu0 %v413
  %v525 = vpop.f32.mrf.mxu0
  %v526 = vadd.f32 %v325, %v525
  %527 = vmatmul.f32.gmra.mxu0 %v416
  %v528 = vpop.f32.mrf.mxu0
  %v529 = vadd.f32 %v325, %v528
  %530 = vmatmul.f32.gmra.mxu0 %v419
  %v531 = vpop.f32.mrf.mxu0
  %v532 = vadd.f32 %v325, %v531
  %533 = vmatmul.f32.gmra.mxu0 %v422
  %v534 = vpop.f32.mrf.mxu0
  %v535 = vadd.f32 %v325, %v534
  %536 = vdwg.mxu0
  %v537 = vsel %vm327, %v23, 0.0
  %538 = vadd.xlane.f32.xlu0 %v537
  %v539 = vpop.xlane.xlu0 %538
  %v540 = vsel %vm327, %v24, 0.0
  %541 = vadd.xlane.f32.xlu0 %v540
  %v542 = vpop.xlane.xlu0 %541
  %v543 = vmax.f32 %v539, 1.0
  %v544 = vmax.f32 %v542, 1.0
  %v545 = vperm.slane %v23, 0
  %v546 = vlaneseq
  %v547 = vshrl.u32 %v546, 7
  %549 = vset.pattern.permute.xlu0 %v547
  %550 = vperm.xlu0 %549, %v545
  %v551 = vpop.permute.xlu0 %550
  %v552 = vlaneseq
  %v553 = vshrl.u32 %v552, 7
  %v554 = vadd.s32 %v553, 8
  %555 = vset.pattern.permute.xlu0 %v554
  %556 = vperm.xlu0 %555, %v545
  %v557 = vpop.permute.xlu0 %556
  %v558 = vperm.slane %v23, 1
  %v559 = vlaneseq
  %v560 = vshrl.u32 %v559, 7
  %562 = vset.pattern.permute.xlu0 %v560
  %563 = vperm.xlu0 %562, %v558
  %v564 = vpop.permute.xlu0 %563
  %v565 = vlaneseq
  %v566 = vshrl.u32 %v565, 7
  %v567 = vadd.s32 %v566, 8
  %568 = vset.pattern.permute.xlu0 %v567
  %569 = vperm.xlu0 %568, %v558
  %v570 = vpop.permute.xlu0 %569
  %v571 = vperm.slane %v23, 2
  %v572 = vlaneseq
  %v573 = vshrl.u32 %v572, 7
  %575 = vset.pattern.permute.xlu0 %v573
  %576 = vperm.xlu0 %575, %v571
  %v577 = vpop.permute.xlu0 %576
  %v578 = vlaneseq
  %v579 = vshrl.u32 %v578, 7
  %v580 = vadd.s32 %v579, 8
  %581 = vset.pattern.permute.xlu0 %v580
  %582 = vperm.xlu0 %581, %v571
  %v583 = vpop.permute.xlu0 %582
  %v584 = vperm.slane %v23, 3
  %v585 = vlaneseq
  %v586 = vshrl.u32 %v585, 7
  %588 = vset.pattern.permute.xlu0 %v586
  %589 = vperm.xlu0 %588, %v584
  %v590 = vpop.permute.xlu0 %589
  %v591 = vlaneseq
  %v592 = vshrl.u32 %v591, 7
  %v593 = vadd.s32 %v592, 8
  %594 = vset.pattern.permute.xlu0 %v593
  %595 = vperm.xlu0 %594, %v584
  %v596 = vpop.permute.xlu0 %595
  %v597 = vperm.slane %v23, 4
  %v598 = vlaneseq
  %v599 = vshrl.u32 %v598, 7
  %601 = vset.pattern.permute.xlu0 %v599
  %602 = vperm.xlu0 %601, %v597
  %v603 = vpop.permute.xlu0 %602
  %v604 = vlaneseq
  %v605 = vshrl.u32 %v604, 7
  %v606 = vadd.s32 %v605, 8
  %607 = vset.pattern.permute.xlu0 %v606
  %608 = vperm.xlu0 %607, %v597
  %v609 = vpop.permute.xlu0 %608
  %v610 = vperm.slane %v23, 5
  %v611 = vlaneseq
  %v612 = vshrl.u32 %v611, 7
  %614 = vset.pattern.permute.xlu0 %v612
  %615 = vperm.xlu0 %614, %v610
  %v616 = vpop.permute.xlu0 %615
  %v617 = vlaneseq
  %v618 = vshrl.u32 %v617, 7
  %v619 = vadd.s32 %v618, 8
  %620 = vset.pattern.permute.xlu0 %v619
  %621 = vperm.xlu0 %620, %v610
  %v622 = vpop.permute.xlu0 %621
  %v623 = vperm.slane %v23, 6
  %v624 = vlaneseq
  %v625 = vshrl.u32 %v624, 7
  %627 = vset.pattern.permute.xlu0 %v625
  %628 = vperm.xlu0 %627, %v623
  %v629 = vpop.permute.xlu0 %628
  %v630 = vlaneseq
  %v631 = vshrl.u32 %v630, 7
  %v632 = vadd.s32 %v631, 8
  %633 = vset.pattern.permute.xlu0 %v632
  %634 = vperm.xlu0 %633, %v623
  %v635 = vpop.permute.xlu0 %634
  %v636 = vperm.slane %v23, 7
  %v637 = vlaneseq
  %v638 = vshrl.u32 %v637, 7
  %640 = vset.pattern.permute.xlu0 %v638
  %641 = vperm.xlu0 %640, %v636
  %v642 = vpop.permute.xlu0 %641
  %v643 = vlaneseq
  %v644 = vshrl.u32 %v643, 7
  %v645 = vadd.s32 %v644, 8
  %646 = vset.pattern.permute.xlu0 %v645
  %647 = vperm.xlu0 %646, %v636
  %v648 = vpop.permute.xlu0 %647
  %v649 = vperm.slane %v24, 0
  %v650 = vlaneseq
  %v651 = vshrl.u32 %v650, 7
  %653 = vset.pattern.permute.xlu0 %v651
  %654 = vperm.xlu0 %653, %v649
  %v655 = vpop.permute.xlu0 %654
  %v656 = vlaneseq
  %v657 = vshrl.u32 %v656, 7
  %v658 = vadd.s32 %v657, 8
  %659 = vset.pattern.permute.xlu0 %v658
  %660 = vperm.xlu0 %659, %v649
  %v661 = vpop.permute.xlu0 %660
  %v662 = vperm.slane %v24, 1
  %v663 = vlaneseq
  %v664 = vshrl.u32 %v663, 7
  %666 = vset.pattern.permute.xlu0 %v664
  %667 = vperm.xlu0 %666, %v662
  %v668 = vpop.permute.xlu0 %667
  %v669 = vlaneseq
  %v670 = vshrl.u32 %v669, 7
  %v671 = vadd.s32 %v670, 8
  %672 = vset.pattern.permute.xlu0 %v671
  %673 = vperm.xlu0 %672, %v662
  %v674 = vpop.permute.xlu0 %673
  %v675 = vperm.slane %v24, 2
  %v676 = vlaneseq
  %v677 = vshrl.u32 %v676, 7
  %679 = vset.pattern.permute.xlu0 %v677
  %680 = vperm.xlu0 %679, %v675
  %v681 = vpop.permute.xlu0 %680
  %v682 = vlaneseq
  %v683 = vshrl.u32 %v682, 7
  %v684 = vadd.s32 %v683, 8
  %685 = vset.pattern.permute.xlu0 %v684
  %686 = vperm.xlu0 %685, %v675
  %v687 = vpop.permute.xlu0 %686
  %v688 = vperm.slane %v24, 3
  %v689 = vlaneseq
  %v690 = vshrl.u32 %v689, 7
  %692 = vset.pattern.permute.xlu0 %v690
  %693 = vperm.xlu0 %692, %v688
  %v694 = vpop.permute.xlu0 %693
  %v695 = vlaneseq
  %v696 = vshrl.u32 %v695, 7
  %v697 = vadd.s32 %v696, 8
  %698 = vset.pattern.permute.xlu0 %v697
  %699 = vperm.xlu0 %698, %v688
  %v700 = vpop.permute.xlu0 %699
  %v701 = vperm.slane %v24, 4
  %v702 = vlaneseq
  %v703 = vshrl.u32 %v702, 7
  %705 = vset.pattern.permute.xlu0 %v703
  %706 = vperm.xlu0 %705, %v701
  %v707 = vpop.permute.xlu0 %706
  %v708 = vlaneseq
  %v709 = vshrl.u32 %v708, 7
  %v710 = vadd.s32 %v709, 8
  %711 = vset.pattern.permute.xlu0 %v710
  %712 = vperm.xlu0 %711, %v701
  %v713 = vpop.permute.xlu0 %712
  %v714 = vperm.slane %v24, 5
  %v715 = vlaneseq
  %v716 = vshrl.u32 %v715, 7
  %718 = vset.pattern.permute.xlu0 %v716
  %719 = vperm.xlu0 %718, %v714
  %v720 = vpop.permute.xlu0 %719
  %v721 = vlaneseq
  %v722 = vshrl.u32 %v721, 7
  %v723 = vadd.s32 %v722, 8
  %724 = vset.pattern.permute.xlu0 %v723
  %725 = vperm.xlu0 %724, %v714
  %v726 = vpop.permute.xlu0 %725
  %v727 = vperm.slane %v24, 6
  %v728 = vlaneseq
  %v729 = vshrl.u32 %v728, 7
  %731 = vset.pattern.permute.xlu0 %v729
  %732 = vperm.xlu0 %731, %v727
  %v733 = vpop.permute.xlu0 %732
  %v734 = vlaneseq
  %v735 = vshrl.u32 %v734, 7
  %v736 = vadd.s32 %v735, 8
  %737 = vset.pattern.permute.xlu0 %v736
  %738 = vperm.xlu0 %737, %v727
  %v739 = vpop.permute.xlu0 %738
  %v740 = vperm.slane %v24, 7
  %v741 = vlaneseq
  %v742 = vshrl.u32 %v741, 7
  %744 = vset.pattern.permute.xlu0 %v742
  %745 = vperm.xlu0 %744, %v740
  %v746 = vpop.permute.xlu0 %745
  %v747 = vlaneseq
  %v748 = vshrl.u32 %v747, 7
  %v749 = vadd.s32 %v748, 8
  %750 = vset.pattern.permute.xlu0 %v749
  %751 = vperm.xlu0 %750, %v740
  %v752 = vpop.permute.xlu0 %751
  %v753 = vmul.f32 %v551, %v442
  %v754 = vmul.f32 %v557, %v445
  %v755 = vmul.f32 %v564, %v448
  %v756 = vmul.f32 %v570, %v451
  %v757 = vmul.f32 %v577, %v454
  %v758 = vmul.f32 %v583, %v457
  %v759 = vmul.f32 %v590, %v460
  %v760 = vmul.f32 %v596, %v463
  %v761 = vmul.f32 %v603, %v466
  %v762 = vmul.f32 %v609, %v469
  %v763 = vmul.f32 %v616, %v472
  %v764 = vmul.f32 %v622, %v475
  %v765 = vmul.f32 %v629, %v478
  %v766 = vmul.f32 %v635, %v481
  %v767 = vmul.f32 %v642, %v484
  %v768 = vmul.f32 %v648, %v487
  %v769 = vmul.f32 %v655, %v490
  %v770 = vmul.f32 %v661, %v493
  %v771 = vmul.f32 %v668, %v496
  %v772 = vmul.f32 %v674, %v499
  %v773 = vmul.f32 %v681, %v502
  %v774 = vmul.f32 %v687, %v505
  %v775 = vmul.f32 %v694, %v508
  %v776 = vmul.f32 %v700, %v511
  %v777 = vmul.f32 %v707, %v514
  %v778 = vmul.f32 %v713, %v517
  %v779 = vmul.f32 %v720, %v520
  %v780 = vmul.f32 %v726, %v523
  %v781 = vmul.f32 %v733, %v526
  %v782 = vmul.f32 %v739, %v529
  %v783 = vmul.f32 %v746, %v532
  %v784 = vmul.f32 %v752, %v535
  %vm785 = vcmask 64512
  %v786 = vsel %vm785, %v753, 0.0
  %v787 = vsel %vm785, %v754, 0.0
  %v788 = vadd.f32 %v786, %v787
  %v789 = vrot.slane %v788, 4
  %v790 = vadd.f32 %v788, %v789
  %v791 = vrot.slane %v790, 2
  %v792 = vadd.f32 %v790, %v791
  %v793 = vrot.slane %v792, 1
  %v794 = vadd.f32 %v792, %v793
  %v795 = vsel %vm785, %v755, 0.0
  %v796 = vsel %vm785, %v756, 0.0
  %v797 = vadd.f32 %v795, %v796
  %v798 = vrot.slane %v797, 4
  %v799 = vadd.f32 %v797, %v798
  %v800 = vrot.slane %v799, 2
  %v801 = vadd.f32 %v799, %v800
  %v802 = vrot.slane %v801, 1
  %v803 = vadd.f32 %v801, %v802
  %v804 = vsel %vm785, %v757, 0.0
  %v805 = vsel %vm785, %v758, 0.0
  %v806 = vadd.f32 %v804, %v805
  %v807 = vrot.slane %v806, 4
  %v808 = vadd.f32 %v806, %v807
  %v809 = vrot.slane %v808, 2
  %v810 = vadd.f32 %v808, %v809
  %v811 = vrot.slane %v810, 1
  %v812 = vadd.f32 %v810, %v811
  %v813 = vsel %vm785, %v759, 0.0
  %v814 = vsel %vm785, %v760, 0.0
  %v815 = vadd.f32 %v813, %v814
  %v816 = vrot.slane %v815, 4
  %v817 = vadd.f32 %v815, %v816
  %v818 = vrot.slane %v817, 2
  %v819 = vadd.f32 %v817, %v818
  %v820 = vrot.slane %v819, 1
  %v821 = vadd.f32 %v819, %v820
  %v822 = vsel %vm785, %v761, 0.0
  %v823 = vsel %vm785, %v762, 0.0
  %v824 = vadd.f32 %v822, %v823
  %v825 = vrot.slane %v824, 4
  %v826 = vadd.f32 %v824, %v825
  %v827 = vrot.slane %v826, 2
  %v828 = vadd.f32 %v826, %v827
  %v829 = vrot.slane %v828, 1
  %v830 = vadd.f32 %v828, %v829
  %v831 = vsel %vm785, %v763, 0.0
  %v832 = vsel %vm785, %v764, 0.0
  %v833 = vadd.f32 %v831, %v832
  %v834 = vrot.slane %v833, 4
  %v835 = vadd.f32 %v833, %v834
  %v836 = vrot.slane %v835, 2
  %v837 = vadd.f32 %v835, %v836
  %v838 = vrot.slane %v837, 1
  %v839 = vadd.f32 %v837, %v838
  %v840 = vsel %vm785, %v765, 0.0
  %v841 = vsel %vm785, %v766, 0.0
  %v842 = vadd.f32 %v840, %v841
  %v843 = vrot.slane %v842, 4
  %v844 = vadd.f32 %v842, %v843
  %v845 = vrot.slane %v844, 2
  %v846 = vadd.f32 %v844, %v845
  %v847 = vrot.slane %v846, 1
  %v848 = vadd.f32 %v846, %v847
  %v849 = vsel %vm785, %v767, 0.0
  %v850 = vsel %vm785, %v768, 0.0
  %v851 = vadd.f32 %v849, %v850
  %v852 = vrot.slane %v851, 4
  %v853 = vadd.f32 %v851, %v852
  %v854 = vrot.slane %v853, 2
  %v855 = vadd.f32 %v853, %v854
  %v856 = vrot.slane %v855, 1
  %v857 = vadd.f32 %v855, %v856
  %v858 = vsel %vm785, %v769, 0.0
  %v859 = vsel %vm785, %v770, 0.0
  %v860 = vadd.f32 %v858, %v859
  %v861 = vrot.slane %v860, 4
  %v862 = vadd.f32 %v860, %v861
  %v863 = vrot.slane %v862, 2
  %v864 = vadd.f32 %v862, %v863
  %v865 = vrot.slane %v864, 1
  %v866 = vadd.f32 %v864, %v865
  %v867 = vsel %vm785, %v771, 0.0
  %v868 = vsel %vm785, %v772, 0.0
  %v869 = vadd.f32 %v867, %v868
  %v870 = vrot.slane %v869, 4
  %v871 = vadd.f32 %v869, %v870
  %v872 = vrot.slane %v871, 2
  %v873 = vadd.f32 %v871, %v872
  %v874 = vrot.slane %v873, 1
  %v875 = vadd.f32 %v873, %v874
  %v876 = vsel %vm785, %v773, 0.0
  %v877 = vsel %vm785, %v774, 0.0
  %v878 = vadd.f32 %v876, %v877
  %v879 = vrot.slane %v878, 4
  %v880 = vadd.f32 %v878, %v879
  %v881 = vrot.slane %v880, 2
  %v882 = vadd.f32 %v880, %v881
  %v883 = vrot.slane %v882, 1
  %v884 = vadd.f32 %v882, %v883
  %v885 = vsel %vm785, %v775, 0.0
  %v886 = vsel %vm785, %v776, 0.0
  %v887 = vadd.f32 %v885, %v886
  %v888 = vrot.slane %v887, 4
  %v889 = vadd.f32 %v887, %v888
  %v890 = vrot.slane %v889, 2
  %v891 = vadd.f32 %v889, %v890
  %v892 = vrot.slane %v891, 1
  %v893 = vadd.f32 %v891, %v892
  %v894 = vsel %vm785, %v777, 0.0
  %v895 = vsel %vm785, %v778, 0.0
  %v896 = vadd.f32 %v894, %v895
  %v897 = vrot.slane %v896, 4
  %v898 = vadd.f32 %v896, %v897
  %v899 = vrot.slane %v898, 2
  %v900 = vadd.f32 %v898, %v899
  %v901 = vrot.slane %v900, 1
  %v902 = vadd.f32 %v900, %v901
  %v903 = vsel %vm785, %v779, 0.0
  %v904 = vsel %vm785, %v780, 0.0
  %v905 = vadd.f32 %v903, %v904
  %v906 = vrot.slane %v905, 4
  %v907 = vadd.f32 %v905, %v906
  %v908 = vrot.slane %v907, 2
  %v909 = vadd.f32 %v907, %v908
  %v910 = vrot.slane %v909, 1
  %v911 = vadd.f32 %v909, %v910
  %v912 = vsel %vm785, %v781, 0.0
  %v913 = vsel %vm785, %v782, 0.0
  %v914 = vadd.f32 %v912, %v913
  %v915 = vrot.slane %v914, 4
  %v916 = vadd.f32 %v914, %v915
  %v917 = vrot.slane %v916, 2
  %v918 = vadd.f32 %v916, %v917
  %v919 = vrot.slane %v918, 1
  %v920 = vadd.f32 %v918, %v919
  %v921 = vsel %vm785, %v783, 0.0
  %v922 = vsel %vm785, %v784, 0.0
  %v923 = vadd.f32 %v921, %v922
  %v924 = vrot.slane %v923, 4
  %v925 = vadd.f32 %v923, %v924
  %v926 = vrot.slane %v925, 2
  %v927 = vadd.f32 %v925, %v926
  %v928 = vrot.slane %v927, 1
  %v929 = vadd.f32 %v927, %v928
  %v932 = vrot.slane %v543, 1
  %v933 = vrot.slane %v543, 2
  %v934 = vrot.slane %v543, 3
  %v935 = vrot.slane %v543, 4
  %v936 = vrot.slane %v543, 5
  %v937 = vrot.slane %v543, 6
  %v938 = vrot.slane %v543, 7
  %v939 = vrot.slane %v544, 1
  %v940 = vrot.slane %v544, 2
  %v941 = vrot.slane %v544, 3
  %v942 = vrot.slane %v544, 4
  %v943 = vrot.slane %v544, 5
  %v944 = vrot.slane %v544, 6
  %v945 = vrot.slane %v544, 7
  %v962 = vrcp.pop %v543
  %v963 = vmul.f32 %v543, %v962
  %v964 = vsub.f32 1.0, %v963
  %v965 = vmul.f32 %v962, %v964
  %v966 = vadd.f32 %v962, %v965
  %vm967 = vweird.f32 %v543
  %vm968 = vweird.f32 %v962
  %vm969 = vmor %vm967, %vm968
  %v970 = vsel %vm969, %v962, %v966
  %v971 = vand.u32 2147483647, %v543
  %vm972 = vcmp.eq.f32.partialorder %v971, 8.507059e+37
  %v973 = vand.u32 %v543, 2147483648
  %v974 = vor.u32 1.1754944e-38, %v973
  %v975 = vsel %vm972, %v974, %v970
  %v976 = vmul.f32 %v794, %v975
  %v977 = vrcp.pop %v932
  %v978 = vmul.f32 %v932, %v977
  %v979 = vsub.f32 1.0, %v978
  %v980 = vmul.f32 %v977, %v979
  %v981 = vadd.f32 %v977, %v980
  %vm982 = vweird.f32 %v932
  %vm983 = vweird.f32 %v977
  %vm984 = vmor %vm982, %vm983
  %v985 = vsel %vm984, %v977, %v981
  %v986 = vand.u32 2147483647, %v932
  %vm987 = vcmp.eq.f32.partialorder %v986, 8.507059e+37
  %v988 = vand.u32 %v932, 2147483648
  %v989 = vor.u32 1.1754944e-38, %v988
  %v990 = vsel %vm987, %v989, %v985
  %v991 = vmul.f32 %v803, %v990
  %v992 = vrcp.pop %v933
  %v993 = vmul.f32 %v933, %v992
  %v994 = vsub.f32 1.0, %v993
  %v995 = vmul.f32 %v992, %v994
  %v996 = vadd.f32 %v992, %v995
  %vm997 = vweird.f32 %v933
  %vm998 = vweird.f32 %v992
  %vm999 = vmor %vm997, %vm998
  %v1000 = vsel %vm999, %v992, %v996
  %v1001 = vand.u32 2147483647, %v933
  %vm1002 = vcmp.eq.f32.partialorder %v1001, 8.507059e+37
  %v1003 = vand.u32 %v933, 2147483648
  %v1004 = vor.u32 1.1754944e-38, %v1003
  %v1005 = vsel %vm1002, %v1004, %v1000
  %v1006 = vmul.f32 %v812, %v1005
  %v1007 = vrcp.pop %v934
  %v1008 = vmul.f32 %v934, %v1007
  %v1009 = vsub.f32 1.0, %v1008
  %v1010 = vmul.f32 %v1007, %v1009
  %v1011 = vadd.f32 %v1007, %v1010
  %vm1012 = vweird.f32 %v934
  %vm1013 = vweird.f32 %v1007
  %vm1014 = vmor %vm1012, %vm1013
  %v1015 = vsel %vm1014, %v1007, %v1011
  %v1016 = vand.u32 2147483647, %v934
  %vm1017 = vcmp.eq.f32.partialorder %v1016, 8.507059e+37
  %v1018 = vand.u32 %v934, 2147483648
  %v1019 = vor.u32 1.1754944e-38, %v1018
  %v1020 = vsel %vm1017, %v1019, %v1015
  %v1021 = vmul.f32 %v821, %v1020
  %v1022 = vrcp.pop %v935
  %v1023 = vmul.f32 %v935, %v1022
  %v1024 = vsub.f32 1.0, %v1023
  %v1025 = vmul.f32 %v1022, %v1024
  %v1026 = vadd.f32 %v1022, %v1025
  %vm1027 = vweird.f32 %v935
  %vm1028 = vweird.f32 %v1022
  %vm1029 = vmor %vm1027, %vm1028
  %v1030 = vsel %vm1029, %v1022, %v1026
  %v1031 = vand.u32 2147483647, %v935
  %vm1032 = vcmp.eq.f32.partialorder %v1031, 8.507059e+37
  %v1033 = vand.u32 %v935, 2147483648
  %v1034 = vor.u32 1.1754944e-38, %v1033
  %v1035 = vsel %vm1032, %v1034, %v1030
  %v1036 = vmul.f32 %v830, %v1035
  %v1037 = vrcp.pop %v936
  %v1038 = vmul.f32 %v936, %v1037
  %v1039 = vsub.f32 1.0, %v1038
  %v1040 = vmul.f32 %v1037, %v1039
  %v1041 = vadd.f32 %v1037, %v1040
  %vm1042 = vweird.f32 %v936
  %vm1043 = vweird.f32 %v1037
  %vm1044 = vmor %vm1042, %vm1043
  %v1045 = vsel %vm1044, %v1037, %v1041
  %v1046 = vand.u32 2147483647, %v936
  %vm1047 = vcmp.eq.f32.partialorder %v1046, 8.507059e+37
  %v1048 = vand.u32 %v936, 2147483648
  %v1049 = vor.u32 1.1754944e-38, %v1048
  %v1050 = vsel %vm1047, %v1049, %v1045
  %v1051 = vmul.f32 %v839, %v1050
  %v1052 = vrcp.pop %v937
  %v1053 = vmul.f32 %v937, %v1052
  %v1054 = vsub.f32 1.0, %v1053
  %v1055 = vmul.f32 %v1052, %v1054
  %v1056 = vadd.f32 %v1052, %v1055
  %vm1057 = vweird.f32 %v937
  %vm1058 = vweird.f32 %v1052
  %vm1059 = vmor %vm1057, %vm1058
  %v1060 = vsel %vm1059, %v1052, %v1056
  %v1061 = vand.u32 2147483647, %v937
  %vm1062 = vcmp.eq.f32.partialorder %v1061, 8.507059e+37
  %v1063 = vand.u32 %v937, 2147483648
  %v1064 = vor.u32 1.1754944e-38, %v1063
  %v1065 = vsel %vm1062, %v1064, %v1060
  %v1066 = vmul.f32 %v848, %v1065
  %v1067 = vrcp.pop %v938
  %v1068 = vmul.f32 %v938, %v1067
  %v1069 = vsub.f32 1.0, %v1068
  %v1070 = vmul.f32 %v1067, %v1069
  %v1071 = vadd.f32 %v1067, %v1070
  %vm1072 = vweird.f32 %v938
  %vm1073 = vweird.f32 %v1067
  %vm1074 = vmor %vm1072, %vm1073
  %v1075 = vsel %vm1074, %v1067, %v1071
  %v1076 = vand.u32 2147483647, %v938
  %vm1077 = vcmp.eq.f32.partialorder %v1076, 8.507059e+37
  %v1078 = vand.u32 %v938, 2147483648
  %v1079 = vor.u32 1.1754944e-38, %v1078
  %v1080 = vsel %vm1077, %v1079, %v1075
  %v1081 = vmul.f32 %v857, %v1080
  %v1082 = vrcp.pop %v544
  %v1083 = vmul.f32 %v544, %v1082
  %v1084 = vsub.f32 1.0, %v1083
  %v1085 = vmul.f32 %v1082, %v1084
  %v1086 = vadd.f32 %v1082, %v1085
  %vm1087 = vweird.f32 %v544
  %vm1088 = vweird.f32 %v1082
  %vm1089 = vmor %vm1087, %vm1088
  %v1090 = vsel %vm1089, %v1082, %v1086
  %v1091 = vand.u32 2147483647, %v544
  %vm1092 = vcmp.eq.f32.partialorder %v1091, 8.507059e+37
  %v1093 = vand.u32 %v544, 2147483648
  %v1094 = vor.u32 1.1754944e-38, %v1093
  %v1095 = vsel %vm1092, %v1094, %v1090
  %v1096 = vmul.f32 %v866, %v1095
  %v1097 = vrcp.pop %v939
  %v1098 = vmul.f32 %v939, %v1097
  %v1099 = vsub.f32 1.0, %v1098
  %v1100 = vmul.f32 %v1097, %v1099
  %v1101 = vadd.f32 %v1097, %v1100
  %vm1102 = vweird.f32 %v939
  %vm1103 = vweird.f32 %v1097
  %vm1104 = vmor %vm1102, %vm1103
  %v1105 = vsel %vm1104, %v1097, %v1101
  %v1106 = vand.u32 2147483647, %v939
  %vm1107 = vcmp.eq.f32.partialorder %v1106, 8.507059e+37
  %v1108 = vand.u32 %v939, 2147483648
  %v1109 = vor.u32 1.1754944e-38, %v1108
  %v1110 = vsel %vm1107, %v1109, %v1105
  %v1111 = vmul.f32 %v875, %v1110
  %v1112 = vrcp.pop %v940
  %v1113 = vmul.f32 %v940, %v1112
  %v1114 = vsub.f32 1.0, %v1113
  %v1115 = vmul.f32 %v1112, %v1114
  %v1116 = vadd.f32 %v1112, %v1115
  %vm1117 = vweird.f32 %v940
  %vm1118 = vweird.f32 %v1112
  %vm1119 = vmor %vm1117, %vm1118
  %v1120 = vsel %vm1119, %v1112, %v1116
  %v1121 = vand.u32 2147483647, %v940
  %vm1122 = vcmp.eq.f32.partialorder %v1121, 8.507059e+37
  %v1123 = vand.u32 %v940, 2147483648
  %v1124 = vor.u32 1.1754944e-38, %v1123
  %v1125 = vsel %vm1122, %v1124, %v1120
  %v1126 = vmul.f32 %v884, %v1125
  %v1127 = vrcp.pop %v941
  %v1128 = vmul.f32 %v941, %v1127
  %v1129 = vsub.f32 1.0, %v1128
  %v1130 = vmul.f32 %v1127, %v1129
  %v1131 = vadd.f32 %v1127, %v1130
  %vm1132 = vweird.f32 %v941
  %vm1133 = vweird.f32 %v1127
  %vm1134 = vmor %vm1132, %vm1133
  %v1135 = vsel %vm1134, %v1127, %v1131
  %v1136 = vand.u32 2147483647, %v941
  %vm1137 = vcmp.eq.f32.partialorder %v1136, 8.507059e+37
  %v1138 = vand.u32 %v941, 2147483648
  %v1139 = vor.u32 1.1754944e-38, %v1138
  %v1140 = vsel %vm1137, %v1139, %v1135
  %v1141 = vmul.f32 %v893, %v1140
  %v1142 = vrcp.pop %v942
  %v1143 = vmul.f32 %v942, %v1142
  %v1144 = vsub.f32 1.0, %v1143
  %v1145 = vmul.f32 %v1142, %v1144
  %v1146 = vadd.f32 %v1142, %v1145
  %vm1147 = vweird.f32 %v942
  %vm1148 = vweird.f32 %v1142
  %vm1149 = vmor %vm1147, %vm1148
  %v1150 = vsel %vm1149, %v1142, %v1146
  %v1151 = vand.u32 2147483647, %v942
  %vm1152 = vcmp.eq.f32.partialorder %v1151, 8.507059e+37
  %v1153 = vand.u32 %v942, 2147483648
  %v1154 = vor.u32 1.1754944e-38, %v1153
  %v1155 = vsel %vm1152, %v1154, %v1150
  %v1156 = vmul.f32 %v902, %v1155
  %v1157 = vrcp.pop %v943
  %v1158 = vmul.f32 %v943, %v1157
  %v1159 = vsub.f32 1.0, %v1158
  %v1160 = vmul.f32 %v1157, %v1159
  %v1161 = vadd.f32 %v1157, %v1160
  %vm1162 = vweird.f32 %v943
  %vm1163 = vweird.f32 %v1157
  %vm1164 = vmor %vm1162, %vm1163
  %v1165 = vsel %vm1164, %v1157, %v1161
  %v1166 = vand.u32 2147483647, %v943
  %vm1167 = vcmp.eq.f32.partialorder %v1166, 8.507059e+37
  %v1168 = vand.u32 %v943, 2147483648
  %v1169 = vor.u32 1.1754944e-38, %v1168
  %v1170 = vsel %vm1167, %v1169, %v1165
  %v1171 = vmul.f32 %v911, %v1170
  %v1172 = vrcp.pop %v944
  %v1173 = vmul.f32 %v944, %v1172
  %v1174 = vsub.f32 1.0, %v1173
  %v1175 = vmul.f32 %v1172, %v1174
  %v1176 = vadd.f32 %v1172, %v1175
  %vm1177 = vweird.f32 %v944
  %vm1178 = vweird.f32 %v1172
  %vm1179 = vmor %vm1177, %vm1178
  %v1180 = vsel %vm1179, %v1172, %v1176
  %v1181 = vand.u32 2147483647, %v944
  %vm1182 = vcmp.eq.f32.partialorder %v1181, 8.507059e+37
  %v1183 = vand.u32 %v944, 2147483648
  %v1184 = vor.u32 1.1754944e-38, %v1183
  %v1185 = vsel %vm1182, %v1184, %v1180
  %v1186 = vmul.f32 %v920, %v1185
  %v1187 = vrcp.pop %v945
  %v1188 = vmul.f32 %v945, %v1187
  %v1189 = vsub.f32 1.0, %v1188
  %v1190 = vmul.f32 %v1187, %v1189
  %v1191 = vadd.f32 %v1187, %v1190
  %vm1192 = vweird.f32 %v945
  %vm1193 = vweird.f32 %v1187
  %vm1194 = vmor %vm1192, %vm1193
  %v1195 = vsel %vm1194, %v1187, %v1191
  %v1196 = vand.u32 2147483647, %v945
  %vm1197 = vcmp.eq.f32.partialorder %v1196, 8.507059e+37
  %v1198 = vand.u32 %v945, 2147483648
  %v1199 = vor.u32 1.1754944e-38, %v1198
  %v1200 = vsel %vm1197, %v1199, %v1195
  %v1201 = vmul.f32 %v929, %v1200
  %v1202 = vlaneseq
  %v1203 = vshrl.u32 %v1202, 7
  %v1204 = vadd.s32 %v1203, 8
  %v1205 = vlaneseq
  %v1206 = vand.u32 %v1205, 127
  %vm1207 = vcmp.eq.s32.totalorder %v1203, %v1206
  %vm1208 = vcmp.eq.s32.totalorder %v1204, %v1206
  %v1209 = vsel %vm1207, 1, 0
  %v1210 = vsel %vm1208, 1, 0
  %v1211 = vcvt.s32.f32 %v1209
  %v1212 = vcvt.s32.f32 %v1210
  %v1213 = vsub.f32 1.0, %v1211
  %v1214 = vsub.f32 1.0, %v1212
  %v1215 = vperm.slane %v1213, 0
  %v1216 = vlaneseq
  %v1217 = vshrl.u32 %v1216, 7
  %1219 = vset.pattern.permute.xlu0 %v1217
  %1220 = vperm.xlu0 %1219, %v1215
  %v1221 = vpop.permute.xlu0 %1220
  %v1222 = vlaneseq
  %v1223 = vshrl.u32 %v1222, 7
  %v1224 = vadd.s32 %v1223, 8
  %1225 = vset.pattern.permute.xlu0 %v1224
  %1226 = vperm.xlu0 %1225, %v1215
  %v1227 = vpop.permute.xlu0 %1226
  %v1228 = vperm.slane %v1213, 1
  %v1229 = vlaneseq
  %v1230 = vshrl.u32 %v1229, 7
  %1232 = vset.pattern.permute.xlu0 %v1230
  %1233 = vperm.xlu0 %1232, %v1228
  %v1234 = vpop.permute.xlu0 %1233
  %v1235 = vlaneseq
  %v1236 = vshrl.u32 %v1235, 7
  %v1237 = vadd.s32 %v1236, 8
  %1238 = vset.pattern.permute.xlu0 %v1237
  %1239 = vperm.xlu0 %1238, %v1228
  %v1240 = vpop.permute.xlu0 %1239
  %v1241 = vperm.slane %v1213, 2
  %v1242 = vlaneseq
  %v1243 = vshrl.u32 %v1242, 7
  %1245 = vset.pattern.permute.xlu0 %v1243
  %1246 = vperm.xlu0 %1245, %v1241
  %v1247 = vpop.permute.xlu0 %1246
  %v1248 = vlaneseq
  %v1249 = vshrl.u32 %v1248, 7
  %v1250 = vadd.s32 %v1249, 8
  %1251 = vset.pattern.permute.xlu0 %v1250
  %1252 = vperm.xlu0 %1251, %v1241
  %v1253 = vpop.permute.xlu0 %1252
  %v1254 = vperm.slane %v1213, 3
  %v1255 = vlaneseq
  %v1256 = vshrl.u32 %v1255, 7
  %1258 = vset.pattern.permute.xlu0 %v1256
  %1259 = vperm.xlu0 %1258, %v1254
  %v1260 = vpop.permute.xlu0 %1259
  %v1261 = vlaneseq
  %v1262 = vshrl.u32 %v1261, 7
  %v1263 = vadd.s32 %v1262, 8
  %1264 = vset.pattern.permute.xlu0 %v1263
  %1265 = vperm.xlu0 %1264, %v1254
  %v1266 = vpop.permute.xlu0 %1265
  %v1267 = vperm.slane %v1213, 4
  %v1268 = vlaneseq
  %v1269 = vshrl.u32 %v1268, 7
  %1271 = vset.pattern.permute.xlu0 %v1269
  %1272 = vperm.xlu0 %1271, %v1267
  %v1273 = vpop.permute.xlu0 %1272
  %v1274 = vlaneseq
  %v1275 = vshrl.u32 %v1274, 7
  %v1276 = vadd.s32 %v1275, 8
  %1277 = vset.pattern.permute.xlu0 %v1276
  %1278 = vperm.xlu0 %1277, %v1267
  %v1279 = vpop.permute.xlu0 %1278
  %v1280 = vperm.slane %v1213, 5
  %v1281 = vlaneseq
  %v1282 = vshrl.u32 %v1281, 7
  %1284 = vset.pattern.permute.xlu0 %v1282
  %1285 = vperm.xlu0 %1284, %v1280
  %v1286 = vpop.permute.xlu0 %1285
  %v1287 = vlaneseq
  %v1288 = vshrl.u32 %v1287, 7
  %v1289 = vadd.s32 %v1288, 8
  %1290 = vset.pattern.permute.xlu0 %v1289
  %1291 = vperm.xlu0 %1290, %v1280
  %v1292 = vpop.permute.xlu0 %1291
  %v1293 = vperm.slane %v1213, 6
  %v1294 = vlaneseq
  %v1295 = vshrl.u32 %v1294, 7
  %1297 = vset.pattern.permute.xlu0 %v1295
  %1298 = vperm.xlu0 %1297, %v1293
  %v1299 = vpop.permute.xlu0 %1298
  %v1300 = vlaneseq
  %v1301 = vshrl.u32 %v1300, 7
  %v1302 = vadd.s32 %v1301, 8
  %1303 = vset.pattern.permute.xlu0 %v1302
  %1304 = vperm.xlu0 %1303, %v1293
  %v1305 = vpop.permute.xlu0 %1304
  %v1306 = vperm.slane %v1213, 7
  %v1307 = vlaneseq
  %v1308 = vshrl.u32 %v1307, 7
  %1310 = vset.pattern.permute.xlu0 %v1308
  %1311 = vperm.xlu0 %1310, %v1306
  %v1312 = vpop.permute.xlu0 %1311
  %v1313 = vlaneseq
  %v1314 = vshrl.u32 %v1313, 7
  %v1315 = vadd.s32 %v1314, 8
  %1316 = vset.pattern.permute.xlu0 %v1315
  %1317 = vperm.xlu0 %1316, %v1306
  %v1318 = vpop.permute.xlu0 %1317
  %v1319 = vperm.slane %v1214, 0
  %v1320 = vlaneseq
  %v1321 = vshrl.u32 %v1320, 7
  %1323 = vset.pattern.permute.xlu0 %v1321
  %1324 = vperm.xlu0 %1323, %v1319
  %v1325 = vpop.permute.xlu0 %1324
  %v1326 = vlaneseq
  %v1327 = vshrl.u32 %v1326, 7
  %v1328 = vadd.s32 %v1327, 8
  %1329 = vset.pattern.permute.xlu0 %v1328
  %1330 = vperm.xlu0 %1329, %v1319
  %v1331 = vpop.permute.xlu0 %1330
  %v1332 = vperm.slane %v1214, 1
  %v1333 = vlaneseq
  %v1334 = vshrl.u32 %v1333, 7
  %1336 = vset.pattern.permute.xlu0 %v1334
  %1337 = vperm.xlu0 %1336, %v1332
  %v1338 = vpop.permute.xlu0 %1337
  %v1339 = vlaneseq
  %v1340 = vshrl.u32 %v1339, 7
  %v1341 = vadd.s32 %v1340, 8
  %1342 = vset.pattern.permute.xlu0 %v1341
  %1343 = vperm.xlu0 %1342, %v1332
  %v1344 = vpop.permute.xlu0 %1343
  %v1345 = vperm.slane %v1214, 2
  %v1346 = vlaneseq
  %v1347 = vshrl.u32 %v1346, 7
  %1349 = vset.pattern.permute.xlu0 %v1347
  %1350 = vperm.xlu0 %1349, %v1345
  %v1351 = vpop.permute.xlu0 %1350
  %v1352 = vlaneseq
  %v1353 = vshrl.u32 %v1352, 7
  %v1354 = vadd.s32 %v1353, 8
  %1355 = vset.pattern.permute.xlu0 %v1354
  %1356 = vperm.xlu0 %1355, %v1345
  %v1357 = vpop.permute.xlu0 %1356
  %v1358 = vperm.slane %v1214, 3
  %v1359 = vlaneseq
  %v1360 = vshrl.u32 %v1359, 7
  %1362 = vset.pattern.permute.xlu0 %v1360
  %1363 = vperm.xlu0 %1362, %v1358
  %v1364 = vpop.permute.xlu0 %1363
  %v1365 = vlaneseq
  %v1366 = vshrl.u32 %v1365, 7
  %v1367 = vadd.s32 %v1366, 8
  %1368 = vset.pattern.permute.xlu0 %v1367
  %1369 = vperm.xlu0 %1368, %v1358
  %v1370 = vpop.permute.xlu0 %1369
  %v1371 = vperm.slane %v1214, 4
  %v1372 = vlaneseq
  %v1373 = vshrl.u32 %v1372, 7
  %1375 = vset.pattern.permute.xlu0 %v1373
  %1376 = vperm.xlu0 %1375, %v1371
  %v1377 = vpop.permute.xlu0 %1376
  %v1378 = vlaneseq
  %v1379 = vshrl.u32 %v1378, 7
  %v1380 = vadd.s32 %v1379, 8
  %1381 = vset.pattern.permute.xlu0 %v1380
  %1382 = vperm.xlu0 %1381, %v1371
  %v1383 = vpop.permute.xlu0 %1382
  %v1384 = vperm.slane %v1214, 5
  %v1385 = vlaneseq
  %v1386 = vshrl.u32 %v1385, 7
  %1388 = vset.pattern.permute.xlu0 %v1386
  %1389 = vperm.xlu0 %1388, %v1384
  %v1390 = vpop.permute.xlu0 %1389
  %v1391 = vlaneseq
  %v1392 = vshrl.u32 %v1391, 7
  %v1393 = vadd.s32 %v1392, 8
  %1394 = vset.pattern.permute.xlu0 %v1393
  %1395 = vperm.xlu0 %1394, %v1384
  %v1396 = vpop.permute.xlu0 %1395
  %v1397 = vperm.slane %v1214, 6
  %v1398 = vlaneseq
  %v1399 = vshrl.u32 %v1398, 7
  %1401 = vset.pattern.permute.xlu0 %v1399
  %1402 = vperm.xlu0 %1401, %v1397
  %v1403 = vpop.permute.xlu0 %1402
  %v1404 = vlaneseq
  %v1405 = vshrl.u32 %v1404, 7
  %v1406 = vadd.s32 %v1405, 8
  %1407 = vset.pattern.permute.xlu0 %v1406
  %1408 = vperm.xlu0 %1407, %v1397
  %v1409 = vpop.permute.xlu0 %1408
  %v1410 = vperm.slane %v1214, 7
  %v1411 = vlaneseq
  %v1412 = vshrl.u32 %v1411, 7
  %1414 = vset.pattern.permute.xlu0 %v1412
  %1415 = vperm.xlu0 %1414, %v1410
  %v1416 = vpop.permute.xlu0 %1415
  %v1417 = vlaneseq
  %v1418 = vshrl.u32 %v1417, 7
  %v1419 = vadd.s32 %v1418, 8
  %1420 = vset.pattern.permute.xlu0 %v1419
  %1421 = vperm.xlu0 %1420, %v1410
  %v1422 = vpop.permute.xlu0 %1421
  %v1423 = vmul.f32 %v442, %v1221
  %v1424 = vmul.f32 %v445, %v1227
  %v1425 = vmul.f32 %v448, %v1234
  %v1426 = vmul.f32 %v451, %v1240
  %v1427 = vmul.f32 %v454, %v1247
  %v1428 = vmul.f32 %v457, %v1253
  %v1429 = vmul.f32 %v460, %v1260
  %v1430 = vmul.f32 %v463, %v1266
  %v1431 = vmul.f32 %v466, %v1273
  %v1432 = vmul.f32 %v469, %v1279
  %v1433 = vmul.f32 %v472, %v1286
  %v1434 = vmul.f32 %v475, %v1292
  %v1435 = vmul.f32 %v478, %v1299
  %v1436 = vmul.f32 %v481, %v1305
  %v1437 = vmul.f32 %v484, %v1312
  %v1438 = vmul.f32 %v487, %v1318
  %v1439 = vmul.f32 %v490, %v1325
  %v1440 = vmul.f32 %v493, %v1331
  %v1441 = vmul.f32 %v496, %v1338
  %v1442 = vmul.f32 %v499, %v1344
  %v1443 = vmul.f32 %v502, %v1351
  %v1444 = vmul.f32 %v505, %v1357
  %v1445 = vmul.f32 %v508, %v1364
  %v1446 = vmul.f32 %v511, %v1370
  %v1447 = vmul.f32 %v514, %v1377
  %v1448 = vmul.f32 %v517, %v1383
  %v1449 = vmul.f32 %v520, %v1390
  %v1450 = vmul.f32 %v523, %v1396
  %v1451 = vmul.f32 %v526, %v1403
  %v1452 = vmul.f32 %v529, %v1409
  %v1453 = vmul.f32 %v532, %v1416
  %v1454 = vmul.f32 %v535, %v1422
  %v1455 = vperm.slane %v1211, 0
  %v1456 = vlaneseq
  %v1457 = vshrl.u32 %v1456, 7
  %1459 = vset.pattern.permute.xlu0 %v1457
  %1460 = vperm.xlu0 %1459, %v1455
  %v1461 = vpop.permute.xlu0 %1460
  %v1462 = vlaneseq
  %v1463 = vshrl.u32 %v1462, 7
  %v1464 = vadd.s32 %v1463, 8
  %1465 = vset.pattern.permute.xlu0 %v1464
  %1466 = vperm.xlu0 %1465, %v1455
  %v1467 = vpop.permute.xlu0 %1466
  %v1468 = vperm.slane %v1211, 1
  %v1469 = vlaneseq
  %v1470 = vshrl.u32 %v1469, 7
  %1472 = vset.pattern.permute.xlu0 %v1470
  %1473 = vperm.xlu0 %1472, %v1468
  %v1474 = vpop.permute.xlu0 %1473
  %v1475 = vlaneseq
  %v1476 = vshrl.u32 %v1475, 7
  %v1477 = vadd.s32 %v1476, 8
  %1478 = vset.pattern.permute.xlu0 %v1477
  %1479 = vperm.xlu0 %1478, %v1468
  %v1480 = vpop.permute.xlu0 %1479
  %v1481 = vperm.slane %v1211, 2
  %v1482 = vlaneseq
  %v1483 = vshrl.u32 %v1482, 7
  %1485 = vset.pattern.permute.xlu0 %v1483
  %1486 = vperm.xlu0 %1485, %v1481
  %v1487 = vpop.permute.xlu0 %1486
  %v1488 = vlaneseq
  %v1489 = vshrl.u32 %v1488, 7
  %v1490 = vadd.s32 %v1489, 8
  %1491 = vset.pattern.permute.xlu0 %v1490
  %1492 = vperm.xlu0 %1491, %v1481
  %v1493 = vpop.permute.xlu0 %1492
  %v1494 = vperm.slane %v1211, 3
  %v1495 = vlaneseq
  %v1496 = vshrl.u32 %v1495, 7
  %1498 = vset.pattern.permute.xlu0 %v1496
  %1499 = vperm.xlu0 %1498, %v1494
  %v1500 = vpop.permute.xlu0 %1499
  %v1501 = vlaneseq
  %v1502 = vshrl.u32 %v1501, 7
  %v1503 = vadd.s32 %v1502, 8
  %1504 = vset.pattern.permute.xlu0 %v1503
  %1505 = vperm.xlu0 %1504, %v1494
  %v1506 = vpop.permute.xlu0 %1505
  %v1507 = vperm.slane %v1211, 4
  %v1508 = vlaneseq
  %v1509 = vshrl.u32 %v1508, 7
  %1511 = vset.pattern.permute.xlu0 %v1509
  %1512 = vperm.xlu0 %1511, %v1507
  %v1513 = vpop.permute.xlu0 %1512
  %v1514 = vlaneseq
  %v1515 = vshrl.u32 %v1514, 7
  %v1516 = vadd.s32 %v1515, 8
  %1517 = vset.pattern.permute.xlu0 %v1516
  %1518 = vperm.xlu0 %1517, %v1507
  %v1519 = vpop.permute.xlu0 %1518
  %v1520 = vperm.slane %v1211, 5
  %v1521 = vlaneseq
  %v1522 = vshrl.u32 %v1521, 7
  %1524 = vset.pattern.permute.xlu0 %v1522
  %1525 = vperm.xlu0 %1524, %v1520
  %v1526 = vpop.permute.xlu0 %1525
  %v1527 = vlaneseq
  %v1528 = vshrl.u32 %v1527, 7
  %v1529 = vadd.s32 %v1528, 8
  %1530 = vset.pattern.permute.xlu0 %v1529
  %1531 = vperm.xlu0 %1530, %v1520
  %v1532 = vpop.permute.xlu0 %1531
  %v1533 = vperm.slane %v1211, 6
  %v1534 = vlaneseq
  %v1535 = vshrl.u32 %v1534, 7
  %1537 = vset.pattern.permute.xlu0 %v1535
  %1538 = vperm.xlu0 %1537, %v1533
  %v1539 = vpop.permute.xlu0 %1538
  %v1540 = vlaneseq
  %v1541 = vshrl.u32 %v1540, 7
  %v1542 = vadd.s32 %v1541, 8
  %1543 = vset.pattern.permute.xlu0 %v1542
  %1544 = vperm.xlu0 %1543, %v1533
  %v1545 = vpop.permute.xlu0 %1544
  %v1546 = vperm.slane %v1211, 7
  %v1547 = vlaneseq
  %v1548 = vshrl.u32 %v1547, 7
  %1550 = vset.pattern.permute.xlu0 %v1548
  %1551 = vperm.xlu0 %1550, %v1546
  %v1552 = vpop.permute.xlu0 %1551
  %v1553 = vlaneseq
  %v1554 = vshrl.u32 %v1553, 7
  %v1555 = vadd.s32 %v1554, 8
  %1556 = vset.pattern.permute.xlu0 %v1555
  %1557 = vperm.xlu0 %1556, %v1546
  %v1558 = vpop.permute.xlu0 %1557
  %v1559 = vperm.slane %v1212, 0
  %v1560 = vlaneseq
  %v1561 = vshrl.u32 %v1560, 7
  %1563 = vset.pattern.permute.xlu0 %v1561
  %1564 = vperm.xlu0 %1563, %v1559
  %v1565 = vpop.permute.xlu0 %1564
  %v1566 = vlaneseq
  %v1567 = vshrl.u32 %v1566, 7
  %v1568 = vadd.s32 %v1567, 8
  %1569 = vset.pattern.permute.xlu0 %v1568
  %1570 = vperm.xlu0 %1569, %v1559
  %v1571 = vpop.permute.xlu0 %1570
  %v1572 = vperm.slane %v1212, 1
  %v1573 = vlaneseq
  %v1574 = vshrl.u32 %v1573, 7
  %1576 = vset.pattern.permute.xlu0 %v1574
  %1577 = vperm.xlu0 %1576, %v1572
  %v1578 = vpop.permute.xlu0 %1577
  %v1579 = vlaneseq
  %v1580 = vshrl.u32 %v1579, 7
  %v1581 = vadd.s32 %v1580, 8
  %1582 = vset.pattern.permute.xlu0 %v1581
  %1583 = vperm.xlu0 %1582, %v1572
  %v1584 = vpop.permute.xlu0 %1583
  %v1585 = vperm.slane %v1212, 2
  %v1586 = vlaneseq
  %v1587 = vshrl.u32 %v1586, 7
  %1589 = vset.pattern.permute.xlu0 %v1587
  %1590 = vperm.xlu0 %1589, %v1585
  %v1591 = vpop.permute.xlu0 %1590
  %v1592 = vlaneseq
  %v1593 = vshrl.u32 %v1592, 7
  %v1594 = vadd.s32 %v1593, 8
  %1595 = vset.pattern.permute.xlu0 %v1594
  %1596 = vperm.xlu0 %1595, %v1585
  %v1597 = vpop.permute.xlu0 %1596
  %v1598 = vperm.slane %v1212, 3
  %v1599 = vlaneseq
  %v1600 = vshrl.u32 %v1599, 7
  %1602 = vset.pattern.permute.xlu0 %v1600
  %1603 = vperm.xlu0 %1602, %v1598
  %v1604 = vpop.permute.xlu0 %1603
  %v1605 = vlaneseq
  %v1606 = vshrl.u32 %v1605, 7
  %v1607 = vadd.s32 %v1606, 8
  %1608 = vset.pattern.permute.xlu0 %v1607
  %1609 = vperm.xlu0 %1608, %v1598
  %v1610 = vpop.permute.xlu0 %1609
  %v1611 = vperm.slane %v1212, 4
  %v1612 = vlaneseq
  %v1613 = vshrl.u32 %v1612, 7
  %1615 = vset.pattern.permute.xlu0 %v1613
  %1616 = vperm.xlu0 %1615, %v1611
  %v1617 = vpop.permute.xlu0 %1616
  %v1618 = vlaneseq
  %v1619 = vshrl.u32 %v1618, 7
  %v1620 = vadd.s32 %v1619, 8
  %1621 = vset.pattern.permute.xlu0 %v1620
  %1622 = vperm.xlu0 %1621, %v1611
  %v1623 = vpop.permute.xlu0 %1622
  %v1624 = vperm.slane %v1212, 5
  %v1625 = vlaneseq
  %v1626 = vshrl.u32 %v1625, 7
  %1628 = vset.pattern.permute.xlu0 %v1626
  %1629 = vperm.xlu0 %1628, %v1624
  %v1630 = vpop.permute.xlu0 %1629
  %v1631 = vlaneseq
  %v1632 = vshrl.u32 %v1631, 7
  %v1633 = vadd.s32 %v1632, 8
  %1634 = vset.pattern.permute.xlu0 %v1633
  %1635 = vperm.xlu0 %1634, %v1624
  %v1636 = vpop.permute.xlu0 %1635
  %v1637 = vperm.slane %v1212, 6
  %v1638 = vlaneseq
  %v1639 = vshrl.u32 %v1638, 7
  %1641 = vset.pattern.permute.xlu0 %v1639
  %1642 = vperm.xlu0 %1641, %v1637
  %v1643 = vpop.permute.xlu0 %1642
  %v1644 = vlaneseq
  %v1645 = vshrl.u32 %v1644, 7
  %v1646 = vadd.s32 %v1645, 8
  %1647 = vset.pattern.permute.xlu0 %v1646
  %1648 = vperm.xlu0 %1647, %v1637
  %v1649 = vpop.permute.xlu0 %1648
  %v1650 = vperm.slane %v1212, 7
  %v1651 = vlaneseq
  %v1652 = vshrl.u32 %v1651, 7
  %1654 = vset.pattern.permute.xlu0 %v1652
  %1655 = vperm.xlu0 %1654, %v1650
  %v1656 = vpop.permute.xlu0 %1655
  %v1657 = vlaneseq
  %v1658 = vshrl.u32 %v1657, 7
  %v1659 = vadd.s32 %v1658, 8
  %1660 = vset.pattern.permute.xlu0 %v1659
  %1661 = vperm.xlu0 %1660, %v1650
  %v1662 = vpop.permute.xlu0 %1661
  %v1663 = vperm.slane %v976, 0
  %v1664 = vperm.slane %v991, 0
  %v1665 = vperm.slane %v1006, 0
  %v1666 = vperm.slane %v1021, 0
  %v1667 = vperm.slane %v1036, 0
  %v1668 = vperm.slane %v1051, 0
  %v1669 = vperm.slane %v1066, 0
  %v1670 = vperm.slane %v1081, 0
  %v1671 = vperm.slane %v1096, 0
  %v1672 = vperm.slane %v1111, 0
  %v1673 = vperm.slane %v1126, 0
  %v1674 = vperm.slane %v1141, 0
  %v1675 = vperm.slane %v1156, 0
  %v1676 = vperm.slane %v1171, 0
  %v1677 = vperm.slane %v1186, 0
  %v1678 = vperm.slane %v1201, 0
  %v1679 = vmul.f32 %v1461, %v1663
  %v1680 = vmul.f32 %v1467, %v1663
  %v1681 = vmul.f32 %v1474, %v1664
  %v1682 = vmul.f32 %v1480, %v1664
  %v1683 = vmul.f32 %v1487, %v1665
  %v1684 = vmul.f32 %v1493, %v1665
  %v1685 = vmul.f32 %v1500, %v1666
  %v1686 = vmul.f32 %v1506, %v1666
  %v1687 = vmul.f32 %v1513, %v1667
  %v1688 = vmul.f32 %v1519, %v1667
  %v1689 = vmul.f32 %v1526, %v1668
  %v1690 = vmul.f32 %v1532, %v1668
  %v1691 = vmul.f32 %v1539, %v1669
  %v1692 = vmul.f32 %v1545, %v1669
  %v1693 = vmul.f32 %v1552, %v1670
  %v1694 = vmul.f32 %v1558, %v1670
  %v1695 = vmul.f32 %v1565, %v1671
  %v1696 = vmul.f32 %v1571, %v1671
  %v1697 = vmul.f32 %v1578, %v1672
  %v1698 = vmul.f32 %v1584, %v1672
  %v1699 = vmul.f32 %v1591, %v1673
  %v1700 = vmul.f32 %v1597, %v1673
  %v1701 = vmul.f32 %v1604, %v1674
  %v1702 = vmul.f32 %v1610, %v1674
  %v1703 = vmul.f32 %v1617, %v1675
  %v1704 = vmul.f32 %v1623, %v1675
  %v1705 = vmul.f32 %v1630, %v1676
  %v1706 = vmul.f32 %v1636, %v1676
  %v1707 = vmul.f32 %v1643, %v1677
  %v1708 = vmul.f32 %v1649, %v1677
  %v1709 = vmul.f32 %v1656, %v1678
  %v1710 = vmul.f32 %v1662, %v1678
  %v1711 = vadd.f32 %v1423, %v1679
  %v1712 = vadd.f32 %v1424, %v1680
  %v1713 = vadd.f32 %v1425, %v1681
  %v1714 = vadd.f32 %v1426, %v1682
  %v1715 = vadd.f32 %v1427, %v1683
  %v1716 = vadd.f32 %v1428, %v1684
  %v1717 = vadd.f32 %v1429, %v1685
  %v1718 = vadd.f32 %v1430, %v1686
  %v1719 = vadd.f32 %v1431, %v1687
  %v1720 = vadd.f32 %v1432, %v1688
  %v1721 = vadd.f32 %v1433, %v1689
  %v1722 = vadd.f32 %v1434, %v1690
  %v1723 = vadd.f32 %v1435, %v1691
  %v1724 = vadd.f32 %v1436, %v1692
  %v1725 = vadd.f32 %v1437, %v1693
  %v1726 = vadd.f32 %v1438, %v1694
  %v1727 = vadd.f32 %v1439, %v1695
  %v1728 = vadd.f32 %v1440, %v1696
  %v1729 = vadd.f32 %v1441, %v1697
  %v1730 = vadd.f32 %v1442, %v1698
  %v1731 = vadd.f32 %v1443, %v1699
  %v1732 = vadd.f32 %v1444, %v1700
  %v1733 = vadd.f32 %v1445, %v1701
  %v1734 = vadd.f32 %v1446, %v1702
  %v1735 = vadd.f32 %v1447, %v1703
  %v1736 = vadd.f32 %v1448, %v1704
  %v1737 = vadd.f32 %v1449, %v1705
  %v1738 = vadd.f32 %v1450, %v1706
  %v1739 = vadd.f32 %v1451, %v1707
  %v1740 = vadd.f32 %v1452, %v1708
  %v1741 = vadd.f32 %v1453, %v1709
  %v1742 = vadd.f32 %v1454, %v1710
  %1743 = vst.msk [vmem:[%s6] sm:$0xff] %vm785, %v1711
  %1744 = vst.msk [vmem:[%s6 + $0x8] sm:$0xff] %vm785, %v1712
  %1745 = vst.msk [vmem:[%s6 + $0x10] sm:$0xff] %vm785, %v1713
  %1746 = vst.msk [vmem:[%s6 + $0x18] sm:$0xff] %vm785, %v1714
  %1747 = vst.msk [vmem:[%s6 + $0x20] sm:$0xff] %vm785, %v1715
  %1748 = vst.msk [vmem:[%s6 + $0x28] sm:$0xff] %vm785, %v1716
  %1749 = vst.msk [vmem:[%s6 + $0x30] sm:$0xff] %vm785, %v1717
  %1750 = vst.msk [vmem:[%s6 + $0x38] sm:$0xff] %vm785, %v1718
  %1751 = vst.msk [vmem:[%s6 + $0x40] sm:$0xff] %vm785, %v1719
  %1752 = vst.msk [vmem:[%s6 + $0x48] sm:$0xff] %vm785, %v1720
  %1753 = vst.msk [vmem:[%s6 + $0x50] sm:$0xff] %vm785, %v1721
  %1754 = vst.msk [vmem:[%s6 + $0x58] sm:$0xff] %vm785, %v1722
  %1755 = vst.msk [vmem:[%s6 + $0x60] sm:$0xff] %vm785, %v1723
  %1756 = vst.msk [vmem:[%s6 + $0x68] sm:$0xff] %vm785, %v1724
  %1757 = vst.msk [vmem:[%s6 + $0x70] sm:$0xff] %vm785, %v1725
  %1758 = vst.msk [vmem:[%s6 + $0x78] sm:$0xff] %vm785, %v1726
  %1759 = vst.msk [vmem:[%s6 + $0x80] sm:$0xff] %vm785, %v1727
  %1760 = vst.msk [vmem:[%s6 + $0x88] sm:$0xff] %vm785, %v1728
  %1761 = vst.msk [vmem:[%s6 + $0x90] sm:$0xff] %vm785, %v1729
  %1762 = vst.msk [vmem:[%s6 + $0x98] sm:$0xff] %vm785, %v1730
  %1763 = vst.msk [vmem:[%s6 + $0xa0] sm:$0xff] %vm785, %v1731
  %1764 = vst.msk [vmem:[%s6 + $0xa8] sm:$0xff] %vm785, %v1732
  %1765 = vst.msk [vmem:[%s6 + $0xb0] sm:$0xff] %vm785, %v1733
  %1766 = vst.msk [vmem:[%s6 + $0xb8] sm:$0xff] %vm785, %v1734
  %1767 = vst.msk [vmem:[%s6 + $0xc0] sm:$0xff] %vm785, %v1735
  %1768 = vst.msk [vmem:[%s6 + $0xc8] sm:$0xff] %vm785, %v1736
  %1769 = vst.msk [vmem:[%s6 + $0xd0] sm:$0xff] %vm785, %v1737
  %1770 = vst.msk [vmem:[%s6 + $0xd8] sm:$0xff] %vm785, %v1738
  %1771 = vst.msk [vmem:[%s6 + $0xe0] sm:$0xff] %vm785, %v1739
  %1772 = vst.msk [vmem:[%s6 + $0xe8] sm:$0xff] %vm785, %v1740
  %1773 = vst.msk [vmem:[%s6 + $0xf0] sm:$0xff] %vm785, %v1741
  %1774 = vst.msk [vmem:[%s6 + $0xf8] sm:$0xff] %vm785, %v1742
  // Predicated region
  $region26: #{fpga_gnn_forward.5} parent=0 // pred_check
    _
  $region27: #{fpga_gnn_forward.5} parent=0 // pred_check_branch
    %1776 = sbr.rel (0) target = $region29
  $region28: #{fpga_gnn_forward.5} parent=0 // pred_region
    _
  $region29: #{fpga_gnn_forward.5} parent=0 // pred_fallthru
    _
  // Predicated region
  $region30: #{fpga_gnn_forward.5} parent=0 // pred_check
    _
  $region31: #{fpga_gnn_forward.5} parent=0 // pred_check_branch
    %1778 = sbr.rel (0) target = $region33
  $region32: #{fpga_gnn_forward.5} parent=0 // pred_region
    _
  $region33: #{fpga_gnn_forward.5} parent=0 // pred_fallthru
    _

// kernel: fpga_gnn_forward.6
$region0: #{fpga_gnn_forward.6}
  #allocation0 [shape = 'u32[]', space=smem, size = 0x4, offset = 0x4, fixed_abs, tag = 'smem constant byte address 0x4 - core index']
  #allocation1 [shape = 'u32[72,128]{1,0:T(1,128)}', space=vmem, size = 0x9000, scoped, tag = 'internal scratch']
  %s0 = inlined_call_operand.vmem [shape: f32[16,8], index: 0, kind: input, shape index: {}]
  %s1 = inlined_call_operand.vmem [shape: f32[256,8], index: 1, kind: input, shape index: {}]
  %s2 = inlined_call_operand.vmem [shape: f32[16,16], index: 2, kind: input, shape index: {}]
  %s3 = inlined_call_operand.vmem [shape: f32[8,256], index: 3, kind: input, shape index: {}]
  %s4 = inlined_call_operand.vmem [shape: f32[1,256], index: 4, kind: input, shape index: {}]
  %s5 = inlined_call_operand.vmem [shape: f32[8,128], index: 5, kind: input, shape index: {}]
  %s6 = inlined_call_operand.vmem [shape: f32[4,32], index: 6, kind: input, shape index: {}]
  %s7 = inlined_call_operand.vmem [shape: f32[1,128], index: 7, kind: input, shape index: {}]
  %s8 = inlined_call_operand.vmem [shape: f32[1,128], index: 8, kind: input, shape index: {}]
  %s9 = inlined_call_operand.vmem [shape: f32[1,128], index: 9, kind: input, shape index: {}]
  %s10 = inlined_call_operand.vmem [shape: f32[16,128], index: 10, kind: output, shape index: {}]
  %s11 = sld [smem:[#allocation0]]
  $region50: #{fpga_gnn_forward.6} parent=0
    _
  %s13 = ssub.s32 1, %s11
  %s14 = scalar_select 0, %s13, %s11
  // Predicated region
  $region2: #{fpga_gnn_forward.6} parent=0 // pred_check
    _
  $region3: #{fpga_gnn_forward.6} parent=0 // pred_check_branch
    %16 = sbr.rel (0) target = $region5
  $region4: #{fpga_gnn_forward.6} parent=0 // pred_region
    _
  $region5: #{fpga_gnn_forward.6} parent=0 // pred_fallthru
    _
  // Predicated region
  $region6: #{fpga_gnn_forward.6} parent=0 // pred_check
    _
  $region7: #{fpga_gnn_forward.6} parent=0 // pred_check_branch
    %18 = sbr.rel (0) target = $region9
  $region8: #{fpga_gnn_forward.6} parent=0 // pred_region
    _
  $region9: #{fpga_gnn_forward.6} parent=0 // pred_fallthru
    _
  // Predicated region
  $region10: #{fpga_gnn_forward.6} parent=0 // pred_check
    _
  $region11: #{fpga_gnn_forward.6} parent=0 // pred_check_branch
    %20 = sbr.rel (0) target = $region13
  $region12: #{fpga_gnn_forward.6} parent=0 // pred_region
    _
  $region13: #{fpga_gnn_forward.6} parent=0 // pred_fallthru
    _
  // Predicated region
  $region14: #{fpga_gnn_forward.6} parent=0 // pred_check
    _
  $region15: #{fpga_gnn_forward.6} parent=0 // pred_check_branch
    %22 = sbr.rel (0) target = $region17
  $region16: #{fpga_gnn_forward.6} parent=0 // pred_region
    _
  $region17: #{fpga_gnn_forward.6} parent=0 // pred_fallthru
    _
  // Predicated region
  $region18: #{fpga_gnn_forward.6} parent=0 // pred_check
    _
  $region19: #{fpga_gnn_forward.6} parent=0 // pred_check_branch
    %24 = sbr.rel (0) target = $region21
  $region20: #{fpga_gnn_forward.6} parent=0 // pred_region
    _
  $region21: #{fpga_gnn_forward.6} parent=0 // pred_fallthru
    _
  // Predicated region
  $region22: #{fpga_gnn_forward.6} parent=0 // pred_check
    _
  $region23: #{fpga_gnn_forward.6} parent=0 // pred_check_branch
    %26 = sbr.rel (0) target = $region25
  $region24: #{fpga_gnn_forward.6} parent=0 // pred_region
    _
  $region25: #{fpga_gnn_forward.6} parent=0 // pred_fallthru
    _
  // Predicated region
  $region26: #{fpga_gnn_forward.6} parent=0 // pred_check
    _
  $region27: #{fpga_gnn_forward.6} parent=0 // pred_check_branch
    %28 = sbr.rel (0) target = $region29
  $region28: #{fpga_gnn_forward.6} parent=0 // pred_region
    _
  $region29: #{fpga_gnn_forward.6} parent=0 // pred_fallthru
    _
  // Predicated region
  $region30: #{fpga_gnn_forward.6} parent=0 // pred_check
    _
  $region31: #{fpga_gnn_forward.6} parent=0 // pred_check_branch
    %30 = sbr.rel (0) target = $region33
  $region32: #{fpga_gnn_forward.6} parent=0 // pred_region
    _
  $region33: #{fpga_gnn_forward.6} parent=0 // pred_fallthru
    _
  // Predicated region
  $region34: #{fpga_gnn_forward.6} parent=0 // pred_check
    _
  $region35: #{fpga_gnn_forward.6} parent=0 // pred_check_branch
    %32 = sbr.rel (0) target = $region37
  $region36: #{fpga_gnn_forward.6} parent=0 // pred_region
    _
  $region37: #{fpga_gnn_forward.6} parent=0 // pred_fallthru
    _
  // Predicated region
  $region38: #{fpga_gnn_forward.6} parent=0 // pred_check
    _
  $region39: #{fpga_gnn_forward.6} parent=0 // pred_check_branch
    %34 = sbr.rel (0) target = $region41
  $region40: #{fpga_gnn_forward.6} parent=0 // pred_region
    _
  $region41: #{fpga_gnn_forward.6} parent=0 // pred_fallthru
    _
  %v35 = vld [vmem:[%s0] sm:$0xff]
  %v36 = vld [vmem:[%s0 + $0x8] sm:$0xff]
  %v37 = vld [vmem:[%s2] sm:$0xff]
  %v38 = vld [vmem:[%s2 + $0x8] sm:$0xff]
  %v39 = vld [vmem:[%s3] sm:$0xff]
  %v40 = vld [vmem:[%s3 + $0x8] sm:$0xff]
  %v41 = vld [vmem:[%s4] sm:$0x3]
  %v43 = vperm.slane %v41, 0
  %v44 = vperm.slane %v41, 1
  %vm47 = vcmask 64512
  %v49 = vsel %vm47, %v35, 0
  %v52 = vsel %vm47, %v36, 0
  %54 = vmatpush.msra.mxu0 0.0
  %55 = vmatpush.msra.mxu0 0.0
  %56 = vmatpush.msra.mxu0 0.0
  %57 = vmatpush.msra.mxu0 0.0
  %58 = vmatpush.msra.mxu0 0.0
  %59 = vmatpush.msra.mxu0 0.0
  %60 = vmatpush.msra.mxu0 0.0
  %61 = vmatpush.msra.mxu0 0.0
  %62 = vmatpush.msra.mxu0 0.0
  %63 = vmatpush.msra.mxu0 0.0
  %64 = vmatpush.msra.mxu0 0.0
  %65 = vmatpush.msra.mxu0 0.0
  %66 = vmatpush.msra.mxu0 0.0
  %67 = vmatpush.msra.mxu0 0.0
  %68 = vmatpush.msra.mxu0 0.0
  %69 = vmatpush.msra.mxu0 %v39
  %70 = vmatmul.f32.gmra.mxu0 %v49
  %v71 = vpop.f32.mrf.mxu0
  %v72 = vadd.f32 %v43, %v71
  %73 = vmatmul.f32.gmra.mxu0 %v52
  %v74 = vpop.f32.mrf.mxu0
  %v75 = vadd.f32 %v43, %v74
  %76 = vdwg.mxu0
  %77 = vmatpush.msra.mxu0 0.0
  %78 = vmatpush.msra.mxu0 0.0
  %79 = vmatpush.msra.mxu0 0.0
  %80 = vmatpush.msra.mxu0 0.0
  %81 = vmatpush.msra.mxu0 0.0
  %82 = vmatpush.msra.mxu0 0.0
  %83 = vmatpush.msra.mxu0 0.0
  %84 = vmatpush.msra.mxu0 0.0
  %85 = vmatpush.msra.mxu0 0.0
  %86 = vmatpush.msra.mxu0 0.0
  %87 = vmatpush.msra.mxu0 0.0
  %88 = vmatpush.msra.mxu0 0.0
  %89 = vmatpush.msra.mxu0 0.0
  %90 = vmatpush.msra.mxu0 0.0
  %91 = vmatpush.msra.mxu0 0.0
  %92 = vmatpush.msra.mxu0 %v40
  %93 = vmatmul.f32.gmra.mxu0 %v49
  %v94 = vpop.f32.mrf.mxu0
  %v95 = vadd.f32 %v44, %v94
  %96 = vmatmul.f32.gmra.mxu0 %v52
  %v97 = vpop.f32.mrf.mxu0
  %v98 = vadd.f32 %v44, %v97
  %99 = vdwg.mxu0
  %v100 = vld [vmem:[%s1] sm:$0xff]
  %v101 = vld [vmem:[%s1 + $0x8] sm:$0xff]
  %v102 = vld [vmem:[%s1 + $0x10] sm:$0xff]
  %v103 = vld [vmem:[%s1 + $0x18] sm:$0xff]
  %v104 = vld [vmem:[%s1 + $0x20] sm:$0xff]
  %v105 = vld [vmem:[%s1 + $0x28] sm:$0xff]
  %v106 = vld [vmem:[%s1 + $0x30] sm:$0xff]
  %v107 = vld [vmem:[%s1 + $0x38] sm:$0xff]
  %v108 = vld [vmem:[%s1 + $0x40] sm:$0xff]
  %v109 = vld [vmem:[%s1 + $0x48] sm:$0xff]
  %v110 = vld [vmem:[%s1 + $0x50] sm:$0xff]
  %v111 = vld [vmem:[%s1 + $0x58] sm:$0xff]
  %v112 = vld [vmem:[%s1 + $0x60] sm:$0xff]
  %v113 = vld [vmem:[%s1 + $0x68] sm:$0xff]
  %v114 = vld [vmem:[%s1 + $0x70] sm:$0xff]
  %v115 = vld [vmem:[%s1 + $0x78] sm:$0xff]
  %v116 = vld [vmem:[%s1 + $0x80] sm:$0xff]
  %v117 = vld [vmem:[%s1 + $0x88] sm:$0xff]
  %v118 = vld [vmem:[%s1 + $0x90] sm:$0xff]
  %v119 = vld [vmem:[%s1 + $0x98] sm:$0xff]
  %v120 = vld [vmem:[%s1 + $0xa0] sm:$0xff]
  %v121 = vld [vmem:[%s1 + $0xa8] sm:$0xff]
  %v122 = vld [vmem:[%s1 + $0xb0] sm:$0xff]
  %v123 = vld [vmem:[%s1 + $0xb8] sm:$0xff]
  %v124 = vld [vmem:[%s1 + $0xc0] sm:$0xff]
  %v125 = vld [vmem:[%s1 + $0xc8] sm:$0xff]
  %v126 = vld [vmem:[%s1 + $0xd0] sm:$0xff]
  %v127 = vld [vmem:[%s1 + $0xd8] sm:$0xff]
  %v128 = vld [vmem:[%s1 + $0xe0] sm:$0xff]
  %v129 = vld [vmem:[%s1 + $0xe8] sm:$0xff]
  %v130 = vld [vmem:[%s1 + $0xf0] sm:$0xff]
  %v131 = vld [vmem:[%s1 + $0xf8] sm:$0xff]
  %v132 = vld [vmem:[%s5] sm:$0xff]
  %v134 = vsel %vm47, %v100, 0
  %v137 = vsel %vm47, %v101, 0
  %v140 = vsel %vm47, %v102, 0
  %v143 = vsel %vm47, %v103, 0
  %v146 = vsel %vm47, %v104, 0
  %v149 = vsel %vm47, %v105, 0
  %v152 = vsel %vm47, %v106, 0
  %v155 = vsel %vm47, %v107, 0
  %v158 = vsel %vm47, %v108, 0
  %v161 = vsel %vm47, %v109, 0
  %v164 = vsel %vm47, %v110, 0
  %v167 = vsel %vm47, %v111, 0
  %v170 = vsel %vm47, %v112, 0
  %v173 = vsel %vm47, %v113, 0
  %v176 = vsel %vm47, %v114, 0
  %v179 = vsel %vm47, %v115, 0
  %v182 = vsel %vm47, %v116, 0
  %v185 = vsel %vm47, %v117, 0
  %v188 = vsel %vm47, %v118, 0
  %v191 = vsel %vm47, %v119, 0
  %v194 = vsel %vm47, %v120, 0
  %v197 = vsel %vm47, %v121, 0
  %v200 = vsel %vm47, %v122, 0
  %v203 = vsel %vm47, %v123, 0
  %v206 = vsel %vm47, %v124, 0
  %v209 = vsel %vm47, %v125, 0
  %v212 = vsel %vm47, %v126, 0
  %v215 = vsel %vm47, %v127, 0
  %v218 = vsel %vm47, %v128, 0
  %v221 = vsel %vm47, %v129, 0
  %v224 = vsel %vm47, %v130, 0
  %v227 = vsel %vm47, %v131, 0
  %229 = vmatpush.msra.mxu0 0.0
  %230 = vmatpush.msra.mxu0 0.0
  %231 = vmatpush.msra.mxu0 0.0
  %232 = vmatpush.msra.mxu0 0.0
  %233 = vmatpush.msra.mxu0 0.0
  %234 = vmatpush.msra.mxu0 0.0
  %235 = vmatpush.msra.mxu0 0.0
  %236 = vmatpush.msra.mxu0 0.0
  %237 = vmatpush.msra.mxu0 0.0
  %238 = vmatpush.msra.mxu0 0.0
  %239 = vmatpush.msra.mxu0 0.0
  %240 = vmatpush.msra.mxu0 0.0
  %241 = vmatpush.msra.mxu0 0.0
  %242 = vmatpush.msra.mxu0 0.0
  %243 = vmatpush.msra.mxu0 0.0
  %244 = vmatpush.msra.mxu0 %v132
  %245 = vmatmul.f32.gmra.mxu0 %v134
  %v246 = vpop.f32.mrf.mxu0
  %v247 = vadd.f32 0.0, %v246
  %248 = vmatmul.f32.gmra.mxu0 %v137
  %v249 = vpop.f32.mrf.mxu0
  %v250 = vadd.f32 0.0, %v249
  %251 = vmatmul.f32.gmra.mxu0 %v140
  %v252 = vpop.f32.mrf.mxu0
  %v253 = vadd.f32 0.0, %v252
  %254 = vmatmul.f32.gmra.mxu0 %v143
  %v255 = vpop.f32.mrf.mxu0
  %v256 = vadd.f32 0.0, %v255
  %257 = vmatmul.f32.gmra.mxu0 %v146
  %v258 = vpop.f32.mrf.mxu0
  %v259 = vadd.f32 0.0, %v258
  %260 = vmatmul.f32.gmra.mxu0 %v149
  %v261 = vpop.f32.mrf.mxu0
  %v262 = vadd.f32 0.0, %v261
  %263 = vmatmul.f32.gmra.mxu0 %v152
  %v264 = vpop.f32.mrf.mxu0
  %v265 = vadd.f32 0.0, %v264
  %266 = vmatmul.f32.gmra.mxu0 %v155
  %v267 = vpop.f32.mrf.mxu0
  %v268 = vadd.f32 0.0, %v267
  %269 = vmatmul.f32.gmra.mxu0 %v158
  %v270 = vpop.f32.mrf.mxu0
  %v271 = vadd.f32 0.0, %v270
  %272 = vmatmul.f32.gmra.mxu0 %v161
  %v273 = vpop.f32.mrf.mxu0
  %v274 = vadd.f32 0.0, %v273
  %275 = vmatmul.f32.gmra.mxu0 %v164
  %v276 = vpop.f32.mrf.mxu0
  %v277 = vadd.f32 0.0, %v276
  %278 = vmatmul.f32.gmra.mxu0 %v167
  %v279 = vpop.f32.mrf.mxu0
  %v280 = vadd.f32 0.0, %v279
  %281 = vmatmul.f32.gmra.mxu0 %v170
  %v282 = vpop.f32.mrf.mxu0
  %v283 = vadd.f32 0.0, %v282
  %284 = vmatmul.f32.gmra.mxu0 %v173
  %v285 = vpop.f32.mrf.mxu0
  %v286 = vadd.f32 0.0, %v285
  %287 = vmatmul.f32.gmra.mxu0 %v176
  %v288 = vpop.f32.mrf.mxu0
  %v289 = vadd.f32 0.0, %v288
  %290 = vmatmul.f32.gmra.mxu0 %v179
  %v291 = vpop.f32.mrf.mxu0
  %v292 = vadd.f32 0.0, %v291
  %293 = vmatmul.f32.gmra.mxu0 %v182
  %v294 = vpop.f32.mrf.mxu0
  %v295 = vadd.f32 0.0, %v294
  %296 = vmatmul.f32.gmra.mxu0 %v185
  %v297 = vpop.f32.mrf.mxu0
  %v298 = vadd.f32 0.0, %v297
  %299 = vmatmul.f32.gmra.mxu0 %v188
  %v300 = vpop.f32.mrf.mxu0
  %v301 = vadd.f32 0.0, %v300
  %302 = vmatmul.f32.gmra.mxu0 %v191
  %v303 = vpop.f32.mrf.mxu0
  %v304 = vadd.f32 0.0, %v303
  %305 = vmatmul.f32.gmra.mxu0 %v194
  %v306 = vpop.f32.mrf.mxu0
  %v307 = vadd.f32 0.0, %v306
  %308 = vmatmul.f32.gmra.mxu0 %v197
  %v309 = vpop.f32.mrf.mxu0
  %v310 = vadd.f32 0.0, %v309
  %311 = vmatmul.f32.gmra.mxu0 %v200
  %v312 = vpop.f32.mrf.mxu0
  %v313 = vadd.f32 0.0, %v312
  %314 = vmatmul.f32.gmra.mxu0 %v203
  %v315 = vpop.f32.mrf.mxu0
  %v316 = vadd.f32 0.0, %v315
  %317 = vmatmul.f32.gmra.mxu0 %v206
  %v318 = vpop.f32.mrf.mxu0
  %v319 = vadd.f32 0.0, %v318
  %320 = vmatmul.f32.gmra.mxu0 %v209
  %v321 = vpop.f32.mrf.mxu0
  %v322 = vadd.f32 0.0, %v321
  %323 = vmatmul.f32.gmra.mxu0 %v212
  %v324 = vpop.f32.mrf.mxu0
  %v325 = vadd.f32 0.0, %v324
  %326 = vmatmul.f32.gmra.mxu0 %v215
  %v327 = vpop.f32.mrf.mxu0
  %v328 = vadd.f32 0.0, %v327
  %329 = vmatmul.f32.gmra.mxu0 %v218
  %v330 = vpop.f32.mrf.mxu0
  %v331 = vadd.f32 0.0, %v330
  %332 = vmatmul.f32.gmra.mxu0 %v221
  %v333 = vpop.f32.mrf.mxu0
  %v334 = vadd.f32 0.0, %v333
  %335 = vmatmul.f32.gmra.mxu0 %v224
  %v336 = vpop.f32.mrf.mxu0
  %v337 = vadd.f32 0.0, %v336
  %338 = vmatmul.f32.gmra.mxu0 %v227
  %v339 = vpop.f32.mrf.mxu0
  %v340 = vadd.f32 0.0, %v339
  %341 = vdwg.mxu0
  %v342 = vld [vmem:[%s6] sm:$0xf]
  %v345 = vrot.slane %v95, 1
  %v346 = vrot.slane %v95, 2
  %v347 = vrot.slane %v95, 3
  %v348 = vrot.slane %v95, 4
  %v349 = vrot.slane %v95, 5
  %v350 = vrot.slane %v95, 6
  %v351 = vrot.slane %v95, 7
  %v352 = vrot.slane %v98, 1
  %v353 = vrot.slane %v98, 2
  %v354 = vrot.slane %v98, 3
  %v355 = vrot.slane %v98, 4
  %v356 = vrot.slane %v98, 5
  %v357 = vrot.slane %v98, 6
  %v358 = vrot.slane %v98, 7
  %v359 = vperm.slane %v95, 0
  %v360 = vperm.slane %v345, 0
  %v361 = vperm.slane %v346, 0
  %v362 = vperm.slane %v347, 0
  %v363 = vperm.slane %v348, 0
  %v364 = vperm.slane %v349, 0
  %v365 = vperm.slane %v350, 0
  %v366 = vperm.slane %v351, 0
  %v367 = vperm.slane %v98, 0
  %v368 = vperm.slane %v352, 0
  %v369 = vperm.slane %v353, 0
  %v370 = vperm.slane %v354, 0
  %v371 = vperm.slane %v355, 0
  %v372 = vperm.slane %v356, 0
  %v373 = vperm.slane %v357, 0
  %v374 = vperm.slane %v358, 0
  %v391 = vadd.f32 %v359, %v72
  %v392 = vadd.f32 %v359, %v75
  %v393 = vadd.f32 %v360, %v72
  %v394 = vadd.f32 %v360, %v75
  %v395 = vadd.f32 %v361, %v72
  %v396 = vadd.f32 %v361, %v75
  %v397 = vadd.f32 %v362, %v72
  %v398 = vadd.f32 %v362, %v75
  %v399 = vadd.f32 %v363, %v72
  %v400 = vadd.f32 %v363, %v75
  %v401 = vadd.f32 %v364, %v72
  %v402 = vadd.f32 %v364, %v75
  %v403 = vadd.f32 %v365, %v72
  %v404 = vadd.f32 %v365, %v75
  %v405 = vadd.f32 %v366, %v72
  %v406 = vadd.f32 %v366, %v75
  %v407 = vadd.f32 %v367, %v72
  %v408 = vadd.f32 %v367, %v75
  %v409 = vadd.f32 %v368, %v72
  %v410 = vadd.f32 %v368, %v75
  %v411 = vadd.f32 %v369, %v72
  %v412 = vadd.f32 %v369, %v75
  %v413 = vadd.f32 %v370, %v72
  %v414 = vadd.f32 %v370, %v75
  %v415 = vadd.f32 %v371, %v72
  %v416 = vadd.f32 %v371, %v75
  %v417 = vadd.f32 %v372, %v72
  %v418 = vadd.f32 %v372, %v75
  %v419 = vadd.f32 %v373, %v72
  %v420 = vadd.f32 %v373, %v75
  %v421 = vadd.f32 %v374, %v72
  %v422 = vadd.f32 %v374, %v75
  %v423 = vadd.f32 %v391, %v247
  %v424 = vadd.f32 %v392, %v250
  %v425 = vadd.f32 %v393, %v253
  %v426 = vadd.f32 %v394, %v256
  %v427 = vadd.f32 %v395, %v259
  %v428 = vadd.f32 %v396, %v262
  %v429 = vadd.f32 %v397, %v265
  %v430 = vadd.f32 %v398, %v268
  %v431 = vadd.f32 %v399, %v271
  %v432 = vadd.f32 %v400, %v274
  %v433 = vadd.f32 %v401, %v277
  %v434 = vadd.f32 %v402, %v280
  %v435 = vadd.f32 %v403, %v283
  %v436 = vadd.f32 %v404, %v286
  %v437 = vadd.f32 %v405, %v289
  %v438 = vadd.f32 %v406, %v292
  %v439 = vadd.f32 %v407, %v295
  %v440 = vadd.f32 %v408, %v298
  %v441 = vadd.f32 %v409, %v301
  %v442 = vadd.f32 %v410, %v304
  %v443 = vadd.f32 %v411, %v307
  %v444 = vadd.f32 %v412, %v310
  %v445 = vadd.f32 %v413, %v313
  %v446 = vadd.f32 %v414, %v316
  %v447 = vadd.f32 %v415, %v319
  %v448 = vadd.f32 %v416, %v322
  %v449 = vadd.f32 %v417, %v325
  %v450 = vadd.f32 %v418, %v328
  %v451 = vadd.f32 %v419, %v331
  %v452 = vadd.f32 %v420, %v334
  %v453 = vadd.f32 %v421, %v337
  %v454 = vadd.f32 %v422, %v340
  %vm455 = vcmp.gt.f32.partialorder %v423, 0.0
  %vm456 = vcmp.gt.f32.partialorder %v424, 0.0
  %vm457 = vcmp.gt.f32.partialorder %v425, 0.0
  %vm458 = vcmp.gt.f32.partialorder %v426, 0.0
  %vm459 = vcmp.gt.f32.partialorder %v427, 0.0
  %vm460 = vcmp.gt.f32.partialorder %v428, 0.0
  %vm461 = vcmp.gt.f32.partialorder %v429, 0.0
  %vm462 = vcmp.gt.f32.partialorder %v430, 0.0
  %vm463 = vcmp.gt.f32.partialorder %v431, 0.0
  %vm464 = vcmp.gt.f32.partialorder %v432, 0.0
  %vm465 = vcmp.gt.f32.partialorder %v433, 0.0
  %vm466 = vcmp.gt.f32.partialorder %v434, 0.0
  %vm467 = vcmp.gt.f32.partialorder %v435, 0.0
  %vm468 = vcmp.gt.f32.partialorder %v436, 0.0
  %vm469 = vcmp.gt.f32.partialorder %v437, 0.0
  %vm470 = vcmp.gt.f32.partialorder %v438, 0.0
  %vm471 = vcmp.gt.f32.partialorder %v439, 0.0
  %vm472 = vcmp.gt.f32.partialorder %v440, 0.0
  %vm473 = vcmp.gt.f32.partialorder %v441, 0.0
  %vm474 = vcmp.gt.f32.partialorder %v442, 0.0
  %vm475 = vcmp.gt.f32.partialorder %v443, 0.0
  %vm476 = vcmp.gt.f32.partialorder %v444, 0.0
  %vm477 = vcmp.gt.f32.partialorder %v445, 0.0
  %vm478 = vcmp.gt.f32.partialorder %v446, 0.0
  %vm479 = vcmp.gt.f32.partialorder %v447, 0.0
  %vm480 = vcmp.gt.f32.partialorder %v448, 0.0
  %vm481 = vcmp.gt.f32.partialorder %v449, 0.0
  %vm482 = vcmp.gt.f32.partialorder %v450, 0.0
  %vm483 = vcmp.gt.f32.partialorder %v451, 0.0
  %vm484 = vcmp.gt.f32.partialorder %v452, 0.0
  %vm485 = vcmp.gt.f32.partialorder %v453, 0.0
  %vm486 = vcmp.gt.f32.partialorder %v454, 0.0
  %v487 = vmul.f32 %v423, 0.2
  %v488 = vmul.f32 %v424, 0.2
  %v489 = vmul.f32 %v425, 0.2
  %v490 = vmul.f32 %v426, 0.2
  %v491 = vmul.f32 %v427, 0.2
  %v492 = vmul.f32 %v428, 0.2
  %v493 = vmul.f32 %v429, 0.2
  %v494 = vmul.f32 %v430, 0.2
  %v495 = vmul.f32 %v431, 0.2
  %v496 = vmul.f32 %v432, 0.2
  %v497 = vmul.f32 %v433, 0.2
  %v498 = vmul.f32 %v434, 0.2
  %v499 = vmul.f32 %v435, 0.2
  %v500 = vmul.f32 %v436, 0.2
  %v501 = vmul.f32 %v437, 0.2
  %v502 = vmul.f32 %v438, 0.2
  %v503 = vmul.f32 %v439, 0.2
  %v504 = vmul.f32 %v440, 0.2
  %v505 = vmul.f32 %v441, 0.2
  %v506 = vmul.f32 %v442, 0.2
  %v507 = vmul.f32 %v443, 0.2
  %v508 = vmul.f32 %v444, 0.2
  %v509 = vmul.f32 %v445, 0.2
  %v510 = vmul.f32 %v446, 0.2
  %v511 = vmul.f32 %v447, 0.2
  %v512 = vmul.f32 %v448, 0.2
  %v513 = vmul.f32 %v449, 0.2
  %v514 = vmul.f32 %v450, 0.2
  %v515 = vmul.f32 %v451, 0.2
  %v516 = vmul.f32 %v452, 0.2
  %v517 = vmul.f32 %v453, 0.2
  %v518 = vmul.f32 %v454, 0.2
  %v519 = vsel %vm455, %v423, %v487
  %v520 = vsel %vm456, %v424, %v488
  %v521 = vsel %vm457, %v425, %v489
  %v522 = vsel %vm458, %v426, %v490
  %v523 = vsel %vm459, %v427, %v491
  %v524 = vsel %vm460, %v428, %v492
  %v525 = vsel %vm461, %v429, %v493
  %v526 = vsel %vm462, %v430, %v494
  %v527 = vsel %vm463, %v431, %v495
  %v528 = vsel %vm464, %v432, %v496
  %v529 = vsel %vm465, %v433, %v497
  %v530 = vsel %vm466, %v434, %v498
  %v531 = vsel %vm467, %v435, %v499
  %v532 = vsel %vm468, %v436, %v500
  %v533 = vsel %vm469, %v437, %v501
  %v534 = vsel %vm470, %v438, %v502
  %v535 = vsel %vm471, %v439, %v503
  %v536 = vsel %vm472, %v440, %v504
  %v537 = vsel %vm473, %v441, %v505
  %v538 = vsel %vm474, %v442, %v506
  %v539 = vsel %vm475, %v443, %v507
  %v540 = vsel %vm476, %v444, %v508
  %v541 = vsel %vm477, %v445, %v509
  %v542 = vsel %vm478, %v446, %v510
  %v543 = vsel %vm479, %v447, %v511
  %v544 = vsel %vm480, %v448, %v512
  %v545 = vsel %vm481, %v449, %v513
  %v546 = vsel %vm482, %v450, %v514
  %v547 = vsel %vm483, %v451, %v515
  %v548 = vsel %vm484, %v452, %v516
  %v549 = vsel %vm485, %v453, %v517
  %v550 = vsel %vm486, %v454, %v518
  %v551 = vperm.slane %v342, 0
  %v552 = vmul.f32 %v519, %v551
  %v553 = vmul.f32 %v520, %v551
  %v554 = vmul.f32 %v521, %v551
  %v555 = vmul.f32 %v522, %v551
  %v556 = vmul.f32 %v523, %v551
  %v557 = vmul.f32 %v524, %v551
  %v558 = vmul.f32 %v525, %v551
  %v559 = vmul.f32 %v526, %v551
  %v560 = vmul.f32 %v527, %v551
  %v561 = vmul.f32 %v528, %v551
  %v562 = vmul.f32 %v529, %v551
  %v563 = vmul.f32 %v530, %v551
  %v564 = vmul.f32 %v531, %v551
  %v565 = vmul.f32 %v532, %v551
  %v566 = vmul.f32 %v533, %v551
  %v567 = vmul.f32 %v534, %v551
  %v568 = vmul.f32 %v535, %v551
  %v569 = vmul.f32 %v536, %v551
  %v570 = vmul.f32 %v537, %v551
  %v571 = vmul.f32 %v538, %v551
  %v572 = vmul.f32 %v539, %v551
  %v573 = vmul.f32 %v540, %v551
  %v574 = vmul.f32 %v541, %v551
  %v575 = vmul.f32 %v542, %v551
  %v576 = vmul.f32 %v543, %v551
  %v577 = vmul.f32 %v544, %v551
  %v578 = vmul.f32 %v545, %v551
  %v579 = vmul.f32 %v546, %v551
  %v580 = vmul.f32 %v547, %v551
  %v581 = vmul.f32 %v548, %v551
  %v582 = vmul.f32 %v549, %v551
  %v583 = vmul.f32 %v550, %v551
  %vm584 = vcmask 261120
  %v585 = vsel %vm584, %v552, 0.0
  %586 = vadd.xlane.f32.xlu0 %v585
  %v587 = vpop.xlane.xlu0 %586
  %v588 = vsel %vm584, %v553, 0.0
  %589 = vadd.xlane.f32.xlu0 %v588
  %v590 = vpop.xlane.xlu0 %589
  %v591 = vsel %vm584, %v554, 0.0
  %592 = vadd.xlane.f32.xlu0 %v591
  %v593 = vpop.xlane.xlu0 %592
  %v594 = vsel %vm584, %v555, 0.0
  %595 = vadd.xlane.f32.xlu0 %v594
  %v596 = vpop.xlane.xlu0 %595
  %v597 = vsel %vm584, %v556, 0.0
  %598 = vadd.xlane.f32.xlu0 %v597
  %v599 = vpop.xlane.xlu0 %598
  %v600 = vsel %vm584, %v557, 0.0
  %601 = vadd.xlane.f32.xlu0 %v600
  %v602 = vpop.xlane.xlu0 %601
  %v603 = vsel %vm584, %v558, 0.0
  %604 = vadd.xlane.f32.xlu0 %v603
  %v605 = vpop.xlane.xlu0 %604
  %v606 = vsel %vm584, %v559, 0.0
  %607 = vadd.xlane.f32.xlu0 %v606
  %v608 = vpop.xlane.xlu0 %607
  %v609 = vsel %vm584, %v560, 0.0
  %610 = vadd.xlane.f32.xlu0 %v609
  %v611 = vpop.xlane.xlu0 %610
  %v612 = vsel %vm584, %v561, 0.0
  %613 = vadd.xlane.f32.xlu0 %v612
  %v614 = vpop.xlane.xlu0 %613
  %v615 = vsel %vm584, %v562, 0.0
  %616 = vadd.xlane.f32.xlu0 %v615
  %v617 = vpop.xlane.xlu0 %616
  %v618 = vsel %vm584, %v563, 0.0
  %619 = vadd.xlane.f32.xlu0 %v618
  %v620 = vpop.xlane.xlu0 %619
  %v621 = vsel %vm584, %v564, 0.0
  %622 = vadd.xlane.f32.xlu0 %v621
  %v623 = vpop.xlane.xlu0 %622
  %v624 = vsel %vm584, %v565, 0.0
  %625 = vadd.xlane.f32.xlu0 %v624
  %v626 = vpop.xlane.xlu0 %625
  %v627 = vsel %vm584, %v566, 0.0
  %628 = vadd.xlane.f32.xlu0 %v627
  %v629 = vpop.xlane.xlu0 %628
  %v630 = vsel %vm584, %v567, 0.0
  %631 = vadd.xlane.f32.xlu0 %v630
  %v632 = vpop.xlane.xlu0 %631
  %v633 = vsel %vm584, %v568, 0.0
  %634 = vadd.xlane.f32.xlu0 %v633
  %v635 = vpop.xlane.xlu0 %634
  %v636 = vsel %vm584, %v569, 0.0
  %637 = vadd.xlane.f32.xlu0 %v636
  %v638 = vpop.xlane.xlu0 %637
  %v639 = vsel %vm584, %v570, 0.0
  %640 = vadd.xlane.f32.xlu0 %v639
  %v641 = vpop.xlane.xlu0 %640
  %v642 = vsel %vm584, %v571, 0.0
  %643 = vadd.xlane.f32.xlu0 %v642
  %v644 = vpop.xlane.xlu0 %643
  %v645 = vsel %vm584, %v572, 0.0
  %646 = vadd.xlane.f32.xlu0 %v645
  %v647 = vpop.xlane.xlu0 %646
  %v648 = vsel %vm584, %v573, 0.0
  %649 = vadd.xlane.f32.xlu0 %v648
  %v650 = vpop.xlane.xlu0 %649
  %v651 = vsel %vm584, %v574, 0.0
  %652 = vadd.xlane.f32.xlu0 %v651
  %v653 = vpop.xlane.xlu0 %652
  %v654 = vsel %vm584, %v575, 0.0
  %655 = vadd.xlane.f32.xlu0 %v654
  %v656 = vpop.xlane.xlu0 %655
  %v657 = vsel %vm584, %v576, 0.0
  %658 = vadd.xlane.f32.xlu0 %v657
  %v659 = vpop.xlane.xlu0 %658
  %v660 = vsel %vm584, %v577, 0.0
  %661 = vadd.xlane.f32.xlu0 %v660
  %v662 = vpop.xlane.xlu0 %661
  %v663 = vsel %vm584, %v578, 0.0
  %664 = vadd.xlane.f32.xlu0 %v663
  %v665 = vpop.xlane.xlu0 %664
  %v666 = vsel %vm584, %v579, 0.0
  %667 = vadd.xlane.f32.xlu0 %v666
  %v668 = vpop.xlane.xlu0 %667
  %v669 = vsel %vm584, %v580, 0.0
  %670 = vadd.xlane.f32.xlu0 %v669
  %v671 = vpop.xlane.xlu0 %670
  %v672 = vsel %vm584, %v581, 0.0
  %673 = vadd.xlane.f32.xlu0 %v672
  %v674 = vpop.xlane.xlu0 %673
  %v675 = vsel %vm584, %v582, 0.0
  %676 = vadd.xlane.f32.xlu0 %v675
  %v677 = vpop.xlane.xlu0 %676
  %v678 = vsel %vm584, %v583, 0.0
  %679 = vadd.xlane.f32.xlu0 %v678
  %v680 = vpop.xlane.xlu0 %679
  %vm681 = vcmp.gt.f32.partialorder %v37, 0.0
  %vm682 = vcmp.gt.f32.partialorder %v38, 0.0
  %v715 = vlaneseq
  %v716 = vand.u32 %v715, 127
  %v717 = vperm.slane %v587, %v716
  %v718 = vadd.s32 %v716, 4294967288
  %v719 = vperm.slane %v590, %v718
  %vm720 = vcmask 130112
  %v721 = vsel %vm720, %v719, %v717
  %v722 = vperm.slane %v593, %v716
  %v723 = vperm.slane %v596, %v718
  %v724 = vsel %vm720, %v723, %v722
  %v725 = vperm.slane %v599, %v716
  %v726 = vperm.slane %v602, %v718
  %v727 = vsel %vm720, %v726, %v725
  %v728 = vperm.slane %v605, %v716
  %v729 = vperm.slane %v608, %v718
  %v730 = vsel %vm720, %v729, %v728
  %v731 = vperm.slane %v611, %v716
  %v732 = vperm.slane %v614, %v718
  %v733 = vsel %vm720, %v732, %v731
  %v734 = vperm.slane %v617, %v716
  %v735 = vperm.slane %v620, %v718
  %v736 = vsel %vm720, %v735, %v734
  %v737 = vperm.slane %v623, %v716
  %v738 = vperm.slane %v626, %v718
  %v739 = vsel %vm720, %v738, %v737
  %v740 = vperm.slane %v629, %v716
  %v741 = vperm.slane %v632, %v718
  %v742 = vsel %vm720, %v741, %v740
  %v743 = vperm.slane %v635, %v716
  %v744 = vperm.slane %v638, %v718
  %v745 = vsel %vm720, %v744, %v743
  %v746 = vperm.slane %v641, %v716
  %v747 = vperm.slane %v644, %v718
  %v748 = vsel %vm720, %v747, %v746
  %v749 = vperm.slane %v647, %v716
  %v750 = vperm.slane %v650, %v718
  %v751 = vsel %vm720, %v750, %v749
  %v752 = vperm.slane %v653, %v716
  %v753 = vperm.slane %v656, %v718
  %v754 = vsel %vm720, %v753, %v752
  %v755 = vperm.slane %v659, %v716
  %v756 = vperm.slane %v662, %v718
  %v757 = vsel %vm720, %v756, %v755
  %v758 = vperm.slane %v665, %v716
  %v759 = vperm.slane %v668, %v718
  %v760 = vsel %vm720, %v759, %v758
  %v761 = vperm.slane %v671, %v716
  %v762 = vperm.slane %v674, %v718
  %v763 = vsel %vm720, %v762, %v761
  %v764 = vperm.slane %v677, %v716
  %v765 = vperm.slane %v680, %v718
  %v766 = vsel %vm720, %v765, %v764
  %vm767 = vcmask 1041409
  %v768 = vsel %vm767, %v724, %v721
  %vm769 = vcmask 1042434
  %v770 = vsel %vm769, %v727, %v768
  %vm771 = vcmask 1043459
  %v772 = vsel %vm771, %v730, %v770
  %vm773 = vcmask 1044484
  %v774 = vsel %vm773, %v733, %v772
  %vm775 = vcmask 1045509
  %v776 = vsel %vm775, %v736, %v774
  %vm777 = vcmask 1046534
  %v778 = vsel %vm777, %v739, %v776
  %vm779 = vcmask 1047559
  %v780 = vsel %vm779, %v742, %v778
  %v781 = vsel %vm767, %v748, %v745
  %v782 = vsel %vm769, %v751, %v781
  %v783 = vsel %vm771, %v754, %v782
  %v784 = vsel %vm773, %v757, %v783
  %v785 = vsel %vm775, %v760, %v784
  %v786 = vsel %vm777, %v763, %v785
  %v787 = vsel %vm779, %v766, %v786
  %v790 = vsel %vm681, %v780, -1e+30
  %v791 = vsel %vm682, %v787, -1e+30
  %vm792 = vcmask 130048
  %v793 = vsel %vm792, %v790, -inf
  %794 = vmax.xlane.f32.xlu0 %v793
  %v795 = vpop.xlane.xlu0 %794
  %v796 = vsel %vm792, %v791, -inf
  %797 = vmax.xlane.f32.xlu0 %v796
  %v798 = vpop.xlane.xlu0 %797
  %v799 = vsub.f32 %v790, %v795
  %v800 = vsub.f32 %v791, %v798
  %v801 = vmul.f32 %v799, 1.442695
  %v802 = vpow.pop %v801
  %v803 = vmul.f32 %v800, 1.442695
  %v804 = vpow.pop %v803
  %v805 = vmul.f32 %v802, %v37
  %v806 = vmul.f32 %v804, %v38
  %v807 = vsel %vm792, %v805, 0.0
  %808 = vadd.xlane.f32.xlu0 %v807
  %v809 = vpop.xlane.xlu0 %808
  %v810 = vsel %vm792, %v806, 0.0
  %811 = vadd.xlane.f32.xlu0 %v810
  %v812 = vpop.xlane.xlu0 %811
  %v813 = vmax.f32 %v809, 1e-20
  %v814 = vmax.f32 %v812, 1e-20
  %v815 = vrcp.pop %v813
  %v816 = vmul.f32 %v813, %v815
  %v817 = vsub.f32 1.0, %v816
  %v818 = vmul.f32 %v815, %v817
  %v819 = vadd.f32 %v815, %v818
  %vm820 = vweird.f32 %v813
  %vm821 = vweird.f32 %v815
  %vm822 = vmor %vm820, %vm821
  %v823 = vsel %vm822, %v815, %v819
  %v824 = vand.u32 2147483647, %v813
  %vm825 = vcmp.eq.f32.partialorder %v824, 8.507059e+37
  %v826 = vand.u32 %v813, 2147483648
  %v827 = vor.u32 1.1754944e-38, %v826
  %v828 = vsel %vm825, %v827, %v823
  %v829 = vmul.f32 %v805, %v828
  %v830 = vrcp.pop %v814
  %v831 = vmul.f32 %v814, %v830
  %v832 = vsub.f32 1.0, %v831
  %v833 = vmul.f32 %v830, %v832
  %v834 = vadd.f32 %v830, %v833
  %vm835 = vweird.f32 %v814
  %vm836 = vweird.f32 %v830
  %vm837 = vmor %vm835, %vm836
  %v838 = vsel %vm837, %v830, %v834
  %v839 = vand.u32 2147483647, %v814
  %vm840 = vcmp.eq.f32.partialorder %v839, 8.507059e+37
  %v841 = vand.u32 %v814, 2147483648
  %v842 = vor.u32 1.1754944e-38, %v841
  %v843 = vsel %vm840, %v842, %v838
  %v844 = vmul.f32 %v806, %v843
  %v846 = vsel %vm792, %v829, 0
  %v849 = vsel %vm792, %v844, 0
  %851 = vmatpush.msra.mxu0 0.0
  %852 = vmatpush.msra.mxu0 0.0
  %853 = vmatpush.msra.mxu0 0.0
  %854 = vmatpush.msra.mxu0 0.0
  %855 = vmatpush.msra.mxu0 0.0
  %856 = vmatpush.msra.mxu0 0.0
  %857 = vmatpush.msra.mxu0 0.0
  %858 = vmatpush.msra.mxu0 0.0
  %859 = vmatpush.msra.mxu0 0.0
  %860 = vmatpush.msra.mxu0 0.0
  %861 = vmatpush.msra.mxu0 0.0
  %862 = vmatpush.msra.mxu0 0.0
  %863 = vmatpush.msra.mxu0 0.0
  %864 = vmatpush.msra.mxu0 0.0
  %865 = vmatpush.msra.mxu0 %v75
  %866 = vmatpush.msra.mxu0 %v72
  %867 = vmatmul.f32.gmra.mxu0 %v846
  %v868 = vpop.f32.mrf.mxu0
  %v869 = vadd.f32 0.0, %v868
  %870 = vmatmul.f32.gmra.mxu0 %v849
  %v871 = vpop.f32.mrf.mxu0
  %v872 = vadd.f32 0.0, %v871
  %873 = vdwg.mxu0
  %v874 = vperm.slane %v342, 1
  %876 = vrot.lane.b32.xlu0 %v874, 32
  %v877 = vpop.permute.xlu0 %876
  %v879 = vmul.f32 %v519, %v877
  %v880 = vmul.f32 %v520, %v877
  %v881 = vmul.f32 %v521, %v877
  %v882 = vmul.f32 %v522, %v877
  %v883 = vmul.f32 %v523, %v877
  %v884 = vmul.f32 %v524, %v877
  %v885 = vmul.f32 %v525, %v877
  %v886 = vmul.f32 %v526, %v877
  %v887 = vmul.f32 %v527, %v877
  %v888 = vmul.f32 %v528, %v877
  %v889 = vmul.f32 %v529, %v877
  %v890 = vmul.f32 %v530, %v877
  %v891 = vmul.f32 %v531, %v877
  %v892 = vmul.f32 %v532, %v877
  %v893 = vmul.f32 %v533, %v877
  %v894 = vmul.f32 %v534, %v877
  %v895 = vmul.f32 %v535, %v877
  %v896 = vmul.f32 %v536, %v877
  %v897 = vmul.f32 %v537, %v877
  %v898 = vmul.f32 %v538, %v877
  %v899 = vmul.f32 %v539, %v877
  %v900 = vmul.f32 %v540, %v877
  %v901 = vmul.f32 %v541, %v877
  %v902 = vmul.f32 %v542, %v877
  %v903 = vmul.f32 %v543, %v877
  %v904 = vmul.f32 %v544, %v877
  %v905 = vmul.f32 %v545, %v877
  %v906 = vmul.f32 %v546, %v877
  %v907 = vmul.f32 %v547, %v877
  %v908 = vmul.f32 %v548, %v877
  %v909 = vmul.f32 %v549, %v877
  %v910 = vmul.f32 %v550, %v877
  %943 = vrot.lane.b32.xlu0 %v879, 96
  %v944 = vpop.permute.xlu0 %943
  %945 = vrot.lane.b32.xlu0 %v880, 96
  %v946 = vpop.permute.xlu0 %945
  %947 = vrot.lane.b32.xlu0 %v881, 96
  %v948 = vpop.permute.xlu0 %947
  %949 = vrot.lane.b32.xlu0 %v882, 96
  %v950 = vpop.permute.xlu0 %949
  %951 = vrot.lane.b32.xlu0 %v883, 96
  %v952 = vpop.permute.xlu0 %951
  %953 = vrot.lane.b32.xlu0 %v884, 96
  %v954 = vpop.permute.xlu0 %953
  %955 = vrot.lane.b32.xlu0 %v885, 96
  %v956 = vpop.permute.xlu0 %955
  %957 = vrot.lane.b32.xlu0 %v886, 96
  %v958 = vpop.permute.xlu0 %957
  %959 = vrot.lane.b32.xlu0 %v887, 96
  %v960 = vpop.permute.xlu0 %959
  %961 = vrot.lane.b32.xlu0 %v888, 96
  %v962 = vpop.permute.xlu0 %961
  %963 = vrot.lane.b32.xlu0 %v889, 96
  %v964 = vpop.permute.xlu0 %963
  %965 = vrot.lane.b32.xlu0 %v890, 96
  %v966 = vpop.permute.xlu0 %965
  %967 = vrot.lane.b32.xlu0 %v891, 96
  %v968 = vpop.permute.xlu0 %967
  %969 = vrot.lane.b32.xlu0 %v892, 96
  %v970 = vpop.permute.xlu0 %969
  %971 = vrot.lane.b32.xlu0 %v893, 96
  %v972 = vpop.permute.xlu0 %971
  %973 = vrot.lane.b32.xlu0 %v894, 96
  %v974 = vpop.permute.xlu0 %973
  %975 = vrot.lane.b32.xlu0 %v895, 96
  %v976 = vpop.permute.xlu0 %975
  %977 = vrot.lane.b32.xlu0 %v896, 96
  %v978 = vpop.permute.xlu0 %977
  %979 = vrot.lane.b32.xlu0 %v897, 96
  %v980 = vpop.permute.xlu0 %979
  %981 = vrot.lane.b32.xlu0 %v898, 96
  %v982 = vpop.permute.xlu0 %981
  %983 = vrot.lane.b32.xlu0 %v899, 96
  %v984 = vpop.permute.xlu0 %983
  %985 = vrot.lane.b32.xlu0 %v900, 96
  %v986 = vpop.permute.xlu0 %985
  %987 = vrot.lane.b32.xlu0 %v901, 96
  %v988 = vpop.permute.xlu0 %987
  %989 = vrot.lane.b32.xlu0 %v902, 96
  %v990 = vpop.permute.xlu0 %989
  %991 = vrot.lane.b32.xlu0 %v903, 96
  %v992 = vpop.permute.xlu0 %991
  %993 = vrot.lane.b32.xlu0 %v904, 96
  %v994 = vpop.permute.xlu0 %993
  %995 = vrot.lane.b32.xlu0 %v905, 96
  %v996 = vpop.permute.xlu0 %995
  %997 = vrot.lane.b32.xlu0 %v906, 96
  %v998 = vpop.permute.xlu0 %997
  %999 = vrot.lane.b32.xlu0 %v907, 96
  %v1000 = vpop.permute.xlu0 %999
  %1001 = vrot.lane.b32.xlu0 %v908, 96
  %v1002 = vpop.permute.xlu0 %1001
  %1003 = vrot.lane.b32.xlu0 %v909, 96
  %v1004 = vpop.permute.xlu0 %1003
  %1005 = vrot.lane.b32.xlu0 %v910, 96
  %v1006 = vpop.permute.xlu0 %1005
  %v1039 = vsel %vm584, %v944, 0.0
  %1040 = vadd.xlane.f32.xlu0 %v1039
  %v1041 = vpop.xlane.xlu0 %1040
  %v1042 = vsel %vm584, %v946, 0.0
  %1043 = vadd.xlane.f32.xlu0 %v1042
  %v1044 = vpop.xlane.xlu0 %1043
  %v1045 = vsel %vm584, %v948, 0.0
  %1046 = vadd.xlane.f32.xlu0 %v1045
  %v1047 = vpop.xlane.xlu0 %1046
  %v1048 = vsel %vm584, %v950, 0.0
  %1049 = vadd.xlane.f32.xlu0 %v1048
  %v1050 = vpop.xlane.xlu0 %1049
  %v1051 = vsel %vm584, %v952, 0.0
  %1052 = vadd.xlane.f32.xlu0 %v1051
  %v1053 = vpop.xlane.xlu0 %1052
  %v1054 = vsel %vm584, %v954, 0.0
  %1055 = vadd.xlane.f32.xlu0 %v1054
  %v1056 = vpop.xlane.xlu0 %1055
  %v1057 = vsel %vm584, %v956, 0.0
  %1058 = vadd.xlane.f32.xlu0 %v1057
  %v1059 = vpop.xlane.xlu0 %1058
  %v1060 = vsel %vm584, %v958, 0.0
  %1061 = vadd.xlane.f32.xlu0 %v1060
  %v1062 = vpop.xlane.xlu0 %1061
  %v1063 = vsel %vm584, %v960, 0.0
  %1064 = vadd.xlane.f32.xlu0 %v1063
  %v1065 = vpop.xlane.xlu0 %1064
  %v1066 = vsel %vm584, %v962, 0.0
  %1067 = vadd.xlane.f32.xlu0 %v1066
  %v1068 = vpop.xlane.xlu0 %1067
  %v1069 = vsel %vm584, %v964, 0.0
  %1070 = vadd.xlane.f32.xlu0 %v1069
  %v1071 = vpop.xlane.xlu0 %1070
  %v1072 = vsel %vm584, %v966, 0.0
  %1073 = vadd.xlane.f32.xlu0 %v1072
  %v1074 = vpop.xlane.xlu0 %1073
  %v1075 = vsel %vm584, %v968, 0.0
  %1076 = vadd.xlane.f32.xlu0 %v1075
  %v1077 = vpop.xlane.xlu0 %1076
  %v1078 = vsel %vm584, %v970, 0.0
  %1079 = vadd.xlane.f32.xlu0 %v1078
  %v1080 = vpop.xlane.xlu0 %1079
  %v1081 = vsel %vm584, %v972, 0.0
  %1082 = vadd.xlane.f32.xlu0 %v1081
  %v1083 = vpop.xlane.xlu0 %1082
  %v1084 = vsel %vm584, %v974, 0.0
  %1085 = vadd.xlane.f32.xlu0 %v1084
  %v1086 = vpop.xlane.xlu0 %1085
  %v1087 = vsel %vm584, %v976, 0.0
  %1088 = vadd.xlane.f32.xlu0 %v1087
  %v1089 = vpop.xlane.xlu0 %1088
  %v1090 = vsel %vm584, %v978, 0.0
  %1091 = vadd.xlane.f32.xlu0 %v1090
  %v1092 = vpop.xlane.xlu0 %1091
  %v1093 = vsel %vm584, %v980, 0.0
  %1094 = vadd.xlane.f32.xlu0 %v1093
  %v1095 = vpop.xlane.xlu0 %1094
  %v1096 = vsel %vm584, %v982, 0.0
  %1097 = vadd.xlane.f32.xlu0 %v1096
  %v1098 = vpop.xlane.xlu0 %1097
  %v1099 = vsel %vm584, %v984, 0.0
  %1100 = vadd.xlane.f32.xlu0 %v1099
  %v1101 = vpop.xlane.xlu0 %1100
  %v1102 = vsel %vm584, %v986, 0.0
  %1103 = vadd.xlane.f32.xlu0 %v1102
  %v1104 = vpop.xlane.xlu0 %1103
  %v1105 = vsel %vm584, %v988, 0.0
  %1106 = vadd.xlane.f32.xlu0 %v1105
  %v1107 = vpop.xlane.xlu0 %1106
  %v1108 = vsel %vm584, %v990, 0.0
  %1109 = vadd.xlane.f32.xlu0 %v1108
  %v1110 = vpop.xlane.xlu0 %1109
  %v1111 = vsel %vm584, %v992, 0.0
  %1112 = vadd.xlane.f32.xlu0 %v1111
  %v1113 = vpop.xlane.xlu0 %1112
  %v1114 = vsel %vm584, %v994, 0.0
  %1115 = vadd.xlane.f32.xlu0 %v1114
  %v1116 = vpop.xlane.xlu0 %1115
  %v1117 = vsel %vm584, %v996, 0.0
  %1118 = vadd.xlane.f32.xlu0 %v1117
  %v1119 = vpop.xlane.xlu0 %1118
  %v1120 = vsel %vm584, %v998, 0.0
  %1121 = vadd.xlane.f32.xlu0 %v1120
  %v1122 = vpop.xlane.xlu0 %1121
  %v1123 = vsel %vm584, %v1000, 0.0
  %1124 = vadd.xlane.f32.xlu0 %v1123
  %v1125 = vpop.xlane.xlu0 %1124
  %v1126 = vsel %vm584, %v1002, 0.0
  %1127 = vadd.xlane.f32.xlu0 %v1126
  %v1128 = vpop.xlane.xlu0 %1127
  %v1129 = vsel %vm584, %v1004, 0.0
  %1130 = vadd.xlane.f32.xlu0 %v1129
  %v1131 = vpop.xlane.xlu0 %1130
  %v1132 = vsel %vm584, %v1006, 0.0
  %1133 = vadd.xlane.f32.xlu0 %v1132
  %v1134 = vpop.xlane.xlu0 %1133
  %v1167 = vperm.slane %v1041, %v716
  %v1168 = vperm.slane %v1044, %v718
  %v1169 = vsel %vm720, %v1168, %v1167
  %v1170 = vperm.slane %v1047, %v716
  %v1171 = vperm.slane %v1050, %v718
  %v1172 = vsel %vm720, %v1171, %v1170
  %v1173 = vperm.slane %v1053, %v716
  %v1174 = vperm.slane %v1056, %v718
  %v1175 = vsel %vm720, %v1174, %v1173
  %v1176 = vperm.slane %v1059, %v716
  %v1177 = vperm.slane %v1062, %v718
  %v1178 = vsel %vm720, %v1177, %v1176
  %v1179 = vperm.slane %v1065, %v716
  %v1180 = vperm.slane %v1068, %v718
  %v1181 = vsel %vm720, %v1180, %v1179
  %v1182 = vperm.slane %v1071, %v716
  %v1183 = vperm.slane %v1074, %v718
  %v1184 = vsel %vm720, %v1183, %v1182
  %v1185 = vperm.slane %v1077, %v716
  %v1186 = vperm.slane %v1080, %v718
  %v1187 = vsel %vm720, %v1186, %v1185
  %v1188 = vperm.slane %v1083, %v716
  %v1189 = vperm.slane %v1086, %v718
  %v1190 = vsel %vm720, %v1189, %v1188
  %v1191 = vperm.slane %v1089, %v716
  %v1192 = vperm.slane %v1092, %v718
  %v1193 = vsel %vm720, %v1192, %v1191
  %v1194 = vperm.slane %v1095, %v716
  %v1195 = vperm.slane %v1098, %v718
  %v1196 = vsel %vm720, %v1195, %v1194
  %v1197 = vperm.slane %v1101, %v716
  %v1198 = vperm.slane %v1104, %v718
  %v1199 = vsel %vm720, %v1198, %v1197
  %v1200 = vperm.slane %v1107, %v716
  %v1201 = vperm.slane %v1110, %v718
  %v1202 = vsel %vm720, %v1201, %v1200
  %v1203 = vperm.slane %v1113, %v716
  %v1204 = vperm.slane %v1116, %v718
  %v1205 = vsel %vm720, %v1204, %v1203
  %v1206 = vperm.slane %v1119, %v716
  %v1207 = vperm.slane %v1122, %v718
  %v1208 = vsel %vm720, %v1207, %v1206
  %v1209 = vperm.slane %v1125, %v716
  %v1210 = vperm.slane %v1128, %v718
  %v1211 = vsel %vm720, %v1210, %v1209
  %v1212 = vperm.slane %v1131, %v716
  %v1213 = vperm.slane %v1134, %v718
  %v1214 = vsel %vm720, %v1213, %v1212
  %v1215 = vsel %vm767, %v1172, %v1169
  %v1216 = vsel %vm769, %v1175, %v1215
  %v1217 = vsel %vm771, %v1178, %v1216
  %v1218 = vsel %vm773, %v1181, %v1217
  %v1219 = vsel %vm775, %v1184, %v1218
  %v1220 = vsel %vm777, %v1187, %v1219
  %v1221 = vsel %vm779, %v1190, %v1220
  %v1222 = vsel %vm767, %v1196, %v1193
  %v1223 = vsel %vm769, %v1199, %v1222
  %v1224 = vsel %vm771, %v1202, %v1223
  %v1225 = vsel %vm773, %v1205, %v1224
  %v1226 = vsel %vm775, %v1208, %v1225
  %v1227 = vsel %vm777, %v1211, %v1226
  %v1228 = vsel %vm779, %v1214, %v1227
  %v1231 = vsel %vm681, %v1221, -1e+30
  %v1232 = vsel %vm682, %v1228, -1e+30
  %v1233 = vsel %vm792, %v1231, -inf
  %1234 = vmax.xlane.f32.xlu0 %v1233
  %v1235 = vpop.xlane.xlu0 %1234
  %v1236 = vsel %vm792, %v1232, -inf
  %1237 = vmax.xlane.f32.xlu0 %v1236
  %v1238 = vpop.xlane.xlu0 %1237
  %v1239 = vsub.f32 %v1231, %v1235
  %v1240 = vsub.f32 %v1232, %v1238
  %v1241 = vmul.f32 %v1239, 1.442695
  %v1242 = vpow.pop %v1241
  %v1243 = vmul.f32 %v1240, 1.442695
  %v1244 = vpow.pop %v1243
  %v1245 = vmul.f32 %v1242, %v37
  %v1246 = vmul.f32 %v1244, %v38
  %v1247 = vsel %vm792, %v1245, 0.0
  %1248 = vadd.xlane.f32.xlu0 %v1247
  %v1249 = vpop.xlane.xlu0 %1248
  %v1250 = vsel %vm792, %v1246, 0.0
  %1251 = vadd.xlane.f32.xlu0 %v1250
  %v1252 = vpop.xlane.xlu0 %1251
  %v1253 = vmax.f32 %v1249, 1e-20
  %v1254 = vmax.f32 %v1252, 1e-20
  %v1255 = vrcp.pop %v1253
  %v1256 = vmul.f32 %v1253, %v1255
  %v1257 = vsub.f32 1.0, %v1256
  %v1258 = vmul.f32 %v1255, %v1257
  %v1259 = vadd.f32 %v1255, %v1258
  %vm1260 = vweird.f32 %v1253
  %vm1261 = vweird.f32 %v1255
  %vm1262 = vmor %vm1260, %vm1261
  %v1263 = vsel %vm1262, %v1255, %v1259
  %v1264 = vand.u32 2147483647, %v1253
  %vm1265 = vcmp.eq.f32.partialorder %v1264, 8.507059e+37
  %v1266 = vand.u32 %v1253, 2147483648
  %v1267 = vor.u32 1.1754944e-38, %v1266
  %v1268 = vsel %vm1265, %v1267, %v1263
  %v1269 = vmul.f32 %v1245, %v1268
  %v1270 = vrcp.pop %v1254
  %v1271 = vmul.f32 %v1254, %v1270
  %v1272 = vsub.f32 1.0, %v1271
  %v1273 = vmul.f32 %v1270, %v1272
  %v1274 = vadd.f32 %v1270, %v1273
  %vm1275 = vweird.f32 %v1254
  %vm1276 = vweird.f32 %v1270
  %vm1277 = vmor %vm1275, %vm1276
  %v1278 = vsel %vm1277, %v1270, %v1274
  %v1279 = vand.u32 2147483647, %v1254
  %vm1280 = vcmp.eq.f32.partialorder %v1279, 8.507059e+37
  %v1281 = vand.u32 %v1254, 2147483648
  %v1282 = vor.u32 1.1754944e-38, %v1281
  %v1283 = vsel %vm1280, %v1282, %v1278
  %v1284 = vmul.f32 %v1246, %v1283
  %1287 = vrot.lane.b32.xlu0 %v72, 96
  %v1288 = vpop.permute.xlu0 %1287
  %1289 = vrot.lane.b32.xlu0 %v75, 96
  %v1290 = vpop.permute.xlu0 %1289
  %v1294 = vsel %vm792, %v1269, 0
  %v1297 = vsel %vm792, %v1284, 0
  %1299 = vmatpush.msra.mxu0 0.0
  %1300 = vmatpush.msra.mxu0 0.0
  %1301 = vmatpush.msra.mxu0 0.0
  %1302 = vmatpush.msra.mxu0 0.0
  %1303 = vmatpush.msra.mxu0 0.0
  %1304 = vmatpush.msra.mxu0 0.0
  %1305 = vmatpush.msra.mxu0 0.0
  %1306 = vmatpush.msra.mxu0 0.0
  %1307 = vmatpush.msra.mxu0 0.0
  %1308 = vmatpush.msra.mxu0 0.0
  %1309 = vmatpush.msra.mxu0 0.0
  %1310 = vmatpush.msra.mxu0 0.0
  %1311 = vmatpush.msra.mxu0 0.0
  %1312 = vmatpush.msra.mxu0 0.0
  %1313 = vmatpush.msra.mxu0 %v1290
  %1314 = vmatpush.msra.mxu0 %v1288
  %1315 = vmatmul.f32.gmra.mxu0 %v1294
  %v1316 = vpop.f32.mrf.mxu0
  %v1317 = vadd.f32 0.0, %v1316
  %1318 = vmatmul.f32.gmra.mxu0 %v1297
  %v1319 = vpop.f32.mrf.mxu0
  %v1320 = vadd.f32 0.0, %v1319
  %1321 = vdwg.mxu0
  %v1322 = vperm.slane %v342, 2
  %1324 = vrot.lane.b32.xlu0 %v1322, 64
  %v1325 = vpop.permute.xlu0 %1324
  %v1327 = vmul.f32 %v519, %v1325
  %v1328 = vmul.f32 %v520, %v1325
  %v1329 = vmul.f32 %v521, %v1325
  %v1330 = vmul.f32 %v522, %v1325
  %v1331 = vmul.f32 %v523, %v1325
  %v1332 = vmul.f32 %v524, %v1325
  %v1333 = vmul.f32 %v525, %v1325
  %v1334 = vmul.f32 %v526, %v1325
  %v1335 = vmul.f32 %v527, %v1325
  %v1336 = vmul.f32 %v528, %v1325
  %v1337 = vmul.f32 %v529, %v1325
  %v1338 = vmul.f32 %v530, %v1325
  %v1339 = vmul.f32 %v531, %v1325
  %v1340 = vmul.f32 %v532, %v1325
  %v1341 = vmul.f32 %v533, %v1325
  %v1342 = vmul.f32 %v534, %v1325
  %v1343 = vmul.f32 %v535, %v1325
  %v1344 = vmul.f32 %v536, %v1325
  %v1345 = vmul.f32 %v537, %v1325
  %v1346 = vmul.f32 %v538, %v1325
  %v1347 = vmul.f32 %v539, %v1325
  %v1348 = vmul.f32 %v540, %v1325
  %v1349 = vmul.f32 %v541, %v1325
  %v1350 = vmul.f32 %v542, %v1325
  %v1351 = vmul.f32 %v543, %v1325
  %v1352 = vmul.f32 %v544, %v1325
  %v1353 = vmul.f32 %v545, %v1325
  %v1354 = vmul.f32 %v546, %v1325
  %v1355 = vmul.f32 %v547, %v1325
  %v1356 = vmul.f32 %v548, %v1325
  %v1357 = vmul.f32 %v549, %v1325
  %v1358 = vmul.f32 %v550, %v1325
  %1391 = vrot.lane.b32.xlu0 %v1327, 64
  %v1392 = vpop.permute.xlu0 %1391
  %1393 = vrot.lane.b32.xlu0 %v1328, 64
  %v1394 = vpop.permute.xlu0 %1393
  %1395 = vrot.lane.b32.xlu0 %v1329, 64
  %v1396 = vpop.permute.xlu0 %1395
  %1397 = vrot.lane.b32.xlu0 %v1330, 64
  %v1398 = vpop.permute.xlu0 %1397
  %1399 = vrot.lane.b32.xlu0 %v1331, 64
  %v1400 = vpop.permute.xlu0 %1399
  %1401 = vrot.lane.b32.xlu0 %v1332, 64
  %v1402 = vpop.permute.xlu0 %1401
  %1403 = vrot.lane.b32.xlu0 %v1333, 64
  %v1404 = vpop.permute.xlu0 %1403
  %1405 = vrot.lane.b32.xlu0 %v1334, 64
  %v1406 = vpop.permute.xlu0 %1405
  %1407 = vrot.lane.b32.xlu0 %v1335, 64
  %v1408 = vpop.permute.xlu0 %1407
  %1409 = vrot.lane.b32.xlu0 %v1336, 64
  %v1410 = vpop.permute.xlu0 %1409
  %1411 = vrot.lane.b32.xlu0 %v1337, 64
  %v1412 = vpop.permute.xlu0 %1411
  %1413 = vrot.lane.b32.xlu0 %v1338, 64
  %v1414 = vpop.permute.xlu0 %1413
  %1415 = vrot.lane.b32.xlu0 %v1339, 64
  %v1416 = vpop.permute.xlu0 %1415
  %1417 = vrot.lane.b32.xlu0 %v1340, 64
  %v1418 = vpop.permute.xlu0 %1417
  %1419 = vrot.lane.b32.xlu0 %v1341, 64
  %v1420 = vpop.permute.xlu0 %1419
  %1421 = vrot.lane.b32.xlu0 %v1342, 64
  %v1422 = vpop.permute.xlu0 %1421
  %1423 = vrot.lane.b32.xlu0 %v1343, 64
  %v1424 = vpop.permute.xlu0 %1423
  %1425 = vrot.lane.b32.xlu0 %v1344, 64
  %v1426 = vpop.permute.xlu0 %1425
  %1427 = vrot.lane.b32.xlu0 %v1345, 64
  %v1428 = vpop.permute.xlu0 %1427
  %1429 = vrot.lane.b32.xlu0 %v1346, 64
  %v1430 = vpop.permute.xlu0 %1429
  %1431 = vrot.lane.b32.xlu0 %v1347, 64
  %v1432 = vpop.permute.xlu0 %1431
  %1433 = vrot.lane.b32.xlu0 %v1348, 64
  %v1434 = vpop.permute.xlu0 %1433
  %1435 = vrot.lane.b32.xlu0 %v1349, 64
  %v1436 = vpop.permute.xlu0 %1435
  %1437 = vrot.lane.b32.xlu0 %v1350, 64
  %v1438 = vpop.permute.xlu0 %1437
  %1439 = vrot.lane.b32.xlu0 %v1351, 64
  %v1440 = vpop.permute.xlu0 %1439
  %1441 = vrot.lane.b32.xlu0 %v1352, 64
  %v1442 = vpop.permute.xlu0 %1441
  %1443 = vrot.lane.b32.xlu0 %v1353, 64
  %v1444 = vpop.permute.xlu0 %1443
  %1445 = vrot.lane.b32.xlu0 %v1354, 64
  %v1446 = vpop.permute.xlu0 %1445
  %1447 = vrot.lane.b32.xlu0 %v1355, 64
  %v1448 = vpop.permute.xlu0 %1447
  %1449 = vrot.lane.b32.xlu0 %v1356, 64
  %v1450 = vpop.permute.xlu0 %1449
  %1451 = vrot.lane.b32.xlu0 %v1357, 64
  %v1452 = vpop.permute.xlu0 %1451
  %1453 = vrot.lane.b32.xlu0 %v1358, 64
  %v1454 = vpop.permute.xlu0 %1453
  %v1487 = vsel %vm584, %v1392, 0.0
  %1488 = vadd.xlane.f32.xlu0 %v1487
  %v1489 = vpop.xlane.xlu0 %1488
  %v1490 = vsel %vm584, %v1394, 0.0
  %1491 = vadd.xlane.f32.xlu0 %v1490
  %v1492 = vpop.xlane.xlu0 %1491
  %v1493 = vsel %vm584, %v1396, 0.0
  %1494 = vadd.xlane.f32.xlu0 %v1493
  %v1495 = vpop.xlane.xlu0 %1494
  %v1496 = vsel %vm584, %v1398, 0.0
  %1497 = vadd.xlane.f32.xlu0 %v1496
  %v1498 = vpop.xlane.xlu0 %1497
  %v1499 = vsel %vm584, %v1400, 0.0
  %1500 = vadd.xlane.f32.xlu0 %v1499
  %v1501 = vpop.xlane.xlu0 %1500
  %v1502 = vsel %vm584, %v1402, 0.0
  %1503 = vadd.xlane.f32.xlu0 %v1502
  %v1504 = vpop.xlane.xlu0 %1503
  %v1505 = vsel %vm584, %v1404, 0.0
  %1506 = vadd.xlane.f32.xlu0 %v1505
  %v1507 = vpop.xlane.xlu0 %1506
  %v1508 = vsel %vm584, %v1406, 0.0
  %1509 = vadd.xlane.f32.xlu0 %v1508
  %v1510 = vpop.xlane.xlu0 %1509
  %v1511 = vsel %vm584, %v1408, 0.0
  %1512 = vadd.xlane.f32.xlu0 %v1511
  %v1513 = vpop.xlane.xlu0 %1512
  %v1514 = vsel %vm584, %v1410, 0.0
  %1515 = vadd.xlane.f32.xlu0 %v1514
  %v1516 = vpop.xlane.xlu0 %1515
  %v1517 = vsel %vm584, %v1412, 0.0
  %1518 = vadd.xlane.f32.xlu0 %v1517
  %v1519 = vpop.xlane.xlu0 %1518
  %v1520 = vsel %vm584, %v1414, 0.0
  %1521 = vadd.xlane.f32.xlu0 %v1520
  %v1522 = vpop.xlane.xlu0 %1521
  %v1523 = vsel %vm584, %v1416, 0.0
  %1524 = vadd.xlane.f32.xlu0 %v1523
  %v1525 = vpop.xlane.xlu0 %1524
  %v1526 = vsel %vm584, %v1418, 0.0
  %1527 = vadd.xlane.f32.xlu0 %v1526
  %v1528 = vpop.xlane.xlu0 %1527
  %v1529 = vsel %vm584, %v1420, 0.0
  %1530 = vadd.xlane.f32.xlu0 %v1529
  %v1531 = vpop.xlane.xlu0 %1530
  %v1532 = vsel %vm584, %v1422, 0.0
  %1533 = vadd.xlane.f32.xlu0 %v1532
  %v1534 = vpop.xlane.xlu0 %1533
  %v1535 = vsel %vm584, %v1424, 0.0
  %1536 = vadd.xlane.f32.xlu0 %v1535
  %v1537 = vpop.xlane.xlu0 %1536
  %v1538 = vsel %vm584, %v1426, 0.0
  %1539 = vadd.xlane.f32.xlu0 %v1538
  %v1540 = vpop.xlane.xlu0 %1539
  %v1541 = vsel %vm584, %v1428, 0.0
  %1542 = vadd.xlane.f32.xlu0 %v1541
  %v1543 = vpop.xlane.xlu0 %1542
  %v1544 = vsel %vm584, %v1430, 0.0
  %1545 = vadd.xlane.f32.xlu0 %v1544
  %v1546 = vpop.xlane.xlu0 %1545
  %v1547 = vsel %vm584, %v1432, 0.0
  %1548 = vadd.xlane.f32.xlu0 %v1547
  %v1549 = vpop.xlane.xlu0 %1548
  %v1550 = vsel %vm584, %v1434, 0.0
  %1551 = vadd.xlane.f32.xlu0 %v1550
  %v1552 = vpop.xlane.xlu0 %1551
  %v1553 = vsel %vm584, %v1436, 0.0
  %1554 = vadd.xlane.f32.xlu0 %v1553
  %v1555 = vpop.xlane.xlu0 %1554
  %v1556 = vsel %vm584, %v1438, 0.0
  %1557 = vadd.xlane.f32.xlu0 %v1556
  %v1558 = vpop.xlane.xlu0 %1557
  %v1559 = vsel %vm584, %v1440, 0.0
  %1560 = vadd.xlane.f32.xlu0 %v1559
  %v1561 = vpop.xlane.xlu0 %1560
  %v1562 = vsel %vm584, %v1442, 0.0
  %1563 = vadd.xlane.f32.xlu0 %v1562
  %v1564 = vpop.xlane.xlu0 %1563
  %v1565 = vsel %vm584, %v1444, 0.0
  %1566 = vadd.xlane.f32.xlu0 %v1565
  %v1567 = vpop.xlane.xlu0 %1566
  %v1568 = vsel %vm584, %v1446, 0.0
  %1569 = vadd.xlane.f32.xlu0 %v1568
  %v1570 = vpop.xlane.xlu0 %1569
  %v1571 = vsel %vm584, %v1448, 0.0
  %1572 = vadd.xlane.f32.xlu0 %v1571
  %v1573 = vpop.xlane.xlu0 %1572
  %v1574 = vsel %vm584, %v1450, 0.0
  %1575 = vadd.xlane.f32.xlu0 %v1574
  %v1576 = vpop.xlane.xlu0 %1575
  %v1577 = vsel %vm584, %v1452, 0.0
  %1578 = vadd.xlane.f32.xlu0 %v1577
  %v1579 = vpop.xlane.xlu0 %1578
  %v1580 = vsel %vm584, %v1454, 0.0
  %1581 = vadd.xlane.f32.xlu0 %v1580
  %v1582 = vpop.xlane.xlu0 %1581
  %v1615 = vperm.slane %v1489, %v716
  %v1616 = vperm.slane %v1492, %v718
  %v1617 = vsel %vm720, %v1616, %v1615
  %v1618 = vperm.slane %v1495, %v716
  %v1619 = vperm.slane %v1498, %v718
  %v1620 = vsel %vm720, %v1619, %v1618
  %v1621 = vperm.slane %v1501, %v716
  %v1622 = vperm.slane %v1504, %v718
  %v1623 = vsel %vm720, %v1622, %v1621
  %v1624 = vperm.slane %v1507, %v716
  %v1625 = vperm.slane %v1510, %v718
  %v1626 = vsel %vm720, %v1625, %v1624
  %v1627 = vperm.slane %v1513, %v716
  %v1628 = vperm.slane %v1516, %v718
  %v1629 = vsel %vm720, %v1628, %v1627
  %v1630 = vperm.slane %v1519, %v716
  %v1631 = vperm.slane %v1522, %v718
  %v1632 = vsel %vm720, %v1631, %v1630
  %v1633 = vperm.slane %v1525, %v716
  %v1634 = vperm.slane %v1528, %v718
  %v1635 = vsel %vm720, %v1634, %v1633
  %v1636 = vperm.slane %v1531, %v716
  %v1637 = vperm.slane %v1534, %v718
  %v1638 = vsel %vm720, %v1637, %v1636
  %v1639 = vperm.slane %v1537, %v716
  %v1640 = vperm.slane %v1540, %v718
  %v1641 = vsel %vm720, %v1640, %v1639
  %v1642 = vperm.slane %v1543, %v716
  %v1643 = vperm.slane %v1546, %v718
  %v1644 = vsel %vm720, %v1643, %v1642
  %v1645 = vperm.slane %v1549, %v716
  %v1646 = vperm.slane %v1552, %v718
  %v1647 = vsel %vm720, %v1646, %v1645
  %v1648 = vperm.slane %v1555, %v716
  %v1649 = vperm.slane %v1558, %v718
  %v1650 = vsel %vm720, %v1649, %v1648
  %v1651 = vperm.slane %v1561, %v716
  %v1652 = vperm.slane %v1564, %v718
  %v1653 = vsel %vm720, %v1652, %v1651
  %v1654 = vperm.slane %v1567, %v716
  %v1655 = vperm.slane %v1570, %v718
  %v1656 = vsel %vm720, %v1655, %v1654
  %v1657 = vperm.slane %v1573, %v716
  %v1658 = vperm.slane %v1576, %v718
  %v1659 = vsel %vm720, %v1658, %v1657
  %v1660 = vperm.slane %v1579, %v716
  %v1661 = vperm.slane %v1582, %v718
  %v1662 = vsel %vm720, %v1661, %v1660
  %v1663 = vsel %vm767, %v1620, %v1617
  %v1664 = vsel %vm769, %v1623, %v1663
  %v1665 = vsel %vm771, %v1626, %v1664
  %v1666 = vsel %vm773, %v1629, %v1665
  %v1667 = vsel %vm775, %v1632, %v1666
  %v1668 = vsel %vm777, %v1635, %v1667
  %v1669 = vsel %vm779, %v1638, %v1668
  %v1670 = vsel %vm767, %v1644, %v1641
  %v1671 = vsel %vm769, %v1647, %v1670
  %v1672 = vsel %vm771, %v1650, %v1671
  %v1673 = vsel %vm773, %v1653, %v1672
  %v1674 = vsel %vm775, %v1656, %v1673
  %v1675 = vsel %vm777, %v1659, %v1674
  %v1676 = vsel %vm779, %v1662, %v1675
  %v1679 = vsel %vm681, %v1669, -1e+30
  %v1680 = vsel %vm682, %v1676, -1e+30
  %v1681 = vsel %vm792, %v1679, -inf
  %1682 = vmax.xlane.f32.xlu0 %v1681
  %v1683 = vpop.xlane.xlu0 %1682
  %v1684 = vsel %vm792, %v1680, -inf
  %1685 = vmax.xlane.f32.xlu0 %v1684
  %v1686 = vpop.xlane.xlu0 %1685
  %v1687 = vsub.f32 %v1679, %v1683
  %v1688 = vsub.f32 %v1680, %v1686
  %v1689 = vmul.f32 %v1687, 1.442695
  %v1690 = vpow.pop %v1689
  %v1691 = vmul.f32 %v1688, 1.442695
  %v1692 = vpow.pop %v1691
  %v1693 = vmul.f32 %v1690, %v37
  %v1694 = vmul.f32 %v1692, %v38
  %v1695 = vsel %vm792, %v1693, 0.0
  %1696 = vadd.xlane.f32.xlu0 %v1695
  %v1697 = vpop.xlane.xlu0 %1696
  %v1698 = vsel %vm792, %v1694, 0.0
  %1699 = vadd.xlane.f32.xlu0 %v1698
  %v1700 = vpop.xlane.xlu0 %1699
  %v1701 = vmax.f32 %v1697, 1e-20
  %v1702 = vmax.f32 %v1700, 1e-20
  %v1703 = vrcp.pop %v1701
  %v1704 = vmul.f32 %v1701, %v1703
  %v1705 = vsub.f32 1.0, %v1704
  %v1706 = vmul.f32 %v1703, %v1705
  %v1707 = vadd.f32 %v1703, %v1706
  %vm1708 = vweird.f32 %v1701
  %vm1709 = vweird.f32 %v1703
  %vm1710 = vmor %vm1708, %vm1709
  %v1711 = vsel %vm1710, %v1703, %v1707
  %v1712 = vand.u32 2147483647, %v1701
  %vm1713 = vcmp.eq.f32.partialorder %v1712, 8.507059e+37
  %v1714 = vand.u32 %v1701, 2147483648
  %v1715 = vor.u32 1.1754944e-38, %v1714
  %v1716 = vsel %vm1713, %v1715, %v1711
  %v1717 = vmul.f32 %v1693, %v1716
  %v1718 = vrcp.pop %v1702
  %v1719 = vmul.f32 %v1702, %v1718
  %v1720 = vsub.f32 1.0, %v1719
  %v1721 = vmul.f32 %v1718, %v1720
  %v1722 = vadd.f32 %v1718, %v1721
  %vm1723 = vweird.f32 %v1702
  %vm1724 = vweird.f32 %v1718
  %vm1725 = vmor %vm1723, %vm1724
  %v1726 = vsel %vm1725, %v1718, %v1722
  %v1727 = vand.u32 2147483647, %v1702
  %vm1728 = vcmp.eq.f32.partialorder %v1727, 8.507059e+37
  %v1729 = vand.u32 %v1702, 2147483648
  %v1730 = vor.u32 1.1754944e-38, %v1729
  %v1731 = vsel %vm1728, %v1730, %v1726
  %v1732 = vmul.f32 %v1694, %v1731
  %1733 = vrot.lane.b32.xlu0 %v72, 64
  %v1734 = vpop.permute.xlu0 %1733
  %1735 = vrot.lane.b32.xlu0 %v75, 64
  %v1736 = vpop.permute.xlu0 %1735
  %v1740 = vsel %vm792, %v1717, 0
  %v1743 = vsel %vm792, %v1732, 0
  %1745 = vmatpush.msra.mxu0 0.0
  %1746 = vmatpush.msra.mxu0 0.0
  %1747 = vmatpush.msra.mxu0 0.0
  %1748 = vmatpush.msra.mxu0 0.0
  %1749 = vmatpush.msra.mxu0 0.0
  %1750 = vmatpush.msra.mxu0 0.0
  %1751 = vmatpush.msra.mxu0 0.0
  %1752 = vmatpush.msra.mxu0 0.0
  %1753 = vmatpush.msra.mxu0 0.0
  %1754 = vmatpush.msra.mxu0 0.0
  %1755 = vmatpush.msra.mxu0 0.0
  %1756 = vmatpush.msra.mxu0 0.0
  %1757 = vmatpush.msra.mxu0 0.0
  %1758 = vmatpush.msra.mxu0 0.0
  %1759 = vmatpush.msra.mxu0 %v1736
  %1760 = vmatpush.msra.mxu0 %v1734
  %1761 = vmatmul.f32.gmra.mxu0 %v1740
  %v1762 = vpop.f32.mrf.mxu0
  %v1763 = vadd.f32 0.0, %v1762
  %1764 = vmatmul.f32.gmra.mxu0 %v1743
  %v1765 = vpop.f32.mrf.mxu0
  %v1766 = vadd.f32 0.0, %v1765
  %1767 = vdwg.mxu0
  %v1768 = vperm.slane %v342, 3
  %1770 = vrot.lane.b32.xlu0 %v1768, 96
  %v1771 = vpop.permute.xlu0 %1770
  %v1773 = vmul.f32 %v519, %v1771
  %v1774 = vmul.f32 %v520, %v1771
  %v1775 = vmul.f32 %v521, %v1771
  %v1776 = vmul.f32 %v522, %v1771
  %v1777 = vmul.f32 %v523, %v1771
  %v1778 = vmul.f32 %v524, %v1771
  %v1779 = vmul.f32 %v525, %v1771
  %v1780 = vmul.f32 %v526, %v1771
  %v1781 = vmul.f32 %v527, %v1771
  %v1782 = vmul.f32 %v528, %v1771
  %v1783 = vmul.f32 %v529, %v1771
  %v1784 = vmul.f32 %v530, %v1771
  %v1785 = vmul.f32 %v531, %v1771
  %v1786 = vmul.f32 %v532, %v1771
  %v1787 = vmul.f32 %v533, %v1771
  %v1788 = vmul.f32 %v534, %v1771
  %v1789 = vmul.f32 %v535, %v1771
  %v1790 = vmul.f32 %v536, %v1771
  %v1791 = vmul.f32 %v537, %v1771
  %v1792 = vmul.f32 %v538, %v1771
  %v1793 = vmul.f32 %v539, %v1771
  %v1794 = vmul.f32 %v540, %v1771
  %v1795 = vmul.f32 %v541, %v1771
  %v1796 = vmul.f32 %v542, %v1771
  %v1797 = vmul.f32 %v543, %v1771
  %v1798 = vmul.f32 %v544, %v1771
  %v1799 = vmul.f32 %v545, %v1771
  %v1800 = vmul.f32 %v546, %v1771
  %v1801 = vmul.f32 %v547, %v1771
  %v1802 = vmul.f32 %v548, %v1771
  %v1803 = vmul.f32 %v549, %v1771
  %v1804 = vmul.f32 %v550, %v1771
  %1837 = vrot.lane.b32.xlu0 %v1773, 32
  %v1838 = vpop.permute.xlu0 %1837
  %1839 = vrot.lane.b32.xlu0 %v1774, 32
  %v1840 = vpop.permute.xlu0 %1839
  %1841 = vrot.lane.b32.xlu0 %v1775, 32
  %v1842 = vpop.permute.xlu0 %1841
  %1843 = vrot.lane.b32.xlu0 %v1776, 32
  %v1844 = vpop.permute.xlu0 %1843
  %1845 = vrot.lane.b32.xlu0 %v1777, 32
  %v1846 = vpop.permute.xlu0 %1845
  %1847 = vrot.lane.b32.xlu0 %v1778, 32
  %v1848 = vpop.permute.xlu0 %1847
  %1849 = vrot.lane.b32.xlu0 %v1779, 32
  %v1850 = vpop.permute.xlu0 %1849
  %1851 = vrot.lane.b32.xlu0 %v1780, 32
  %v1852 = vpop.permute.xlu0 %1851
  %1853 = vrot.lane.b32.xlu0 %v1781, 32
  %v1854 = vpop.permute.xlu0 %1853
  %1855 = vrot.lane.b32.xlu0 %v1782, 32
  %v1856 = vpop.permute.xlu0 %1855
  %1857 = vrot.lane.b32.xlu0 %v1783, 32
  %v1858 = vpop.permute.xlu0 %1857
  %1859 = vrot.lane.b32.xlu0 %v1784, 32
  %v1860 = vpop.permute.xlu0 %1859
  %1861 = vrot.lane.b32.xlu0 %v1785, 32
  %v1862 = vpop.permute.xlu0 %1861
  %1863 = vrot.lane.b32.xlu0 %v1786, 32
  %v1864 = vpop.permute.xlu0 %1863
  %1865 = vrot.lane.b32.xlu0 %v1787, 32
  %v1866 = vpop.permute.xlu0 %1865
  %1867 = vrot.lane.b32.xlu0 %v1788, 32
  %v1868 = vpop.permute.xlu0 %1867
  %1869 = vrot.lane.b32.xlu0 %v1789, 32
  %v1870 = vpop.permute.xlu0 %1869
  %1871 = vrot.lane.b32.xlu0 %v1790, 32
  %v1872 = vpop.permute.xlu0 %1871
  %1873 = vrot.lane.b32.xlu0 %v1791, 32
  %v1874 = vpop.permute.xlu0 %1873
  %1875 = vrot.lane.b32.xlu0 %v1792, 32
  %v1876 = vpop.permute.xlu0 %1875
  %1877 = vrot.lane.b32.xlu0 %v1793, 32
  %v1878 = vpop.permute.xlu0 %1877
  %1879 = vrot.lane.b32.xlu0 %v1794, 32
  %v1880 = vpop.permute.xlu0 %1879
  %1881 = vrot.lane.b32.xlu0 %v1795, 32
  %v1882 = vpop.permute.xlu0 %1881
  %1883 = vrot.lane.b32.xlu0 %v1796, 32
  %v1884 = vpop.permute.xlu0 %1883
  %1885 = vrot.lane.b32.xlu0 %v1797, 32
  %v1886 = vpop.permute.xlu0 %1885
  %1887 = vrot.lane.b32.xlu0 %v1798, 32
  %v1888 = vpop.permute.xlu0 %1887
  %1889 = vrot.lane.b32.xlu0 %v1799, 32
  %v1890 = vpop.permute.xlu0 %1889
  %1891 = vrot.lane.b32.xlu0 %v1800, 32
  %v1892 = vpop.permute.xlu0 %1891
  %1893 = vrot.lane.b32.xlu0 %v1801, 32
  %v1894 = vpop.permute.xlu0 %1893
  %1895 = vrot.lane.b32.xlu0 %v1802, 32
  %v1896 = vpop.permute.xlu0 %1895
  %1897 = vrot.lane.b32.xlu0 %v1803, 32
  %v1898 = vpop.permute.xlu0 %1897
  %1899 = vrot.lane.b32.xlu0 %v1804, 32
  %v1900 = vpop.permute.xlu0 %1899
  %v1933 = vsel %vm584, %v1838, 0.0
  %1934 = vadd.xlane.f32.xlu0 %v1933
  %v1935 = vpop.xlane.xlu0 %1934
  %v1936 = vsel %vm584, %v1840, 0.0
  %1937 = vadd.xlane.f32.xlu0 %v1936
  %v1938 = vpop.xlane.xlu0 %1937
  %v1939 = vsel %vm584, %v1842, 0.0
  %1940 = vadd.xlane.f32.xlu0 %v1939
  %v1941 = vpop.xlane.xlu0 %1940
  %v1942 = vsel %vm584, %v1844, 0.0
  %1943 = vadd.xlane.f32.xlu0 %v1942
  %v1944 = vpop.xlane.xlu0 %1943
  %v1945 = vsel %vm584, %v1846, 0.0
  %1946 = vadd.xlane.f32.xlu0 %v1945
  %v1947 = vpop.xlane.xlu0 %1946
  %v1948 = vsel %vm584, %v1848, 0.0
  %1949 = vadd.xlane.f32.xlu0 %v1948
  %v1950 = vpop.xlane.xlu0 %1949
  %v1951 = vsel %vm584, %v1850, 0.0
  %1952 = vadd.xlane.f32.xlu0 %v1951
  %v1953 = vpop.xlane.xlu0 %1952
  %v1954 = vsel %vm584, %v1852, 0.0
  %1955 = vadd.xlane.f32.xlu0 %v1954
  %v1956 = vpop.xlane.xlu0 %1955
  %v1957 = vsel %vm584, %v1854, 0.0
  %1958 = vadd.xlane.f32.xlu0 %v1957
  %v1959 = vpop.xlane.xlu0 %1958
  %v1960 = vsel %vm584, %v1856, 0.0
  %1961 = vadd.xlane.f32.xlu0 %v1960
  %v1962 = vpop.xlane.xlu0 %1961
  %v1963 = vsel %vm584, %v1858, 0.0
  %1964 = vadd.xlane.f32.xlu0 %v1963
  %v1965 = vpop.xlane.xlu0 %1964
  %v1966 = vsel %vm584, %v1860, 0.0
  %1967 = vadd.xlane.f32.xlu0 %v1966
  %v1968 = vpop.xlane.xlu0 %1967
  %v1969 = vsel %vm584, %v1862, 0.0
  %1970 = vadd.xlane.f32.xlu0 %v1969
  %v1971 = vpop.xlane.xlu0 %1970
  %v1972 = vsel %vm584, %v1864, 0.0
  %1973 = vadd.xlane.f32.xlu0 %v1972
  %v1974 = vpop.xlane.xlu0 %1973
  %v1975 = vsel %vm584, %v1866, 0.0
  %1976 = vadd.xlane.f32.xlu0 %v1975
  %v1977 = vpop.xlane.xlu0 %1976
  %v1978 = vsel %vm584, %v1868, 0.0
  %1979 = vadd.xlane.f32.xlu0 %v1978
  %v1980 = vpop.xlane.xlu0 %1979
  %v1981 = vsel %vm584, %v1870, 0.0
  %1982 = vadd.xlane.f32.xlu0 %v1981
  %v1983 = vpop.xlane.xlu0 %1982
  %v1984 = vsel %vm584, %v1872, 0.0
  %1985 = vadd.xlane.f32.xlu0 %v1984
  %v1986 = vpop.xlane.xlu0 %1985
  %v1987 = vsel %vm584, %v1874, 0.0
  %1988 = vadd.xlane.f32.xlu0 %v1987
  %v1989 = vpop.xlane.xlu0 %1988
  %v1990 = vsel %vm584, %v1876, 0.0
  %1991 = vadd.xlane.f32.xlu0 %v1990
  %v1992 = vpop.xlane.xlu0 %1991
  %v1993 = vsel %vm584, %v1878, 0.0
  %1994 = vadd.xlane.f32.xlu0 %v1993
  %v1995 = vpop.xlane.xlu0 %1994
  %v1996 = vsel %vm584, %v1880, 0.0
  %1997 = vadd.xlane.f32.xlu0 %v1996
  %v1998 = vpop.xlane.xlu0 %1997
  %v1999 = vsel %vm584, %v1882, 0.0
  %2000 = vadd.xlane.f32.xlu0 %v1999
  %v2001 = vpop.xlane.xlu0 %2000
  %v2002 = vsel %vm584, %v1884, 0.0
  %2003 = vadd.xlane.f32.xlu0 %v2002
  %v2004 = vpop.xlane.xlu0 %2003
  %v2005 = vsel %vm584, %v1886, 0.0
  %2006 = vadd.xlane.f32.xlu0 %v2005
  %v2007 = vpop.xlane.xlu0 %2006
  %v2008 = vsel %vm584, %v1888, 0.0
  %2009 = vadd.xlane.f32.xlu0 %v2008
  %v2010 = vpop.xlane.xlu0 %2009
  %v2011 = vsel %vm584, %v1890, 0.0
  %2012 = vadd.xlane.f32.xlu0 %v2011
  %v2013 = vpop.xlane.xlu0 %2012
  %v2014 = vsel %vm584, %v1892, 0.0
  %2015 = vadd.xlane.f32.xlu0 %v2014
  %v2016 = vpop.xlane.xlu0 %2015
  %v2017 = vsel %vm584, %v1894, 0.0
  %2018 = vadd.xlane.f32.xlu0 %v2017
  %v2019 = vpop.xlane.xlu0 %2018
  %v2020 = vsel %vm584, %v1896, 0.0
  %2021 = vadd.xlane.f32.xlu0 %v2020
  %v2022 = vpop.xlane.xlu0 %2021
  %v2023 = vsel %vm584, %v1898, 0.0
  %2024 = vadd.xlane.f32.xlu0 %v2023
  %v2025 = vpop.xlane.xlu0 %2024
  %v2026 = vsel %vm584, %v1900, 0.0
  %2027 = vadd.xlane.f32.xlu0 %v2026
  %v2028 = vpop.xlane.xlu0 %2027
  %v2061 = vperm.slane %v1935, %v716
  %v2062 = vperm.slane %v1938, %v718
  %v2063 = vsel %vm720, %v2062, %v2061
  %v2064 = vperm.slane %v1941, %v716
  %v2065 = vperm.slane %v1944, %v718
  %v2066 = vsel %vm720, %v2065, %v2064
  %v2067 = vperm.slane %v1947, %v716
  %v2068 = vperm.slane %v1950, %v718
  %v2069 = vsel %vm720, %v2068, %v2067
  %v2070 = vperm.slane %v1953, %v716
  %v2071 = vperm.slane %v1956, %v718
  %v2072 = vsel %vm720, %v2071, %v2070
  %v2073 = vperm.slane %v1959, %v716
  %v2074 = vperm.slane %v1962, %v718
  %v2075 = vsel %vm720, %v2074, %v2073
  %v2076 = vperm.slane %v1965, %v716
  %v2077 = vperm.slane %v1968, %v718
  %v2078 = vsel %vm720, %v2077, %v2076
  %v2079 = vperm.slane %v1971, %v716
  %v2080 = vperm.slane %v1974, %v718
  %v2081 = vsel %vm720, %v2080, %v2079
  %v2082 = vperm.slane %v1977, %v716
  %v2083 = vperm.slane %v1980, %v718
  %v2084 = vsel %vm720, %v2083, %v2082
  %v2085 = vperm.slane %v1983, %v716
  %v2086 = vperm.slane %v1986, %v718
  %v2087 = vsel %vm720, %v2086, %v2085
  %v2088 = vperm.slane %v1989, %v716
  %v2089 = vperm.slane %v1992, %v718
  %v2090 = vsel %vm720, %v2089, %v2088
  %v2091 = vperm.slane %v1995, %v716
  %v2092 = vperm.slane %v1998, %v718
  %v2093 = vsel %vm720, %v2092, %v2091
  %v2094 = vperm.slane %v2001, %v716
  %v2095 = vperm.slane %v2004, %v718
  %v2096 = vsel %vm720, %v2095, %v2094
  %v2097 = vperm.slane %v2007, %v716
  %v2098 = vperm.slane %v2010, %v718
  %v2099 = vsel %vm720, %v2098, %v2097
  %v2100 = vperm.slane %v2013, %v716
  %v2101 = vperm.slane %v2016, %v718
  %v2102 = vsel %vm720, %v2101, %v2100
  %v2103 = vperm.slane %v2019, %v716
  %v2104 = vperm.slane %v2022, %v718
  %v2105 = vsel %vm720, %v2104, %v2103
  %v2106 = vperm.slane %v2025, %v716
  %v2107 = vperm.slane %v2028, %v718
  %v2108 = vsel %vm720, %v2107, %v2106
  %v2109 = vsel %vm767, %v2066, %v2063
  %v2110 = vsel %vm769, %v2069, %v2109
  %v2111 = vsel %vm771, %v2072, %v2110
  %v2112 = vsel %vm773, %v2075, %v2111
  %v2113 = vsel %vm775, %v2078, %v2112
  %v2114 = vsel %vm777, %v2081, %v2113
  %v2115 = vsel %vm779, %v2084, %v2114
  %v2116 = vsel %vm767, %v2090, %v2087
  %v2117 = vsel %vm769, %v2093, %v2116
  %v2118 = vsel %vm771, %v2096, %v2117
  %v2119 = vsel %vm773, %v2099, %v2118
  %v2120 = vsel %vm775, %v2102, %v2119
  %v2121 = vsel %vm777, %v2105, %v2120
  %v2122 = vsel %vm779, %v2108, %v2121
  %v2125 = vsel %vm681, %v2115, -1e+30
  %v2126 = vsel %vm682, %v2122, -1e+30
  %v2127 = vsel %vm792, %v2125, -inf
  %2128 = vmax.xlane.f32.xlu0 %v2127
  %v2129 = vpop.xlane.xlu0 %2128
  %v2130 = vsel %vm792, %v2126, -inf
  %2131 = vmax.xlane.f32.xlu0 %v2130
  %v2132 = vpop.xlane.xlu0 %2131
  %v2133 = vsub.f32 %v2125, %v2129
  %v2134 = vsub.f32 %v2126, %v2132
  %v2135 = vmul.f32 %v2133, 1.442695
  %v2136 = vpow.pop %v2135
  %v2137 = vmul.f32 %v2134, 1.442695
  %v2138 = vpow.pop %v2137
  %v2139 = vmul.f32 %v2136, %v37
  %v2140 = vmul.f32 %v2138, %v38
  %v2141 = vsel %vm792, %v2139, 0.0
  %2142 = vadd.xlane.f32.xlu0 %v2141
  %v2143 = vpop.xlane.xlu0 %2142
  %v2144 = vsel %vm792, %v2140, 0.0
  %2145 = vadd.xlane.f32.xlu0 %v2144
  %v2146 = vpop.xlane.xlu0 %2145
  %v2147 = vmax.f32 %v2143, 1e-20
  %v2148 = vmax.f32 %v2146, 1e-20
  %v2149 = vrcp.pop %v2147
  %v2150 = vmul.f32 %v2147, %v2149
  %v2151 = vsub.f32 1.0, %v2150
  %v2152 = vmul.f32 %v2149, %v2151
  %v2153 = vadd.f32 %v2149, %v2152
  %vm2154 = vweird.f32 %v2147
  %vm2155 = vweird.f32 %v2149
  %vm2156 = vmor %vm2154, %vm2155
  %v2157 = vsel %vm2156, %v2149, %v2153
  %v2158 = vand.u32 2147483647, %v2147
  %vm2159 = vcmp.eq.f32.partialorder %v2158, 8.507059e+37
  %v2160 = vand.u32 %v2147, 2147483648
  %v2161 = vor.u32 1.1754944e-38, %v2160
  %v2162 = vsel %vm2159, %v2161, %v2157
  %v2163 = vmul.f32 %v2139, %v2162
  %v2164 = vrcp.pop %v2148
  %v2165 = vmul.f32 %v2148, %v2164
  %v2166 = vsub.f32 1.0, %v2165
  %v2167 = vmul.f32 %v2164, %v2166
  %v2168 = vadd.f32 %v2164, %v2167
  %vm2169 = vweird.f32 %v2148
  %vm2170 = vweird.f32 %v2164
  %vm2171 = vmor %vm2169, %vm2170
  %v2172 = vsel %vm2171, %v2164, %v2168
  %v2173 = vand.u32 2147483647, %v2148
  %vm2174 = vcmp.eq.f32.partialorder %v2173, 8.507059e+37
  %v2175 = vand.u32 %v2148, 2147483648
  %v2176 = vor.u32 1.1754944e-38, %v2175
  %v2177 = vsel %vm2174, %v2176, %v2172
  %v2178 = vmul.f32 %v2140, %v2177
  %2179 = vrot.lane.b32.xlu0 %v72, 32
  %v2180 = vpop.permute.xlu0 %2179
  %2181 = vrot.lane.b32.xlu0 %v75, 32
  %v2182 = vpop.permute.xlu0 %2181
  %v2186 = vsel %vm792, %v2163, 0
  %v2189 = vsel %vm792, %v2178, 0
  %2191 = vmatpush.msra.mxu0 0.0
  %2192 = vmatpush.msra.mxu0 0.0
  %2193 = vmatpush.msra.mxu0 0.0
  %2194 = vmatpush.msra.mxu0 0.0
  %2195 = vmatpush.msra.mxu0 0.0
  %2196 = vmatpush.msra.mxu0 0.0
  %2197 = vmatpush.msra.mxu0 0.0
  %2198 = vmatpush.msra.mxu0 0.0
  %2199 = vmatpush.msra.mxu0 0.0
  %2200 = vmatpush.msra.mxu0 0.0
  %2201 = vmatpush.msra.mxu0 0.0
  %2202 = vmatpush.msra.mxu0 0.0
  %2203 = vmatpush.msra.mxu0 0.0
  %2204 = vmatpush.msra.mxu0 0.0
  %2205 = vmatpush.msra.mxu0 %v2182
  %2206 = vmatpush.msra.mxu0 %v2180
  %2207 = vmatmul.f32.gmra.mxu0 %v2186
  %v2208 = vpop.f32.mrf.mxu0
  %v2209 = vadd.f32 0.0, %v2208
  %2210 = vmatmul.f32.gmra.mxu0 %v2189
  %v2211 = vpop.f32.mrf.mxu0
  %v2212 = vadd.f32 0.0, %v2211
  %2213 = vdwg.mxu0
  %2216 = vrot.lane.b32.xlu0 %v1317, 32
  %v2217 = vpop.permute.xlu0 %2216
  %2218 = vrot.lane.b32.xlu0 %v1320, 32
  %v2219 = vpop.permute.xlu0 %2218
  %2224 = vrot.lane.b32.xlu0 %v1763, 64
  %v2225 = vpop.permute.xlu0 %2224
  %2226 = vrot.lane.b32.xlu0 %v1766, 64
  %v2227 = vpop.permute.xlu0 %2226
  %2232 = vrot.lane.b32.xlu0 %v2209, 96
  %v2233 = vpop.permute.xlu0 %2232
  %2234 = vrot.lane.b32.xlu0 %v2212, 96
  %v2235 = vpop.permute.xlu0 %2234
  %v2238 = vsel %vm584, %v869, %v2217
  %v2239 = vsel %vm584, %v872, %v2219
  %vm2240 = vcmask 523264
  %v2241 = vsel %vm2240, %v2238, %v2225
  %v2242 = vsel %vm2240, %v2239, %v2227
  %vm2243 = vcmask 785408
  %v2244 = vsel %vm2243, %v2241, %v2233
  %v2245 = vsel %vm2243, %v2242, %v2235
  %v2246 = vld [vmem:[%s7] sm:$0x1]
  %v2248 = vperm.slane %v2246, 0
  %v2250 = vadd.f32 %v2244, %v2248
  %v2251 = vadd.f32 %v2245, %v2248
  %v2252 = vld [vmem:[%s8] sm:$0x1]
  %v2253 = vld [vmem:[%s9] sm:$0x1]
  %2254 = vadd.xlane.f32.xlu0 %v2250
  %v2255 = vpop.xlane.xlu0 %2254
  %2256 = vadd.xlane.f32.xlu0 %v2251
  %v2257 = vpop.xlane.xlu0 %2256
  %v2258 = vrcp.pop 128.0
  %v2259 = vmul.f32 128.0, %v2258
  %v2260 = vsub.f32 1.0, %v2259
  %v2261 = vmul.f32 %v2258, %v2260
  %v2262 = vadd.f32 %v2258, %v2261
  %vm2263 = vweird.f32 %v2258
  %v2264 = vsel %vm2263, %v2258, %v2262
  %v2265 = vmul.f32 %v2255, %v2264
  %v2266 = vmul.f32 %v2257, %v2264
  %v2267 = vsub.f32 %v2250, %v2265
  %v2268 = vsub.f32 %v2251, %v2266
  %v2269 = vmul.f32 %v2267, %v2267
  %v2270 = vmul.f32 %v2268, %v2268
  %2271 = vadd.xlane.f32.xlu0 %v2269
  %v2272 = vpop.xlane.xlu0 %2271
  %2273 = vadd.xlane.f32.xlu0 %v2270
  %v2274 = vpop.xlane.xlu0 %2273
  %v2275 = vmul.f32 %v2272, %v2264
  %v2276 = vmul.f32 %v2274, %v2264
  %v2277 = vadd.f32 %v2275, 1e-05
  %v2278 = vadd.f32 %v2276, 1e-05
  %v2279 = vrsqrt.pop %v2277
  %v2280 = vmul.f32 %v2279, %v2277
  %v2281 = vmul.f32 %v2280, %v2279
  %v2282 = vmul.f32 0.5, %v2281
  %v2283 = vsub.f32 1.5, %v2282
  %v2284 = vmul.f32 %v2279, %v2283
  %vm2285 = vweird.f32 %v2277
  %vm2286 = vweird.f32 %v2279
  %vm2287 = vmor %vm2285, %vm2286
  %v2288 = vsel %vm2287, %v2279, %v2284
  %v2289 = vrsqrt.pop %v2278
  %v2290 = vmul.f32 %v2289, %v2278
  %v2291 = vmul.f32 %v2290, %v2289
  %v2292 = vmul.f32 0.5, %v2291
  %v2293 = vsub.f32 1.5, %v2292
  %v2294 = vmul.f32 %v2289, %v2293
  %vm2295 = vweird.f32 %v2278
  %vm2296 = vweird.f32 %v2289
  %vm2297 = vmor %vm2295, %vm2296
  %v2298 = vsel %vm2297, %v2289, %v2294
  %v2299 = vmul.f32 %v2267, %v2288
  %v2300 = vmul.f32 %v2268, %v2298
  %v2302 = vperm.slane %v2252, 0
  %v2304 = vmul.f32 %v2299, %v2302
  %v2305 = vmul.f32 %v2300, %v2302
  %v2307 = vperm.slane %v2253, 0
  %v2309 = vadd.f32 %v2304, %v2307
  %v2310 = vadd.f32 %v2305, %v2307
  %vm2311 = vcmp.gt.f32.partialorder %v2309, 0.0
  %vm2312 = vcmp.gt.f32.partialorder %v2310, 0.0
  %v2313 = vmul.f32 %v2309, 1.442695
  %v2314 = vpow.pop %v2313
  %v2315 = vmul.f32 %v2310, 1.442695
  %v2316 = vpow.pop %v2315
  %v2317 = vsub.f32 %v2314, 1.0
  %v2318 = vsub.f32 %v2316, 1.0
  %v2319 = vsel %vm2311, %v2309, %v2317
  %v2320 = vsel %vm2312, %v2310, %v2318
  %2321 = vst [vmem:[%s10] sm:$0xff] %v2319
  %2322 = vst [vmem:[%s10 + $0x8] sm:$0xff] %v2320
  // Predicated region
  $region42: #{fpga_gnn_forward.6} parent=0 // pred_check
    _
  $region43: #{fpga_gnn_forward.6} parent=0 // pred_check_branch
    %2324 = sbr.rel (0) target = $region45
  $region44: #{fpga_gnn_forward.6} parent=0 // pred_region
    _
  $region45: #{fpga_gnn_forward.6} parent=0 // pred_fallthru
    _
  // Predicated region
  $region46: #{fpga_gnn_forward.6} parent=0 // pred_check
    _
  $region47: #{fpga_gnn_forward.6} parent=0 // pred_check_branch
    %2326 = sbr.rel (0) target = $region49
  $region48: #{fpga_gnn_forward.6} parent=0 // pred_region
    _
  $region49: #{fpga_gnn_forward.6} parent=0 // pred_fallthru
    _

// kernel: fpga_gnn_forward.7
$region0: #{fpga_gnn_forward.7}
  #allocation0 [shape = 'u32[]', space=smem, size = 0x4, offset = 0x4, fixed_abs, tag = 'smem constant byte address 0x4 - core index']
  #allocation1 [shape = 'u32[72,128]{1,0:T(1,128)}', space=vmem, size = 0x9000, scoped, tag = 'internal scratch']
  %s0 = inlined_call_operand.vmem [shape: f32[16,128], index: 0, kind: input, shape index: {}]
  %s1 = inlined_call_operand.vmem [shape: f32[256,8], index: 1, kind: input, shape index: {}]
  %s2 = inlined_call_operand.vmem [shape: f32[16,16], index: 2, kind: input, shape index: {}]
  %s3 = inlined_call_operand.vmem [shape: f32[128,256], index: 3, kind: input, shape index: {}]
  %s4 = inlined_call_operand.vmem [shape: f32[1,256], index: 4, kind: input, shape index: {}]
  %s5 = inlined_call_operand.vmem [shape: f32[8,128], index: 5, kind: input, shape index: {}]
  %s6 = inlined_call_operand.vmem [shape: f32[4,32], index: 6, kind: input, shape index: {}]
  %s7 = inlined_call_operand.vmem [shape: f32[1,128], index: 7, kind: input, shape index: {}]
  %s8 = inlined_call_operand.vmem [shape: f32[1,128], index: 8, kind: input, shape index: {}]
  %s9 = inlined_call_operand.vmem [shape: f32[1,128], index: 9, kind: input, shape index: {}]
  %s10 = inlined_call_operand.vmem [shape: f32[16,8], index: 10, kind: input, shape index: {}]
  %s11 = inlined_call_operand.vmem [shape: f32[8,128], index: 11, kind: input, shape index: {}]
  %s12 = inlined_call_operand.vmem [shape: f32[128,128], index: 12, kind: input, shape index: {}]
  %s13 = inlined_call_operand.vmem [shape: f32[128,128], index: 13, kind: input, shape index: {}]
  %s14 = inlined_call_operand.vmem [shape: f32[1,128], index: 14, kind: input, shape index: {}]
  %s15 = inlined_call_operand.vmem [shape: f32[16,128], index: 15, kind: output, shape index: {}]
  %s16 = sld [smem:[#allocation0]]
  $region70: #{fpga_gnn_forward.7} parent=0
    _
  %s18 = ssub.s32 1, %s16
  %s19 = scalar_select 0, %s18, %s16
  // Predicated region
  $region2: #{fpga_gnn_forward.7} parent=0 // pred_check
    _
  $region3: #{fpga_gnn_forward.7} parent=0 // pred_check_branch
    %21 = sbr.rel (0) target = $region5
  $region4: #{fpga_gnn_forward.7} parent=0 // pred_region
    _
  $region5: #{fpga_gnn_forward.7} parent=0 // pred_fallthru
    _
  // Predicated region
  $region6: #{fpga_gnn_forward.7} parent=0 // pred_check
    _
  $region7: #{fpga_gnn_forward.7} parent=0 // pred_check_branch
    %23 = sbr.rel (0) target = $region9
  $region8: #{fpga_gnn_forward.7} parent=0 // pred_region
    _
  $region9: #{fpga_gnn_forward.7} parent=0 // pred_fallthru
    _
  // Predicated region
  $region10: #{fpga_gnn_forward.7} parent=0 // pred_check
    _
  $region11: #{fpga_gnn_forward.7} parent=0 // pred_check_branch
    %25 = sbr.rel (0) target = $region13
  $region12: #{fpga_gnn_forward.7} parent=0 // pred_region
    _
  $region13: #{fpga_gnn_forward.7} parent=0 // pred_fallthru
    _
  // Predicated region
  $region14: #{fpga_gnn_forward.7} parent=0 // pred_check
    _
  $region15: #{fpga_gnn_forward.7} parent=0 // pred_check_branch
    %27 = sbr.rel (0) target = $region17
  $region16: #{fpga_gnn_forward.7} parent=0 // pred_region
    _
  $region17: #{fpga_gnn_forward.7} parent=0 // pred_fallthru
    _
  // Predicated region
  $region18: #{fpga_gnn_forward.7} parent=0 // pred_check
    _
  $region19: #{fpga_gnn_forward.7} parent=0 // pred_check_branch
    %29 = sbr.rel (0) target = $region21
  $region20: #{fpga_gnn_forward.7} parent=0 // pred_region
    _
  $region21: #{fpga_gnn_forward.7} parent=0 // pred_fallthru
    _
  // Predicated region
  $region22: #{fpga_gnn_forward.7} parent=0 // pred_check
    _
  $region23: #{fpga_gnn_forward.7} parent=0 // pred_check_branch
    %31 = sbr.rel (0) target = $region25
  $region24: #{fpga_gnn_forward.7} parent=0 // pred_region
    _
  $region25: #{fpga_gnn_forward.7} parent=0 // pred_fallthru
    _
  // Predicated region
  $region26: #{fpga_gnn_forward.7} parent=0 // pred_check
    _
  $region27: #{fpga_gnn_forward.7} parent=0 // pred_check_branch
    %33 = sbr.rel (0) target = $region29
  $region28: #{fpga_gnn_forward.7} parent=0 // pred_region
    _
  $region29: #{fpga_gnn_forward.7} parent=0 // pred_fallthru
    _
  // Predicated region
  $region30: #{fpga_gnn_forward.7} parent=0 // pred_check
    _
  $region31: #{fpga_gnn_forward.7} parent=0 // pred_check_branch
    %35 = sbr.rel (0) target = $region33
  $region32: #{fpga_gnn_forward.7} parent=0 // pred_region
    _
  $region33: #{fpga_gnn_forward.7} parent=0 // pred_fallthru
    _
  // Predicated region
  $region34: #{fpga_gnn_forward.7} parent=0 // pred_check
    _
  $region35: #{fpga_gnn_forward.7} parent=0 // pred_check_branch
    %37 = sbr.rel (0) target = $region37
  $region36: #{fpga_gnn_forward.7} parent=0 // pred_region
    _
  $region37: #{fpga_gnn_forward.7} parent=0 // pred_fallthru
    _
  // Predicated region
  $region38: #{fpga_gnn_forward.7} parent=0 // pred_check
    _
  $region39: #{fpga_gnn_forward.7} parent=0 // pred_check_branch
    %39 = sbr.rel (0) target = $region41
  $region40: #{fpga_gnn_forward.7} parent=0 // pred_region
    _
  $region41: #{fpga_gnn_forward.7} parent=0 // pred_fallthru
    _
  // Predicated region
  $region42: #{fpga_gnn_forward.7} parent=0 // pred_check
    _
  $region43: #{fpga_gnn_forward.7} parent=0 // pred_check_branch
    %41 = sbr.rel (0) target = $region45
  $region44: #{fpga_gnn_forward.7} parent=0 // pred_region
    _
  $region45: #{fpga_gnn_forward.7} parent=0 // pred_fallthru
    _
  // Predicated region
  $region46: #{fpga_gnn_forward.7} parent=0 // pred_check
    _
  $region47: #{fpga_gnn_forward.7} parent=0 // pred_check_branch
    %43 = sbr.rel (0) target = $region49
  $region48: #{fpga_gnn_forward.7} parent=0 // pred_region
    _
  $region49: #{fpga_gnn_forward.7} parent=0 // pred_fallthru
    _
  // Predicated region
  $region50: #{fpga_gnn_forward.7} parent=0 // pred_check
    _
  $region51: #{fpga_gnn_forward.7} parent=0 // pred_check_branch
    %45 = sbr.rel (0) target = $region53
  $region52: #{fpga_gnn_forward.7} parent=0 // pred_region
    _
  $region53: #{fpga_gnn_forward.7} parent=0 // pred_fallthru
    _
  // Predicated region
  $region54: #{fpga_gnn_forward.7} parent=0 // pred_check
    _
  $region55: #{fpga_gnn_forward.7} parent=0 // pred_check_branch
    %47 = sbr.rel (0) target = $region57
  $region56: #{fpga_gnn_forward.7} parent=0 // pred_region
    _
  $region57: #{fpga_gnn_forward.7} parent=0 // pred_fallthru
    _
  // Predicated region
  $region58: #{fpga_gnn_forward.7} parent=0 // pred_check
    _
  $region59: #{fpga_gnn_forward.7} parent=0 // pred_check_branch
    %49 = sbr.rel (0) target = $region61
  $region60: #{fpga_gnn_forward.7} parent=0 // pred_region
    _
  $region61: #{fpga_gnn_forward.7} parent=0 // pred_fallthru
    _
  %v50 = vld [vmem:[%s0] sm:$0xff]
  %v51 = vld [vmem:[%s0 + $0x8] sm:$0xff]
  %v52 = vld [vmem:[%s2] sm:$0xff]
  %v53 = vld [vmem:[%s2 + $0x8] sm:$0xff]
  %v54 = vld [vmem:[%s3] sm:$0xff]
  %v55 = vld [vmem:[%s3 + $0x8] sm:$0xff]
  %v56 = vld [vmem:[%s3 + $0x10] sm:$0xff]
  %v57 = vld [vmem:[%s3 + $0x18] sm:$0xff]
  %v58 = vld [vmem:[%s3 + $0x20] sm:$0xff]
  %v59 = vld [vmem:[%s3 + $0x28] sm:$0xff]
  %v60 = vld [vmem:[%s3 + $0x30] sm:$0xff]
  %v61 = vld [vmem:[%s3 + $0x38] sm:$0xff]
  %v62 = vld [vmem:[%s3 + $0x40] sm:$0xff]
  %v63 = vld [vmem:[%s3 + $0x48] sm:$0xff]
  %v64 = vld [vmem:[%s3 + $0x50] sm:$0xff]
  %v65 = vld [vmem:[%s3 + $0x58] sm:$0xff]
  %v66 = vld [vmem:[%s3 + $0x60] sm:$0xff]
  %v67 = vld [vmem:[%s3 + $0x68] sm:$0xff]
  %v68 = vld [vmem:[%s3 + $0x70] sm:$0xff]
  %v69 = vld [vmem:[%s3 + $0x78] sm:$0xff]
  %v70 = vld [vmem:[%s3 + $0x80] sm:$0xff]
  %v71 = vld [vmem:[%s3 + $0x88] sm:$0xff]
  %v72 = vld [vmem:[%s3 + $0x90] sm:$0xff]
  %v73 = vld [vmem:[%s3 + $0x98] sm:$0xff]
  %v74 = vld [vmem:[%s3 + $0xa0] sm:$0xff]
  %v75 = vld [vmem:[%s3 + $0xa8] sm:$0xff]
  %v76 = vld [vmem:[%s3 + $0xb0] sm:$0xff]
  %v77 = vld [vmem:[%s3 + $0xb8] sm:$0xff]
  %v78 = vld [vmem:[%s3 + $0xc0] sm:$0xff]
  %v79 = vld [vmem:[%s3 + $0xc8] sm:$0xff]
  %v80 = vld [vmem:[%s3 + $0xd0] sm:$0xff]
  %v81 = vld [vmem:[%s3 + $0xd8] sm:$0xff]
  %v82 = vld [vmem:[%s3 + $0xe0] sm:$0xff]
  %v83 = vld [vmem:[%s3 + $0xe8] sm:$0xff]
  %v84 = vld [vmem:[%s3 + $0xf0] sm:$0xff]
  %v85 = vld [vmem:[%s3 + $0xf8] sm:$0xff]
  %v86 = vld [vmem:[%s4] sm:$0x3]
  %v88 = vperm.slane %v86, 0
  %v89 = vperm.slane %v86, 1
  %92 = vmatpush.msra.mxu0 %v84
  %93 = vmatpush.msra.mxu0 %v82
  %94 = vmatpush.msra.mxu0 %v80
  %95 = vmatpush.msra.mxu0 %v78
  %96 = vmatpush.msra.mxu0 %v76
  %97 = vmatpush.msra.mxu0 %v74
  %98 = vmatpush.msra.mxu0 %v72
  %99 = vmatpush.msra.mxu0 %v70
  %100 = vmatpush.msra.mxu0 %v68
  %101 = vmatpush.msra.mxu0 %v66
  %102 = vmatpush.msra.mxu0 %v64
  %103 = vmatpush.msra.mxu0 %v62
  %104 = vmatpush.msra.mxu0 %v60
  %105 = vmatpush.msra.mxu0 %v58
  %106 = vmatpush.msra.mxu0 %v56
  %107 = vmatpush.msra.mxu0 %v54
  %108 = vmatmul.f32.gmra.mxu0 %v50
  %v109 = vpop.f32.mrf.mxu0
  %v110 = vadd.f32 %v88, %v109
  %111 = vmatmul.f32.gmra.mxu0 %v51
  %v112 = vpop.f32.mrf.mxu0
  %v113 = vadd.f32 %v88, %v112
  %114 = vdwg.mxu0
  %115 = vmatpush.msra.mxu0 %v85
  %116 = vmatpush.msra.mxu0 %v83
  %117 = vmatpush.msra.mxu0 %v81
  %118 = vmatpush.msra.mxu0 %v79
  %119 = vmatpush.msra.mxu0 %v77
  %120 = vmatpush.msra.mxu0 %v75
  %121 = vmatpush.msra.mxu0 %v73
  %122 = vmatpush.msra.mxu0 %v71
  %123 = vmatpush.msra.mxu0 %v69
  %124 = vmatpush.msra.mxu0 %v67
  %125 = vmatpush.msra.mxu0 %v65
  %126 = vmatpush.msra.mxu0 %v63
  %127 = vmatpush.msra.mxu0 %v61
  %128 = vmatpush.msra.mxu0 %v59
  %129 = vmatpush.msra.mxu0 %v57
  %130 = vmatpush.msra.mxu0 %v55
  %131 = vmatmul.f32.gmra.mxu0 %v50
  %v132 = vpop.f32.mrf.mxu0
  %v133 = vadd.f32 %v89, %v132
  %134 = vmatmul.f32.gmra.mxu0 %v51
  %v135 = vpop.f32.mrf.mxu0
  %v136 = vadd.f32 %v89, %v135
  %137 = vdwg.mxu0
  %v138 = vld [vmem:[%s1] sm:$0xff]
  %v139 = vld [vmem:[%s1 + $0x8] sm:$0xff]
  %v140 = vld [vmem:[%s1 + $0x10] sm:$0xff]
  %v141 = vld [vmem:[%s1 + $0x18] sm:$0xff]
  %v142 = vld [vmem:[%s1 + $0x20] sm:$0xff]
  %v143 = vld [vmem:[%s1 + $0x28] sm:$0xff]
  %v144 = vld [vmem:[%s1 + $0x30] sm:$0xff]
  %v145 = vld [vmem:[%s1 + $0x38] sm:$0xff]
  %v146 = vld [vmem:[%s1 + $0x40] sm:$0xff]
  %v147 = vld [vmem:[%s1 + $0x48] sm:$0xff]
  %v148 = vld [vmem:[%s1 + $0x50] sm:$0xff]
  %v149 = vld [vmem:[%s1 + $0x58] sm:$0xff]
  %v150 = vld [vmem:[%s1 + $0x60] sm:$0xff]
  %v151 = vld [vmem:[%s1 + $0x68] sm:$0xff]
  %v152 = vld [vmem:[%s1 + $0x70] sm:$0xff]
  %v153 = vld [vmem:[%s1 + $0x78] sm:$0xff]
  %v154 = vld [vmem:[%s1 + $0x80] sm:$0xff]
  %v155 = vld [vmem:[%s1 + $0x88] sm:$0xff]
  %v156 = vld [vmem:[%s1 + $0x90] sm:$0xff]
  %v157 = vld [vmem:[%s1 + $0x98] sm:$0xff]
  %v158 = vld [vmem:[%s1 + $0xa0] sm:$0xff]
  %v159 = vld [vmem:[%s1 + $0xa8] sm:$0xff]
  %v160 = vld [vmem:[%s1 + $0xb0] sm:$0xff]
  %v161 = vld [vmem:[%s1 + $0xb8] sm:$0xff]
  %v162 = vld [vmem:[%s1 + $0xc0] sm:$0xff]
  %v163 = vld [vmem:[%s1 + $0xc8] sm:$0xff]
  %v164 = vld [vmem:[%s1 + $0xd0] sm:$0xff]
  %v165 = vld [vmem:[%s1 + $0xd8] sm:$0xff]
  %v166 = vld [vmem:[%s1 + $0xe0] sm:$0xff]
  %v167 = vld [vmem:[%s1 + $0xe8] sm:$0xff]
  %v168 = vld [vmem:[%s1 + $0xf0] sm:$0xff]
  %v169 = vld [vmem:[%s1 + $0xf8] sm:$0xff]
  %v170 = vld [vmem:[%s5] sm:$0xff]
  %vm171 = vcmask 64512
  %v173 = vsel %vm171, %v138, 0
  %v176 = vsel %vm171, %v139, 0
  %v179 = vsel %vm171, %v140, 0
  %v182 = vsel %vm171, %v141, 0
  %v185 = vsel %vm171, %v142, 0
  %v188 = vsel %vm171, %v143, 0
  %v191 = vsel %vm171, %v144, 0
  %v194 = vsel %vm171, %v145, 0
  %v197 = vsel %vm171, %v146, 0
  %v200 = vsel %vm171, %v147, 0
  %v203 = vsel %vm171, %v148, 0
  %v206 = vsel %vm171, %v149, 0
  %v209 = vsel %vm171, %v150, 0
  %v212 = vsel %vm171, %v151, 0
  %v215 = vsel %vm171, %v152, 0
  %v218 = vsel %vm171, %v153, 0
  %v221 = vsel %vm171, %v154, 0
  %v224 = vsel %vm171, %v155, 0
  %v227 = vsel %vm171, %v156, 0
  %v230 = vsel %vm171, %v157, 0
  %v233 = vsel %vm171, %v158, 0
  %v236 = vsel %vm171, %v159, 0
  %v239 = vsel %vm171, %v160, 0
  %v242 = vsel %vm171, %v161, 0
  %v245 = vsel %vm171, %v162, 0
  %v248 = vsel %vm171, %v163, 0
  %v251 = vsel %vm171, %v164, 0
  %v254 = vsel %vm171, %v165, 0
  %v257 = vsel %vm171, %v166, 0
  %v260 = vsel %vm171, %v167, 0
  %v263 = vsel %vm171, %v168, 0
  %v266 = vsel %vm171, %v169, 0
  %268 = vmatpush.msra.mxu0 0.0
  %269 = vmatpush.msra.mxu0 0.0
  %270 = vmatpush.msra.mxu0 0.0
  %271 = vmatpush.msra.mxu0 0.0
  %272 = vmatpush.msra.mxu0 0.0
  %273 = vmatpush.msra.mxu0 0.0
  %274 = vmatpush.msra.mxu0 0.0
  %275 = vmatpush.msra.mxu0 0.0
  %276 = vmatpush.msra.mxu0 0.0
  %277 = vmatpush.msra.mxu0 0.0
  %278 = vmatpush.msra.mxu0 0.0
  %279 = vmatpush.msra.mxu0 0.0
  %280 = vmatpush.msra.mxu0 0.0
  %281 = vmatpush.msra.mxu0 0.0
  %282 = vmatpush.msra.mxu0 0.0
  %283 = vmatpush.msra.mxu0 %v170
  %284 = vmatmul.f32.gmra.mxu0 %v173
  %v285 = vpop.f32.mrf.mxu0
  %v286 = vadd.f32 0.0, %v285
  %287 = vmatmul.f32.gmra.mxu0 %v176
  %v288 = vpop.f32.mrf.mxu0
  %v289 = vadd.f32 0.0, %v288
  %290 = vmatmul.f32.gmra.mxu0 %v179
  %v291 = vpop.f32.mrf.mxu0
  %v292 = vadd.f32 0.0, %v291
  %293 = vmatmul.f32.gmra.mxu0 %v182
  %v294 = vpop.f32.mrf.mxu0
  %v295 = vadd.f32 0.0, %v294
  %296 = vmatmul.f32.gmra.mxu0 %v185
  %v297 = vpop.f32.mrf.mxu0
  %v298 = vadd.f32 0.0, %v297
  %299 = vmatmul.f32.gmra.mxu0 %v188
  %v300 = vpop.f32.mrf.mxu0
  %v301 = vadd.f32 0.0, %v300
  %302 = vmatmul.f32.gmra.mxu0 %v191
  %v303 = vpop.f32.mrf.mxu0
  %v304 = vadd.f32 0.0, %v303
  %305 = vmatmul.f32.gmra.mxu0 %v194
  %v306 = vpop.f32.mrf.mxu0
  %v307 = vadd.f32 0.0, %v306
  %308 = vmatmul.f32.gmra.mxu0 %v197
  %v309 = vpop.f32.mrf.mxu0
  %v310 = vadd.f32 0.0, %v309
  %311 = vmatmul.f32.gmra.mxu0 %v200
  %v312 = vpop.f32.mrf.mxu0
  %v313 = vadd.f32 0.0, %v312
  %314 = vmatmul.f32.gmra.mxu0 %v203
  %v315 = vpop.f32.mrf.mxu0
  %v316 = vadd.f32 0.0, %v315
  %317 = vmatmul.f32.gmra.mxu0 %v206
  %v318 = vpop.f32.mrf.mxu0
  %v319 = vadd.f32 0.0, %v318
  %320 = vmatmul.f32.gmra.mxu0 %v209
  %v321 = vpop.f32.mrf.mxu0
  %v322 = vadd.f32 0.0, %v321
  %323 = vmatmul.f32.gmra.mxu0 %v212
  %v324 = vpop.f32.mrf.mxu0
  %v325 = vadd.f32 0.0, %v324
  %326 = vmatmul.f32.gmra.mxu0 %v215
  %v327 = vpop.f32.mrf.mxu0
  %v328 = vadd.f32 0.0, %v327
  %329 = vmatmul.f32.gmra.mxu0 %v218
  %v330 = vpop.f32.mrf.mxu0
  %v331 = vadd.f32 0.0, %v330
  %332 = vmatmul.f32.gmra.mxu0 %v221
  %v333 = vpop.f32.mrf.mxu0
  %v334 = vadd.f32 0.0, %v333
  %335 = vmatmul.f32.gmra.mxu0 %v224
  %v336 = vpop.f32.mrf.mxu0
  %v337 = vadd.f32 0.0, %v336
  %338 = vmatmul.f32.gmra.mxu0 %v227
  %v339 = vpop.f32.mrf.mxu0
  %v340 = vadd.f32 0.0, %v339
  %341 = vmatmul.f32.gmra.mxu0 %v230
  %v342 = vpop.f32.mrf.mxu0
  %v343 = vadd.f32 0.0, %v342
  %344 = vmatmul.f32.gmra.mxu0 %v233
  %v345 = vpop.f32.mrf.mxu0
  %v346 = vadd.f32 0.0, %v345
  %347 = vmatmul.f32.gmra.mxu0 %v236
  %v348 = vpop.f32.mrf.mxu0
  %v349 = vadd.f32 0.0, %v348
  %350 = vmatmul.f32.gmra.mxu0 %v239
  %v351 = vpop.f32.mrf.mxu0
  %v352 = vadd.f32 0.0, %v351
  %353 = vmatmul.f32.gmra.mxu0 %v242
  %v354 = vpop.f32.mrf.mxu0
  %v355 = vadd.f32 0.0, %v354
  %356 = vmatmul.f32.gmra.mxu0 %v245
  %v357 = vpop.f32.mrf.mxu0
  %v358 = vadd.f32 0.0, %v357
  %359 = vmatmul.f32.gmra.mxu0 %v248
  %v360 = vpop.f32.mrf.mxu0
  %v361 = vadd.f32 0.0, %v360
  %362 = vmatmul.f32.gmra.mxu0 %v251
  %v363 = vpop.f32.mrf.mxu0
  %v364 = vadd.f32 0.0, %v363
  %365 = vmatmul.f32.gmra.mxu0 %v254
  %v366 = vpop.f32.mrf.mxu0
  %v367 = vadd.f32 0.0, %v366
  %368 = vmatmul.f32.gmra.mxu0 %v257
  %v369 = vpop.f32.mrf.mxu0
  %v370 = vadd.f32 0.0, %v369
  %371 = vmatmul.f32.gmra.mxu0 %v260
  %v372 = vpop.f32.mrf.mxu0
  %v373 = vadd.f32 0.0, %v372
  %374 = vmatmul.f32.gmra.mxu0 %v263
  %v375 = vpop.f32.mrf.mxu0
  %v376 = vadd.f32 0.0, %v375
  %377 = vmatmul.f32.gmra.mxu0 %v266
  %v378 = vpop.f32.mrf.mxu0
  %v379 = vadd.f32 0.0, %v378
  %380 = vdwg.mxu0
  %v381 = vld [vmem:[%s6] sm:$0xf]
  %v384 = vrot.slane %v133, 1
  %v385 = vrot.slane %v133, 2
  %v386 = vrot.slane %v133, 3
  %v387 = vrot.slane %v133, 4
  %v388 = vrot.slane %v133, 5
  %v389 = vrot.slane %v133, 6
  %v390 = vrot.slane %v133, 7
  %v391 = vrot.slane %v136, 1
  %v392 = vrot.slane %v136, 2
  %v393 = vrot.slane %v136, 3
  %v394 = vrot.slane %v136, 4
  %v395 = vrot.slane %v136, 5
  %v396 = vrot.slane %v136, 6
  %v397 = vrot.slane %v136, 7
  %v398 = vperm.slane %v133, 0
  %v399 = vperm.slane %v384, 0
  %v400 = vperm.slane %v385, 0
  %v401 = vperm.slane %v386, 0
  %v402 = vperm.slane %v387, 0
  %v403 = vperm.slane %v388, 0
  %v404 = vperm.slane %v389, 0
  %v405 = vperm.slane %v390, 0
  %v406 = vperm.slane %v136, 0
  %v407 = vperm.slane %v391, 0
  %v408 = vperm.slane %v392, 0
  %v409 = vperm.slane %v393, 0
  %v410 = vperm.slane %v394, 0
  %v411 = vperm.slane %v395, 0
  %v412 = vperm.slane %v396, 0
  %v413 = vperm.slane %v397, 0
  %v430 = vadd.f32 %v398, %v110
  %v431 = vadd.f32 %v398, %v113
  %v432 = vadd.f32 %v399, %v110
  %v433 = vadd.f32 %v399, %v113
  %v434 = vadd.f32 %v400, %v110
  %v435 = vadd.f32 %v400, %v113
  %v436 = vadd.f32 %v401, %v110
  %v437 = vadd.f32 %v401, %v113
  %v438 = vadd.f32 %v402, %v110
  %v439 = vadd.f32 %v402, %v113
  %v440 = vadd.f32 %v403, %v110
  %v441 = vadd.f32 %v403, %v113
  %v442 = vadd.f32 %v404, %v110
  %v443 = vadd.f32 %v404, %v113
  %v444 = vadd.f32 %v405, %v110
  %v445 = vadd.f32 %v405, %v113
  %v446 = vadd.f32 %v406, %v110
  %v447 = vadd.f32 %v406, %v113
  %v448 = vadd.f32 %v407, %v110
  %v449 = vadd.f32 %v407, %v113
  %v450 = vadd.f32 %v408, %v110
  %v451 = vadd.f32 %v408, %v113
  %v452 = vadd.f32 %v409, %v110
  %v453 = vadd.f32 %v409, %v113
  %v454 = vadd.f32 %v410, %v110
  %v455 = vadd.f32 %v410, %v113
  %v456 = vadd.f32 %v411, %v110
  %v457 = vadd.f32 %v411, %v113
  %v458 = vadd.f32 %v412, %v110
  %v459 = vadd.f32 %v412, %v113
  %v460 = vadd.f32 %v413, %v110
  %v461 = vadd.f32 %v413, %v113
  %v462 = vadd.f32 %v430, %v286
  %v463 = vadd.f32 %v431, %v289
  %v464 = vadd.f32 %v432, %v292
  %v465 = vadd.f32 %v433, %v295
  %v466 = vadd.f32 %v434, %v298
  %v467 = vadd.f32 %v435, %v301
  %v468 = vadd.f32 %v436, %v304
  %v469 = vadd.f32 %v437, %v307
  %v470 = vadd.f32 %v438, %v310
  %v471 = vadd.f32 %v439, %v313
  %v472 = vadd.f32 %v440, %v316
  %v473 = vadd.f32 %v441, %v319
  %v474 = vadd.f32 %v442, %v322
  %v475 = vadd.f32 %v443, %v325
  %v476 = vadd.f32 %v444, %v328
  %v477 = vadd.f32 %v445, %v331
  %v478 = vadd.f32 %v446, %v334
  %v479 = vadd.f32 %v447, %v337
  %v480 = vadd.f32 %v448, %v340
  %v481 = vadd.f32 %v449, %v343
  %v482 = vadd.f32 %v450, %v346
  %v483 = vadd.f32 %v451, %v349
  %v484 = vadd.f32 %v452, %v352
  %v485 = vadd.f32 %v453, %v355
  %v486 = vadd.f32 %v454, %v358
  %v487 = vadd.f32 %v455, %v361
  %v488 = vadd.f32 %v456, %v364
  %v489 = vadd.f32 %v457, %v367
  %v490 = vadd.f32 %v458, %v370
  %v491 = vadd.f32 %v459, %v373
  %v492 = vadd.f32 %v460, %v376
  %v493 = vadd.f32 %v461, %v379
  %vm494 = vcmp.gt.f32.partialorder %v462, 0.0
  %vm495 = vcmp.gt.f32.partialorder %v463, 0.0
  %vm496 = vcmp.gt.f32.partialorder %v464, 0.0
  %vm497 = vcmp.gt.f32.partialorder %v465, 0.0
  %vm498 = vcmp.gt.f32.partialorder %v466, 0.0
  %vm499 = vcmp.gt.f32.partialorder %v467, 0.0
  %vm500 = vcmp.gt.f32.partialorder %v468, 0.0
  %vm501 = vcmp.gt.f32.partialorder %v469, 0.0
  %vm502 = vcmp.gt.f32.partialorder %v470, 0.0
  %vm503 = vcmp.gt.f32.partialorder %v471, 0.0
  %vm504 = vcmp.gt.f32.partialorder %v472, 0.0
  %vm505 = vcmp.gt.f32.partialorder %v473, 0.0
  %vm506 = vcmp.gt.f32.partialorder %v474, 0.0
  %vm507 = vcmp.gt.f32.partialorder %v475, 0.0
  %vm508 = vcmp.gt.f32.partialorder %v476, 0.0
  %vm509 = vcmp.gt.f32.partialorder %v477, 0.0
  %vm510 = vcmp.gt.f32.partialorder %v478, 0.0
  %vm511 = vcmp.gt.f32.partialorder %v479, 0.0
  %vm512 = vcmp.gt.f32.partialorder %v480, 0.0
  %vm513 = vcmp.gt.f32.partialorder %v481, 0.0
  %vm514 = vcmp.gt.f32.partialorder %v482, 0.0
  %vm515 = vcmp.gt.f32.partialorder %v483, 0.0
  %vm516 = vcmp.gt.f32.partialorder %v484, 0.0
  %vm517 = vcmp.gt.f32.partialorder %v485, 0.0
  %vm518 = vcmp.gt.f32.partialorder %v486, 0.0
  %vm519 = vcmp.gt.f32.partialorder %v487, 0.0
  %vm520 = vcmp.gt.f32.partialorder %v488, 0.0
  %vm521 = vcmp.gt.f32.partialorder %v489, 0.0
  %vm522 = vcmp.gt.f32.partialorder %v490, 0.0
  %vm523 = vcmp.gt.f32.partialorder %v491, 0.0
  %vm524 = vcmp.gt.f32.partialorder %v492, 0.0
  %vm525 = vcmp.gt.f32.partialorder %v493, 0.0
  %v526 = vmul.f32 %v462, 0.2
  %v527 = vmul.f32 %v463, 0.2
  %v528 = vmul.f32 %v464, 0.2
  %v529 = vmul.f32 %v465, 0.2
  %v530 = vmul.f32 %v466, 0.2
  %v531 = vmul.f32 %v467, 0.2
  %v532 = vmul.f32 %v468, 0.2
  %v533 = vmul.f32 %v469, 0.2
  %v534 = vmul.f32 %v470, 0.2
  %v535 = vmul.f32 %v471, 0.2
  %v536 = vmul.f32 %v472, 0.2
  %v537 = vmul.f32 %v473, 0.2
  %v538 = vmul.f32 %v474, 0.2
  %v539 = vmul.f32 %v475, 0.2
  %v540 = vmul.f32 %v476, 0.2
  %v541 = vmul.f32 %v477, 0.2
  %v542 = vmul.f32 %v478, 0.2
  %v543 = vmul.f32 %v479, 0.2
  %v544 = vmul.f32 %v480, 0.2
  %v545 = vmul.f32 %v481, 0.2
  %v546 = vmul.f32 %v482, 0.2
  %v547 = vmul.f32 %v483, 0.2
  %v548 = vmul.f32 %v484, 0.2
  %v549 = vmul.f32 %v485, 0.2
  %v550 = vmul.f32 %v486, 0.2
  %v551 = vmul.f32 %v487, 0.2
  %v552 = vmul.f32 %v488, 0.2
  %v553 = vmul.f32 %v489, 0.2
  %v554 = vmul.f32 %v490, 0.2
  %v555 = vmul.f32 %v491, 0.2
  %v556 = vmul.f32 %v492, 0.2
  %v557 = vmul.f32 %v493, 0.2
  %v558 = vsel %vm494, %v462, %v526
  %v559 = vsel %vm495, %v463, %v527
  %v560 = vsel %vm496, %v464, %v528
  %v561 = vsel %vm497, %v465, %v529
  %v562 = vsel %vm498, %v466, %v530
  %v563 = vsel %vm499, %v467, %v531
  %v564 = vsel %vm500, %v468, %v532
  %v565 = vsel %vm501, %v469, %v533
  %v566 = vsel %vm502, %v470, %v534
  %v567 = vsel %vm503, %v471, %v535
  %v568 = vsel %vm504, %v472, %v536
  %v569 = vsel %vm505, %v473, %v537
  %v570 = vsel %vm506, %v474, %v538
  %v571 = vsel %vm507, %v475, %v539
  %v572 = vsel %vm508, %v476, %v540
  %v573 = vsel %vm509, %v477, %v541
  %v574 = vsel %vm510, %v478, %v542
  %v575 = vsel %vm511, %v479, %v543
  %v576 = vsel %vm512, %v480, %v544
  %v577 = vsel %vm513, %v481, %v545
  %v578 = vsel %vm514, %v482, %v546
  %v579 = vsel %vm515, %v483, %v547
  %v580 = vsel %vm516, %v484, %v548
  %v581 = vsel %vm517, %v485, %v549
  %v582 = vsel %vm518, %v486, %v550
  %v583 = vsel %vm519, %v487, %v551
  %v584 = vsel %vm520, %v488, %v552
  %v585 = vsel %vm521, %v489, %v553
  %v586 = vsel %vm522, %v490, %v554
  %v587 = vsel %vm523, %v491, %v555
  %v588 = vsel %vm524, %v492, %v556
  %v589 = vsel %vm525, %v493, %v557
  %v590 = vperm.slane %v381, 0
  %v591 = vmul.f32 %v558, %v590
  %v592 = vmul.f32 %v559, %v590
  %v593 = vmul.f32 %v560, %v590
  %v594 = vmul.f32 %v561, %v590
  %v595 = vmul.f32 %v562, %v590
  %v596 = vmul.f32 %v563, %v590
  %v597 = vmul.f32 %v564, %v590
  %v598 = vmul.f32 %v565, %v590
  %v599 = vmul.f32 %v566, %v590
  %v600 = vmul.f32 %v567, %v590
  %v601 = vmul.f32 %v568, %v590
  %v602 = vmul.f32 %v569, %v590
  %v603 = vmul.f32 %v570, %v590
  %v604 = vmul.f32 %v571, %v590
  %v605 = vmul.f32 %v572, %v590
  %v606 = vmul.f32 %v573, %v590
  %v607 = vmul.f32 %v574, %v590
  %v608 = vmul.f32 %v575, %v590
  %v609 = vmul.f32 %v576, %v590
  %v610 = vmul.f32 %v577, %v590
  %v611 = vmul.f32 %v578, %v590
  %v612 = vmul.f32 %v579, %v590
  %v613 = vmul.f32 %v580, %v590
  %v614 = vmul.f32 %v581, %v590
  %v615 = vmul.f32 %v582, %v590
  %v616 = vmul.f32 %v583, %v590
  %v617 = vmul.f32 %v584, %v590
  %v618 = vmul.f32 %v585, %v590
  %v619 = vmul.f32 %v586, %v590
  %v620 = vmul.f32 %v587, %v590
  %v621 = vmul.f32 %v588, %v590
  %v622 = vmul.f32 %v589, %v590
  %vm623 = vcmask 261120
  %v624 = vsel %vm623, %v591, 0.0
  %625 = vadd.xlane.f32.xlu0 %v624
  %v626 = vpop.xlane.xlu0 %625
  %v627 = vsel %vm623, %v592, 0.0
  %628 = vadd.xlane.f32.xlu0 %v627
  %v629 = vpop.xlane.xlu0 %628
  %v630 = vsel %vm623, %v593, 0.0
  %631 = vadd.xlane.f32.xlu0 %v630
  %v632 = vpop.xlane.xlu0 %631
  %v633 = vsel %vm623, %v594, 0.0
  %634 = vadd.xlane.f32.xlu0 %v633
  %v635 = vpop.xlane.xlu0 %634
  %v636 = vsel %vm623, %v595, 0.0
  %637 = vadd.xlane.f32.xlu0 %v636
  %v638 = vpop.xlane.xlu0 %637
  %v639 = vsel %vm623, %v596, 0.0
  %640 = vadd.xlane.f32.xlu0 %v639
  %v641 = vpop.xlane.xlu0 %640
  %v642 = vsel %vm623, %v597, 0.0
  %643 = vadd.xlane.f32.xlu0 %v642
  %v644 = vpop.xlane.xlu0 %643
  %v645 = vsel %vm623, %v598, 0.0
  %646 = vadd.xlane.f32.xlu0 %v645
  %v647 = vpop.xlane.xlu0 %646
  %v648 = vsel %vm623, %v599, 0.0
  %649 = vadd.xlane.f32.xlu0 %v648
  %v650 = vpop.xlane.xlu0 %649
  %v651 = vsel %vm623, %v600, 0.0
  %652 = vadd.xlane.f32.xlu0 %v651
  %v653 = vpop.xlane.xlu0 %652
  %v654 = vsel %vm623, %v601, 0.0
  %655 = vadd.xlane.f32.xlu0 %v654
  %v656 = vpop.xlane.xlu0 %655
  %v657 = vsel %vm623, %v602, 0.0
  %658 = vadd.xlane.f32.xlu0 %v657
  %v659 = vpop.xlane.xlu0 %658
  %v660 = vsel %vm623, %v603, 0.0
  %661 = vadd.xlane.f32.xlu0 %v660
  %v662 = vpop.xlane.xlu0 %661
  %v663 = vsel %vm623, %v604, 0.0
  %664 = vadd.xlane.f32.xlu0 %v663
  %v665 = vpop.xlane.xlu0 %664
  %v666 = vsel %vm623, %v605, 0.0
  %667 = vadd.xlane.f32.xlu0 %v666
  %v668 = vpop.xlane.xlu0 %667
  %v669 = vsel %vm623, %v606, 0.0
  %670 = vadd.xlane.f32.xlu0 %v669
  %v671 = vpop.xlane.xlu0 %670
  %v672 = vsel %vm623, %v607, 0.0
  %673 = vadd.xlane.f32.xlu0 %v672
  %v674 = vpop.xlane.xlu0 %673
  %v675 = vsel %vm623, %v608, 0.0
  %676 = vadd.xlane.f32.xlu0 %v675
  %v677 = vpop.xlane.xlu0 %676
  %v678 = vsel %vm623, %v609, 0.0
  %679 = vadd.xlane.f32.xlu0 %v678
  %v680 = vpop.xlane.xlu0 %679
  %v681 = vsel %vm623, %v610, 0.0
  %682 = vadd.xlane.f32.xlu0 %v681
  %v683 = vpop.xlane.xlu0 %682
  %v684 = vsel %vm623, %v611, 0.0
  %685 = vadd.xlane.f32.xlu0 %v684
  %v686 = vpop.xlane.xlu0 %685
  %v687 = vsel %vm623, %v612, 0.0
  %688 = vadd.xlane.f32.xlu0 %v687
  %v689 = vpop.xlane.xlu0 %688
  %v690 = vsel %vm623, %v613, 0.0
  %691 = vadd.xlane.f32.xlu0 %v690
  %v692 = vpop.xlane.xlu0 %691
  %v693 = vsel %vm623, %v614, 0.0
  %694 = vadd.xlane.f32.xlu0 %v693
  %v695 = vpop.xlane.xlu0 %694
  %v696 = vsel %vm623, %v615, 0.0
  %697 = vadd.xlane.f32.xlu0 %v696
  %v698 = vpop.xlane.xlu0 %697
  %v699 = vsel %vm623, %v616, 0.0
  %700 = vadd.xlane.f32.xlu0 %v699
  %v701 = vpop.xlane.xlu0 %700
  %v702 = vsel %vm623, %v617, 0.0
  %703 = vadd.xlane.f32.xlu0 %v702
  %v704 = vpop.xlane.xlu0 %703
  %v705 = vsel %vm623, %v618, 0.0
  %706 = vadd.xlane.f32.xlu0 %v705
  %v707 = vpop.xlane.xlu0 %706
  %v708 = vsel %vm623, %v619, 0.0
  %709 = vadd.xlane.f32.xlu0 %v708
  %v710 = vpop.xlane.xlu0 %709
  %v711 = vsel %vm623, %v620, 0.0
  %712 = vadd.xlane.f32.xlu0 %v711
  %v713 = vpop.xlane.xlu0 %712
  %v714 = vsel %vm623, %v621, 0.0
  %715 = vadd.xlane.f32.xlu0 %v714
  %v716 = vpop.xlane.xlu0 %715
  %v717 = vsel %vm623, %v622, 0.0
  %718 = vadd.xlane.f32.xlu0 %v717
  %v719 = vpop.xlane.xlu0 %718
  %vm720 = vcmp.gt.f32.partialorder %v52, 0.0
  %vm721 = vcmp.gt.f32.partialorder %v53, 0.0
  %v754 = vlaneseq
  %v755 = vand.u32 %v754, 127
  %v756 = vperm.slane %v626, %v755
  %v757 = vadd.s32 %v755, 4294967288
  %v758 = vperm.slane %v629, %v757
  %vm759 = vcmask 130112
  %v760 = vsel %vm759, %v758, %v756
  %v761 = vperm.slane %v632, %v755
  %v762 = vperm.slane %v635, %v757
  %v763 = vsel %vm759, %v762, %v761
  %v764 = vperm.slane %v638, %v755
  %v765 = vperm.slane %v641, %v757
  %v766 = vsel %vm759, %v765, %v764
  %v767 = vperm.slane %v644, %v755
  %v768 = vperm.slane %v647, %v757
  %v769 = vsel %vm759, %v768, %v767
  %v770 = vperm.slane %v650, %v755
  %v771 = vperm.slane %v653, %v757
  %v772 = vsel %vm759, %v771, %v770
  %v773 = vperm.slane %v656, %v755
  %v774 = vperm.slane %v659, %v757
  %v775 = vsel %vm759, %v774, %v773
  %v776 = vperm.slane %v662, %v755
  %v777 = vperm.slane %v665, %v757
  %v778 = vsel %vm759, %v777, %v776
  %v779 = vperm.slane %v668, %v755
  %v780 = vperm.slane %v671, %v757
  %v781 = vsel %vm759, %v780, %v779
  %v782 = vperm.slane %v674, %v755
  %v783 = vperm.slane %v677, %v757
  %v784 = vsel %vm759, %v783, %v782
  %v785 = vperm.slane %v680, %v755
  %v786 = vperm.slane %v683, %v757
  %v787 = vsel %vm759, %v786, %v785
  %v788 = vperm.slane %v686, %v755
  %v789 = vperm.slane %v689, %v757
  %v790 = vsel %vm759, %v789, %v788
  %v791 = vperm.slane %v692, %v755
  %v792 = vperm.slane %v695, %v757
  %v793 = vsel %vm759, %v792, %v791
  %v794 = vperm.slane %v698, %v755
  %v795 = vperm.slane %v701, %v757
  %v796 = vsel %vm759, %v795, %v794
  %v797 = vperm.slane %v704, %v755
  %v798 = vperm.slane %v707, %v757
  %v799 = vsel %vm759, %v798, %v797
  %v800 = vperm.slane %v710, %v755
  %v801 = vperm.slane %v713, %v757
  %v802 = vsel %vm759, %v801, %v800
  %v803 = vperm.slane %v716, %v755
  %v804 = vperm.slane %v719, %v757
  %v805 = vsel %vm759, %v804, %v803
  %vm806 = vcmask 1041409
  %v807 = vsel %vm806, %v763, %v760
  %vm808 = vcmask 1042434
  %v809 = vsel %vm808, %v766, %v807
  %vm810 = vcmask 1043459
  %v811 = vsel %vm810, %v769, %v809
  %vm812 = vcmask 1044484
  %v813 = vsel %vm812, %v772, %v811
  %vm814 = vcmask 1045509
  %v815 = vsel %vm814, %v775, %v813
  %vm816 = vcmask 1046534
  %v817 = vsel %vm816, %v778, %v815
  %vm818 = vcmask 1047559
  %v819 = vsel %vm818, %v781, %v817
  %v820 = vsel %vm806, %v787, %v784
  %v821 = vsel %vm808, %v790, %v820
  %v822 = vsel %vm810, %v793, %v821
  %v823 = vsel %vm812, %v796, %v822
  %v824 = vsel %vm814, %v799, %v823
  %v825 = vsel %vm816, %v802, %v824
  %v826 = vsel %vm818, %v805, %v825
  %v829 = vsel %vm720, %v819, -1e+30
  %v830 = vsel %vm721, %v826, -1e+30
  %vm831 = vcmask 130048
  %v832 = vsel %vm831, %v829, -inf
  %833 = vmax.xlane.f32.xlu0 %v832
  %v834 = vpop.xlane.xlu0 %833
  %v835 = vsel %vm831, %v830, -inf
  %836 = vmax.xlane.f32.xlu0 %v835
  %v837 = vpop.xlane.xlu0 %836
  %v838 = vsub.f32 %v829, %v834
  %v839 = vsub.f32 %v830, %v837
  %v840 = vmul.f32 %v838, 1.442695
  %v841 = vpow.pop %v840
  %v842 = vmul.f32 %v839, 1.442695
  %v843 = vpow.pop %v842
  %v844 = vmul.f32 %v841, %v52
  %v845 = vmul.f32 %v843, %v53
  %v846 = vsel %vm831, %v844, 0.0
  %847 = vadd.xlane.f32.xlu0 %v846
  %v848 = vpop.xlane.xlu0 %847
  %v849 = vsel %vm831, %v845, 0.0
  %850 = vadd.xlane.f32.xlu0 %v849
  %v851 = vpop.xlane.xlu0 %850
  %v852 = vmax.f32 %v848, 1e-20
  %v853 = vmax.f32 %v851, 1e-20
  %v854 = vrcp.pop %v852
  %v855 = vmul.f32 %v852, %v854
  %v856 = vsub.f32 1.0, %v855
  %v857 = vmul.f32 %v854, %v856
  %v858 = vadd.f32 %v854, %v857
  %vm859 = vweird.f32 %v852
  %vm860 = vweird.f32 %v854
  %vm861 = vmor %vm859, %vm860
  %v862 = vsel %vm861, %v854, %v858
  %v863 = vand.u32 2147483647, %v852
  %vm864 = vcmp.eq.f32.partialorder %v863, 8.507059e+37
  %v865 = vand.u32 %v852, 2147483648
  %v866 = vor.u32 1.1754944e-38, %v865
  %v867 = vsel %vm864, %v866, %v862
  %v868 = vmul.f32 %v844, %v867
  %v869 = vrcp.pop %v853
  %v870 = vmul.f32 %v853, %v869
  %v871 = vsub.f32 1.0, %v870
  %v872 = vmul.f32 %v869, %v871
  %v873 = vadd.f32 %v869, %v872
  %vm874 = vweird.f32 %v853
  %vm875 = vweird.f32 %v869
  %vm876 = vmor %vm874, %vm875
  %v877 = vsel %vm876, %v869, %v873
  %v878 = vand.u32 2147483647, %v853
  %vm879 = vcmp.eq.f32.partialorder %v878, 8.507059e+37
  %v880 = vand.u32 %v853, 2147483648
  %v881 = vor.u32 1.1754944e-38, %v880
  %v882 = vsel %vm879, %v881, %v877
  %v883 = vmul.f32 %v845, %v882
  %v885 = vsel %vm831, %v868, 0
  %v888 = vsel %vm831, %v883, 0
  %890 = vmatpush.msra.mxu0 0.0
  %891 = vmatpush.msra.mxu0 0.0
  %892 = vmatpush.msra.mxu0 0.0
  %893 = vmatpush.msra.mxu0 0.0
  %894 = vmatpush.msra.mxu0 0.0
  %895 = vmatpush.msra.mxu0 0.0
  %896 = vmatpush.msra.mxu0 0.0
  %897 = vmatpush.msra.mxu0 0.0
  %898 = vmatpush.msra.mxu0 0.0
  %899 = vmatpush.msra.mxu0 0.0
  %900 = vmatpush.msra.mxu0 0.0
  %901 = vmatpush.msra.mxu0 0.0
  %902 = vmatpush.msra.mxu0 0.0
  %903 = vmatpush.msra.mxu0 0.0
  %904 = vmatpush.msra.mxu0 %v113
  %905 = vmatpush.msra.mxu0 %v110
  %906 = vmatmul.f32.gmra.mxu0 %v885
  %v907 = vpop.f32.mrf.mxu0
  %v908 = vadd.f32 0.0, %v907
  %909 = vmatmul.f32.gmra.mxu0 %v888
  %v910 = vpop.f32.mrf.mxu0
  %v911 = vadd.f32 0.0, %v910
  %912 = vdwg.mxu0
  %v913 = vperm.slane %v381, 1
  %915 = vrot.lane.b32.xlu0 %v913, 32
  %v916 = vpop.permute.xlu0 %915
  %v918 = vmul.f32 %v558, %v916
  %v919 = vmul.f32 %v559, %v916
  %v920 = vmul.f32 %v560, %v916
  %v921 = vmul.f32 %v561, %v916
  %v922 = vmul.f32 %v562, %v916
  %v923 = vmul.f32 %v563, %v916
  %v924 = vmul.f32 %v564, %v916
  %v925 = vmul.f32 %v565, %v916
  %v926 = vmul.f32 %v566, %v916
  %v927 = vmul.f32 %v567, %v916
  %v928 = vmul.f32 %v568, %v916
  %v929 = vmul.f32 %v569, %v916
  %v930 = vmul.f32 %v570, %v916
  %v931 = vmul.f32 %v571, %v916
  %v932 = vmul.f32 %v572, %v916
  %v933 = vmul.f32 %v573, %v916
  %v934 = vmul.f32 %v574, %v916
  %v935 = vmul.f32 %v575, %v916
  %v936 = vmul.f32 %v576, %v916
  %v937 = vmul.f32 %v577, %v916
  %v938 = vmul.f32 %v578, %v916
  %v939 = vmul.f32 %v579, %v916
  %v940 = vmul.f32 %v580, %v916
  %v941 = vmul.f32 %v581, %v916
  %v942 = vmul.f32 %v582, %v916
  %v943 = vmul.f32 %v583, %v916
  %v944 = vmul.f32 %v584, %v916
  %v945 = vmul.f32 %v585, %v916
  %v946 = vmul.f32 %v586, %v916
  %v947 = vmul.f32 %v587, %v916
  %v948 = vmul.f32 %v588, %v916
  %v949 = vmul.f32 %v589, %v916
  %982 = vrot.lane.b32.xlu0 %v918, 96
  %v983 = vpop.permute.xlu0 %982
  %984 = vrot.lane.b32.xlu0 %v919, 96
  %v985 = vpop.permute.xlu0 %984
  %986 = vrot.lane.b32.xlu0 %v920, 96
  %v987 = vpop.permute.xlu0 %986
  %988 = vrot.lane.b32.xlu0 %v921, 96
  %v989 = vpop.permute.xlu0 %988
  %990 = vrot.lane.b32.xlu0 %v922, 96
  %v991 = vpop.permute.xlu0 %990
  %992 = vrot.lane.b32.xlu0 %v923, 96
  %v993 = vpop.permute.xlu0 %992
  %994 = vrot.lane.b32.xlu0 %v924, 96
  %v995 = vpop.permute.xlu0 %994
  %996 = vrot.lane.b32.xlu0 %v925, 96
  %v997 = vpop.permute.xlu0 %996
  %998 = vrot.lane.b32.xlu0 %v926, 96
  %v999 = vpop.permute.xlu0 %998
  %1000 = vrot.lane.b32.xlu0 %v927, 96
  %v1001 = vpop.permute.xlu0 %1000
  %1002 = vrot.lane.b32.xlu0 %v928, 96
  %v1003 = vpop.permute.xlu0 %1002
  %1004 = vrot.lane.b32.xlu0 %v929, 96
  %v1005 = vpop.permute.xlu0 %1004
  %1006 = vrot.lane.b32.xlu0 %v930, 96
  %v1007 = vpop.permute.xlu0 %1006
  %1008 = vrot.lane.b32.xlu0 %v931, 96
  %v1009 = vpop.permute.xlu0 %1008
  %1010 = vrot.lane.b32.xlu0 %v932, 96
  %v1011 = vpop.permute.xlu0 %1010
  %1012 = vrot.lane.b32.xlu0 %v933, 96
  %v1013 = vpop.permute.xlu0 %1012
  %1014 = vrot.lane.b32.xlu0 %v934, 96
  %v1015 = vpop.permute.xlu0 %1014
  %1016 = vrot.lane.b32.xlu0 %v935, 96
  %v1017 = vpop.permute.xlu0 %1016
  %1018 = vrot.lane.b32.xlu0 %v936, 96
  %v1019 = vpop.permute.xlu0 %1018
  %1020 = vrot.lane.b32.xlu0 %v937, 96
  %v1021 = vpop.permute.xlu0 %1020
  %1022 = vrot.lane.b32.xlu0 %v938, 96
  %v1023 = vpop.permute.xlu0 %1022
  %1024 = vrot.lane.b32.xlu0 %v939, 96
  %v1025 = vpop.permute.xlu0 %1024
  %1026 = vrot.lane.b32.xlu0 %v940, 96
  %v1027 = vpop.permute.xlu0 %1026
  %1028 = vrot.lane.b32.xlu0 %v941, 96
  %v1029 = vpop.permute.xlu0 %1028
  %1030 = vrot.lane.b32.xlu0 %v942, 96
  %v1031 = vpop.permute.xlu0 %1030
  %1032 = vrot.lane.b32.xlu0 %v943, 96
  %v1033 = vpop.permute.xlu0 %1032
  %1034 = vrot.lane.b32.xlu0 %v944, 96
  %v1035 = vpop.permute.xlu0 %1034
  %1036 = vrot.lane.b32.xlu0 %v945, 96
  %v1037 = vpop.permute.xlu0 %1036
  %1038 = vrot.lane.b32.xlu0 %v946, 96
  %v1039 = vpop.permute.xlu0 %1038
  %1040 = vrot.lane.b32.xlu0 %v947, 96
  %v1041 = vpop.permute.xlu0 %1040
  %1042 = vrot.lane.b32.xlu0 %v948, 96
  %v1043 = vpop.permute.xlu0 %1042
  %1044 = vrot.lane.b32.xlu0 %v949, 96
  %v1045 = vpop.permute.xlu0 %1044
  %v1078 = vsel %vm623, %v983, 0.0
  %1079 = vadd.xlane.f32.xlu0 %v1078
  %v1080 = vpop.xlane.xlu0 %1079
  %v1081 = vsel %vm623, %v985, 0.0
  %1082 = vadd.xlane.f32.xlu0 %v1081
  %v1083 = vpop.xlane.xlu0 %1082
  %v1084 = vsel %vm623, %v987, 0.0
  %1085 = vadd.xlane.f32.xlu0 %v1084
  %v1086 = vpop.xlane.xlu0 %1085
  %v1087 = vsel %vm623, %v989, 0.0
  %1088 = vadd.xlane.f32.xlu0 %v1087
  %v1089 = vpop.xlane.xlu0 %1088
  %v1090 = vsel %vm623, %v991, 0.0
  %1091 = vadd.xlane.f32.xlu0 %v1090
  %v1092 = vpop.xlane.xlu0 %1091
  %v1093 = vsel %vm623, %v993, 0.0
  %1094 = vadd.xlane.f32.xlu0 %v1093
  %v1095 = vpop.xlane.xlu0 %1094
  %v1096 = vsel %vm623, %v995, 0.0
  %1097 = vadd.xlane.f32.xlu0 %v1096
  %v1098 = vpop.xlane.xlu0 %1097
  %v1099 = vsel %vm623, %v997, 0.0
  %1100 = vadd.xlane.f32.xlu0 %v1099
  %v1101 = vpop.xlane.xlu0 %1100
  %v1102 = vsel %vm623, %v999, 0.0
  %1103 = vadd.xlane.f32.xlu0 %v1102
  %v1104 = vpop.xlane.xlu0 %1103
  %v1105 = vsel %vm623, %v1001, 0.0
  %1106 = vadd.xlane.f32.xlu0 %v1105
  %v1107 = vpop.xlane.xlu0 %1106
  %v1108 = vsel %vm623, %v1003, 0.0
  %1109 = vadd.xlane.f32.xlu0 %v1108
  %v1110 = vpop.xlane.xlu0 %1109
  %v1111 = vsel %vm623, %v1005, 0.0
  %1112 = vadd.xlane.f32.xlu0 %v1111
  %v1113 = vpop.xlane.xlu0 %1112
  %v1114 = vsel %vm623, %v1007, 0.0
  %1115 = vadd.xlane.f32.xlu0 %v1114
  %v1116 = vpop.xlane.xlu0 %1115
  %v1117 = vsel %vm623, %v1009, 0.0
  %1118 = vadd.xlane.f32.xlu0 %v1117
  %v1119 = vpop.xlane.xlu0 %1118
  %v1120 = vsel %vm623, %v1011, 0.0
  %1121 = vadd.xlane.f32.xlu0 %v1120
  %v1122 = vpop.xlane.xlu0 %1121
  %v1123 = vsel %vm623, %v1013, 0.0
  %1124 = vadd.xlane.f32.xlu0 %v1123
  %v1125 = vpop.xlane.xlu0 %1124
  %v1126 = vsel %vm623, %v1015, 0.0
  %1127 = vadd.xlane.f32.xlu0 %v1126
  %v1128 = vpop.xlane.xlu0 %1127
  %v1129 = vsel %vm623, %v1017, 0.0
  %1130 = vadd.xlane.f32.xlu0 %v1129
  %v1131 = vpop.xlane.xlu0 %1130
  %v1132 = vsel %vm623, %v1019, 0.0
  %1133 = vadd.xlane.f32.xlu0 %v1132
  %v1134 = vpop.xlane.xlu0 %1133
  %v1135 = vsel %vm623, %v1021, 0.0
  %1136 = vadd.xlane.f32.xlu0 %v1135
  %v1137 = vpop.xlane.xlu0 %1136
  %v1138 = vsel %vm623, %v1023, 0.0
  %1139 = vadd.xlane.f32.xlu0 %v1138
  %v1140 = vpop.xlane.xlu0 %1139
  %v1141 = vsel %vm623, %v1025, 0.0
  %1142 = vadd.xlane.f32.xlu0 %v1141
  %v1143 = vpop.xlane.xlu0 %1142
  %v1144 = vsel %vm623, %v1027, 0.0
  %1145 = vadd.xlane.f32.xlu0 %v1144
  %v1146 = vpop.xlane.xlu0 %1145
  %v1147 = vsel %vm623, %v1029, 0.0
  %1148 = vadd.xlane.f32.xlu0 %v1147
  %v1149 = vpop.xlane.xlu0 %1148
  %v1150 = vsel %vm623, %v1031, 0.0
  %1151 = vadd.xlane.f32.xlu0 %v1150
  %v1152 = vpop.xlane.xlu0 %1151
  %v1153 = vsel %vm623, %v1033, 0.0
  %1154 = vadd.xlane.f32.xlu0 %v1153
  %v1155 = vpop.xlane.xlu0 %1154
  %v1156 = vsel %vm623, %v1035, 0.0
  %1157 = vadd.xlane.f32.xlu0 %v1156
  %v1158 = vpop.xlane.xlu0 %1157
  %v1159 = vsel %vm623, %v1037, 0.0
  %1160 = vadd.xlane.f32.xlu0 %v1159
  %v1161 = vpop.xlane.xlu0 %1160
  %v1162 = vsel %vm623, %v1039, 0.0
  %1163 = vadd.xlane.f32.xlu0 %v1162
  %v1164 = vpop.xlane.xlu0 %1163
  %v1165 = vsel %vm623, %v1041, 0.0
  %1166 = vadd.xlane.f32.xlu0 %v1165
  %v1167 = vpop.xlane.xlu0 %1166
  %v1168 = vsel %vm623, %v1043, 0.0
  %1169 = vadd.xlane.f32.xlu0 %v1168
  %v1170 = vpop.xlane.xlu0 %1169
  %v1171 = vsel %vm623, %v1045, 0.0
  %1172 = vadd.xlane.f32.xlu0 %v1171
  %v1173 = vpop.xlane.xlu0 %1172
  %v1206 = vperm.slane %v1080, %v755
  %v1207 = vperm.slane %v1083, %v757
  %v1208 = vsel %vm759, %v1207, %v1206
  %v1209 = vperm.slane %v1086, %v755
  %v1210 = vperm.slane %v1089, %v757
  %v1211 = vsel %vm759, %v1210, %v1209
  %v1212 = vperm.slane %v1092, %v755
  %v1213 = vperm.slane %v1095, %v757
  %v1214 = vsel %vm759, %v1213, %v1212
  %v1215 = vperm.slane %v1098, %v755
  %v1216 = vperm.slane %v1101, %v757
  %v1217 = vsel %vm759, %v1216, %v1215
  %v1218 = vperm.slane %v1104, %v755
  %v1219 = vperm.slane %v1107, %v757
  %v1220 = vsel %vm759, %v1219, %v1218
  %v1221 = vperm.slane %v1110, %v755
  %v1222 = vperm.slane %v1113, %v757
  %v1223 = vsel %vm759, %v1222, %v1221
  %v1224 = vperm.slane %v1116, %v755
  %v1225 = vperm.slane %v1119, %v757
  %v1226 = vsel %vm759, %v1225, %v1224
  %v1227 = vperm.slane %v1122, %v755
  %v1228 = vperm.slane %v1125, %v757
  %v1229 = vsel %vm759, %v1228, %v1227
  %v1230 = vperm.slane %v1128, %v755
  %v1231 = vperm.slane %v1131, %v757
  %v1232 = vsel %vm759, %v1231, %v1230
  %v1233 = vperm.slane %v1134, %v755
  %v1234 = vperm.slane %v1137, %v757
  %v1235 = vsel %vm759, %v1234, %v1233
  %v1236 = vperm.slane %v1140, %v755
  %v1237 = vperm.slane %v1143, %v757
  %v1238 = vsel %vm759, %v1237, %v1236
  %v1239 = vperm.slane %v1146, %v755
  %v1240 = vperm.slane %v1149, %v757
  %v1241 = vsel %vm759, %v1240, %v1239
  %v1242 = vperm.slane %v1152, %v755
  %v1243 = vperm.slane %v1155, %v757
  %v1244 = vsel %vm759, %v1243, %v1242
  %v1245 = vperm.slane %v1158, %v755
  %v1246 = vperm.slane %v1161, %v757
  %v1247 = vsel %vm759, %v1246, %v1245
  %v1248 = vperm.slane %v1164, %v755
  %v1249 = vperm.slane %v1167, %v757
  %v1250 = vsel %vm759, %v1249, %v1248
  %v1251 = vperm.slane %v1170, %v755
  %v1252 = vperm.slane %v1173, %v757
  %v1253 = vsel %vm759, %v1252, %v1251
  %v1254 = vsel %vm806, %v1211, %v1208
  %v1255 = vsel %vm808, %v1214, %v1254
  %v1256 = vsel %vm810, %v1217, %v1255
  %v1257 = vsel %vm812, %v1220, %v1256
  %v1258 = vsel %vm814, %v1223, %v1257
  %v1259 = vsel %vm816, %v1226, %v1258
  %v1260 = vsel %vm818, %v1229, %v1259
  %v1261 = vsel %vm806, %v1235, %v1232
  %v1262 = vsel %vm808, %v1238, %v1261
  %v1263 = vsel %vm810, %v1241, %v1262
  %v1264 = vsel %vm812, %v1244, %v1263
  %v1265 = vsel %vm814, %v1247, %v1264
  %v1266 = vsel %vm816, %v1250, %v1265
  %v1267 = vsel %vm818, %v1253, %v1266
  %v1270 = vsel %vm720, %v1260, -1e+30
  %v1271 = vsel %vm721, %v1267, -1e+30
  %v1272 = vsel %vm831, %v1270, -inf
  %1273 = vmax.xlane.f32.xlu0 %v1272
  %v1274 = vpop.xlane.xlu0 %1273
  %v1275 = vsel %vm831, %v1271, -inf
  %1276 = vmax.xlane.f32.xlu0 %v1275
  %v1277 = vpop.xlane.xlu0 %1276
  %v1278 = vsub.f32 %v1270, %v1274
  %v1279 = vsub.f32 %v1271, %v1277
  %v1280 = vmul.f32 %v1278, 1.442695
  %v1281 = vpow.pop %v1280
  %v1282 = vmul.f32 %v1279, 1.442695
  %v1283 = vpow.pop %v1282
  %v1284 = vmul.f32 %v1281, %v52
  %v1285 = vmul.f32 %v1283, %v53
  %v1286 = vsel %vm831, %v1284, 0.0
  %1287 = vadd.xlane.f32.xlu0 %v1286
  %v1288 = vpop.xlane.xlu0 %1287
  %v1289 = vsel %vm831, %v1285, 0.0
  %1290 = vadd.xlane.f32.xlu0 %v1289
  %v1291 = vpop.xlane.xlu0 %1290
  %v1292 = vmax.f32 %v1288, 1e-20
  %v1293 = vmax.f32 %v1291, 1e-20
  %v1294 = vrcp.pop %v1292
  %v1295 = vmul.f32 %v1292, %v1294
  %v1296 = vsub.f32 1.0, %v1295
  %v1297 = vmul.f32 %v1294, %v1296
  %v1298 = vadd.f32 %v1294, %v1297
  %vm1299 = vweird.f32 %v1292
  %vm1300 = vweird.f32 %v1294
  %vm1301 = vmor %vm1299, %vm1300
  %v1302 = vsel %vm1301, %v1294, %v1298
  %v1303 = vand.u32 2147483647, %v1292
  %vm1304 = vcmp.eq.f32.partialorder %v1303, 8.507059e+37
  %v1305 = vand.u32 %v1292, 2147483648
  %v1306 = vor.u32 1.1754944e-38, %v1305
  %v1307 = vsel %vm1304, %v1306, %v1302
  %v1308 = vmul.f32 %v1284, %v1307
  %v1309 = vrcp.pop %v1293
  %v1310 = vmul.f32 %v1293, %v1309
  %v1311 = vsub.f32 1.0, %v1310
  %v1312 = vmul.f32 %v1309, %v1311
  %v1313 = vadd.f32 %v1309, %v1312
  %vm1314 = vweird.f32 %v1293
  %vm1315 = vweird.f32 %v1309
  %vm1316 = vmor %vm1314, %vm1315
  %v1317 = vsel %vm1316, %v1309, %v1313
  %v1318 = vand.u32 2147483647, %v1293
  %vm1319 = vcmp.eq.f32.partialorder %v1318, 8.507059e+37
  %v1320 = vand.u32 %v1293, 2147483648
  %v1321 = vor.u32 1.1754944e-38, %v1320
  %v1322 = vsel %vm1319, %v1321, %v1317
  %v1323 = vmul.f32 %v1285, %v1322
  %1326 = vrot.lane.b32.xlu0 %v110, 96
  %v1327 = vpop.permute.xlu0 %1326
  %1328 = vrot.lane.b32.xlu0 %v113, 96
  %v1329 = vpop.permute.xlu0 %1328
  %v1333 = vsel %vm831, %v1308, 0
  %v1336 = vsel %vm831, %v1323, 0
  %1338 = vmatpush.msra.mxu0 0.0
  %1339 = vmatpush.msra.mxu0 0.0
  %1340 = vmatpush.msra.mxu0 0.0
  %1341 = vmatpush.msra.mxu0 0.0
  %1342 = vmatpush.msra.mxu0 0.0
  %1343 = vmatpush.msra.mxu0 0.0
  %1344 = vmatpush.msra.mxu0 0.0
  %1345 = vmatpush.msra.mxu0 0.0
  %1346 = vmatpush.msra.mxu0 0.0
  %1347 = vmatpush.msra.mxu0 0.0
  %1348 = vmatpush.msra.mxu0 0.0
  %1349 = vmatpush.msra.mxu0 0.0
  %1350 = vmatpush.msra.mxu0 0.0
  %1351 = vmatpush.msra.mxu0 0.0
  %1352 = vmatpush.msra.mxu0 %v1329
  %1353 = vmatpush.msra.mxu0 %v1327
  %1354 = vmatmul.f32.gmra.mxu0 %v1333
  %v1355 = vpop.f32.mrf.mxu0
  %v1356 = vadd.f32 0.0, %v1355
  %1357 = vmatmul.f32.gmra.mxu0 %v1336
  %v1358 = vpop.f32.mrf.mxu0
  %v1359 = vadd.f32 0.0, %v1358
  %1360 = vdwg.mxu0
  %v1361 = vperm.slane %v381, 2
  %1363 = vrot.lane.b32.xlu0 %v1361, 64
  %v1364 = vpop.permute.xlu0 %1363
  %v1366 = vmul.f32 %v558, %v1364
  %v1367 = vmul.f32 %v559, %v1364
  %v1368 = vmul.f32 %v560, %v1364
  %v1369 = vmul.f32 %v561, %v1364
  %v1370 = vmul.f32 %v562, %v1364
  %v1371 = vmul.f32 %v563, %v1364
  %v1372 = vmul.f32 %v564, %v1364
  %v1373 = vmul.f32 %v565, %v1364
  %v1374 = vmul.f32 %v566, %v1364
  %v1375 = vmul.f32 %v567, %v1364
  %v1376 = vmul.f32 %v568, %v1364
  %v1377 = vmul.f32 %v569, %v1364
  %v1378 = vmul.f32 %v570, %v1364
  %v1379 = vmul.f32 %v571, %v1364
  %v1380 = vmul.f32 %v572, %v1364
  %v1381 = vmul.f32 %v573, %v1364
  %v1382 = vmul.f32 %v574, %v1364
  %v1383 = vmul.f32 %v575, %v1364
  %v1384 = vmul.f32 %v576, %v1364
  %v1385 = vmul.f32 %v577, %v1364
  %v1386 = vmul.f32 %v578, %v1364
  %v1387 = vmul.f32 %v579, %v1364
  %v1388 = vmul.f32 %v580, %v1364
  %v1389 = vmul.f32 %v581, %v1364
  %v1390 = vmul.f32 %v582, %v1364
  %v1391 = vmul.f32 %v583, %v1364
  %v1392 = vmul.f32 %v584, %v1364
  %v1393 = vmul.f32 %v585, %v1364
  %v1394 = vmul.f32 %v586, %v1364
  %v1395 = vmul.f32 %v587, %v1364
  %v1396 = vmul.f32 %v588, %v1364
  %v1397 = vmul.f32 %v589, %v1364
  %1430 = vrot.lane.b32.xlu0 %v1366, 64
  %v1431 = vpop.permute.xlu0 %1430
  %1432 = vrot.lane.b32.xlu0 %v1367, 64
  %v1433 = vpop.permute.xlu0 %1432
  %1434 = vrot.lane.b32.xlu0 %v1368, 64
  %v1435 = vpop.permute.xlu0 %1434
  %1436 = vrot.lane.b32.xlu0 %v1369, 64
  %v1437 = vpop.permute.xlu0 %1436
  %1438 = vrot.lane.b32.xlu0 %v1370, 64
  %v1439 = vpop.permute.xlu0 %1438
  %1440 = vrot.lane.b32.xlu0 %v1371, 64
  %v1441 = vpop.permute.xlu0 %1440
  %1442 = vrot.lane.b32.xlu0 %v1372, 64
  %v1443 = vpop.permute.xlu0 %1442
  %1444 = vrot.lane.b32.xlu0 %v1373, 64
  %v1445 = vpop.permute.xlu0 %1444
  %1446 = vrot.lane.b32.xlu0 %v1374, 64
  %v1447 = vpop.permute.xlu0 %1446
  %1448 = vrot.lane.b32.xlu0 %v1375, 64
  %v1449 = vpop.permute.xlu0 %1448
  %1450 = vrot.lane.b32.xlu0 %v1376, 64
  %v1451 = vpop.permute.xlu0 %1450
  %1452 = vrot.lane.b32.xlu0 %v1377, 64
  %v1453 = vpop.permute.xlu0 %1452
  %1454 = vrot.lane.b32.xlu0 %v1378, 64
  %v1455 = vpop.permute.xlu0 %1454
  %1456 = vrot.lane.b32.xlu0 %v1379, 64
  %v1457 = vpop.permute.xlu0 %1456
  %1458 = vrot.lane.b32.xlu0 %v1380, 64
  %v1459 = vpop.permute.xlu0 %1458
  %1460 = vrot.lane.b32.xlu0 %v1381, 64
  %v1461 = vpop.permute.xlu0 %1460
  %1462 = vrot.lane.b32.xlu0 %v1382, 64
  %v1463 = vpop.permute.xlu0 %1462
  %1464 = vrot.lane.b32.xlu0 %v1383, 64
  %v1465 = vpop.permute.xlu0 %1464
  %1466 = vrot.lane.b32.xlu0 %v1384, 64
  %v1467 = vpop.permute.xlu0 %1466
  %1468 = vrot.lane.b32.xlu0 %v1385, 64
  %v1469 = vpop.permute.xlu0 %1468
  %1470 = vrot.lane.b32.xlu0 %v1386, 64
  %v1471 = vpop.permute.xlu0 %1470
  %1472 = vrot.lane.b32.xlu0 %v1387, 64
  %v1473 = vpop.permute.xlu0 %1472
  %1474 = vrot.lane.b32.xlu0 %v1388, 64
  %v1475 = vpop.permute.xlu0 %1474
  %1476 = vrot.lane.b32.xlu0 %v1389, 64
  %v1477 = vpop.permute.xlu0 %1476
  %1478 = vrot.lane.b32.xlu0 %v1390, 64
  %v1479 = vpop.permute.xlu0 %1478
  %1480 = vrot.lane.b32.xlu0 %v1391, 64
  %v1481 = vpop.permute.xlu0 %1480
  %1482 = vrot.lane.b32.xlu0 %v1392, 64
  %v1483 = vpop.permute.xlu0 %1482
  %1484 = vrot.lane.b32.xlu0 %v1393, 64
  %v1485 = vpop.permute.xlu0 %1484
  %1486 = vrot.lane.b32.xlu0 %v1394, 64
  %v1487 = vpop.permute.xlu0 %1486
  %1488 = vrot.lane.b32.xlu0 %v1395, 64
  %v1489 = vpop.permute.xlu0 %1488
  %1490 = vrot.lane.b32.xlu0 %v1396, 64
  %v1491 = vpop.permute.xlu0 %1490
  %1492 = vrot.lane.b32.xlu0 %v1397, 64
  %v1493 = vpop.permute.xlu0 %1492
  %v1526 = vsel %vm623, %v1431, 0.0
  %1527 = vadd.xlane.f32.xlu0 %v1526
  %v1528 = vpop.xlane.xlu0 %1527
  %v1529 = vsel %vm623, %v1433, 0.0
  %1530 = vadd.xlane.f32.xlu0 %v1529
  %v1531 = vpop.xlane.xlu0 %1530
  %v1532 = vsel %vm623, %v1435, 0.0
  %1533 = vadd.xlane.f32.xlu0 %v1532
  %v1534 = vpop.xlane.xlu0 %1533
  %v1535 = vsel %vm623, %v1437, 0.0
  %1536 = vadd.xlane.f32.xlu0 %v1535
  %v1537 = vpop.xlane.xlu0 %1536
  %v1538 = vsel %vm623, %v1439, 0.0
  %1539 = vadd.xlane.f32.xlu0 %v1538
  %v1540 = vpop.xlane.xlu0 %1539
  %v1541 = vsel %vm623, %v1441, 0.0
  %1542 = vadd.xlane.f32.xlu0 %v1541
  %v1543 = vpop.xlane.xlu0 %1542
  %v1544 = vsel %vm623, %v1443, 0.0
  %1545 = vadd.xlane.f32.xlu0 %v1544
  %v1546 = vpop.xlane.xlu0 %1545
  %v1547 = vsel %vm623, %v1445, 0.0
  %1548 = vadd.xlane.f32.xlu0 %v1547
  %v1549 = vpop.xlane.xlu0 %1548
  %v1550 = vsel %vm623, %v1447, 0.0
  %1551 = vadd.xlane.f32.xlu0 %v1550
  %v1552 = vpop.xlane.xlu0 %1551
  %v1553 = vsel %vm623, %v1449, 0.0
  %1554 = vadd.xlane.f32.xlu0 %v1553
  %v1555 = vpop.xlane.xlu0 %1554
  %v1556 = vsel %vm623, %v1451, 0.0
  %1557 = vadd.xlane.f32.xlu0 %v1556
  %v1558 = vpop.xlane.xlu0 %1557
  %v1559 = vsel %vm623, %v1453, 0.0
  %1560 = vadd.xlane.f32.xlu0 %v1559
  %v1561 = vpop.xlane.xlu0 %1560
  %v1562 = vsel %vm623, %v1455, 0.0
  %1563 = vadd.xlane.f32.xlu0 %v1562
  %v1564 = vpop.xlane.xlu0 %1563
  %v1565 = vsel %vm623, %v1457, 0.0
  %1566 = vadd.xlane.f32.xlu0 %v1565
  %v1567 = vpop.xlane.xlu0 %1566
  %v1568 = vsel %vm623, %v1459, 0.0
  %1569 = vadd.xlane.f32.xlu0 %v1568
  %v1570 = vpop.xlane.xlu0 %1569
  %v1571 = vsel %vm623, %v1461, 0.0
  %1572 = vadd.xlane.f32.xlu0 %v1571
  %v1573 = vpop.xlane.xlu0 %1572
  %v1574 = vsel %vm623, %v1463, 0.0
  %1575 = vadd.xlane.f32.xlu0 %v1574
  %v1576 = vpop.xlane.xlu0 %1575
  %v1577 = vsel %vm623, %v1465, 0.0
  %1578 = vadd.xlane.f32.xlu0 %v1577
  %v1579 = vpop.xlane.xlu0 %1578
  %v1580 = vsel %vm623, %v1467, 0.0
  %1581 = vadd.xlane.f32.xlu0 %v1580
  %v1582 = vpop.xlane.xlu0 %1581
  %v1583 = vsel %vm623, %v1469, 0.0
  %1584 = vadd.xlane.f32.xlu0 %v1583
  %v1585 = vpop.xlane.xlu0 %1584
  %v1586 = vsel %vm623, %v1471, 0.0
  %1587 = vadd.xlane.f32.xlu0 %v1586
  %v1588 = vpop.xlane.xlu0 %1587
  %v1589 = vsel %vm623, %v1473, 0.0
  %1590 = vadd.xlane.f32.xlu0 %v1589
  %v1591 = vpop.xlane.xlu0 %1590
  %v1592 = vsel %vm623, %v1475, 0.0
  %1593 = vadd.xlane.f32.xlu0 %v1592
  %v1594 = vpop.xlane.xlu0 %1593
  %v1595 = vsel %vm623, %v1477, 0.0
  %1596 = vadd.xlane.f32.xlu0 %v1595
  %v1597 = vpop.xlane.xlu0 %1596
  %v1598 = vsel %vm623, %v1479, 0.0
  %1599 = vadd.xlane.f32.xlu0 %v1598
  %v1600 = vpop.xlane.xlu0 %1599
  %v1601 = vsel %vm623, %v1481, 0.0
  %1602 = vadd.xlane.f32.xlu0 %v1601
  %v1603 = vpop.xlane.xlu0 %1602
  %v1604 = vsel %vm623, %v1483, 0.0
  %1605 = vadd.xlane.f32.xlu0 %v1604
  %v1606 = vpop.xlane.xlu0 %1605
  %v1607 = vsel %vm623, %v1485, 0.0
  %1608 = vadd.xlane.f32.xlu0 %v1607
  %v1609 = vpop.xlane.xlu0 %1608
  %v1610 = vsel %vm623, %v1487, 0.0
  %1611 = vadd.xlane.f32.xlu0 %v1610
  %v1612 = vpop.xlane.xlu0 %1611
  %v1613 = vsel %vm623, %v1489, 0.0
  %1614 = vadd.xlane.f32.xlu0 %v1613
  %v1615 = vpop.xlane.xlu0 %1614
  %v1616 = vsel %vm623, %v1491, 0.0
  %1617 = vadd.xlane.f32.xlu0 %v1616
  %v1618 = vpop.xlane.xlu0 %1617
  %v1619 = vsel %vm623, %v1493, 0.0
  %1620 = vadd.xlane.f32.xlu0 %v1619
  %v1621 = vpop.xlane.xlu0 %1620
  %v1654 = vperm.slane %v1528, %v755
  %v1655 = vperm.slane %v1531, %v757
  %v1656 = vsel %vm759, %v1655, %v1654
  %v1657 = vperm.slane %v1534, %v755
  %v1658 = vperm.slane %v1537, %v757
  %v1659 = vsel %vm759, %v1658, %v1657
  %v1660 = vperm.slane %v1540, %v755
  %v1661 = vperm.slane %v1543, %v757
  %v1662 = vsel %vm759, %v1661, %v1660
  %v1663 = vperm.slane %v1546, %v755
  %v1664 = vperm.slane %v1549, %v757
  %v1665 = vsel %vm759, %v1664, %v1663
  %v1666 = vperm.slane %v1552, %v755
  %v1667 = vperm.slane %v1555, %v757
  %v1668 = vsel %vm759, %v1667, %v1666
  %v1669 = vperm.slane %v1558, %v755
  %v1670 = vperm.slane %v1561, %v757
  %v1671 = vsel %vm759, %v1670, %v1669
  %v1672 = vperm.slane %v1564, %v755
  %v1673 = vperm.slane %v1567, %v757
  %v1674 = vsel %vm759, %v1673, %v1672
  %v1675 = vperm.slane %v1570, %v755
  %v1676 = vperm.slane %v1573, %v757
  %v1677 = vsel %vm759, %v1676, %v1675
  %v1678 = vperm.slane %v1576, %v755
  %v1679 = vperm.slane %v1579, %v757
  %v1680 = vsel %vm759, %v1679, %v1678
  %v1681 = vperm.slane %v1582, %v755
  %v1682 = vperm.slane %v1585, %v757
  %v1683 = vsel %vm759, %v1682, %v1681
  %v1684 = vperm.slane %v1588, %v755
  %v1685 = vperm.slane %v1591, %v757
  %v1686 = vsel %vm759, %v1685, %v1684
  %v1687 = vperm.slane %v1594, %v755
  %v1688 = vperm.slane %v1597, %v757
  %v1689 = vsel %vm759, %v1688, %v1687
  %v1690 = vperm.slane %v1600, %v755
  %v1691 = vperm.slane %v1603, %v757
  %v1692 = vsel %vm759, %v1691, %v1690
  %v1693 = vperm.slane %v1606, %v755
  %v1694 = vperm.slane %v1609, %v757
  %v1695 = vsel %vm759, %v1694, %v1693
  %v1696 = vperm.slane %v1612, %v755
  %v1697 = vperm.slane %v1615, %v757
  %v1698 = vsel %vm759, %v1697, %v1696
  %v1699 = vperm.slane %v1618, %v755
  %v1700 = vperm.slane %v1621, %v757
  %v1701 = vsel %vm759, %v1700, %v1699
  %v1702 = vsel %vm806, %v1659, %v1656
  %v1703 = vsel %vm808, %v1662, %v1702
  %v1704 = vsel %vm810, %v1665, %v1703
  %v1705 = vsel %vm812, %v1668, %v1704
  %v1706 = vsel %vm814, %v1671, %v1705
  %v1707 = vsel %vm816, %v1674, %v1706
  %v1708 = vsel %vm818, %v1677, %v1707
  %v1709 = vsel %vm806, %v1683, %v1680
  %v1710 = vsel %vm808, %v1686, %v1709
  %v1711 = vsel %vm810, %v1689, %v1710
  %v1712 = vsel %vm812, %v1692, %v1711
  %v1713 = vsel %vm814, %v1695, %v1712
  %v1714 = vsel %vm816, %v1698, %v1713
  %v1715 = vsel %vm818, %v1701, %v1714
  %v1718 = vsel %vm720, %v1708, -1e+30
  %v1719 = vsel %vm721, %v1715, -1e+30
  %v1720 = vsel %vm831, %v1718, -inf
  %1721 = vmax.xlane.f32.xlu0 %v1720
  %v1722 = vpop.xlane.xlu0 %1721
  %v1723 = vsel %vm831, %v1719, -inf
  %1724 = vmax.xlane.f32.xlu0 %v1723
  %v1725 = vpop.xlane.xlu0 %1724
  %v1726 = vsub.f32 %v1718, %v1722
  %v1727 = vsub.f32 %v1719, %v1725
  %v1728 = vmul.f32 %v1726, 1.442695
  %v1729 = vpow.pop %v1728
  %v1730 = vmul.f32 %v1727, 1.442695
  %v1731 = vpow.pop %v1730
  %v1732 = vmul.f32 %v1729, %v52
  %v1733 = vmul.f32 %v1731, %v53
  %v1734 = vsel %vm831, %v1732, 0.0
  %1735 = vadd.xlane.f32.xlu0 %v1734
  %v1736 = vpop.xlane.xlu0 %1735
  %v1737 = vsel %vm831, %v1733, 0.0
  %1738 = vadd.xlane.f32.xlu0 %v1737
  %v1739 = vpop.xlane.xlu0 %1738
  %v1740 = vmax.f32 %v1736, 1e-20
  %v1741 = vmax.f32 %v1739, 1e-20
  %v1742 = vrcp.pop %v1740
  %v1743 = vmul.f32 %v1740, %v1742
  %v1744 = vsub.f32 1.0, %v1743
  %v1745 = vmul.f32 %v1742, %v1744
  %v1746 = vadd.f32 %v1742, %v1745
  %vm1747 = vweird.f32 %v1740
  %vm1748 = vweird.f32 %v1742
  %vm1749 = vmor %vm1747, %vm1748
  %v1750 = vsel %vm1749, %v1742, %v1746
  %v1751 = vand.u32 2147483647, %v1740
  %vm1752 = vcmp.eq.f32.partialorder %v1751, 8.507059e+37
  %v1753 = vand.u32 %v1740, 2147483648
  %v1754 = vor.u32 1.1754944e-38, %v1753
  %v1755 = vsel %vm1752, %v1754, %v1750
  %v1756 = vmul.f32 %v1732, %v1755
  %v1757 = vrcp.pop %v1741
  %v1758 = vmul.f32 %v1741, %v1757
  %v1759 = vsub.f32 1.0, %v1758
  %v1760 = vmul.f32 %v1757, %v1759
  %v1761 = vadd.f32 %v1757, %v1760
  %vm1762 = vweird.f32 %v1741
  %vm1763 = vweird.f32 %v1757
  %vm1764 = vmor %vm1762, %vm1763
  %v1765 = vsel %vm1764, %v1757, %v1761
  %v1766 = vand.u32 2147483647, %v1741
  %vm1767 = vcmp.eq.f32.partialorder %v1766, 8.507059e+37
  %v1768 = vand.u32 %v1741, 2147483648
  %v1769 = vor.u32 1.1754944e-38, %v1768
  %v1770 = vsel %vm1767, %v1769, %v1765
  %v1771 = vmul.f32 %v1733, %v1770
  %1772 = vrot.lane.b32.xlu0 %v110, 64
  %v1773 = vpop.permute.xlu0 %1772
  %1774 = vrot.lane.b32.xlu0 %v113, 64
  %v1775 = vpop.permute.xlu0 %1774
  %v1779 = vsel %vm831, %v1756, 0
  %v1782 = vsel %vm831, %v1771, 0
  %1784 = vmatpush.msra.mxu0 0.0
  %1785 = vmatpush.msra.mxu0 0.0
  %1786 = vmatpush.msra.mxu0 0.0
  %1787 = vmatpush.msra.mxu0 0.0
  %1788 = vmatpush.msra.mxu0 0.0
  %1789 = vmatpush.msra.mxu0 0.0
  %1790 = vmatpush.msra.mxu0 0.0
  %1791 = vmatpush.msra.mxu0 0.0
  %1792 = vmatpush.msra.mxu0 0.0
  %1793 = vmatpush.msra.mxu0 0.0
  %1794 = vmatpush.msra.mxu0 0.0
  %1795 = vmatpush.msra.mxu0 0.0
  %1796 = vmatpush.msra.mxu0 0.0
  %1797 = vmatpush.msra.mxu0 0.0
  %1798 = vmatpush.msra.mxu0 %v1775
  %1799 = vmatpush.msra.mxu0 %v1773
  %1800 = vmatmul.f32.gmra.mxu0 %v1779
  %v1801 = vpop.f32.mrf.mxu0
  %v1802 = vadd.f32 0.0, %v1801
  %1803 = vmatmul.f32.gmra.mxu0 %v1782
  %v1804 = vpop.f32.mrf.mxu0
  %v1805 = vadd.f32 0.0, %v1804
  %1806 = vdwg.mxu0
  %v1807 = vperm.slane %v381, 3
  %1809 = vrot.lane.b32.xlu0 %v1807, 96
  %v1810 = vpop.permute.xlu0 %1809
  %v1812 = vmul.f32 %v558, %v1810
  %v1813 = vmul.f32 %v559, %v1810
  %v1814 = vmul.f32 %v560, %v1810
  %v1815 = vmul.f32 %v561, %v1810
  %v1816 = vmul.f32 %v562, %v1810
  %v1817 = vmul.f32 %v563, %v1810
  %v1818 = vmul.f32 %v564, %v1810
  %v1819 = vmul.f32 %v565, %v1810
  %v1820 = vmul.f32 %v566, %v1810
  %v1821 = vmul.f32 %v567, %v1810
  %v1822 = vmul.f32 %v568, %v1810
  %v1823 = vmul.f32 %v569, %v1810
  %v1824 = vmul.f32 %v570, %v1810
  %v1825 = vmul.f32 %v571, %v1810
  %v1826 = vmul.f32 %v572, %v1810
  %v1827 = vmul.f32 %v573, %v1810
  %v1828 = vmul.f32 %v574, %v1810
  %v1829 = vmul.f32 %v575, %v1810
  %v1830 = vmul.f32 %v576, %v1810
  %v1831 = vmul.f32 %v577, %v1810
  %v1832 = vmul.f32 %v578, %v1810
  %v1833 = vmul.f32 %v579, %v1810
  %v1834 = vmul.f32 %v580, %v1810
  %v1835 = vmul.f32 %v581, %v1810
  %v1836 = vmul.f32 %v582, %v1810
  %v1837 = vmul.f32 %v583, %v1810
  %v1838 = vmul.f32 %v584, %v1810
  %v1839 = vmul.f32 %v585, %v1810
  %v1840 = vmul.f32 %v586, %v1810
  %v1841 = vmul.f32 %v587, %v1810
  %v1842 = vmul.f32 %v588, %v1810
  %v1843 = vmul.f32 %v589, %v1810
  %1876 = vrot.lane.b32.xlu0 %v1812, 32
  %v1877 = vpop.permute.xlu0 %1876
  %1878 = vrot.lane.b32.xlu0 %v1813, 32
  %v1879 = vpop.permute.xlu0 %1878
  %1880 = vrot.lane.b32.xlu0 %v1814, 32
  %v1881 = vpop.permute.xlu0 %1880
  %1882 = vrot.lane.b32.xlu0 %v1815, 32
  %v1883 = vpop.permute.xlu0 %1882
  %1884 = vrot.lane.b32.xlu0 %v1816, 32
  %v1885 = vpop.permute.xlu0 %1884
  %1886 = vrot.lane.b32.xlu0 %v1817, 32
  %v1887 = vpop.permute.xlu0 %1886
  %1888 = vrot.lane.b32.xlu0 %v1818, 32
  %v1889 = vpop.permute.xlu0 %1888
  %1890 = vrot.lane.b32.xlu0 %v1819, 32
  %v1891 = vpop.permute.xlu0 %1890
  %1892 = vrot.lane.b32.xlu0 %v1820, 32
  %v1893 = vpop.permute.xlu0 %1892
  %1894 = vrot.lane.b32.xlu0 %v1821, 32
  %v1895 = vpop.permute.xlu0 %1894
  %1896 = vrot.lane.b32.xlu0 %v1822, 32
  %v1897 = vpop.permute.xlu0 %1896
  %1898 = vrot.lane.b32.xlu0 %v1823, 32
  %v1899 = vpop.permute.xlu0 %1898
  %1900 = vrot.lane.b32.xlu0 %v1824, 32
  %v1901 = vpop.permute.xlu0 %1900
  %1902 = vrot.lane.b32.xlu0 %v1825, 32
  %v1903 = vpop.permute.xlu0 %1902
  %1904 = vrot.lane.b32.xlu0 %v1826, 32
  %v1905 = vpop.permute.xlu0 %1904
  %1906 = vrot.lane.b32.xlu0 %v1827, 32
  %v1907 = vpop.permute.xlu0 %1906
  %1908 = vrot.lane.b32.xlu0 %v1828, 32
  %v1909 = vpop.permute.xlu0 %1908
  %1910 = vrot.lane.b32.xlu0 %v1829, 32
  %v1911 = vpop.permute.xlu0 %1910
  %1912 = vrot.lane.b32.xlu0 %v1830, 32
  %v1913 = vpop.permute.xlu0 %1912
  %1914 = vrot.lane.b32.xlu0 %v1831, 32
  %v1915 = vpop.permute.xlu0 %1914
  %1916 = vrot.lane.b32.xlu0 %v1832, 32
  %v1917 = vpop.permute.xlu0 %1916
  %1918 = vrot.lane.b32.xlu0 %v1833, 32
  %v1919 = vpop.permute.xlu0 %1918
  %1920 = vrot.lane.b32.xlu0 %v1834, 32
  %v1921 = vpop.permute.xlu0 %1920
  %1922 = vrot.lane.b32.xlu0 %v1835, 32
  %v1923 = vpop.permute.xlu0 %1922
  %1924 = vrot.lane.b32.xlu0 %v1836, 32
  %v1925 = vpop.permute.xlu0 %1924
  %1926 = vrot.lane.b32.xlu0 %v1837, 32
  %v1927 = vpop.permute.xlu0 %1926
  %1928 = vrot.lane.b32.xlu0 %v1838, 32
  %v1929 = vpop.permute.xlu0 %1928
  %1930 = vrot.lane.b32.xlu0 %v1839, 32
  %v1931 = vpop.permute.xlu0 %1930
  %1932 = vrot.lane.b32.xlu0 %v1840, 32
  %v1933 = vpop.permute.xlu0 %1932
  %1934 = vrot.lane.b32.xlu0 %v1841, 32
  %v1935 = vpop.permute.xlu0 %1934
  %1936 = vrot.lane.b32.xlu0 %v1842, 32
  %v1937 = vpop.permute.xlu0 %1936
  %1938 = vrot.lane.b32.xlu0 %v1843, 32
  %v1939 = vpop.permute.xlu0 %1938
  %v1972 = vsel %vm623, %v1877, 0.0
  %1973 = vadd.xlane.f32.xlu0 %v1972
  %v1974 = vpop.xlane.xlu0 %1973
  %v1975 = vsel %vm623, %v1879, 0.0
  %1976 = vadd.xlane.f32.xlu0 %v1975
  %v1977 = vpop.xlane.xlu0 %1976
  %v1978 = vsel %vm623, %v1881, 0.0
  %1979 = vadd.xlane.f32.xlu0 %v1978
  %v1980 = vpop.xlane.xlu0 %1979
  %v1981 = vsel %vm623, %v1883, 0.0
  %1982 = vadd.xlane.f32.xlu0 %v1981
  %v1983 = vpop.xlane.xlu0 %1982
  %v1984 = vsel %vm623, %v1885, 0.0
  %1985 = vadd.xlane.f32.xlu0 %v1984
  %v1986 = vpop.xlane.xlu0 %1985
  %v1987 = vsel %vm623, %v1887, 0.0
  %1988 = vadd.xlane.f32.xlu0 %v1987
  %v1989 = vpop.xlane.xlu0 %1988
  %v1990 = vsel %vm623, %v1889, 0.0
  %1991 = vadd.xlane.f32.xlu0 %v1990
  %v1992 = vpop.xlane.xlu0 %1991
  %v1993 = vsel %vm623, %v1891, 0.0
  %1994 = vadd.xlane.f32.xlu0 %v1993
  %v1995 = vpop.xlane.xlu0 %1994
  %v1996 = vsel %vm623, %v1893, 0.0
  %1997 = vadd.xlane.f32.xlu0 %v1996
  %v1998 = vpop.xlane.xlu0 %1997
  %v1999 = vsel %vm623, %v1895, 0.0
  %2000 = vadd.xlane.f32.xlu0 %v1999
  %v2001 = vpop.xlane.xlu0 %2000
  %v2002 = vsel %vm623, %v1897, 0.0
  %2003 = vadd.xlane.f32.xlu0 %v2002
  %v2004 = vpop.xlane.xlu0 %2003
  %v2005 = vsel %vm623, %v1899, 0.0
  %2006 = vadd.xlane.f32.xlu0 %v2005
  %v2007 = vpop.xlane.xlu0 %2006
  %v2008 = vsel %vm623, %v1901, 0.0
  %2009 = vadd.xlane.f32.xlu0 %v2008
  %v2010 = vpop.xlane.xlu0 %2009
  %v2011 = vsel %vm623, %v1903, 0.0
  %2012 = vadd.xlane.f32.xlu0 %v2011
  %v2013 = vpop.xlane.xlu0 %2012
  %v2014 = vsel %vm623, %v1905, 0.0
  %2015 = vadd.xlane.f32.xlu0 %v2014
  %v2016 = vpop.xlane.xlu0 %2015
  %v2017 = vsel %vm623, %v1907, 0.0
  %2018 = vadd.xlane.f32.xlu0 %v2017
  %v2019 = vpop.xlane.xlu0 %2018
  %v2020 = vsel %vm623, %v1909, 0.0
  %2021 = vadd.xlane.f32.xlu0 %v2020
  %v2022 = vpop.xlane.xlu0 %2021
  %v2023 = vsel %vm623, %v1911, 0.0
  %2024 = vadd.xlane.f32.xlu0 %v2023
  %v2025 = vpop.xlane.xlu0 %2024
  %v2026 = vsel %vm623, %v1913, 0.0
  %2027 = vadd.xlane.f32.xlu0 %v2026
  %v2028 = vpop.xlane.xlu0 %2027
  %v2029 = vsel %vm623, %v1915, 0.0
  %2030 = vadd.xlane.f32.xlu0 %v2029
  %v2031 = vpop.xlane.xlu0 %2030
  %v2032 = vsel %vm623, %v1917, 0.0
  %2033 = vadd.xlane.f32.xlu0 %v2032
  %v2034 = vpop.xlane.xlu0 %2033
  %v2035 = vsel %vm623, %v1919, 0.0
  %2036 = vadd.xlane.f32.xlu0 %v2035
  %v2037 = vpop.xlane.xlu0 %2036
  %v2038 = vsel %vm623, %v1921, 0.0
  %2039 = vadd.xlane.f32.xlu0 %v2038
  %v2040 = vpop.xlane.xlu0 %2039
  %v2041 = vsel %vm623, %v1923, 0.0
  %2042 = vadd.xlane.f32.xlu0 %v2041
  %v2043 = vpop.xlane.xlu0 %2042
  %v2044 = vsel %vm623, %v1925, 0.0
  %2045 = vadd.xlane.f32.xlu0 %v2044
  %v2046 = vpop.xlane.xlu0 %2045
  %v2047 = vsel %vm623, %v1927, 0.0
  %2048 = vadd.xlane.f32.xlu0 %v2047
  %v2049 = vpop.xlane.xlu0 %2048
  %v2050 = vsel %vm623, %v1929, 0.0
  %2051 = vadd.xlane.f32.xlu0 %v2050
  %v2052 = vpop.xlane.xlu0 %2051
  %v2053 = vsel %vm623, %v1931, 0.0
  %2054 = vadd.xlane.f32.xlu0 %v2053
  %v2055 = vpop.xlane.xlu0 %2054
  %v2056 = vsel %vm623, %v1933, 0.0
  %2057 = vadd.xlane.f32.xlu0 %v2056
  %v2058 = vpop.xlane.xlu0 %2057
  %v2059 = vsel %vm623, %v1935, 0.0
  %2060 = vadd.xlane.f32.xlu0 %v2059
  %v2061 = vpop.xlane.xlu0 %2060
  %v2062 = vsel %vm623, %v1937, 0.0
  %2063 = vadd.xlane.f32.xlu0 %v2062
  %v2064 = vpop.xlane.xlu0 %2063
  %v2065 = vsel %vm623, %v1939, 0.0
  %2066 = vadd.xlane.f32.xlu0 %v2065
  %v2067 = vpop.xlane.xlu0 %2066
  %v2100 = vperm.slane %v1974, %v755
  %v2101 = vperm.slane %v1977, %v757
  %v2102 = vsel %vm759, %v2101, %v2100
  %v2103 = vperm.slane %v1980, %v755
  %v2104 = vperm.slane %v1983, %v757
  %v2105 = vsel %vm759, %v2104, %v2103
  %v2106 = vperm.slane %v1986, %v755
  %v2107 = vperm.slane %v1989, %v757
  %v2108 = vsel %vm759, %v2107, %v2106
  %v2109 = vperm.slane %v1992, %v755
  %v2110 = vperm.slane %v1995, %v757
  %v2111 = vsel %vm759, %v2110, %v2109
  %v2112 = vperm.slane %v1998, %v755
  %v2113 = vperm.slane %v2001, %v757
  %v2114 = vsel %vm759, %v2113, %v2112
  %v2115 = vperm.slane %v2004, %v755
  %v2116 = vperm.slane %v2007, %v757
  %v2117 = vsel %vm759, %v2116, %v2115
  %v2118 = vperm.slane %v2010, %v755
  %v2119 = vperm.slane %v2013, %v757
  %v2120 = vsel %vm759, %v2119, %v2118
  %v2121 = vperm.slane %v2016, %v755
  %v2122 = vperm.slane %v2019, %v757
  %v2123 = vsel %vm759, %v2122, %v2121
  %v2124 = vperm.slane %v2022, %v755
  %v2125 = vperm.slane %v2025, %v757
  %v2126 = vsel %vm759, %v2125, %v2124
  %v2127 = vperm.slane %v2028, %v755
  %v2128 = vperm.slane %v2031, %v757
  %v2129 = vsel %vm759, %v2128, %v2127
  %v2130 = vperm.slane %v2034, %v755
  %v2131 = vperm.slane %v2037, %v757
  %v2132 = vsel %vm759, %v2131, %v2130
  %v2133 = vperm.slane %v2040, %v755
  %v2134 = vperm.slane %v2043, %v757
  %v2135 = vsel %vm759, %v2134, %v2133
  %v2136 = vperm.slane %v2046, %v755
  %v2137 = vperm.slane %v2049, %v757
  %v2138 = vsel %vm759, %v2137, %v2136
  %v2139 = vperm.slane %v2052, %v755
  %v2140 = vperm.slane %v2055, %v757
  %v2141 = vsel %vm759, %v2140, %v2139
  %v2142 = vperm.slane %v2058, %v755
  %v2143 = vperm.slane %v2061, %v757
  %v2144 = vsel %vm759, %v2143, %v2142
  %v2145 = vperm.slane %v2064, %v755
  %v2146 = vperm.slane %v2067, %v757
  %v2147 = vsel %vm759, %v2146, %v2145
  %v2148 = vsel %vm806, %v2105, %v2102
  %v2149 = vsel %vm808, %v2108, %v2148
  %v2150 = vsel %vm810, %v2111, %v2149
  %v2151 = vsel %vm812, %v2114, %v2150
  %v2152 = vsel %vm814, %v2117, %v2151
  %v2153 = vsel %vm816, %v2120, %v2152
  %v2154 = vsel %vm818, %v2123, %v2153
  %v2155 = vsel %vm806, %v2129, %v2126
  %v2156 = vsel %vm808, %v2132, %v2155
  %v2157 = vsel %vm810, %v2135, %v2156
  %v2158 = vsel %vm812, %v2138, %v2157
  %v2159 = vsel %vm814, %v2141, %v2158
  %v2160 = vsel %vm816, %v2144, %v2159
  %v2161 = vsel %vm818, %v2147, %v2160
  %v2164 = vsel %vm720, %v2154, -1e+30
  %v2165 = vsel %vm721, %v2161, -1e+30
  %v2166 = vsel %vm831, %v2164, -inf
  %2167 = vmax.xlane.f32.xlu0 %v2166
  %v2168 = vpop.xlane.xlu0 %2167
  %v2169 = vsel %vm831, %v2165, -inf
  %2170 = vmax.xlane.f32.xlu0 %v2169
  %v2171 = vpop.xlane.xlu0 %2170
  %v2172 = vsub.f32 %v2164, %v2168
  %v2173 = vsub.f32 %v2165, %v2171
  %v2174 = vmul.f32 %v2172, 1.442695
  %v2175 = vpow.pop %v2174
  %v2176 = vmul.f32 %v2173, 1.442695
  %v2177 = vpow.pop %v2176
  %v2178 = vmul.f32 %v2175, %v52
  %v2179 = vmul.f32 %v2177, %v53
  %v2180 = vsel %vm831, %v2178, 0.0
  %2181 = vadd.xlane.f32.xlu0 %v2180
  %v2182 = vpop.xlane.xlu0 %2181
  %v2183 = vsel %vm831, %v2179, 0.0
  %2184 = vadd.xlane.f32.xlu0 %v2183
  %v2185 = vpop.xlane.xlu0 %2184
  %v2186 = vmax.f32 %v2182, 1e-20
  %v2187 = vmax.f32 %v2185, 1e-20
  %v2188 = vrcp.pop %v2186
  %v2189 = vmul.f32 %v2186, %v2188
  %v2190 = vsub.f32 1.0, %v2189
  %v2191 = vmul.f32 %v2188, %v2190
  %v2192 = vadd.f32 %v2188, %v2191
  %vm2193 = vweird.f32 %v2186
  %vm2194 = vweird.f32 %v2188
  %vm2195 = vmor %vm2193, %vm2194
  %v2196 = vsel %vm2195, %v2188, %v2192
  %v2197 = vand.u32 2147483647, %v2186
  %vm2198 = vcmp.eq.f32.partialorder %v2197, 8.507059e+37
  %v2199 = vand.u32 %v2186, 2147483648
  %v2200 = vor.u32 1.1754944e-38, %v2199
  %v2201 = vsel %vm2198, %v2200, %v2196
  %v2202 = vmul.f32 %v2178, %v2201
  %v2203 = vrcp.pop %v2187
  %v2204 = vmul.f32 %v2187, %v2203
  %v2205 = vsub.f32 1.0, %v2204
  %v2206 = vmul.f32 %v2203, %v2205
  %v2207 = vadd.f32 %v2203, %v2206
  %vm2208 = vweird.f32 %v2187
  %vm2209 = vweird.f32 %v2203
  %vm2210 = vmor %vm2208, %vm2209
  %v2211 = vsel %vm2210, %v2203, %v2207
  %v2212 = vand.u32 2147483647, %v2187
  %vm2213 = vcmp.eq.f32.partialorder %v2212, 8.507059e+37
  %v2214 = vand.u32 %v2187, 2147483648
  %v2215 = vor.u32 1.1754944e-38, %v2214
  %v2216 = vsel %vm2213, %v2215, %v2211
  %v2217 = vmul.f32 %v2179, %v2216
  %2218 = vrot.lane.b32.xlu0 %v110, 32
  %v2219 = vpop.permute.xlu0 %2218
  %2220 = vrot.lane.b32.xlu0 %v113, 32
  %v2221 = vpop.permute.xlu0 %2220
  %v2225 = vsel %vm831, %v2202, 0
  %v2228 = vsel %vm831, %v2217, 0
  %2230 = vmatpush.msra.mxu0 0.0
  %2231 = vmatpush.msra.mxu0 0.0
  %2232 = vmatpush.msra.mxu0 0.0
  %2233 = vmatpush.msra.mxu0 0.0
  %2234 = vmatpush.msra.mxu0 0.0
  %2235 = vmatpush.msra.mxu0 0.0
  %2236 = vmatpush.msra.mxu0 0.0
  %2237 = vmatpush.msra.mxu0 0.0
  %2238 = vmatpush.msra.mxu0 0.0
  %2239 = vmatpush.msra.mxu0 0.0
  %2240 = vmatpush.msra.mxu0 0.0
  %2241 = vmatpush.msra.mxu0 0.0
  %2242 = vmatpush.msra.mxu0 0.0
  %2243 = vmatpush.msra.mxu0 0.0
  %2244 = vmatpush.msra.mxu0 %v2221
  %2245 = vmatpush.msra.mxu0 %v2219
  %2246 = vmatmul.f32.gmra.mxu0 %v2225
  %v2247 = vpop.f32.mrf.mxu0
  %v2248 = vadd.f32 0.0, %v2247
  %2249 = vmatmul.f32.gmra.mxu0 %v2228
  %v2250 = vpop.f32.mrf.mxu0
  %v2251 = vadd.f32 0.0, %v2250
  %2252 = vdwg.mxu0
  %2255 = vrot.lane.b32.xlu0 %v1356, 32
  %v2256 = vpop.permute.xlu0 %2255
  %2257 = vrot.lane.b32.xlu0 %v1359, 32
  %v2258 = vpop.permute.xlu0 %2257
  %2263 = vrot.lane.b32.xlu0 %v1802, 64
  %v2264 = vpop.permute.xlu0 %2263
  %2265 = vrot.lane.b32.xlu0 %v1805, 64
  %v2266 = vpop.permute.xlu0 %2265
  %2271 = vrot.lane.b32.xlu0 %v2248, 96
  %v2272 = vpop.permute.xlu0 %2271
  %2273 = vrot.lane.b32.xlu0 %v2251, 96
  %v2274 = vpop.permute.xlu0 %2273
  %v2277 = vsel %vm623, %v908, %v2256
  %v2278 = vsel %vm623, %v911, %v2258
  %vm2279 = vcmask 523264
  %v2280 = vsel %vm2279, %v2277, %v2264
  %v2281 = vsel %vm2279, %v2278, %v2266
  %vm2282 = vcmask 785408
  %v2283 = vsel %vm2282, %v2280, %v2272
  %v2284 = vsel %vm2282, %v2281, %v2274
  %v2285 = vld [vmem:[%s7] sm:$0x1]
  %v2287 = vperm.slane %v2285, 0
  %v2289 = vadd.f32 %v2283, %v2287
  %v2290 = vadd.f32 %v2284, %v2287
  %v2291 = vld [vmem:[%s8] sm:$0x1]
  %v2292 = vld [vmem:[%s9] sm:$0x1]
  %2293 = vadd.xlane.f32.xlu0 %v2289
  %v2294 = vpop.xlane.xlu0 %2293
  %2295 = vadd.xlane.f32.xlu0 %v2290
  %v2296 = vpop.xlane.xlu0 %2295
  %v2297 = vrcp.pop 128.0
  %v2298 = vmul.f32 128.0, %v2297
  %v2299 = vsub.f32 1.0, %v2298
  %v2300 = vmul.f32 %v2297, %v2299
  %v2301 = vadd.f32 %v2297, %v2300
  %vm2302 = vweird.f32 %v2297
  %v2303 = vsel %vm2302, %v2297, %v2301
  %v2304 = vmul.f32 %v2294, %v2303
  %v2305 = vmul.f32 %v2296, %v2303
  %v2306 = vsub.f32 %v2289, %v2304
  %v2307 = vsub.f32 %v2290, %v2305
  %v2308 = vmul.f32 %v2306, %v2306
  %v2309 = vmul.f32 %v2307, %v2307
  %2310 = vadd.xlane.f32.xlu0 %v2308
  %v2311 = vpop.xlane.xlu0 %2310
  %2312 = vadd.xlane.f32.xlu0 %v2309
  %v2313 = vpop.xlane.xlu0 %2312
  %v2314 = vmul.f32 %v2311, %v2303
  %v2315 = vmul.f32 %v2313, %v2303
  %v2316 = vadd.f32 %v2314, 1e-05
  %v2317 = vadd.f32 %v2315, 1e-05
  %v2318 = vrsqrt.pop %v2316
  %v2319 = vmul.f32 %v2318, %v2316
  %v2320 = vmul.f32 %v2319, %v2318
  %v2321 = vmul.f32 0.5, %v2320
  %v2322 = vsub.f32 1.5, %v2321
  %v2323 = vmul.f32 %v2318, %v2322
  %vm2324 = vweird.f32 %v2316
  %vm2325 = vweird.f32 %v2318
  %vm2326 = vmor %vm2324, %vm2325
  %v2327 = vsel %vm2326, %v2318, %v2323
  %v2328 = vrsqrt.pop %v2317
  %v2329 = vmul.f32 %v2328, %v2317
  %v2330 = vmul.f32 %v2329, %v2328
  %v2331 = vmul.f32 0.5, %v2330
  %v2332 = vsub.f32 1.5, %v2331
  %v2333 = vmul.f32 %v2328, %v2332
  %vm2334 = vweird.f32 %v2317
  %vm2335 = vweird.f32 %v2328
  %vm2336 = vmor %vm2334, %vm2335
  %v2337 = vsel %vm2336, %v2328, %v2333
  %v2338 = vmul.f32 %v2306, %v2327
  %v2339 = vmul.f32 %v2307, %v2337
  %v2341 = vperm.slane %v2291, 0
  %v2343 = vmul.f32 %v2338, %v2341
  %v2344 = vmul.f32 %v2339, %v2341
  %v2346 = vperm.slane %v2292, 0
  %v2348 = vadd.f32 %v2343, %v2346
  %v2349 = vadd.f32 %v2344, %v2346
  %vm2350 = vcmp.gt.f32.partialorder %v2348, 0.0
  %vm2351 = vcmp.gt.f32.partialorder %v2349, 0.0
  %v2352 = vmul.f32 %v2348, 1.442695
  %v2353 = vpow.pop %v2352
  %v2354 = vmul.f32 %v2349, 1.442695
  %v2355 = vpow.pop %v2354
  %v2356 = vsub.f32 %v2353, 1.0
  %v2357 = vsub.f32 %v2355, 1.0
  %v2358 = vsel %vm2350, %v2348, %v2356
  %v2359 = vsel %vm2351, %v2349, %v2357
  %v2360 = vld [vmem:[%s10] sm:$0xff]
  %v2361 = vld [vmem:[%s10 + $0x8] sm:$0xff]
  %v2362 = vld [vmem:[%s14] sm:$0x1]
  %v2363 = vld [vmem:[%s11] sm:$0xff]
  %v2365 = vsel %vm171, %v2360, 0
  %v2368 = vsel %vm171, %v2361, 0
  %2370 = vmatpush.msra.mxu0 0.0
  %2371 = vmatpush.msra.mxu0 0.0
  %2372 = vmatpush.msra.mxu0 0.0
  %2373 = vmatpush.msra.mxu0 0.0
  %2374 = vmatpush.msra.mxu0 0.0
  %2375 = vmatpush.msra.mxu0 0.0
  %2376 = vmatpush.msra.mxu0 0.0
  %2377 = vmatpush.msra.mxu0 0.0
  %2378 = vmatpush.msra.mxu0 0.0
  %2379 = vmatpush.msra.mxu0 0.0
  %2380 = vmatpush.msra.mxu0 0.0
  %2381 = vmatpush.msra.mxu0 0.0
  %2382 = vmatpush.msra.mxu0 0.0
  %2383 = vmatpush.msra.mxu0 0.0
  %2384 = vmatpush.msra.mxu0 0.0
  %2385 = vmatpush.msra.mxu0 %v2363
  %2386 = vmatmul.f32.gmra.mxu0 %v2365
  %v2387 = vpop.f32.mrf.mxu0
  %v2388 = vadd.f32 0.0, %v2387
  %2389 = vmatmul.f32.gmra.mxu0 %v2368
  %v2390 = vpop.f32.mrf.mxu0
  %v2391 = vadd.f32 0.0, %v2390
  %2392 = vdwg.mxu0
  %v2394 = vperm.slane %v2362, 0
  %v2396 = vadd.f32 %v2394, %v2388
  %v2397 = vadd.f32 %v2394, %v2391
  %v2398 = vld [vmem:[%s12] sm:$0xff]
  %v2399 = vld [vmem:[%s12 + $0x8] sm:$0xff]
  %v2400 = vld [vmem:[%s12 + $0x10] sm:$0xff]
  %v2401 = vld [vmem:[%s12 + $0x18] sm:$0xff]
  %v2402 = vld [vmem:[%s12 + $0x20] sm:$0xff]
  %v2403 = vld [vmem:[%s12 + $0x28] sm:$0xff]
  %v2404 = vld [vmem:[%s12 + $0x30] sm:$0xff]
  %v2405 = vld [vmem:[%s12 + $0x38] sm:$0xff]
  %v2406 = vld [vmem:[%s12 + $0x40] sm:$0xff]
  %v2407 = vld [vmem:[%s12 + $0x48] sm:$0xff]
  %v2408 = vld [vmem:[%s12 + $0x50] sm:$0xff]
  %v2409 = vld [vmem:[%s12 + $0x58] sm:$0xff]
  %v2410 = vld [vmem:[%s12 + $0x60] sm:$0xff]
  %v2411 = vld [vmem:[%s12 + $0x68] sm:$0xff]
  %v2412 = vld [vmem:[%s12 + $0x70] sm:$0xff]
  %v2413 = vld [vmem:[%s12 + $0x78] sm:$0xff]
  %2414 = vmatpush.msra.mxu0 %v2413
  %2415 = vmatpush.msra.mxu0 %v2412
  %2416 = vmatpush.msra.mxu0 %v2411
  %2417 = vmatpush.msra.mxu0 %v2410
  %2418 = vmatpush.msra.mxu0 %v2409
  %2419 = vmatpush.msra.mxu0 %v2408
  %2420 = vmatpush.msra.mxu0 %v2407
  %2421 = vmatpush.msra.mxu0 %v2406
  %2422 = vmatpush.msra.mxu0 %v2405
  %2423 = vmatpush.msra.mxu0 %v2404
  %2424 = vmatpush.msra.mxu0 %v2403
  %2425 = vmatpush.msra.mxu0 %v2402
  %2426 = vmatpush.msra.mxu0 %v2401
  %2427 = vmatpush.msra.mxu0 %v2400
  %2428 = vmatpush.msra.mxu0 %v2399
  %2429 = vmatpush.msra.mxu0 %v2398
  %2430 = vmatmul.f32.gmra.mxu0 %v50
  %v2431 = vpop.f32.mrf.mxu0
  %v2432 = vadd.f32 0.0, %v2431
  %2433 = vmatmul.f32.gmra.mxu0 %v51
  %v2434 = vpop.f32.mrf.mxu0
  %v2435 = vadd.f32 0.0, %v2434
  %2436 = vdwg.mxu0
  %v2437 = vadd.f32 %v2396, %v2432
  %v2438 = vadd.f32 %v2397, %v2435
  %v2439 = vld [vmem:[%s13] sm:$0xff]
  %v2440 = vld [vmem:[%s13 + $0x8] sm:$0xff]
  %v2441 = vld [vmem:[%s13 + $0x10] sm:$0xff]
  %v2442 = vld [vmem:[%s13 + $0x18] sm:$0xff]
  %v2443 = vld [vmem:[%s13 + $0x20] sm:$0xff]
  %v2444 = vld [vmem:[%s13 + $0x28] sm:$0xff]
  %v2445 = vld [vmem:[%s13 + $0x30] sm:$0xff]
  %v2446 = vld [vmem:[%s13 + $0x38] sm:$0xff]
  %v2447 = vld [vmem:[%s13 + $0x40] sm:$0xff]
  %v2448 = vld [vmem:[%s13 + $0x48] sm:$0xff]
  %v2449 = vld [vmem:[%s13 + $0x50] sm:$0xff]
  %v2450 = vld [vmem:[%s13 + $0x58] sm:$0xff]
  %v2451 = vld [vmem:[%s13 + $0x60] sm:$0xff]
  %v2452 = vld [vmem:[%s13 + $0x68] sm:$0xff]
  %v2453 = vld [vmem:[%s13 + $0x70] sm:$0xff]
  %v2454 = vld [vmem:[%s13 + $0x78] sm:$0xff]
  %2455 = vmatpush.msra.mxu0 %v2454
  %2456 = vmatpush.msra.mxu0 %v2453
  %2457 = vmatpush.msra.mxu0 %v2452
  %2458 = vmatpush.msra.mxu0 %v2451
  %2459 = vmatpush.msra.mxu0 %v2450
  %2460 = vmatpush.msra.mxu0 %v2449
  %2461 = vmatpush.msra.mxu0 %v2448
  %2462 = vmatpush.msra.mxu0 %v2447
  %2463 = vmatpush.msra.mxu0 %v2446
  %2464 = vmatpush.msra.mxu0 %v2445
  %2465 = vmatpush.msra.mxu0 %v2444
  %2466 = vmatpush.msra.mxu0 %v2443
  %2467 = vmatpush.msra.mxu0 %v2442
  %2468 = vmatpush.msra.mxu0 %v2441
  %2469 = vmatpush.msra.mxu0 %v2440
  %2470 = vmatpush.msra.mxu0 %v2439
  %2471 = vmatmul.f32.gmra.mxu0 %v2358
  %v2472 = vpop.f32.mrf.mxu0
  %v2473 = vadd.f32 0.0, %v2472
  %2474 = vmatmul.f32.gmra.mxu0 %v2359
  %v2475 = vpop.f32.mrf.mxu0
  %v2476 = vadd.f32 0.0, %v2475
  %2477 = vdwg.mxu0
  %v2478 = vadd.f32 %v2437, %v2473
  %v2479 = vadd.f32 %v2438, %v2476
  %vm2480 = vcmp.gt.f32.partialorder %v2478, 0.0
  %vm2481 = vcmp.gt.f32.partialorder %v2479, 0.0
  %v2482 = vmul.f32 %v2478, 1.442695
  %v2483 = vpow.pop %v2482
  %v2484 = vmul.f32 %v2479, 1.442695
  %v2485 = vpow.pop %v2484
  %v2486 = vsub.f32 %v2483, 1.0
  %v2487 = vsub.f32 %v2485, 1.0
  %v2488 = vsel %vm2480, %v2478, %v2486
  %v2489 = vsel %vm2481, %v2479, %v2487
  %2490 = vst [vmem:[%s15] sm:$0xff] %v2488
  %2491 = vst [vmem:[%s15 + $0x8] sm:$0xff] %v2489
  // Predicated region
  $region62: #{fpga_gnn_forward.7} parent=0 // pred_check
    _
  $region63: #{fpga_gnn_forward.7} parent=0 // pred_check_branch
    %2493 = sbr.rel (0) target = $region65
  $region64: #{fpga_gnn_forward.7} parent=0 // pred_region
    _
  $region65: #{fpga_gnn_forward.7} parent=0 // pred_fallthru
    _
  // Predicated region
  $region66: #{fpga_gnn_forward.7} parent=0 // pred_check
    _
  $region67: #{fpga_gnn_forward.7} parent=0 // pred_check_branch
    %2495 = sbr.rel (0) target = $region69
  $region68: #{fpga_gnn_forward.7} parent=0 // pred_region
    _
  $region69: #{fpga_gnn_forward.7} parent=0 // pred_fallthru
    _

// kernel: fpga_gnn_forward.8
$region0: #{fpga_gnn_forward.8}
  #allocation0 [shape = 'u32[]', space=smem, size = 0x4, offset = 0x4, fixed_abs, tag = 'smem constant byte address 0x4 - core index']
  #allocation1 [shape = 'u32[72,128]{1,0:T(1,128)}', space=vmem, size = 0x9000, scoped, tag = 'internal scratch']
  %s0 = inlined_call_operand.vmem [shape: f32[16,128], index: 0, kind: input, shape index: {}]
  %s1 = inlined_call_operand.vmem [shape: f32[256,8], index: 1, kind: input, shape index: {}]
  %s2 = inlined_call_operand.vmem [shape: f32[16,16], index: 2, kind: input, shape index: {}]
  %s3 = inlined_call_operand.vmem [shape: f32[128,256], index: 3, kind: input, shape index: {}]
  %s4 = inlined_call_operand.vmem [shape: f32[1,256], index: 4, kind: input, shape index: {}]
  %s5 = inlined_call_operand.vmem [shape: f32[8,128], index: 5, kind: input, shape index: {}]
  %s6 = inlined_call_operand.vmem [shape: f32[4,32], index: 6, kind: input, shape index: {}]
  %s7 = inlined_call_operand.vmem [shape: f32[1,128], index: 7, kind: input, shape index: {}]
  %s8 = inlined_call_operand.vmem [shape: f32[1,128], index: 8, kind: input, shape index: {}]
  %s9 = inlined_call_operand.vmem [shape: f32[1,128], index: 9, kind: input, shape index: {}]
  %s10 = inlined_call_operand.vmem [shape: f32[16,8], index: 10, kind: input, shape index: {}]
  %s11 = inlined_call_operand.vmem [shape: f32[16,128], index: 11, kind: input, shape index: {}]
  %s12 = inlined_call_operand.vmem [shape: f32[8,128], index: 12, kind: input, shape index: {}]
  %s13 = inlined_call_operand.vmem [shape: f32[128,128], index: 13, kind: input, shape index: {}]
  %s14 = inlined_call_operand.vmem [shape: f32[128,128], index: 14, kind: input, shape index: {}]
  %s15 = inlined_call_operand.vmem [shape: f32[128,128], index: 15, kind: input, shape index: {}]
  %s16 = inlined_call_operand.vmem [shape: f32[1,128], index: 16, kind: input, shape index: {}]
  %s17 = inlined_call_operand.vmem [shape: f32[16,128], index: 17, kind: output, shape index: {}]
  %s18 = sld [smem:[#allocation0]]
  $region78: #{fpga_gnn_forward.8} parent=0
    _
  %s20 = ssub.s32 1, %s18
  %s21 = scalar_select 0, %s20, %s18
  // Predicated region
  $region2: #{fpga_gnn_forward.8} parent=0 // pred_check
    _
  $region3: #{fpga_gnn_forward.8} parent=0 // pred_check_branch
    %23 = sbr.rel (0) target = $region5
  $region4: #{fpga_gnn_forward.8} parent=0 // pred_region
    _
  $region5: #{fpga_gnn_forward.8} parent=0 // pred_fallthru
    _
  // Predicated region
  $region6: #{fpga_gnn_forward.8} parent=0 // pred_check
    _
  $region7: #{fpga_gnn_forward.8} parent=0 // pred_check_branch
    %25 = sbr.rel (0) target = $region9
  $region8: #{fpga_gnn_forward.8} parent=0 // pred_region
    _
  $region9: #{fpga_gnn_forward.8} parent=0 // pred_fallthru
    _
  // Predicated region
  $region10: #{fpga_gnn_forward.8} parent=0 // pred_check
    _
  $region11: #{fpga_gnn_forward.8} parent=0 // pred_check_branch
    %27 = sbr.rel (0) target = $region13
  $region12: #{fpga_gnn_forward.8} parent=0 // pred_region
    _
  $region13: #{fpga_gnn_forward.8} parent=0 // pred_fallthru
    _
  // Predicated region
  $region14: #{fpga_gnn_forward.8} parent=0 // pred_check
    _
  $region15: #{fpga_gnn_forward.8} parent=0 // pred_check_branch
    %29 = sbr.rel (0) target = $region17
  $region16: #{fpga_gnn_forward.8} parent=0 // pred_region
    _
  $region17: #{fpga_gnn_forward.8} parent=0 // pred_fallthru
    _
  // Predicated region
  $region18: #{fpga_gnn_forward.8} parent=0 // pred_check
    _
  $region19: #{fpga_gnn_forward.8} parent=0 // pred_check_branch
    %31 = sbr.rel (0) target = $region21
  $region20: #{fpga_gnn_forward.8} parent=0 // pred_region
    _
  $region21: #{fpga_gnn_forward.8} parent=0 // pred_fallthru
    _
  // Predicated region
  $region22: #{fpga_gnn_forward.8} parent=0 // pred_check
    _
  $region23: #{fpga_gnn_forward.8} parent=0 // pred_check_branch
    %33 = sbr.rel (0) target = $region25
  $region24: #{fpga_gnn_forward.8} parent=0 // pred_region
    _
  $region25: #{fpga_gnn_forward.8} parent=0 // pred_fallthru
    _
  // Predicated region
  $region26: #{fpga_gnn_forward.8} parent=0 // pred_check
    _
  $region27: #{fpga_gnn_forward.8} parent=0 // pred_check_branch
    %35 = sbr.rel (0) target = $region29
  $region28: #{fpga_gnn_forward.8} parent=0 // pred_region
    _
  $region29: #{fpga_gnn_forward.8} parent=0 // pred_fallthru
    _
  // Predicated region
  $region30: #{fpga_gnn_forward.8} parent=0 // pred_check
    _
  $region31: #{fpga_gnn_forward.8} parent=0 // pred_check_branch
    %37 = sbr.rel (0) target = $region33
  $region32: #{fpga_gnn_forward.8} parent=0 // pred_region
    _
  $region33: #{fpga_gnn_forward.8} parent=0 // pred_fallthru
    _
  // Predicated region
  $region34: #{fpga_gnn_forward.8} parent=0 // pred_check
    _
  $region35: #{fpga_gnn_forward.8} parent=0 // pred_check_branch
    %39 = sbr.rel (0) target = $region37
  $region36: #{fpga_gnn_forward.8} parent=0 // pred_region
    _
  $region37: #{fpga_gnn_forward.8} parent=0 // pred_fallthru
    _
  // Predicated region
  $region38: #{fpga_gnn_forward.8} parent=0 // pred_check
    _
  $region39: #{fpga_gnn_forward.8} parent=0 // pred_check_branch
    %41 = sbr.rel (0) target = $region41
  $region40: #{fpga_gnn_forward.8} parent=0 // pred_region
    _
  $region41: #{fpga_gnn_forward.8} parent=0 // pred_fallthru
    _
  // Predicated region
  $region42: #{fpga_gnn_forward.8} parent=0 // pred_check
    _
  $region43: #{fpga_gnn_forward.8} parent=0 // pred_check_branch
    %43 = sbr.rel (0) target = $region45
  $region44: #{fpga_gnn_forward.8} parent=0 // pred_region
    _
  $region45: #{fpga_gnn_forward.8} parent=0 // pred_fallthru
    _
  // Predicated region
  $region46: #{fpga_gnn_forward.8} parent=0 // pred_check
    _
  $region47: #{fpga_gnn_forward.8} parent=0 // pred_check_branch
    %45 = sbr.rel (0) target = $region49
  $region48: #{fpga_gnn_forward.8} parent=0 // pred_region
    _
  $region49: #{fpga_gnn_forward.8} parent=0 // pred_fallthru
    _
  // Predicated region
  $region50: #{fpga_gnn_forward.8} parent=0 // pred_check
    _
  $region51: #{fpga_gnn_forward.8} parent=0 // pred_check_branch
    %47 = sbr.rel (0) target = $region53
  $region52: #{fpga_gnn_forward.8} parent=0 // pred_region
    _
  $region53: #{fpga_gnn_forward.8} parent=0 // pred_fallthru
    _
  // Predicated region
  $region54: #{fpga_gnn_forward.8} parent=0 // pred_check
    _
  $region55: #{fpga_gnn_forward.8} parent=0 // pred_check_branch
    %49 = sbr.rel (0) target = $region57
  $region56: #{fpga_gnn_forward.8} parent=0 // pred_region
    _
  $region57: #{fpga_gnn_forward.8} parent=0 // pred_fallthru
    _
  // Predicated region
  $region58: #{fpga_gnn_forward.8} parent=0 // pred_check
    _
  $region59: #{fpga_gnn_forward.8} parent=0 // pred_check_branch
    %51 = sbr.rel (0) target = $region61
  $region60: #{fpga_gnn_forward.8} parent=0 // pred_region
    _
  $region61: #{fpga_gnn_forward.8} parent=0 // pred_fallthru
    _
  // Predicated region
  $region62: #{fpga_gnn_forward.8} parent=0 // pred_check
    _
  $region63: #{fpga_gnn_forward.8} parent=0 // pred_check_branch
    %53 = sbr.rel (0) target = $region65
  $region64: #{fpga_gnn_forward.8} parent=0 // pred_region
    _
  $region65: #{fpga_gnn_forward.8} parent=0 // pred_fallthru
    _
  // Predicated region
  $region66: #{fpga_gnn_forward.8} parent=0 // pred_check
    _
  $region67: #{fpga_gnn_forward.8} parent=0 // pred_check_branch
    %55 = sbr.rel (0) target = $region69
  $region68: #{fpga_gnn_forward.8} parent=0 // pred_region
    _
  $region69: #{fpga_gnn_forward.8} parent=0 // pred_fallthru
    _
  %v56 = vld [vmem:[%s0] sm:$0xff]
  %v57 = vld [vmem:[%s0 + $0x8] sm:$0xff]
  %v58 = vld [vmem:[%s2] sm:$0xff]
  %v59 = vld [vmem:[%s2 + $0x8] sm:$0xff]
  %v60 = vld [vmem:[%s3] sm:$0xff]
  %v61 = vld [vmem:[%s3 + $0x8] sm:$0xff]
  %v62 = vld [vmem:[%s3 + $0x10] sm:$0xff]
  %v63 = vld [vmem:[%s3 + $0x18] sm:$0xff]
  %v64 = vld [vmem:[%s3 + $0x20] sm:$0xff]
  %v65 = vld [vmem:[%s3 + $0x28] sm:$0xff]
  %v66 = vld [vmem:[%s3 + $0x30] sm:$0xff]
  %v67 = vld [vmem:[%s3 + $0x38] sm:$0xff]
  %v68 = vld [vmem:[%s3 + $0x40] sm:$0xff]
  %v69 = vld [vmem:[%s3 + $0x48] sm:$0xff]
  %v70 = vld [vmem:[%s3 + $0x50] sm:$0xff]
  %v71 = vld [vmem:[%s3 + $0x58] sm:$0xff]
  %v72 = vld [vmem:[%s3 + $0x60] sm:$0xff]
  %v73 = vld [vmem:[%s3 + $0x68] sm:$0xff]
  %v74 = vld [vmem:[%s3 + $0x70] sm:$0xff]
  %v75 = vld [vmem:[%s3 + $0x78] sm:$0xff]
  %v76 = vld [vmem:[%s3 + $0x80] sm:$0xff]
  %v77 = vld [vmem:[%s3 + $0x88] sm:$0xff]
  %v78 = vld [vmem:[%s3 + $0x90] sm:$0xff]
  %v79 = vld [vmem:[%s3 + $0x98] sm:$0xff]
  %v80 = vld [vmem:[%s3 + $0xa0] sm:$0xff]
  %v81 = vld [vmem:[%s3 + $0xa8] sm:$0xff]
  %v82 = vld [vmem:[%s3 + $0xb0] sm:$0xff]
  %v83 = vld [vmem:[%s3 + $0xb8] sm:$0xff]
  %v84 = vld [vmem:[%s3 + $0xc0] sm:$0xff]
  %v85 = vld [vmem:[%s3 + $0xc8] sm:$0xff]
  %v86 = vld [vmem:[%s3 + $0xd0] sm:$0xff]
  %v87 = vld [vmem:[%s3 + $0xd8] sm:$0xff]
  %v88 = vld [vmem:[%s3 + $0xe0] sm:$0xff]
  %v89 = vld [vmem:[%s3 + $0xe8] sm:$0xff]
  %v90 = vld [vmem:[%s3 + $0xf0] sm:$0xff]
  %v91 = vld [vmem:[%s3 + $0xf8] sm:$0xff]
  %v92 = vld [vmem:[%s4] sm:$0x3]
  %v94 = vperm.slane %v92, 0
  %v95 = vperm.slane %v92, 1
  %98 = vmatpush.msra.mxu0 %v90
  %99 = vmatpush.msra.mxu0 %v88
  %100 = vmatpush.msra.mxu0 %v86
  %101 = vmatpush.msra.mxu0 %v84
  %102 = vmatpush.msra.mxu0 %v82
  %103 = vmatpush.msra.mxu0 %v80
  %104 = vmatpush.msra.mxu0 %v78
  %105 = vmatpush.msra.mxu0 %v76
  %106 = vmatpush.msra.mxu0 %v74
  %107 = vmatpush.msra.mxu0 %v72
  %108 = vmatpush.msra.mxu0 %v70
  %109 = vmatpush.msra.mxu0 %v68
  %110 = vmatpush.msra.mxu0 %v66
  %111 = vmatpush.msra.mxu0 %v64
  %112 = vmatpush.msra.mxu0 %v62
  %113 = vmatpush.msra.mxu0 %v60
  %114 = vmatmul.f32.gmra.mxu0 %v56
  %v115 = vpop.f32.mrf.mxu0
  %v116 = vadd.f32 %v94, %v115
  %117 = vmatmul.f32.gmra.mxu0 %v57
  %v118 = vpop.f32.mrf.mxu0
  %v119 = vadd.f32 %v94, %v118
  %120 = vdwg.mxu0
  %121 = vmatpush.msra.mxu0 %v91
  %122 = vmatpush.msra.mxu0 %v89
  %123 = vmatpush.msra.mxu0 %v87
  %124 = vmatpush.msra.mxu0 %v85
  %125 = vmatpush.msra.mxu0 %v83
  %126 = vmatpush.msra.mxu0 %v81
  %127 = vmatpush.msra.mxu0 %v79
  %128 = vmatpush.msra.mxu0 %v77
  %129 = vmatpush.msra.mxu0 %v75
  %130 = vmatpush.msra.mxu0 %v73
  %131 = vmatpush.msra.mxu0 %v71
  %132 = vmatpush.msra.mxu0 %v69
  %133 = vmatpush.msra.mxu0 %v67
  %134 = vmatpush.msra.mxu0 %v65
  %135 = vmatpush.msra.mxu0 %v63
  %136 = vmatpush.msra.mxu0 %v61
  %137 = vmatmul.f32.gmra.mxu0 %v56
  %v138 = vpop.f32.mrf.mxu0
  %v139 = vadd.f32 %v95, %v138
  %140 = vmatmul.f32.gmra.mxu0 %v57
  %v141 = vpop.f32.mrf.mxu0
  %v142 = vadd.f32 %v95, %v141
  %143 = vdwg.mxu0
  %v144 = vld [vmem:[%s1] sm:$0xff]
  %v145 = vld [vmem:[%s1 + $0x8] sm:$0xff]
  %v146 = vld [vmem:[%s1 + $0x10] sm:$0xff]
  %v147 = vld [vmem:[%s1 + $0x18] sm:$0xff]
  %v148 = vld [vmem:[%s1 + $0x20] sm:$0xff]
  %v149 = vld [vmem:[%s1 + $0x28] sm:$0xff]
  %v150 = vld [vmem:[%s1 + $0x30] sm:$0xff]
  %v151 = vld [vmem:[%s1 + $0x38] sm:$0xff]
  %v152 = vld [vmem:[%s1 + $0x40] sm:$0xff]
  %v153 = vld [vmem:[%s1 + $0x48] sm:$0xff]
  %v154 = vld [vmem:[%s1 + $0x50] sm:$0xff]
  %v155 = vld [vmem:[%s1 + $0x58] sm:$0xff]
  %v156 = vld [vmem:[%s1 + $0x60] sm:$0xff]
  %v157 = vld [vmem:[%s1 + $0x68] sm:$0xff]
  %v158 = vld [vmem:[%s1 + $0x70] sm:$0xff]
  %v159 = vld [vmem:[%s1 + $0x78] sm:$0xff]
  %v160 = vld [vmem:[%s1 + $0x80] sm:$0xff]
  %v161 = vld [vmem:[%s1 + $0x88] sm:$0xff]
  %v162 = vld [vmem:[%s1 + $0x90] sm:$0xff]
  %v163 = vld [vmem:[%s1 + $0x98] sm:$0xff]
  %v164 = vld [vmem:[%s1 + $0xa0] sm:$0xff]
  %v165 = vld [vmem:[%s1 + $0xa8] sm:$0xff]
  %v166 = vld [vmem:[%s1 + $0xb0] sm:$0xff]
  %v167 = vld [vmem:[%s1 + $0xb8] sm:$0xff]
  %v168 = vld [vmem:[%s1 + $0xc0] sm:$0xff]
  %v169 = vld [vmem:[%s1 + $0xc8] sm:$0xff]
  %v170 = vld [vmem:[%s1 + $0xd0] sm:$0xff]
  %v171 = vld [vmem:[%s1 + $0xd8] sm:$0xff]
  %v172 = vld [vmem:[%s1 + $0xe0] sm:$0xff]
  %v173 = vld [vmem:[%s1 + $0xe8] sm:$0xff]
  %v174 = vld [vmem:[%s1 + $0xf0] sm:$0xff]
  %v175 = vld [vmem:[%s1 + $0xf8] sm:$0xff]
  %v176 = vld [vmem:[%s5] sm:$0xff]
  %vm177 = vcmask 64512
  %v179 = vsel %vm177, %v144, 0
  %v182 = vsel %vm177, %v145, 0
  %v185 = vsel %vm177, %v146, 0
  %v188 = vsel %vm177, %v147, 0
  %v191 = vsel %vm177, %v148, 0
  %v194 = vsel %vm177, %v149, 0
  %v197 = vsel %vm177, %v150, 0
  %v200 = vsel %vm177, %v151, 0
  %v203 = vsel %vm177, %v152, 0
  %v206 = vsel %vm177, %v153, 0
  %v209 = vsel %vm177, %v154, 0
  %v212 = vsel %vm177, %v155, 0
  %v215 = vsel %vm177, %v156, 0
  %v218 = vsel %vm177, %v157, 0
  %v221 = vsel %vm177, %v158, 0
  %v224 = vsel %vm177, %v159, 0
  %v227 = vsel %vm177, %v160, 0
  %v230 = vsel %vm177, %v161, 0
  %v233 = vsel %vm177, %v162, 0
  %v236 = vsel %vm177, %v163, 0
  %v239 = vsel %vm177, %v164, 0
  %v242 = vsel %vm177, %v165, 0
  %v245 = vsel %vm177, %v166, 0
  %v248 = vsel %vm177, %v167, 0
  %v251 = vsel %vm177, %v168, 0
  %v254 = vsel %vm177, %v169, 0
  %v257 = vsel %vm177, %v170, 0
  %v260 = vsel %vm177, %v171, 0
  %v263 = vsel %vm177, %v172, 0
  %v266 = vsel %vm177, %v173, 0
  %v269 = vsel %vm177, %v174, 0
  %v272 = vsel %vm177, %v175, 0
  %274 = vmatpush.msra.mxu0 0.0
  %275 = vmatpush.msra.mxu0 0.0
  %276 = vmatpush.msra.mxu0 0.0
  %277 = vmatpush.msra.mxu0 0.0
  %278 = vmatpush.msra.mxu0 0.0
  %279 = vmatpush.msra.mxu0 0.0
  %280 = vmatpush.msra.mxu0 0.0
  %281 = vmatpush.msra.mxu0 0.0
  %282 = vmatpush.msra.mxu0 0.0
  %283 = vmatpush.msra.mxu0 0.0
  %284 = vmatpush.msra.mxu0 0.0
  %285 = vmatpush.msra.mxu0 0.0
  %286 = vmatpush.msra.mxu0 0.0
  %287 = vmatpush.msra.mxu0 0.0
  %288 = vmatpush.msra.mxu0 0.0
  %289 = vmatpush.msra.mxu0 %v176
  %290 = vmatmul.f32.gmra.mxu0 %v179
  %v291 = vpop.f32.mrf.mxu0
  %v292 = vadd.f32 0.0, %v291
  %293 = vmatmul.f32.gmra.mxu0 %v182
  %v294 = vpop.f32.mrf.mxu0
  %v295 = vadd.f32 0.0, %v294
  %296 = vmatmul.f32.gmra.mxu0 %v185
  %v297 = vpop.f32.mrf.mxu0
  %v298 = vadd.f32 0.0, %v297
  %299 = vmatmul.f32.gmra.mxu0 %v188
  %v300 = vpop.f32.mrf.mxu0
  %v301 = vadd.f32 0.0, %v300
  %302 = vmatmul.f32.gmra.mxu0 %v191
  %v303 = vpop.f32.mrf.mxu0
  %v304 = vadd.f32 0.0, %v303
  %305 = vmatmul.f32.gmra.mxu0 %v194
  %v306 = vpop.f32.mrf.mxu0
  %v307 = vadd.f32 0.0, %v306
  %308 = vmatmul.f32.gmra.mxu0 %v197
  %v309 = vpop.f32.mrf.mxu0
  %v310 = vadd.f32 0.0, %v309
  %311 = vmatmul.f32.gmra.mxu0 %v200
  %v312 = vpop.f32.mrf.mxu0
  %v313 = vadd.f32 0.0, %v312
  %314 = vmatmul.f32.gmra.mxu0 %v203
  %v315 = vpop.f32.mrf.mxu0
  %v316 = vadd.f32 0.0, %v315
  %317 = vmatmul.f32.gmra.mxu0 %v206
  %v318 = vpop.f32.mrf.mxu0
  %v319 = vadd.f32 0.0, %v318
  %320 = vmatmul.f32.gmra.mxu0 %v209
  %v321 = vpop.f32.mrf.mxu0
  %v322 = vadd.f32 0.0, %v321
  %323 = vmatmul.f32.gmra.mxu0 %v212
  %v324 = vpop.f32.mrf.mxu0
  %v325 = vadd.f32 0.0, %v324
  %326 = vmatmul.f32.gmra.mxu0 %v215
  %v327 = vpop.f32.mrf.mxu0
  %v328 = vadd.f32 0.0, %v327
  %329 = vmatmul.f32.gmra.mxu0 %v218
  %v330 = vpop.f32.mrf.mxu0
  %v331 = vadd.f32 0.0, %v330
  %332 = vmatmul.f32.gmra.mxu0 %v221
  %v333 = vpop.f32.mrf.mxu0
  %v334 = vadd.f32 0.0, %v333
  %335 = vmatmul.f32.gmra.mxu0 %v224
  %v336 = vpop.f32.mrf.mxu0
  %v337 = vadd.f32 0.0, %v336
  %338 = vmatmul.f32.gmra.mxu0 %v227
  %v339 = vpop.f32.mrf.mxu0
  %v340 = vadd.f32 0.0, %v339
  %341 = vmatmul.f32.gmra.mxu0 %v230
  %v342 = vpop.f32.mrf.mxu0
  %v343 = vadd.f32 0.0, %v342
  %344 = vmatmul.f32.gmra.mxu0 %v233
  %v345 = vpop.f32.mrf.mxu0
  %v346 = vadd.f32 0.0, %v345
  %347 = vmatmul.f32.gmra.mxu0 %v236
  %v348 = vpop.f32.mrf.mxu0
  %v349 = vadd.f32 0.0, %v348
  %350 = vmatmul.f32.gmra.mxu0 %v239
  %v351 = vpop.f32.mrf.mxu0
  %v352 = vadd.f32 0.0, %v351
  %353 = vmatmul.f32.gmra.mxu0 %v242
  %v354 = vpop.f32.mrf.mxu0
  %v355 = vadd.f32 0.0, %v354
  %356 = vmatmul.f32.gmra.mxu0 %v245
  %v357 = vpop.f32.mrf.mxu0
  %v358 = vadd.f32 0.0, %v357
  %359 = vmatmul.f32.gmra.mxu0 %v248
  %v360 = vpop.f32.mrf.mxu0
  %v361 = vadd.f32 0.0, %v360
  %362 = vmatmul.f32.gmra.mxu0 %v251
  %v363 = vpop.f32.mrf.mxu0
  %v364 = vadd.f32 0.0, %v363
  %365 = vmatmul.f32.gmra.mxu0 %v254
  %v366 = vpop.f32.mrf.mxu0
  %v367 = vadd.f32 0.0, %v366
  %368 = vmatmul.f32.gmra.mxu0 %v257
  %v369 = vpop.f32.mrf.mxu0
  %v370 = vadd.f32 0.0, %v369
  %371 = vmatmul.f32.gmra.mxu0 %v260
  %v372 = vpop.f32.mrf.mxu0
  %v373 = vadd.f32 0.0, %v372
  %374 = vmatmul.f32.gmra.mxu0 %v263
  %v375 = vpop.f32.mrf.mxu0
  %v376 = vadd.f32 0.0, %v375
  %377 = vmatmul.f32.gmra.mxu0 %v266
  %v378 = vpop.f32.mrf.mxu0
  %v379 = vadd.f32 0.0, %v378
  %380 = vmatmul.f32.gmra.mxu0 %v269
  %v381 = vpop.f32.mrf.mxu0
  %v382 = vadd.f32 0.0, %v381
  %383 = vmatmul.f32.gmra.mxu0 %v272
  %v384 = vpop.f32.mrf.mxu0
  %v385 = vadd.f32 0.0, %v384
  %386 = vdwg.mxu0
  %v387 = vld [vmem:[%s6] sm:$0xf]
  %v390 = vrot.slane %v139, 1
  %v391 = vrot.slane %v139, 2
  %v392 = vrot.slane %v139, 3
  %v393 = vrot.slane %v139, 4
  %v394 = vrot.slane %v139, 5
  %v395 = vrot.slane %v139, 6
  %v396 = vrot.slane %v139, 7
  %v397 = vrot.slane %v142, 1
  %v398 = vrot.slane %v142, 2
  %v399 = vrot.slane %v142, 3
  %v400 = vrot.slane %v142, 4
  %v401 = vrot.slane %v142, 5
  %v402 = vrot.slane %v142, 6
  %v403 = vrot.slane %v142, 7
  %v404 = vperm.slane %v139, 0
  %v405 = vperm.slane %v390, 0
  %v406 = vperm.slane %v391, 0
  %v407 = vperm.slane %v392, 0
  %v408 = vperm.slane %v393, 0
  %v409 = vperm.slane %v394, 0
  %v410 = vperm.slane %v395, 0
  %v411 = vperm.slane %v396, 0
  %v412 = vperm.slane %v142, 0
  %v413 = vperm.slane %v397, 0
  %v414 = vperm.slane %v398, 0
  %v415 = vperm.slane %v399, 0
  %v416 = vperm.slane %v400, 0
  %v417 = vperm.slane %v401, 0
  %v418 = vperm.slane %v402, 0
  %v419 = vperm.slane %v403, 0
  %v436 = vadd.f32 %v404, %v116
  %v437 = vadd.f32 %v404, %v119
  %v438 = vadd.f32 %v405, %v116
  %v439 = vadd.f32 %v405, %v119
  %v440 = vadd.f32 %v406, %v116
  %v441 = vadd.f32 %v406, %v119
  %v442 = vadd.f32 %v407, %v116
  %v443 = vadd.f32 %v407, %v119
  %v444 = vadd.f32 %v408, %v116
  %v445 = vadd.f32 %v408, %v119
  %v446 = vadd.f32 %v409, %v116
  %v447 = vadd.f32 %v409, %v119
  %v448 = vadd.f32 %v410, %v116
  %v449 = vadd.f32 %v410, %v119
  %v450 = vadd.f32 %v411, %v116
  %v451 = vadd.f32 %v411, %v119
  %v452 = vadd.f32 %v412, %v116
  %v453 = vadd.f32 %v412, %v119
  %v454 = vadd.f32 %v413, %v116
  %v455 = vadd.f32 %v413, %v119
  %v456 = vadd.f32 %v414, %v116
  %v457 = vadd.f32 %v414, %v119
  %v458 = vadd.f32 %v415, %v116
  %v459 = vadd.f32 %v415, %v119
  %v460 = vadd.f32 %v416, %v116
  %v461 = vadd.f32 %v416, %v119
  %v462 = vadd.f32 %v417, %v116
  %v463 = vadd.f32 %v417, %v119
  %v464 = vadd.f32 %v418, %v116
  %v465 = vadd.f32 %v418, %v119
  %v466 = vadd.f32 %v419, %v116
  %v467 = vadd.f32 %v419, %v119
  %v468 = vadd.f32 %v436, %v292
  %v469 = vadd.f32 %v437, %v295
  %v470 = vadd.f32 %v438, %v298
  %v471 = vadd.f32 %v439, %v301
  %v472 = vadd.f32 %v440, %v304
  %v473 = vadd.f32 %v441, %v307
  %v474 = vadd.f32 %v442, %v310
  %v475 = vadd.f32 %v443, %v313
  %v476 = vadd.f32 %v444, %v316
  %v477 = vadd.f32 %v445, %v319
  %v478 = vadd.f32 %v446, %v322
  %v479 = vadd.f32 %v447, %v325
  %v480 = vadd.f32 %v448, %v328
  %v481 = vadd.f32 %v449, %v331
  %v482 = vadd.f32 %v450, %v334
  %v483 = vadd.f32 %v451, %v337
  %v484 = vadd.f32 %v452, %v340
  %v485 = vadd.f32 %v453, %v343
  %v486 = vadd.f32 %v454, %v346
  %v487 = vadd.f32 %v455, %v349
  %v488 = vadd.f32 %v456, %v352
  %v489 = vadd.f32 %v457, %v355
  %v490 = vadd.f32 %v458, %v358
  %v491 = vadd.f32 %v459, %v361
  %v492 = vadd.f32 %v460, %v364
  %v493 = vadd.f32 %v461, %v367
  %v494 = vadd.f32 %v462, %v370
  %v495 = vadd.f32 %v463, %v373
  %v496 = vadd.f32 %v464, %v376
  %v497 = vadd.f32 %v465, %v379
  %v498 = vadd.f32 %v466, %v382
  %v499 = vadd.f32 %v467, %v385
  %vm500 = vcmp.gt.f32.partialorder %v468, 0.0
  %vm501 = vcmp.gt.f32.partialorder %v469, 0.0
  %vm502 = vcmp.gt.f32.partialorder %v470, 0.0
  %vm503 = vcmp.gt.f32.partialorder %v471, 0.0
  %vm504 = vcmp.gt.f32.partialorder %v472, 0.0
  %vm505 = vcmp.gt.f32.partialorder %v473, 0.0
  %vm506 = vcmp.gt.f32.partialorder %v474, 0.0
  %vm507 = vcmp.gt.f32.partialorder %v475, 0.0
  %vm508 = vcmp.gt.f32.partialorder %v476, 0.0
  %vm509 = vcmp.gt.f32.partialorder %v477, 0.0
  %vm510 = vcmp.gt.f32.partialorder %v478, 0.0
  %vm511 = vcmp.gt.f32.partialorder %v479, 0.0
  %vm512 = vcmp.gt.f32.partialorder %v480, 0.0
  %vm513 = vcmp.gt.f32.partialorder %v481, 0.0
  %vm514 = vcmp.gt.f32.partialorder %v482, 0.0
  %vm515 = vcmp.gt.f32.partialorder %v483, 0.0
  %vm516 = vcmp.gt.f32.partialorder %v484, 0.0
  %vm517 = vcmp.gt.f32.partialorder %v485, 0.0
  %vm518 = vcmp.gt.f32.partialorder %v486, 0.0
  %vm519 = vcmp.gt.f32.partialorder %v487, 0.0
  %vm520 = vcmp.gt.f32.partialorder %v488, 0.0
  %vm521 = vcmp.gt.f32.partialorder %v489, 0.0
  %vm522 = vcmp.gt.f32.partialorder %v490, 0.0
  %vm523 = vcmp.gt.f32.partialorder %v491, 0.0
  %vm524 = vcmp.gt.f32.partialorder %v492, 0.0
  %vm525 = vcmp.gt.f32.partialorder %v493, 0.0
  %vm526 = vcmp.gt.f32.partialorder %v494, 0.0
  %vm527 = vcmp.gt.f32.partialorder %v495, 0.0
  %vm528 = vcmp.gt.f32.partialorder %v496, 0.0
  %vm529 = vcmp.gt.f32.partialorder %v497, 0.0
  %vm530 = vcmp.gt.f32.partialorder %v498, 0.0
  %vm531 = vcmp.gt.f32.partialorder %v499, 0.0
  %v532 = vmul.f32 %v468, 0.2
  %v533 = vmul.f32 %v469, 0.2
  %v534 = vmul.f32 %v470, 0.2
  %v535 = vmul.f32 %v471, 0.2
  %v536 = vmul.f32 %v472, 0.2
  %v537 = vmul.f32 %v473, 0.2
  %v538 = vmul.f32 %v474, 0.2
  %v539 = vmul.f32 %v475, 0.2
  %v540 = vmul.f32 %v476, 0.2
  %v541 = vmul.f32 %v477, 0.2
  %v542 = vmul.f32 %v478, 0.2
  %v543 = vmul.f32 %v479, 0.2
  %v544 = vmul.f32 %v480, 0.2
  %v545 = vmul.f32 %v481, 0.2
  %v546 = vmul.f32 %v482, 0.2
  %v547 = vmul.f32 %v483, 0.2
  %v548 = vmul.f32 %v484, 0.2
  %v549 = vmul.f32 %v485, 0.2
  %v550 = vmul.f32 %v486, 0.2
  %v551 = vmul.f32 %v487, 0.2
  %v552 = vmul.f32 %v488, 0.2
  %v553 = vmul.f32 %v489, 0.2
  %v554 = vmul.f32 %v490, 0.2
  %v555 = vmul.f32 %v491, 0.2
  %v556 = vmul.f32 %v492, 0.2
  %v557 = vmul.f32 %v493, 0.2
  %v558 = vmul.f32 %v494, 0.2
  %v559 = vmul.f32 %v495, 0.2
  %v560 = vmul.f32 %v496, 0.2
  %v561 = vmul.f32 %v497, 0.2
  %v562 = vmul.f32 %v498, 0.2
  %v563 = vmul.f32 %v499, 0.2
  %v564 = vsel %vm500, %v468, %v532
  %v565 = vsel %vm501, %v469, %v533
  %v566 = vsel %vm502, %v470, %v534
  %v567 = vsel %vm503, %v471, %v535
  %v568 = vsel %vm504, %v472, %v536
  %v569 = vsel %vm505, %v473, %v537
  %v570 = vsel %vm506, %v474, %v538
  %v571 = vsel %vm507, %v475, %v539
  %v572 = vsel %vm508, %v476, %v540
  %v573 = vsel %vm509, %v477, %v541
  %v574 = vsel %vm510, %v478, %v542
  %v575 = vsel %vm511, %v479, %v543
  %v576 = vsel %vm512, %v480, %v544
  %v577 = vsel %vm513, %v481, %v545
  %v578 = vsel %vm514, %v482, %v546
  %v579 = vsel %vm515, %v483, %v547
  %v580 = vsel %vm516, %v484, %v548
  %v581 = vsel %vm517, %v485, %v549
  %v582 = vsel %vm518, %v486, %v550
  %v583 = vsel %vm519, %v487, %v551
  %v584 = vsel %vm520, %v488, %v552
  %v585 = vsel %vm521, %v489, %v553
  %v586 = vsel %vm522, %v490, %v554
  %v587 = vsel %vm523, %v491, %v555
  %v588 = vsel %vm524, %v492, %v556
  %v589 = vsel %vm525, %v493, %v557
  %v590 = vsel %vm526, %v494, %v558
  %v591 = vsel %vm527, %v495, %v559
  %v592 = vsel %vm528, %v496, %v560
  %v593 = vsel %vm529, %v497, %v561
  %v594 = vsel %vm530, %v498, %v562
  %v595 = vsel %vm531, %v499, %v563
  %v596 = vperm.slane %v387, 0
  %v597 = vmul.f32 %v564, %v596
  %v598 = vmul.f32 %v565, %v596
  %v599 = vmul.f32 %v566, %v596
  %v600 = vmul.f32 %v567, %v596
  %v601 = vmul.f32 %v568, %v596
  %v602 = vmul.f32 %v569, %v596
  %v603 = vmul.f32 %v570, %v596
  %v604 = vmul.f32 %v571, %v596
  %v605 = vmul.f32 %v572, %v596
  %v606 = vmul.f32 %v573, %v596
  %v607 = vmul.f32 %v574, %v596
  %v608 = vmul.f32 %v575, %v596
  %v609 = vmul.f32 %v576, %v596
  %v610 = vmul.f32 %v577, %v596
  %v611 = vmul.f32 %v578, %v596
  %v612 = vmul.f32 %v579, %v596
  %v613 = vmul.f32 %v580, %v596
  %v614 = vmul.f32 %v581, %v596
  %v615 = vmul.f32 %v582, %v596
  %v616 = vmul.f32 %v583, %v596
  %v617 = vmul.f32 %v584, %v596
  %v618 = vmul.f32 %v585, %v596
  %v619 = vmul.f32 %v586, %v596
  %v620 = vmul.f32 %v587, %v596
  %v621 = vmul.f32 %v588, %v596
  %v622 = vmul.f32 %v589, %v596
  %v623 = vmul.f32 %v590, %v596
  %v624 = vmul.f32 %v591, %v596
  %v625 = vmul.f32 %v592, %v596
  %v626 = vmul.f32 %v593, %v596
  %v627 = vmul.f32 %v594, %v596
  %v628 = vmul.f32 %v595, %v596
  %vm629 = vcmask 261120
  %v630 = vsel %vm629, %v597, 0.0
  %631 = vadd.xlane.f32.xlu0 %v630
  %v632 = vpop.xlane.xlu0 %631
  %v633 = vsel %vm629, %v598, 0.0
  %634 = vadd.xlane.f32.xlu0 %v633
  %v635 = vpop.xlane.xlu0 %634
  %v636 = vsel %vm629, %v599, 0.0
  %637 = vadd.xlane.f32.xlu0 %v636
  %v638 = vpop.xlane.xlu0 %637
  %v639 = vsel %vm629, %v600, 0.0
  %640 = vadd.xlane.f32.xlu0 %v639
  %v641 = vpop.xlane.xlu0 %640
  %v642 = vsel %vm629, %v601, 0.0
  %643 = vadd.xlane.f32.xlu0 %v642
  %v644 = vpop.xlane.xlu0 %643
  %v645 = vsel %vm629, %v602, 0.0
  %646 = vadd.xlane.f32.xlu0 %v645
  %v647 = vpop.xlane.xlu0 %646
  %v648 = vsel %vm629, %v603, 0.0
  %649 = vadd.xlane.f32.xlu0 %v648
  %v650 = vpop.xlane.xlu0 %649
  %v651 = vsel %vm629, %v604, 0.0
  %652 = vadd.xlane.f32.xlu0 %v651
  %v653 = vpop.xlane.xlu0 %652
  %v654 = vsel %vm629, %v605, 0.0
  %655 = vadd.xlane.f32.xlu0 %v654
  %v656 = vpop.xlane.xlu0 %655
  %v657 = vsel %vm629, %v606, 0.0
  %658 = vadd.xlane.f32.xlu0 %v657
  %v659 = vpop.xlane.xlu0 %658
  %v660 = vsel %vm629, %v607, 0.0
  %661 = vadd.xlane.f32.xlu0 %v660
  %v662 = vpop.xlane.xlu0 %661
  %v663 = vsel %vm629, %v608, 0.0
  %664 = vadd.xlane.f32.xlu0 %v663
  %v665 = vpop.xlane.xlu0 %664
  %v666 = vsel %vm629, %v609, 0.0
  %667 = vadd.xlane.f32.xlu0 %v666
  %v668 = vpop.xlane.xlu0 %667
  %v669 = vsel %vm629, %v610, 0.0
  %670 = vadd.xlane.f32.xlu0 %v669
  %v671 = vpop.xlane.xlu0 %670
  %v672 = vsel %vm629, %v611, 0.0
  %673 = vadd.xlane.f32.xlu0 %v672
  %v674 = vpop.xlane.xlu0 %673
  %v675 = vsel %vm629, %v612, 0.0
  %676 = vadd.xlane.f32.xlu0 %v675
  %v677 = vpop.xlane.xlu0 %676
  %v678 = vsel %vm629, %v613, 0.0
  %679 = vadd.xlane.f32.xlu0 %v678
  %v680 = vpop.xlane.xlu0 %679
  %v681 = vsel %vm629, %v614, 0.0
  %682 = vadd.xlane.f32.xlu0 %v681
  %v683 = vpop.xlane.xlu0 %682
  %v684 = vsel %vm629, %v615, 0.0
  %685 = vadd.xlane.f32.xlu0 %v684
  %v686 = vpop.xlane.xlu0 %685
  %v687 = vsel %vm629, %v616, 0.0
  %688 = vadd.xlane.f32.xlu0 %v687
  %v689 = vpop.xlane.xlu0 %688
  %v690 = vsel %vm629, %v617, 0.0
  %691 = vadd.xlane.f32.xlu0 %v690
  %v692 = vpop.xlane.xlu0 %691
  %v693 = vsel %vm629, %v618, 0.0
  %694 = vadd.xlane.f32.xlu0 %v693
  %v695 = vpop.xlane.xlu0 %694
  %v696 = vsel %vm629, %v619, 0.0
  %697 = vadd.xlane.f32.xlu0 %v696
  %v698 = vpop.xlane.xlu0 %697
  %v699 = vsel %vm629, %v620, 0.0
  %700 = vadd.xlane.f32.xlu0 %v699
  %v701 = vpop.xlane.xlu0 %700
  %v702 = vsel %vm629, %v621, 0.0
  %703 = vadd.xlane.f32.xlu0 %v702
  %v704 = vpop.xlane.xlu0 %703
  %v705 = vsel %vm629, %v622, 0.0
  %706 = vadd.xlane.f32.xlu0 %v705
  %v707 = vpop.xlane.xlu0 %706
  %v708 = vsel %vm629, %v623, 0.0
  %709 = vadd.xlane.f32.xlu0 %v708
  %v710 = vpop.xlane.xlu0 %709
  %v711 = vsel %vm629, %v624, 0.0
  %712 = vadd.xlane.f32.xlu0 %v711
  %v713 = vpop.xlane.xlu0 %712
  %v714 = vsel %vm629, %v625, 0.0
  %715 = vadd.xlane.f32.xlu0 %v714
  %v716 = vpop.xlane.xlu0 %715
  %v717 = vsel %vm629, %v626, 0.0
  %718 = vadd.xlane.f32.xlu0 %v717
  %v719 = vpop.xlane.xlu0 %718
  %v720 = vsel %vm629, %v627, 0.0
  %721 = vadd.xlane.f32.xlu0 %v720
  %v722 = vpop.xlane.xlu0 %721
  %v723 = vsel %vm629, %v628, 0.0
  %724 = vadd.xlane.f32.xlu0 %v723
  %v725 = vpop.xlane.xlu0 %724
  %vm726 = vcmp.gt.f32.partialorder %v58, 0.0
  %vm727 = vcmp.gt.f32.partialorder %v59, 0.0
  %v760 = vlaneseq
  %v761 = vand.u32 %v760, 127
  %v762 = vperm.slane %v632, %v761
  %v763 = vadd.s32 %v761, 4294967288
  %v764 = vperm.slane %v635, %v763
  %vm765 = vcmask 130112
  %v766 = vsel %vm765, %v764, %v762
  %v767 = vperm.slane %v638, %v761
  %v768 = vperm.slane %v641, %v763
  %v769 = vsel %vm765, %v768, %v767
  %v770 = vperm.slane %v644, %v761
  %v771 = vperm.slane %v647, %v763
  %v772 = vsel %vm765, %v771, %v770
  %v773 = vperm.slane %v650, %v761
  %v774 = vperm.slane %v653, %v763
  %v775 = vsel %vm765, %v774, %v773
  %v776 = vperm.slane %v656, %v761
  %v777 = vperm.slane %v659, %v763
  %v778 = vsel %vm765, %v777, %v776
  %v779 = vperm.slane %v662, %v761
  %v780 = vperm.slane %v665, %v763
  %v781 = vsel %vm765, %v780, %v779
  %v782 = vperm.slane %v668, %v761
  %v783 = vperm.slane %v671, %v763
  %v784 = vsel %vm765, %v783, %v782
  %v785 = vperm.slane %v674, %v761
  %v786 = vperm.slane %v677, %v763
  %v787 = vsel %vm765, %v786, %v785
  %v788 = vperm.slane %v680, %v761
  %v789 = vperm.slane %v683, %v763
  %v790 = vsel %vm765, %v789, %v788
  %v791 = vperm.slane %v686, %v761
  %v792 = vperm.slane %v689, %v763
  %v793 = vsel %vm765, %v792, %v791
  %v794 = vperm.slane %v692, %v761
  %v795 = vperm.slane %v695, %v763
  %v796 = vsel %vm765, %v795, %v794
  %v797 = vperm.slane %v698, %v761
  %v798 = vperm.slane %v701, %v763
  %v799 = vsel %vm765, %v798, %v797
  %v800 = vperm.slane %v704, %v761
  %v801 = vperm.slane %v707, %v763
  %v802 = vsel %vm765, %v801, %v800
  %v803 = vperm.slane %v710, %v761
  %v804 = vperm.slane %v713, %v763
  %v805 = vsel %vm765, %v804, %v803
  %v806 = vperm.slane %v716, %v761
  %v807 = vperm.slane %v719, %v763
  %v808 = vsel %vm765, %v807, %v806
  %v809 = vperm.slane %v722, %v761
  %v810 = vperm.slane %v725, %v763
  %v811 = vsel %vm765, %v810, %v809
  %vm812 = vcmask 1041409
  %v813 = vsel %vm812, %v769, %v766
  %vm814 = vcmask 1042434
  %v815 = vsel %vm814, %v772, %v813
  %vm816 = vcmask 1043459
  %v817 = vsel %vm816, %v775, %v815
  %vm818 = vcmask 1044484
  %v819 = vsel %vm818, %v778, %v817
  %vm820 = vcmask 1045509
  %v821 = vsel %vm820, %v781, %v819
  %vm822 = vcmask 1046534
  %v823 = vsel %vm822, %v784, %v821
  %vm824 = vcmask 1047559
  %v825 = vsel %vm824, %v787, %v823
  %v826 = vsel %vm812, %v793, %v790
  %v827 = vsel %vm814, %v796, %v826
  %v828 = vsel %vm816, %v799, %v827
  %v829 = vsel %vm818, %v802, %v828
  %v830 = vsel %vm820, %v805, %v829
  %v831 = vsel %vm822, %v808, %v830
  %v832 = vsel %vm824, %v811, %v831
  %v835 = vsel %vm726, %v825, -1e+30
  %v836 = vsel %vm727, %v832, -1e+30
  %vm837 = vcmask 130048
  %v838 = vsel %vm837, %v835, -inf
  %839 = vmax.xlane.f32.xlu0 %v838
  %v840 = vpop.xlane.xlu0 %839
  %v841 = vsel %vm837, %v836, -inf
  %842 = vmax.xlane.f32.xlu0 %v841
  %v843 = vpop.xlane.xlu0 %842
  %v844 = vsub.f32 %v835, %v840
  %v845 = vsub.f32 %v836, %v843
  %v846 = vmul.f32 %v844, 1.442695
  %v847 = vpow.pop %v846
  %v848 = vmul.f32 %v845, 1.442695
  %v849 = vpow.pop %v848
  %v850 = vmul.f32 %v847, %v58
  %v851 = vmul.f32 %v849, %v59
  %v852 = vsel %vm837, %v850, 0.0
  %853 = vadd.xlane.f32.xlu0 %v852
  %v854 = vpop.xlane.xlu0 %853
  %v855 = vsel %vm837, %v851, 0.0
  %856 = vadd.xlane.f32.xlu0 %v855
  %v857 = vpop.xlane.xlu0 %856
  %v858 = vmax.f32 %v854, 1e-20
  %v859 = vmax.f32 %v857, 1e-20
  %v860 = vrcp.pop %v858
  %v861 = vmul.f32 %v858, %v860
  %v862 = vsub.f32 1.0, %v861
  %v863 = vmul.f32 %v860, %v862
  %v864 = vadd.f32 %v860, %v863
  %vm865 = vweird.f32 %v858
  %vm866 = vweird.f32 %v860
  %vm867 = vmor %vm865, %vm866
  %v868 = vsel %vm867, %v860, %v864
  %v869 = vand.u32 2147483647, %v858
  %vm870 = vcmp.eq.f32.partialorder %v869, 8.507059e+37
  %v871 = vand.u32 %v858, 2147483648
  %v872 = vor.u32 1.1754944e-38, %v871
  %v873 = vsel %vm870, %v872, %v868
  %v874 = vmul.f32 %v850, %v873
  %v875 = vrcp.pop %v859
  %v876 = vmul.f32 %v859, %v875
  %v877 = vsub.f32 1.0, %v876
  %v878 = vmul.f32 %v875, %v877
  %v879 = vadd.f32 %v875, %v878
  %vm880 = vweird.f32 %v859
  %vm881 = vweird.f32 %v875
  %vm882 = vmor %vm880, %vm881
  %v883 = vsel %vm882, %v875, %v879
  %v884 = vand.u32 2147483647, %v859
  %vm885 = vcmp.eq.f32.partialorder %v884, 8.507059e+37
  %v886 = vand.u32 %v859, 2147483648
  %v887 = vor.u32 1.1754944e-38, %v886
  %v888 = vsel %vm885, %v887, %v883
  %v889 = vmul.f32 %v851, %v888
  %v891 = vsel %vm837, %v874, 0
  %v894 = vsel %vm837, %v889, 0
  %896 = vmatpush.msra.mxu0 0.0
  %897 = vmatpush.msra.mxu0 0.0
  %898 = vmatpush.msra.mxu0 0.0
  %899 = vmatpush.msra.mxu0 0.0
  %900 = vmatpush.msra.mxu0 0.0
  %901 = vmatpush.msra.mxu0 0.0
  %902 = vmatpush.msra.mxu0 0.0
  %903 = vmatpush.msra.mxu0 0.0
  %904 = vmatpush.msra.mxu0 0.0
  %905 = vmatpush.msra.mxu0 0.0
  %906 = vmatpush.msra.mxu0 0.0
  %907 = vmatpush.msra.mxu0 0.0
  %908 = vmatpush.msra.mxu0 0.0
  %909 = vmatpush.msra.mxu0 0.0
  %910 = vmatpush.msra.mxu0 %v119
  %911 = vmatpush.msra.mxu0 %v116
  %912 = vmatmul.f32.gmra.mxu0 %v891
  %v913 = vpop.f32.mrf.mxu0
  %v914 = vadd.f32 0.0, %v913
  %915 = vmatmul.f32.gmra.mxu0 %v894
  %v916 = vpop.f32.mrf.mxu0
  %v917 = vadd.f32 0.0, %v916
  %918 = vdwg.mxu0
  %v919 = vperm.slane %v387, 1
  %921 = vrot.lane.b32.xlu0 %v919, 32
  %v922 = vpop.permute.xlu0 %921
  %v924 = vmul.f32 %v564, %v922
  %v925 = vmul.f32 %v565, %v922
  %v926 = vmul.f32 %v566, %v922
  %v927 = vmul.f32 %v567, %v922
  %v928 = vmul.f32 %v568, %v922
  %v929 = vmul.f32 %v569, %v922
  %v930 = vmul.f32 %v570, %v922
  %v931 = vmul.f32 %v571, %v922
  %v932 = vmul.f32 %v572, %v922
  %v933 = vmul.f32 %v573, %v922
  %v934 = vmul.f32 %v574, %v922
  %v935 = vmul.f32 %v575, %v922
  %v936 = vmul.f32 %v576, %v922
  %v937 = vmul.f32 %v577, %v922
  %v938 = vmul.f32 %v578, %v922
  %v939 = vmul.f32 %v579, %v922
  %v940 = vmul.f32 %v580, %v922
  %v941 = vmul.f32 %v581, %v922
  %v942 = vmul.f32 %v582, %v922
  %v943 = vmul.f32 %v583, %v922
  %v944 = vmul.f32 %v584, %v922
  %v945 = vmul.f32 %v585, %v922
  %v946 = vmul.f32 %v586, %v922
  %v947 = vmul.f32 %v587, %v922
  %v948 = vmul.f32 %v588, %v922
  %v949 = vmul.f32 %v589, %v922
  %v950 = vmul.f32 %v590, %v922
  %v951 = vmul.f32 %v591, %v922
  %v952 = vmul.f32 %v592, %v922
  %v953 = vmul.f32 %v593, %v922
  %v954 = vmul.f32 %v594, %v922
  %v955 = vmul.f32 %v595, %v922
  %988 = vrot.lane.b32.xlu0 %v924, 96
  %v989 = vpop.permute.xlu0 %988
  %990 = vrot.lane.b32.xlu0 %v925, 96
  %v991 = vpop.permute.xlu0 %990
  %992 = vrot.lane.b32.xlu0 %v926, 96
  %v993 = vpop.permute.xlu0 %992
  %994 = vrot.lane.b32.xlu0 %v927, 96
  %v995 = vpop.permute.xlu0 %994
  %996 = vrot.lane.b32.xlu0 %v928, 96
  %v997 = vpop.permute.xlu0 %996
  %998 = vrot.lane.b32.xlu0 %v929, 96
  %v999 = vpop.permute.xlu0 %998
  %1000 = vrot.lane.b32.xlu0 %v930, 96
  %v1001 = vpop.permute.xlu0 %1000
  %1002 = vrot.lane.b32.xlu0 %v931, 96
  %v1003 = vpop.permute.xlu0 %1002
  %1004 = vrot.lane.b32.xlu0 %v932, 96
  %v1005 = vpop.permute.xlu0 %1004
  %1006 = vrot.lane.b32.xlu0 %v933, 96
  %v1007 = vpop.permute.xlu0 %1006
  %1008 = vrot.lane.b32.xlu0 %v934, 96
  %v1009 = vpop.permute.xlu0 %1008
  %1010 = vrot.lane.b32.xlu0 %v935, 96
  %v1011 = vpop.permute.xlu0 %1010
  %1012 = vrot.lane.b32.xlu0 %v936, 96
  %v1013 = vpop.permute.xlu0 %1012
  %1014 = vrot.lane.b32.xlu0 %v937, 96
  %v1015 = vpop.permute.xlu0 %1014
  %1016 = vrot.lane.b32.xlu0 %v938, 96
  %v1017 = vpop.permute.xlu0 %1016
  %1018 = vrot.lane.b32.xlu0 %v939, 96
  %v1019 = vpop.permute.xlu0 %1018
  %1020 = vrot.lane.b32.xlu0 %v940, 96
  %v1021 = vpop.permute.xlu0 %1020
  %1022 = vrot.lane.b32.xlu0 %v941, 96
  %v1023 = vpop.permute.xlu0 %1022
  %1024 = vrot.lane.b32.xlu0 %v942, 96
  %v1025 = vpop.permute.xlu0 %1024
  %1026 = vrot.lane.b32.xlu0 %v943, 96
  %v1027 = vpop.permute.xlu0 %1026
  %1028 = vrot.lane.b32.xlu0 %v944, 96
  %v1029 = vpop.permute.xlu0 %1028
  %1030 = vrot.lane.b32.xlu0 %v945, 96
  %v1031 = vpop.permute.xlu0 %1030
  %1032 = vrot.lane.b32.xlu0 %v946, 96
  %v1033 = vpop.permute.xlu0 %1032
  %1034 = vrot.lane.b32.xlu0 %v947, 96
  %v1035 = vpop.permute.xlu0 %1034
  %1036 = vrot.lane.b32.xlu0 %v948, 96
  %v1037 = vpop.permute.xlu0 %1036
  %1038 = vrot.lane.b32.xlu0 %v949, 96
  %v1039 = vpop.permute.xlu0 %1038
  %1040 = vrot.lane.b32.xlu0 %v950, 96
  %v1041 = vpop.permute.xlu0 %1040
  %1042 = vrot.lane.b32.xlu0 %v951, 96
  %v1043 = vpop.permute.xlu0 %1042
  %1044 = vrot.lane.b32.xlu0 %v952, 96
  %v1045 = vpop.permute.xlu0 %1044
  %1046 = vrot.lane.b32.xlu0 %v953, 96
  %v1047 = vpop.permute.xlu0 %1046
  %1048 = vrot.lane.b32.xlu0 %v954, 96
  %v1049 = vpop.permute.xlu0 %1048
  %1050 = vrot.lane.b32.xlu0 %v955, 96
  %v1051 = vpop.permute.xlu0 %1050
  %v1084 = vsel %vm629, %v989, 0.0
  %1085 = vadd.xlane.f32.xlu0 %v1084
  %v1086 = vpop.xlane.xlu0 %1085
  %v1087 = vsel %vm629, %v991, 0.0
  %1088 = vadd.xlane.f32.xlu0 %v1087
  %v1089 = vpop.xlane.xlu0 %1088
  %v1090 = vsel %vm629, %v993, 0.0
  %1091 = vadd.xlane.f32.xlu0 %v1090
  %v1092 = vpop.xlane.xlu0 %1091
  %v1093 = vsel %vm629, %v995, 0.0
  %1094 = vadd.xlane.f32.xlu0 %v1093
  %v1095 = vpop.xlane.xlu0 %1094
  %v1096 = vsel %vm629, %v997, 0.0
  %1097 = vadd.xlane.f32.xlu0 %v1096
  %v1098 = vpop.xlane.xlu0 %1097
  %v1099 = vsel %vm629, %v999, 0.0
  %1100 = vadd.xlane.f32.xlu0 %v1099
  %v1101 = vpop.xlane.xlu0 %1100
  %v1102 = vsel %vm629, %v1001, 0.0
  %1103 = vadd.xlane.f32.xlu0 %v1102
  %v1104 = vpop.xlane.xlu0 %1103
  %v1105 = vsel %vm629, %v1003, 0.0
  %1106 = vadd.xlane.f32.xlu0 %v1105
  %v1107 = vpop.xlane.xlu0 %1106
  %v1108 = vsel %vm629, %v1005, 0.0
  %1109 = vadd.xlane.f32.xlu0 %v1108
  %v1110 = vpop.xlane.xlu0 %1109
  %v1111 = vsel %vm629, %v1007, 0.0
  %1112 = vadd.xlane.f32.xlu0 %v1111
  %v1113 = vpop.xlane.xlu0 %1112
  %v1114 = vsel %vm629, %v1009, 0.0
  %1115 = vadd.xlane.f32.xlu0 %v1114
  %v1116 = vpop.xlane.xlu0 %1115
  %v1117 = vsel %vm629, %v1011, 0.0
  %1118 = vadd.xlane.f32.xlu0 %v1117
  %v1119 = vpop.xlane.xlu0 %1118
  %v1120 = vsel %vm629, %v1013, 0.0
  %1121 = vadd.xlane.f32.xlu0 %v1120
  %v1122 = vpop.xlane.xlu0 %1121
  %v1123 = vsel %vm629, %v1015, 0.0
  %1124 = vadd.xlane.f32.xlu0 %v1123
  %v1125 = vpop.xlane.xlu0 %1124
  %v1126 = vsel %vm629, %v1017, 0.0
  %1127 = vadd.xlane.f32.xlu0 %v1126
  %v1128 = vpop.xlane.xlu0 %1127
  %v1129 = vsel %vm629, %v1019, 0.0
  %1130 = vadd.xlane.f32.xlu0 %v1129
  %v1131 = vpop.xlane.xlu0 %1130
  %v1132 = vsel %vm629, %v1021, 0.0
  %1133 = vadd.xlane.f32.xlu0 %v1132
  %v1134 = vpop.xlane.xlu0 %1133
  %v1135 = vsel %vm629, %v1023, 0.0
  %1136 = vadd.xlane.f32.xlu0 %v1135
  %v1137 = vpop.xlane.xlu0 %1136
  %v1138 = vsel %vm629, %v1025, 0.0
  %1139 = vadd.xlane.f32.xlu0 %v1138
  %v1140 = vpop.xlane.xlu0 %1139
  %v1141 = vsel %vm629, %v1027, 0.0
  %1142 = vadd.xlane.f32.xlu0 %v1141
  %v1143 = vpop.xlane.xlu0 %1142
  %v1144 = vsel %vm629, %v1029, 0.0
  %1145 = vadd.xlane.f32.xlu0 %v1144
  %v1146 = vpop.xlane.xlu0 %1145
  %v1147 = vsel %vm629, %v1031, 0.0
  %1148 = vadd.xlane.f32.xlu0 %v1147
  %v1149 = vpop.xlane.xlu0 %1148
  %v1150 = vsel %vm629, %v1033, 0.0
  %1151 = vadd.xlane.f32.xlu0 %v1150
  %v1152 = vpop.xlane.xlu0 %1151
  %v1153 = vsel %vm629, %v1035, 0.0
  %1154 = vadd.xlane.f32.xlu0 %v1153
  %v1155 = vpop.xlane.xlu0 %1154
  %v1156 = vsel %vm629, %v1037, 0.0
  %1157 = vadd.xlane.f32.xlu0 %v1156
  %v1158 = vpop.xlane.xlu0 %1157
  %v1159 = vsel %vm629, %v1039, 0.0
  %1160 = vadd.xlane.f32.xlu0 %v1159
  %v1161 = vpop.xlane.xlu0 %1160
  %v1162 = vsel %vm629, %v1041, 0.0
  %1163 = vadd.xlane.f32.xlu0 %v1162
  %v1164 = vpop.xlane.xlu0 %1163
  %v1165 = vsel %vm629, %v1043, 0.0
  %1166 = vadd.xlane.f32.xlu0 %v1165
  %v1167 = vpop.xlane.xlu0 %1166
  %v1168 = vsel %vm629, %v1045, 0.0
  %1169 = vadd.xlane.f32.xlu0 %v1168
  %v1170 = vpop.xlane.xlu0 %1169
  %v1171 = vsel %vm629, %v1047, 0.0
  %1172 = vadd.xlane.f32.xlu0 %v1171
  %v1173 = vpop.xlane.xlu0 %1172
  %v1174 = vsel %vm629, %v1049, 0.0
  %1175 = vadd.xlane.f32.xlu0 %v1174
  %v1176 = vpop.xlane.xlu0 %1175
  %v1177 = vsel %vm629, %v1051, 0.0
  %1178 = vadd.xlane.f32.xlu0 %v1177
  %v1179 = vpop.xlane.xlu0 %1178
  %v1212 = vperm.slane %v1086, %v761
  %v1213 = vperm.slane %v1089, %v763
  %v1214 = vsel %vm765, %v1213, %v1212
  %v1215 = vperm.slane %v1092, %v761
  %v1216 = vperm.slane %v1095, %v763
  %v1217 = vsel %vm765, %v1216, %v1215
  %v1218 = vperm.slane %v1098, %v761
  %v1219 = vperm.slane %v1101, %v763
  %v1220 = vsel %vm765, %v1219, %v1218
  %v1221 = vperm.slane %v1104, %v761
  %v1222 = vperm.slane %v1107, %v763
  %v1223 = vsel %vm765, %v1222, %v1221
  %v1224 = vperm.slane %v1110, %v761
  %v1225 = vperm.slane %v1113, %v763
  %v1226 = vsel %vm765, %v1225, %v1224
  %v1227 = vperm.slane %v1116, %v761
  %v1228 = vperm.slane %v1119, %v763
  %v1229 = vsel %vm765, %v1228, %v1227
  %v1230 = vperm.slane %v1122, %v761
  %v1231 = vperm.slane %v1125, %v763
  %v1232 = vsel %vm765, %v1231, %v1230
  %v1233 = vperm.slane %v1128, %v761
  %v1234 = vperm.slane %v1131, %v763
  %v1235 = vsel %vm765, %v1234, %v1233
  %v1236 = vperm.slane %v1134, %v761
  %v1237 = vperm.slane %v1137, %v763
  %v1238 = vsel %vm765, %v1237, %v1236
  %v1239 = vperm.slane %v1140, %v761
  %v1240 = vperm.slane %v1143, %v763
  %v1241 = vsel %vm765, %v1240, %v1239
  %v1242 = vperm.slane %v1146, %v761
  %v1243 = vperm.slane %v1149, %v763
  %v1244 = vsel %vm765, %v1243, %v1242
  %v1245 = vperm.slane %v1152, %v761
  %v1246 = vperm.slane %v1155, %v763
  %v1247 = vsel %vm765, %v1246, %v1245
  %v1248 = vperm.slane %v1158, %v761
  %v1249 = vperm.slane %v1161, %v763
  %v1250 = vsel %vm765, %v1249, %v1248
  %v1251 = vperm.slane %v1164, %v761
  %v1252 = vperm.slane %v1167, %v763
  %v1253 = vsel %vm765, %v1252, %v1251
  %v1254 = vperm.slane %v1170, %v761
  %v1255 = vperm.slane %v1173, %v763
  %v1256 = vsel %vm765, %v1255, %v1254
  %v1257 = vperm.slane %v1176, %v761
  %v1258 = vperm.slane %v1179, %v763
  %v1259 = vsel %vm765, %v1258, %v1257
  %v1260 = vsel %vm812, %v1217, %v1214
  %v1261 = vsel %vm814, %v1220, %v1260
  %v1262 = vsel %vm816, %v1223, %v1261
  %v1263 = vsel %vm818, %v1226, %v1262
  %v1264 = vsel %vm820, %v1229, %v1263
  %v1265 = vsel %vm822, %v1232, %v1264
  %v1266 = vsel %vm824, %v1235, %v1265
  %v1267 = vsel %vm812, %v1241, %v1238
  %v1268 = vsel %vm814, %v1244, %v1267
  %v1269 = vsel %vm816, %v1247, %v1268
  %v1270 = vsel %vm818, %v1250, %v1269
  %v1271 = vsel %vm820, %v1253, %v1270
  %v1272 = vsel %vm822, %v1256, %v1271
  %v1273 = vsel %vm824, %v1259, %v1272
  %v1276 = vsel %vm726, %v1266, -1e+30
  %v1277 = vsel %vm727, %v1273, -1e+30
  %v1278 = vsel %vm837, %v1276, -inf
  %1279 = vmax.xlane.f32.xlu0 %v1278
  %v1280 = vpop.xlane.xlu0 %1279
  %v1281 = vsel %vm837, %v1277, -inf
  %1282 = vmax.xlane.f32.xlu0 %v1281
  %v1283 = vpop.xlane.xlu0 %1282
  %v1284 = vsub.f32 %v1276, %v1280
  %v1285 = vsub.f32 %v1277, %v1283
  %v1286 = vmul.f32 %v1284, 1.442695
  %v1287 = vpow.pop %v1286
  %v1288 = vmul.f32 %v1285, 1.442695
  %v1289 = vpow.pop %v1288
  %v1290 = vmul.f32 %v1287, %v58
  %v1291 = vmul.f32 %v1289, %v59
  %v1292 = vsel %vm837, %v1290, 0.0
  %1293 = vadd.xlane.f32.xlu0 %v1292
  %v1294 = vpop.xlane.xlu0 %1293
  %v1295 = vsel %vm837, %v1291, 0.0
  %1296 = vadd.xlane.f32.xlu0 %v1295
  %v1297 = vpop.xlane.xlu0 %1296
  %v1298 = vmax.f32 %v1294, 1e-20
  %v1299 = vmax.f32 %v1297, 1e-20
  %v1300 = vrcp.pop %v1298
  %v1301 = vmul.f32 %v1298, %v1300
  %v1302 = vsub.f32 1.0, %v1301
  %v1303 = vmul.f32 %v1300, %v1302
  %v1304 = vadd.f32 %v1300, %v1303
  %vm1305 = vweird.f32 %v1298
  %vm1306 = vweird.f32 %v1300
  %vm1307 = vmor %vm1305, %vm1306
  %v1308 = vsel %vm1307, %v1300, %v1304
  %v1309 = vand.u32 2147483647, %v1298
  %vm1310 = vcmp.eq.f32.partialorder %v1309, 8.507059e+37
  %v1311 = vand.u32 %v1298, 2147483648
  %v1312 = vor.u32 1.1754944e-38, %v1311
  %v1313 = vsel %vm1310, %v1312, %v1308
  %v1314 = vmul.f32 %v1290, %v1313
  %v1315 = vrcp.pop %v1299
  %v1316 = vmul.f32 %v1299, %v1315
  %v1317 = vsub.f32 1.0, %v1316
  %v1318 = vmul.f32 %v1315, %v1317
  %v1319 = vadd.f32 %v1315, %v1318
  %vm1320 = vweird.f32 %v1299
  %vm1321 = vweird.f32 %v1315
  %vm1322 = vmor %vm1320, %vm1321
  %v1323 = vsel %vm1322, %v1315, %v1319
  %v1324 = vand.u32 2147483647, %v1299
  %vm1325 = vcmp.eq.f32.partialorder %v1324, 8.507059e+37
  %v1326 = vand.u32 %v1299, 2147483648
  %v1327 = vor.u32 1.1754944e-38, %v1326
  %v1328 = vsel %vm1325, %v1327, %v1323
  %v1329 = vmul.f32 %v1291, %v1328
  %1332 = vrot.lane.b32.xlu0 %v116, 96
  %v1333 = vpop.permute.xlu0 %1332
  %1334 = vrot.lane.b32.xlu0 %v119, 96
  %v1335 = vpop.permute.xlu0 %1334
  %v1339 = vsel %vm837, %v1314, 0
  %v1342 = vsel %vm837, %v1329, 0
  %1344 = vmatpush.msra.mxu0 0.0
  %1345 = vmatpush.msra.mxu0 0.0
  %1346 = vmatpush.msra.mxu0 0.0
  %1347 = vmatpush.msra.mxu0 0.0
  %1348 = vmatpush.msra.mxu0 0.0
  %1349 = vmatpush.msra.mxu0 0.0
  %1350 = vmatpush.msra.mxu0 0.0
  %1351 = vmatpush.msra.mxu0 0.0
  %1352 = vmatpush.msra.mxu0 0.0
  %1353 = vmatpush.msra.mxu0 0.0
  %1354 = vmatpush.msra.mxu0 0.0
  %1355 = vmatpush.msra.mxu0 0.0
  %1356 = vmatpush.msra.mxu0 0.0
  %1357 = vmatpush.msra.mxu0 0.0
  %1358 = vmatpush.msra.mxu0 %v1335
  %1359 = vmatpush.msra.mxu0 %v1333
  %1360 = vmatmul.f32.gmra.mxu0 %v1339
  %v1361 = vpop.f32.mrf.mxu0
  %v1362 = vadd.f32 0.0, %v1361
  %1363 = vmatmul.f32.gmra.mxu0 %v1342
  %v1364 = vpop.f32.mrf.mxu0
  %v1365 = vadd.f32 0.0, %v1364
  %1366 = vdwg.mxu0
  %v1367 = vperm.slane %v387, 2
  %1369 = vrot.lane.b32.xlu0 %v1367, 64
  %v1370 = vpop.permute.xlu0 %1369
  %v1372 = vmul.f32 %v564, %v1370
  %v1373 = vmul.f32 %v565, %v1370
  %v1374 = vmul.f32 %v566, %v1370
  %v1375 = vmul.f32 %v567, %v1370
  %v1376 = vmul.f32 %v568, %v1370
  %v1377 = vmul.f32 %v569, %v1370
  %v1378 = vmul.f32 %v570, %v1370
  %v1379 = vmul.f32 %v571, %v1370
  %v1380 = vmul.f32 %v572, %v1370
  %v1381 = vmul.f32 %v573, %v1370
  %v1382 = vmul.f32 %v574, %v1370
  %v1383 = vmul.f32 %v575, %v1370
  %v1384 = vmul.f32 %v576, %v1370
  %v1385 = vmul.f32 %v577, %v1370
  %v1386 = vmul.f32 %v578, %v1370
  %v1387 = vmul.f32 %v579, %v1370
  %v1388 = vmul.f32 %v580, %v1370
  %v1389 = vmul.f32 %v581, %v1370
  %v1390 = vmul.f32 %v582, %v1370
  %v1391 = vmul.f32 %v583, %v1370
  %v1392 = vmul.f32 %v584, %v1370
  %v1393 = vmul.f32 %v585, %v1370
  %v1394 = vmul.f32 %v586, %v1370
  %v1395 = vmul.f32 %v587, %v1370
  %v1396 = vmul.f32 %v588, %v1370
  %v1397 = vmul.f32 %v589, %v1370
  %v1398 = vmul.f32 %v590, %v1370
  %v1399 = vmul.f32 %v591, %v1370
  %v1400 = vmul.f32 %v592, %v1370
  %v1401 = vmul.f32 %v593, %v1370
  %v1402 = vmul.f32 %v594, %v1370
  %v1403 = vmul.f32 %v595, %v1370
  %1436 = vrot.lane.b32.xlu0 %v1372, 64
  %v1437 = vpop.permute.xlu0 %1436
  %1438 = vrot.lane.b32.xlu0 %v1373, 64
  %v1439 = vpop.permute.xlu0 %1438
  %1440 = vrot.lane.b32.xlu0 %v1374, 64
  %v1441 = vpop.permute.xlu0 %1440
  %1442 = vrot.lane.b32.xlu0 %v1375, 64
  %v1443 = vpop.permute.xlu0 %1442
  %1444 = vrot.lane.b32.xlu0 %v1376, 64
  %v1445 = vpop.permute.xlu0 %1444
  %1446 = vrot.lane.b32.xlu0 %v1377, 64
  %v1447 = vpop.permute.xlu0 %1446
  %1448 = vrot.lane.b32.xlu0 %v1378, 64
  %v1449 = vpop.permute.xlu0 %1448
  %1450 = vrot.lane.b32.xlu0 %v1379, 64
  %v1451 = vpop.permute.xlu0 %1450
  %1452 = vrot.lane.b32.xlu0 %v1380, 64
  %v1453 = vpop.permute.xlu0 %1452
  %1454 = vrot.lane.b32.xlu0 %v1381, 64
  %v1455 = vpop.permute.xlu0 %1454
  %1456 = vrot.lane.b32.xlu0 %v1382, 64
  %v1457 = vpop.permute.xlu0 %1456
  %1458 = vrot.lane.b32.xlu0 %v1383, 64
  %v1459 = vpop.permute.xlu0 %1458
  %1460 = vrot.lane.b32.xlu0 %v1384, 64
  %v1461 = vpop.permute.xlu0 %1460
  %1462 = vrot.lane.b32.xlu0 %v1385, 64
  %v1463 = vpop.permute.xlu0 %1462
  %1464 = vrot.lane.b32.xlu0 %v1386, 64
  %v1465 = vpop.permute.xlu0 %1464
  %1466 = vrot.lane.b32.xlu0 %v1387, 64
  %v1467 = vpop.permute.xlu0 %1466
  %1468 = vrot.lane.b32.xlu0 %v1388, 64
  %v1469 = vpop.permute.xlu0 %1468
  %1470 = vrot.lane.b32.xlu0 %v1389, 64
  %v1471 = vpop.permute.xlu0 %1470
  %1472 = vrot.lane.b32.xlu0 %v1390, 64
  %v1473 = vpop.permute.xlu0 %1472
  %1474 = vrot.lane.b32.xlu0 %v1391, 64
  %v1475 = vpop.permute.xlu0 %1474
  %1476 = vrot.lane.b32.xlu0 %v1392, 64
  %v1477 = vpop.permute.xlu0 %1476
  %1478 = vrot.lane.b32.xlu0 %v1393, 64
  %v1479 = vpop.permute.xlu0 %1478
  %1480 = vrot.lane.b32.xlu0 %v1394, 64
  %v1481 = vpop.permute.xlu0 %1480
  %1482 = vrot.lane.b32.xlu0 %v1395, 64
  %v1483 = vpop.permute.xlu0 %1482
  %1484 = vrot.lane.b32.xlu0 %v1396, 64
  %v1485 = vpop.permute.xlu0 %1484
  %1486 = vrot.lane.b32.xlu0 %v1397, 64
  %v1487 = vpop.permute.xlu0 %1486
  %1488 = vrot.lane.b32.xlu0 %v1398, 64
  %v1489 = vpop.permute.xlu0 %1488
  %1490 = vrot.lane.b32.xlu0 %v1399, 64
  %v1491 = vpop.permute.xlu0 %1490
  %1492 = vrot.lane.b32.xlu0 %v1400, 64
  %v1493 = vpop.permute.xlu0 %1492
  %1494 = vrot.lane.b32.xlu0 %v1401, 64
  %v1495 = vpop.permute.xlu0 %1494
  %1496 = vrot.lane.b32.xlu0 %v1402, 64
  %v1497 = vpop.permute.xlu0 %1496
  %1498 = vrot.lane.b32.xlu0 %v1403, 64
  %v1499 = vpop.permute.xlu0 %1498
  %v1532 = vsel %vm629, %v1437, 0.0
  %1533 = vadd.xlane.f32.xlu0 %v1532
  %v1534 = vpop.xlane.xlu0 %1533
  %v1535 = vsel %vm629, %v1439, 0.0
  %1536 = vadd.xlane.f32.xlu0 %v1535
  %v1537 = vpop.xlane.xlu0 %1536
  %v1538 = vsel %vm629, %v1441, 0.0
  %1539 = vadd.xlane.f32.xlu0 %v1538
  %v1540 = vpop.xlane.xlu0 %1539
  %v1541 = vsel %vm629, %v1443, 0.0
  %1542 = vadd.xlane.f32.xlu0 %v1541
  %v1543 = vpop.xlane.xlu0 %1542
  %v1544 = vsel %vm629, %v1445, 0.0
  %1545 = vadd.xlane.f32.xlu0 %v1544
  %v1546 = vpop.xlane.xlu0 %1545
  %v1547 = vsel %vm629, %v1447, 0.0
  %1548 = vadd.xlane.f32.xlu0 %v1547
  %v1549 = vpop.xlane.xlu0 %1548
  %v1550 = vsel %vm629, %v1449, 0.0
  %1551 = vadd.xlane.f32.xlu0 %v1550
  %v1552 = vpop.xlane.xlu0 %1551
  %v1553 = vsel %vm629, %v1451, 0.0
  %1554 = vadd.xlane.f32.xlu0 %v1553
  %v1555 = vpop.xlane.xlu0 %1554
  %v1556 = vsel %vm629, %v1453, 0.0
  %1557 = vadd.xlane.f32.xlu0 %v1556
  %v1558 = vpop.xlane.xlu0 %1557
  %v1559 = vsel %vm629, %v1455, 0.0
  %1560 = vadd.xlane.f32.xlu0 %v1559
  %v1561 = vpop.xlane.xlu0 %1560
  %v1562 = vsel %vm629, %v1457, 0.0
  %1563 = vadd.xlane.f32.xlu0 %v1562
  %v1564 = vpop.xlane.xlu0 %1563
  %v1565 = vsel %vm629, %v1459, 0.0
  %1566 = vadd.xlane.f32.xlu0 %v1565
  %v1567 = vpop.xlane.xlu0 %1566
  %v1568 = vsel %vm629, %v1461, 0.0
  %1569 = vadd.xlane.f32.xlu0 %v1568
  %v1570 = vpop.xlane.xlu0 %1569
  %v1571 = vsel %vm629, %v1463, 0.0
  %1572 = vadd.xlane.f32.xlu0 %v1571
  %v1573 = vpop.xlane.xlu0 %1572
  %v1574 = vsel %vm629, %v1465, 0.0
  %1575 = vadd.xlane.f32.xlu0 %v1574
  %v1576 = vpop.xlane.xlu0 %1575
  %v1577 = vsel %vm629, %v1467, 0.0
  %1578 = vadd.xlane.f32.xlu0 %v1577
  %v1579 = vpop.xlane.xlu0 %1578
  %v1580 = vsel %vm629, %v1469, 0.0
  %1581 = vadd.xlane.f32.xlu0 %v1580
  %v1582 = vpop.xlane.xlu0 %1581
  %v1583 = vsel %vm629, %v1471, 0.0
  %1584 = vadd.xlane.f32.xlu0 %v1583
  %v1585 = vpop.xlane.xlu0 %1584
  %v1586 = vsel %vm629, %v1473, 0.0
  %1587 = vadd.xlane.f32.xlu0 %v1586
  %v1588 = vpop.xlane.xlu0 %1587
  %v1589 = vsel %vm629, %v1475, 0.0
  %1590 = vadd.xlane.f32.xlu0 %v1589
  %v1591 = vpop.xlane.xlu0 %1590
  %v1592 = vsel %vm629, %v1477, 0.0
  %1593 = vadd.xlane.f32.xlu0 %v1592
  %v1594 = vpop.xlane.xlu0 %1593
  %v1595 = vsel %vm629, %v1479, 0.0
  %1596 = vadd.xlane.f32.xlu0 %v1595
  %v1597 = vpop.xlane.xlu0 %1596
  %v1598 = vsel %vm629, %v1481, 0.0
  %1599 = vadd.xlane.f32.xlu0 %v1598
  %v1600 = vpop.xlane.xlu0 %1599
  %v1601 = vsel %vm629, %v1483, 0.0
  %1602 = vadd.xlane.f32.xlu0 %v1601
  %v1603 = vpop.xlane.xlu0 %1602
  %v1604 = vsel %vm629, %v1485, 0.0
  %1605 = vadd.xlane.f32.xlu0 %v1604
  %v1606 = vpop.xlane.xlu0 %1605
  %v1607 = vsel %vm629, %v1487, 0.0
  %1608 = vadd.xlane.f32.xlu0 %v1607
  %v1609 = vpop.xlane.xlu0 %1608
  %v1610 = vsel %vm629, %v1489, 0.0
  %1611 = vadd.xlane.f32.xlu0 %v1610
  %v1612 = vpop.xlane.xlu0 %1611
  %v1613 = vsel %vm629, %v1491, 0.0
  %1614 = vadd.xlane.f32.xlu0 %v1613
  %v1615 = vpop.xlane.xlu0 %1614
  %v1616 = vsel %vm629, %v1493, 0.0
  %1617 = vadd.xlane.f32.xlu0 %v1616
  %v1618 = vpop.xlane.xlu0 %1617
  %v1619 = vsel %vm629, %v1495, 0.0
  %1620 = vadd.xlane.f32.xlu0 %v1619
  %v1621 = vpop.xlane.xlu0 %1620
  %v1622 = vsel %vm629, %v1497, 0.0
  %1623 = vadd.xlane.f32.xlu0 %v1622
  %v1624 = vpop.xlane.xlu0 %1623
  %v1625 = vsel %vm629, %v1499, 0.0
  %1626 = vadd.xlane.f32.xlu0 %v1625
  %v1627 = vpop.xlane.xlu0 %1626
  %v1660 = vperm.slane %v1534, %v761
  %v1661 = vperm.slane %v1537, %v763
  %v1662 = vsel %vm765, %v1661, %v1660
  %v1663 = vperm.slane %v1540, %v761
  %v1664 = vperm.slane %v1543, %v763
  %v1665 = vsel %vm765, %v1664, %v1663
  %v1666 = vperm.slane %v1546, %v761
  %v1667 = vperm.slane %v1549, %v763
  %v1668 = vsel %vm765, %v1667, %v1666
  %v1669 = vperm.slane %v1552, %v761
  %v1670 = vperm.slane %v1555, %v763
  %v1671 = vsel %vm765, %v1670, %v1669
  %v1672 = vperm.slane %v1558, %v761
  %v1673 = vperm.slane %v1561, %v763
  %v1674 = vsel %vm765, %v1673, %v1672
  %v1675 = vperm.slane %v1564, %v761
  %v1676 = vperm.slane %v1567, %v763
  %v1677 = vsel %vm765, %v1676, %v1675
  %v1678 = vperm.slane %v1570, %v761
  %v1679 = vperm.slane %v1573, %v763
  %v1680 = vsel %vm765, %v1679, %v1678
  %v1681 = vperm.slane %v1576, %v761
  %v1682 = vperm.slane %v1579, %v763
  %v1683 = vsel %vm765, %v1682, %v1681
  %v1684 = vperm.slane %v1582, %v761
  %v1685 = vperm.slane %v1585, %v763
  %v1686 = vsel %vm765, %v1685, %v1684
  %v1687 = vperm.slane %v1588, %v761
  %v1688 = vperm.slane %v1591, %v763
  %v1689 = vsel %vm765, %v1688, %v1687
  %v1690 = vperm.slane %v1594, %v761
  %v1691 = vperm.slane %v1597, %v763
  %v1692 = vsel %vm765, %v1691, %v1690
  %v1693 = vperm.slane %v1600, %v761
  %v1694 = vperm.slane %v1603, %v763
  %v1695 = vsel %vm765, %v1694, %v1693
  %v1696 = vperm.slane %v1606, %v761
  %v1697 = vperm.slane %v1609, %v763
  %v1698 = vsel %vm765, %v1697, %v1696
  %v1699 = vperm.slane %v1612, %v761
  %v1700 = vperm.slane %v1615, %v763
  %v1701 = vsel %vm765, %v1700, %v1699
  %v1702 = vperm.slane %v1618, %v761
  %v1703 = vperm.slane %v1621, %v763
  %v1704 = vsel %vm765, %v1703, %v1702
  %v1705 = vperm.slane %v1624, %v761
  %v1706 = vperm.slane %v1627, %v763
  %v1707 = vsel %vm765, %v1706, %v1705
  %v1708 = vsel %vm812, %v1665, %v1662
  %v1709 = vsel %vm814, %v1668, %v1708
  %v1710 = vsel %vm816, %v1671, %v1709
  %v1711 = vsel %vm818, %v1674, %v1710
  %v1712 = vsel %vm820, %v1677, %v1711
  %v1713 = vsel %vm822, %v1680, %v1712
  %v1714 = vsel %vm824, %v1683, %v1713
  %v1715 = vsel %vm812, %v1689, %v1686
  %v1716 = vsel %vm814, %v1692, %v1715
  %v1717 = vsel %vm816, %v1695, %v1716
  %v1718 = vsel %vm818, %v1698, %v1717
  %v1719 = vsel %vm820, %v1701, %v1718
  %v1720 = vsel %vm822, %v1704, %v1719
  %v1721 = vsel %vm824, %v1707, %v1720
  %v1724 = vsel %vm726, %v1714, -1e+30
  %v1725 = vsel %vm727, %v1721, -1e+30
  %v1726 = vsel %vm837, %v1724, -inf
  %1727 = vmax.xlane.f32.xlu0 %v1726
  %v1728 = vpop.xlane.xlu0 %1727
  %v1729 = vsel %vm837, %v1725, -inf
  %1730 = vmax.xlane.f32.xlu0 %v1729
  %v1731 = vpop.xlane.xlu0 %1730
  %v1732 = vsub.f32 %v1724, %v1728
  %v1733 = vsub.f32 %v1725, %v1731
  %v1734 = vmul.f32 %v1732, 1.442695
  %v1735 = vpow.pop %v1734
  %v1736 = vmul.f32 %v1733, 1.442695
  %v1737 = vpow.pop %v1736
  %v1738 = vmul.f32 %v1735, %v58
  %v1739 = vmul.f32 %v1737, %v59
  %v1740 = vsel %vm837, %v1738, 0.0
  %1741 = vadd.xlane.f32.xlu0 %v1740
  %v1742 = vpop.xlane.xlu0 %1741
  %v1743 = vsel %vm837, %v1739, 0.0
  %1744 = vadd.xlane.f32.xlu0 %v1743
  %v1745 = vpop.xlane.xlu0 %1744
  %v1746 = vmax.f32 %v1742, 1e-20
  %v1747 = vmax.f32 %v1745, 1e-20
  %v1748 = vrcp.pop %v1746
  %v1749 = vmul.f32 %v1746, %v1748
  %v1750 = vsub.f32 1.0, %v1749
  %v1751 = vmul.f32 %v1748, %v1750
  %v1752 = vadd.f32 %v1748, %v1751
  %vm1753 = vweird.f32 %v1746
  %vm1754 = vweird.f32 %v1748
  %vm1755 = vmor %vm1753, %vm1754
  %v1756 = vsel %vm1755, %v1748, %v1752
  %v1757 = vand.u32 2147483647, %v1746
  %vm1758 = vcmp.eq.f32.partialorder %v1757, 8.507059e+37
  %v1759 = vand.u32 %v1746, 2147483648
  %v1760 = vor.u32 1.1754944e-38, %v1759
  %v1761 = vsel %vm1758, %v1760, %v1756
  %v1762 = vmul.f32 %v1738, %v1761
  %v1763 = vrcp.pop %v1747
  %v1764 = vmul.f32 %v1747, %v1763
  %v1765 = vsub.f32 1.0, %v1764
  %v1766 = vmul.f32 %v1763, %v1765
  %v1767 = vadd.f32 %v1763, %v1766
  %vm1768 = vweird.f32 %v1747
  %vm1769 = vweird.f32 %v1763
  %vm1770 = vmor %vm1768, %vm1769
  %v1771 = vsel %vm1770, %v1763, %v1767
  %v1772 = vand.u32 2147483647, %v1747
  %vm1773 = vcmp.eq.f32.partialorder %v1772, 8.507059e+37
  %v1774 = vand.u32 %v1747, 2147483648
  %v1775 = vor.u32 1.1754944e-38, %v1774
  %v1776 = vsel %vm1773, %v1775, %v1771
  %v1777 = vmul.f32 %v1739, %v1776
  %1778 = vrot.lane.b32.xlu0 %v116, 64
  %v1779 = vpop.permute.xlu0 %1778
  %1780 = vrot.lane.b32.xlu0 %v119, 64
  %v1781 = vpop.permute.xlu0 %1780
  %v1785 = vsel %vm837, %v1762, 0
  %v1788 = vsel %vm837, %v1777, 0
  %1790 = vmatpush.msra.mxu0 0.0
  %1791 = vmatpush.msra.mxu0 0.0
  %1792 = vmatpush.msra.mxu0 0.0
  %1793 = vmatpush.msra.mxu0 0.0
  %1794 = vmatpush.msra.mxu0 0.0
  %1795 = vmatpush.msra.mxu0 0.0
  %1796 = vmatpush.msra.mxu0 0.0
  %1797 = vmatpush.msra.mxu0 0.0
  %1798 = vmatpush.msra.mxu0 0.0
  %1799 = vmatpush.msra.mxu0 0.0
  %1800 = vmatpush.msra.mxu0 0.0
  %1801 = vmatpush.msra.mxu0 0.0
  %1802 = vmatpush.msra.mxu0 0.0
  %1803 = vmatpush.msra.mxu0 0.0
  %1804 = vmatpush.msra.mxu0 %v1781
  %1805 = vmatpush.msra.mxu0 %v1779
  %1806 = vmatmul.f32.gmra.mxu0 %v1785
  %v1807 = vpop.f32.mrf.mxu0
  %v1808 = vadd.f32 0.0, %v1807
  %1809 = vmatmul.f32.gmra.mxu0 %v1788
  %v1810 = vpop.f32.mrf.mxu0
  %v1811 = vadd.f32 0.0, %v1810
  %1812 = vdwg.mxu0
  %v1813 = vperm.slane %v387, 3
  %1815 = vrot.lane.b32.xlu0 %v1813, 96
  %v1816 = vpop.permute.xlu0 %1815
  %v1818 = vmul.f32 %v564, %v1816
  %v1819 = vmul.f32 %v565, %v1816
  %v1820 = vmul.f32 %v566, %v1816
  %v1821 = vmul.f32 %v567, %v1816
  %v1822 = vmul.f32 %v568, %v1816
  %v1823 = vmul.f32 %v569, %v1816
  %v1824 = vmul.f32 %v570, %v1816
  %v1825 = vmul.f32 %v571, %v1816
  %v1826 = vmul.f32 %v572, %v1816
  %v1827 = vmul.f32 %v573, %v1816
  %v1828 = vmul.f32 %v574, %v1816
  %v1829 = vmul.f32 %v575, %v1816
  %v1830 = vmul.f32 %v576, %v1816
  %v1831 = vmul.f32 %v577, %v1816
  %v1832 = vmul.f32 %v578, %v1816
  %v1833 = vmul.f32 %v579, %v1816
  %v1834 = vmul.f32 %v580, %v1816
  %v1835 = vmul.f32 %v581, %v1816
  %v1836 = vmul.f32 %v582, %v1816
  %v1837 = vmul.f32 %v583, %v1816
  %v1838 = vmul.f32 %v584, %v1816
  %v1839 = vmul.f32 %v585, %v1816
  %v1840 = vmul.f32 %v586, %v1816
  %v1841 = vmul.f32 %v587, %v1816
  %v1842 = vmul.f32 %v588, %v1816
  %v1843 = vmul.f32 %v589, %v1816
  %v1844 = vmul.f32 %v590, %v1816
  %v1845 = vmul.f32 %v591, %v1816
  %v1846 = vmul.f32 %v592, %v1816
  %v1847 = vmul.f32 %v593, %v1816
  %v1848 = vmul.f32 %v594, %v1816
  %v1849 = vmul.f32 %v595, %v1816
  %1882 = vrot.lane.b32.xlu0 %v1818, 32
  %v1883 = vpop.permute.xlu0 %1882
  %1884 = vrot.lane.b32.xlu0 %v1819, 32
  %v1885 = vpop.permute.xlu0 %1884
  %1886 = vrot.lane.b32.xlu0 %v1820, 32
  %v1887 = vpop.permute.xlu0 %1886
  %1888 = vrot.lane.b32.xlu0 %v1821, 32
  %v1889 = vpop.permute.xlu0 %1888
  %1890 = vrot.lane.b32.xlu0 %v1822, 32
  %v1891 = vpop.permute.xlu0 %1890
  %1892 = vrot.lane.b32.xlu0 %v1823, 32
  %v1893 = vpop.permute.xlu0 %1892
  %1894 = vrot.lane.b32.xlu0 %v1824, 32
  %v1895 = vpop.permute.xlu0 %1894
  %1896 = vrot.lane.b32.xlu0 %v1825, 32
  %v1897 = vpop.permute.xlu0 %1896
  %1898 = vrot.lane.b32.xlu0 %v1826, 32
  %v1899 = vpop.permute.xlu0 %1898
  %1900 = vrot.lane.b32.xlu0 %v1827, 32
  %v1901 = vpop.permute.xlu0 %1900
  %1902 = vrot.lane.b32.xlu0 %v1828, 32
  %v1903 = vpop.permute.xlu0 %1902
  %1904 = vrot.lane.b32.xlu0 %v1829, 32
  %v1905 = vpop.permute.xlu0 %1904
  %1906 = vrot.lane.b32.xlu0 %v1830, 32
  %v1907 = vpop.permute.xlu0 %1906
  %1908 = vrot.lane.b32.xlu0 %v1831, 32
  %v1909 = vpop.permute.xlu0 %1908
  %1910 = vrot.lane.b32.xlu0 %v1832, 32
  %v1911 = vpop.permute.xlu0 %1910
  %1912 = vrot.lane.b32.xlu0 %v1833, 32
  %v1913 = vpop.permute.xlu0 %1912
  %1914 = vrot.lane.b32.xlu0 %v1834, 32
  %v1915 = vpop.permute.xlu0 %1914
  %1916 = vrot.lane.b32.xlu0 %v1835, 32
  %v1917 = vpop.permute.xlu0 %1916
  %1918 = vrot.lane.b32.xlu0 %v1836, 32
  %v1919 = vpop.permute.xlu0 %1918
  %1920 = vrot.lane.b32.xlu0 %v1837, 32
  %v1921 = vpop.permute.xlu0 %1920
  %1922 = vrot.lane.b32.xlu0 %v1838, 32
  %v1923 = vpop.permute.xlu0 %1922
  %1924 = vrot.lane.b32.xlu0 %v1839, 32
  %v1925 = vpop.permute.xlu0 %1924
  %1926 = vrot.lane.b32.xlu0 %v1840, 32
  %v1927 = vpop.permute.xlu0 %1926
  %1928 = vrot.lane.b32.xlu0 %v1841, 32
  %v1929 = vpop.permute.xlu0 %1928
  %1930 = vrot.lane.b32.xlu0 %v1842, 32
  %v1931 = vpop.permute.xlu0 %1930
  %1932 = vrot.lane.b32.xlu0 %v1843, 32
  %v1933 = vpop.permute.xlu0 %1932
  %1934 = vrot.lane.b32.xlu0 %v1844, 32
  %v1935 = vpop.permute.xlu0 %1934
  %1936 = vrot.lane.b32.xlu0 %v1845, 32
  %v1937 = vpop.permute.xlu0 %1936
  %1938 = vrot.lane.b32.xlu0 %v1846, 32
  %v1939 = vpop.permute.xlu0 %1938
  %1940 = vrot.lane.b32.xlu0 %v1847, 32
  %v1941 = vpop.permute.xlu0 %1940
  %1942 = vrot.lane.b32.xlu0 %v1848, 32
  %v1943 = vpop.permute.xlu0 %1942
  %1944 = vrot.lane.b32.xlu0 %v1849, 32
  %v1945 = vpop.permute.xlu0 %1944
  %v1978 = vsel %vm629, %v1883, 0.0
  %1979 = vadd.xlane.f32.xlu0 %v1978
  %v1980 = vpop.xlane.xlu0 %1979
  %v1981 = vsel %vm629, %v1885, 0.0
  %1982 = vadd.xlane.f32.xlu0 %v1981
  %v1983 = vpop.xlane.xlu0 %1982
  %v1984 = vsel %vm629, %v1887, 0.0
  %1985 = vadd.xlane.f32.xlu0 %v1984
  %v1986 = vpop.xlane.xlu0 %1985
  %v1987 = vsel %vm629, %v1889, 0.0
  %1988 = vadd.xlane.f32.xlu0 %v1987
  %v1989 = vpop.xlane.xlu0 %1988
  %v1990 = vsel %vm629, %v1891, 0.0
  %1991 = vadd.xlane.f32.xlu0 %v1990
  %v1992 = vpop.xlane.xlu0 %1991
  %v1993 = vsel %vm629, %v1893, 0.0
  %1994 = vadd.xlane.f32.xlu0 %v1993
  %v1995 = vpop.xlane.xlu0 %1994
  %v1996 = vsel %vm629, %v1895, 0.0
  %1997 = vadd.xlane.f32.xlu0 %v1996
  %v1998 = vpop.xlane.xlu0 %1997
  %v1999 = vsel %vm629, %v1897, 0.0
  %2000 = vadd.xlane.f32.xlu0 %v1999
  %v2001 = vpop.xlane.xlu0 %2000
  %v2002 = vsel %vm629, %v1899, 0.0
  %2003 = vadd.xlane.f32.xlu0 %v2002
  %v2004 = vpop.xlane.xlu0 %2003
  %v2005 = vsel %vm629, %v1901, 0.0
  %2006 = vadd.xlane.f32.xlu0 %v2005
  %v2007 = vpop.xlane.xlu0 %2006
  %v2008 = vsel %vm629, %v1903, 0.0
  %2009 = vadd.xlane.f32.xlu0 %v2008
  %v2010 = vpop.xlane.xlu0 %2009
  %v2011 = vsel %vm629, %v1905, 0.0
  %2012 = vadd.xlane.f32.xlu0 %v2011
  %v2013 = vpop.xlane.xlu0 %2012
  %v2014 = vsel %vm629, %v1907, 0.0
  %2015 = vadd.xlane.f32.xlu0 %v2014
  %v2016 = vpop.xlane.xlu0 %2015
  %v2017 = vsel %vm629, %v1909, 0.0
  %2018 = vadd.xlane.f32.xlu0 %v2017
  %v2019 = vpop.xlane.xlu0 %2018
  %v2020 = vsel %vm629, %v1911, 0.0
  %2021 = vadd.xlane.f32.xlu0 %v2020
  %v2022 = vpop.xlane.xlu0 %2021
  %v2023 = vsel %vm629, %v1913, 0.0
  %2024 = vadd.xlane.f32.xlu0 %v2023
  %v2025 = vpop.xlane.xlu0 %2024
  %v2026 = vsel %vm629, %v1915, 0.0
  %2027 = vadd.xlane.f32.xlu0 %v2026
  %v2028 = vpop.xlane.xlu0 %2027
  %v2029 = vsel %vm629, %v1917, 0.0
  %2030 = vadd.xlane.f32.xlu0 %v2029
  %v2031 = vpop.xlane.xlu0 %2030
  %v2032 = vsel %vm629, %v1919, 0.0
  %2033 = vadd.xlane.f32.xlu0 %v2032
  %v2034 = vpop.xlane.xlu0 %2033
  %v2035 = vsel %vm629, %v1921, 0.0
  %2036 = vadd.xlane.f32.xlu0 %v2035
  %v2037 = vpop.xlane.xlu0 %2036
  %v2038 = vsel %vm629, %v1923, 0.0
  %2039 = vadd.xlane.f32.xlu0 %v2038
  %v2040 = vpop.xlane.xlu0 %2039
  %v2041 = vsel %vm629, %v1925, 0.0
  %2042 = vadd.xlane.f32.xlu0 %v2041
  %v2043 = vpop.xlane.xlu0 %2042
  %v2044 = vsel %vm629, %v1927, 0.0
  %2045 = vadd.xlane.f32.xlu0 %v2044
  %v2046 = vpop.xlane.xlu0 %2045
  %v2047 = vsel %vm629, %v1929, 0.0
  %2048 = vadd.xlane.f32.xlu0 %v2047
  %v2049 = vpop.xlane.xlu0 %2048
  %v2050 = vsel %vm629, %v1931, 0.0
  %2051 = vadd.xlane.f32.xlu0 %v2050
  %v2052 = vpop.xlane.xlu0 %2051
  %v2053 = vsel %vm629, %v1933, 0.0
  %2054 = vadd.xlane.f32.xlu0 %v2053
  %v2055 = vpop.xlane.xlu0 %2054
  %v2056 = vsel %vm629, %v1935, 0.0
  %2057 = vadd.xlane.f32.xlu0 %v2056
  %v2058 = vpop.xlane.xlu0 %2057
  %v2059 = vsel %vm629, %v1937, 0.0
  %2060 = vadd.xlane.f32.xlu0 %v2059
  %v2061 = vpop.xlane.xlu0 %2060
  %v2062 = vsel %vm629, %v1939, 0.0
  %2063 = vadd.xlane.f32.xlu0 %v2062
  %v2064 = vpop.xlane.xlu0 %2063
  %v2065 = vsel %vm629, %v1941, 0.0
  %2066 = vadd.xlane.f32.xlu0 %v2065
  %v2067 = vpop.xlane.xlu0 %2066
  %v2068 = vsel %vm629, %v1943, 0.0
  %2069 = vadd.xlane.f32.xlu0 %v2068
  %v2070 = vpop.xlane.xlu0 %2069
  %v2071 = vsel %vm629, %v1945, 0.0
  %2072 = vadd.xlane.f32.xlu0 %v2071
  %v2073 = vpop.xlane.xlu0 %2072
  %v2106 = vperm.slane %v1980, %v761
  %v2107 = vperm.slane %v1983, %v763
  %v2108 = vsel %vm765, %v2107, %v2106
  %v2109 = vperm.slane %v1986, %v761
  %v2110 = vperm.slane %v1989, %v763
  %v2111 = vsel %vm765, %v2110, %v2109
  %v2112 = vperm.slane %v1992, %v761
  %v2113 = vperm.slane %v1995, %v763
  %v2114 = vsel %vm765, %v2113, %v2112
  %v2115 = vperm.slane %v1998, %v761
  %v2116 = vperm.slane %v2001, %v763
  %v2117 = vsel %vm765, %v2116, %v2115
  %v2118 = vperm.slane %v2004, %v761
  %v2119 = vperm.slane %v2007, %v763
  %v2120 = vsel %vm765, %v2119, %v2118
  %v2121 = vperm.slane %v2010, %v761
  %v2122 = vperm.slane %v2013, %v763
  %v2123 = vsel %vm765, %v2122, %v2121
  %v2124 = vperm.slane %v2016, %v761
  %v2125 = vperm.slane %v2019, %v763
  %v2126 = vsel %vm765, %v2125, %v2124
  %v2127 = vperm.slane %v2022, %v761
  %v2128 = vperm.slane %v2025, %v763
  %v2129 = vsel %vm765, %v2128, %v2127
  %v2130 = vperm.slane %v2028, %v761
  %v2131 = vperm.slane %v2031, %v763
  %v2132 = vsel %vm765, %v2131, %v2130
  %v2133 = vperm.slane %v2034, %v761
  %v2134 = vperm.slane %v2037, %v763
  %v2135 = vsel %vm765, %v2134, %v2133
  %v2136 = vperm.slane %v2040, %v761
  %v2137 = vperm.slane %v2043, %v763
  %v2138 = vsel %vm765, %v2137, %v2136
  %v2139 = vperm.slane %v2046, %v761
  %v2140 = vperm.slane %v2049, %v763
  %v2141 = vsel %vm765, %v2140, %v2139
  %v2142 = vperm.slane %v2052, %v761
  %v2143 = vperm.slane %v2055, %v763
  %v2144 = vsel %vm765, %v2143, %v2142
  %v2145 = vperm.slane %v2058, %v761
  %v2146 = vperm.slane %v2061, %v763
  %v2147 = vsel %vm765, %v2146, %v2145
  %v2148 = vperm.slane %v2064, %v761
  %v2149 = vperm.slane %v2067, %v763
  %v2150 = vsel %vm765, %v2149, %v2148
  %v2151 = vperm.slane %v2070, %v761
  %v2152 = vperm.slane %v2073, %v763
  %v2153 = vsel %vm765, %v2152, %v2151
  %v2154 = vsel %vm812, %v2111, %v2108
  %v2155 = vsel %vm814, %v2114, %v2154
  %v2156 = vsel %vm816, %v2117, %v2155
  %v2157 = vsel %vm818, %v2120, %v2156
  %v2158 = vsel %vm820, %v2123, %v2157
  %v2159 = vsel %vm822, %v2126, %v2158
  %v2160 = vsel %vm824, %v2129, %v2159
  %v2161 = vsel %vm812, %v2135, %v2132
  %v2162 = vsel %vm814, %v2138, %v2161
  %v2163 = vsel %vm816, %v2141, %v2162
  %v2164 = vsel %vm818, %v2144, %v2163
  %v2165 = vsel %vm820, %v2147, %v2164
  %v2166 = vsel %vm822, %v2150, %v2165
  %v2167 = vsel %vm824, %v2153, %v2166
  %v2170 = vsel %vm726, %v2160, -1e+30
  %v2171 = vsel %vm727, %v2167, -1e+30
  %v2172 = vsel %vm837, %v2170, -inf
  %2173 = vmax.xlane.f32.xlu0 %v2172
  %v2174 = vpop.xlane.xlu0 %2173
  %v2175 = vsel %vm837, %v2171, -inf
  %2176 = vmax.xlane.f32.xlu0 %v2175
  %v2177 = vpop.xlane.xlu0 %2176
  %v2178 = vsub.f32 %v2170, %v2174
  %v2179 = vsub.f32 %v2171, %v2177
  %v2180 = vmul.f32 %v2178, 1.442695
  %v2181 = vpow.pop %v2180
  %v2182 = vmul.f32 %v2179, 1.442695
  %v2183 = vpow.pop %v2182
  %v2184 = vmul.f32 %v2181, %v58
  %v2185 = vmul.f32 %v2183, %v59
  %v2186 = vsel %vm837, %v2184, 0.0
  %2187 = vadd.xlane.f32.xlu0 %v2186
  %v2188 = vpop.xlane.xlu0 %2187
  %v2189 = vsel %vm837, %v2185, 0.0
  %2190 = vadd.xlane.f32.xlu0 %v2189
  %v2191 = vpop.xlane.xlu0 %2190
  %v2192 = vmax.f32 %v2188, 1e-20
  %v2193 = vmax.f32 %v2191, 1e-20
  %v2194 = vrcp.pop %v2192
  %v2195 = vmul.f32 %v2192, %v2194
  %v2196 = vsub.f32 1.0, %v2195
  %v2197 = vmul.f32 %v2194, %v2196
  %v2198 = vadd.f32 %v2194, %v2197
  %vm2199 = vweird.f32 %v2192
  %vm2200 = vweird.f32 %v2194
  %vm2201 = vmor %vm2199, %vm2200
  %v2202 = vsel %vm2201, %v2194, %v2198
  %v2203 = vand.u32 2147483647, %v2192
  %vm2204 = vcmp.eq.f32.partialorder %v2203, 8.507059e+37
  %v2205 = vand.u32 %v2192, 2147483648
  %v2206 = vor.u32 1.1754944e-38, %v2205
  %v2207 = vsel %vm2204, %v2206, %v2202
  %v2208 = vmul.f32 %v2184, %v2207
  %v2209 = vrcp.pop %v2193
  %v2210 = vmul.f32 %v2193, %v2209
  %v2211 = vsub.f32 1.0, %v2210
  %v2212 = vmul.f32 %v2209, %v2211
  %v2213 = vadd.f32 %v2209, %v2212
  %vm2214 = vweird.f32 %v2193
  %vm2215 = vweird.f32 %v2209
  %vm2216 = vmor %vm2214, %vm2215
  %v2217 = vsel %vm2216, %v2209, %v2213
  %v2218 = vand.u32 2147483647, %v2193
  %vm2219 = vcmp.eq.f32.partialorder %v2218, 8.507059e+37
  %v2220 = vand.u32 %v2193, 2147483648
  %v2221 = vor.u32 1.1754944e-38, %v2220
  %v2222 = vsel %vm2219, %v2221, %v2217
  %v2223 = vmul.f32 %v2185, %v2222
  %2224 = vrot.lane.b32.xlu0 %v116, 32
  %v2225 = vpop.permute.xlu0 %2224
  %2226 = vrot.lane.b32.xlu0 %v119, 32
  %v2227 = vpop.permute.xlu0 %2226
  %v2231 = vsel %vm837, %v2208, 0
  %v2234 = vsel %vm837, %v2223, 0
  %2236 = vmatpush.msra.mxu0 0.0
  %2237 = vmatpush.msra.mxu0 0.0
  %2238 = vmatpush.msra.mxu0 0.0
  %2239 = vmatpush.msra.mxu0 0.0
  %2240 = vmatpush.msra.mxu0 0.0
  %2241 = vmatpush.msra.mxu0 0.0
  %2242 = vmatpush.msra.mxu0 0.0
  %2243 = vmatpush.msra.mxu0 0.0
  %2244 = vmatpush.msra.mxu0 0.0
  %2245 = vmatpush.msra.mxu0 0.0
  %2246 = vmatpush.msra.mxu0 0.0
  %2247 = vmatpush.msra.mxu0 0.0
  %2248 = vmatpush.msra.mxu0 0.0
  %2249 = vmatpush.msra.mxu0 0.0
  %2250 = vmatpush.msra.mxu0 %v2227
  %2251 = vmatpush.msra.mxu0 %v2225
  %2252 = vmatmul.f32.gmra.mxu0 %v2231
  %v2253 = vpop.f32.mrf.mxu0
  %v2254 = vadd.f32 0.0, %v2253
  %2255 = vmatmul.f32.gmra.mxu0 %v2234
  %v2256 = vpop.f32.mrf.mxu0
  %v2257 = vadd.f32 0.0, %v2256
  %2258 = vdwg.mxu0
  %2261 = vrot.lane.b32.xlu0 %v1362, 32
  %v2262 = vpop.permute.xlu0 %2261
  %2263 = vrot.lane.b32.xlu0 %v1365, 32
  %v2264 = vpop.permute.xlu0 %2263
  %2269 = vrot.lane.b32.xlu0 %v1808, 64
  %v2270 = vpop.permute.xlu0 %2269
  %2271 = vrot.lane.b32.xlu0 %v1811, 64
  %v2272 = vpop.permute.xlu0 %2271
  %2277 = vrot.lane.b32.xlu0 %v2254, 96
  %v2278 = vpop.permute.xlu0 %2277
  %2279 = vrot.lane.b32.xlu0 %v2257, 96
  %v2280 = vpop.permute.xlu0 %2279
  %v2283 = vsel %vm629, %v914, %v2262
  %v2284 = vsel %vm629, %v917, %v2264
  %vm2285 = vcmask 523264
  %v2286 = vsel %vm2285, %v2283, %v2270
  %v2287 = vsel %vm2285, %v2284, %v2272
  %vm2288 = vcmask 785408
  %v2289 = vsel %vm2288, %v2286, %v2278
  %v2290 = vsel %vm2288, %v2287, %v2280
  %v2291 = vld [vmem:[%s7] sm:$0x1]
  %v2293 = vperm.slane %v2291, 0
  %v2295 = vadd.f32 %v2289, %v2293
  %v2296 = vadd.f32 %v2290, %v2293
  %v2297 = vld [vmem:[%s8] sm:$0x1]
  %v2298 = vld [vmem:[%s9] sm:$0x1]
  %2299 = vadd.xlane.f32.xlu0 %v2295
  %v2300 = vpop.xlane.xlu0 %2299
  %2301 = vadd.xlane.f32.xlu0 %v2296
  %v2302 = vpop.xlane.xlu0 %2301
  %v2303 = vrcp.pop 128.0
  %v2304 = vmul.f32 128.0, %v2303
  %v2305 = vsub.f32 1.0, %v2304
  %v2306 = vmul.f32 %v2303, %v2305
  %v2307 = vadd.f32 %v2303, %v2306
  %vm2308 = vweird.f32 %v2303
  %v2309 = vsel %vm2308, %v2303, %v2307
  %v2310 = vmul.f32 %v2300, %v2309
  %v2311 = vmul.f32 %v2302, %v2309
  %v2312 = vsub.f32 %v2295, %v2310
  %v2313 = vsub.f32 %v2296, %v2311
  %v2314 = vmul.f32 %v2312, %v2312
  %v2315 = vmul.f32 %v2313, %v2313
  %2316 = vadd.xlane.f32.xlu0 %v2314
  %v2317 = vpop.xlane.xlu0 %2316
  %2318 = vadd.xlane.f32.xlu0 %v2315
  %v2319 = vpop.xlane.xlu0 %2318
  %v2320 = vmul.f32 %v2317, %v2309
  %v2321 = vmul.f32 %v2319, %v2309
  %v2322 = vadd.f32 %v2320, 1e-05
  %v2323 = vadd.f32 %v2321, 1e-05
  %v2324 = vrsqrt.pop %v2322
  %v2325 = vmul.f32 %v2324, %v2322
  %v2326 = vmul.f32 %v2325, %v2324
  %v2327 = vmul.f32 0.5, %v2326
  %v2328 = vsub.f32 1.5, %v2327
  %v2329 = vmul.f32 %v2324, %v2328
  %vm2330 = vweird.f32 %v2322
  %vm2331 = vweird.f32 %v2324
  %vm2332 = vmor %vm2330, %vm2331
  %v2333 = vsel %vm2332, %v2324, %v2329
  %v2334 = vrsqrt.pop %v2323
  %v2335 = vmul.f32 %v2334, %v2323
  %v2336 = vmul.f32 %v2335, %v2334
  %v2337 = vmul.f32 0.5, %v2336
  %v2338 = vsub.f32 1.5, %v2337
  %v2339 = vmul.f32 %v2334, %v2338
  %vm2340 = vweird.f32 %v2323
  %vm2341 = vweird.f32 %v2334
  %vm2342 = vmor %vm2340, %vm2341
  %v2343 = vsel %vm2342, %v2334, %v2339
  %v2344 = vmul.f32 %v2312, %v2333
  %v2345 = vmul.f32 %v2313, %v2343
  %v2347 = vperm.slane %v2297, 0
  %v2349 = vmul.f32 %v2344, %v2347
  %v2350 = vmul.f32 %v2345, %v2347
  %v2352 = vperm.slane %v2298, 0
  %v2354 = vadd.f32 %v2349, %v2352
  %v2355 = vadd.f32 %v2350, %v2352
  %vm2356 = vcmp.gt.f32.partialorder %v2354, 0.0
  %vm2357 = vcmp.gt.f32.partialorder %v2355, 0.0
  %v2358 = vmul.f32 %v2354, 1.442695
  %v2359 = vpow.pop %v2358
  %v2360 = vmul.f32 %v2355, 1.442695
  %v2361 = vpow.pop %v2360
  %v2362 = vsub.f32 %v2359, 1.0
  %v2363 = vsub.f32 %v2361, 1.0
  %v2364 = vsel %vm2356, %v2354, %v2362
  %v2365 = vsel %vm2357, %v2355, %v2363
  %v2366 = vld [vmem:[%s10] sm:$0xff]
  %v2367 = vld [vmem:[%s10 + $0x8] sm:$0xff]
  %v2368 = vld [vmem:[%s11] sm:$0xff]
  %v2369 = vld [vmem:[%s11 + $0x8] sm:$0xff]
  %v2370 = vld [vmem:[%s16] sm:$0x1]
  %v2371 = vld [vmem:[%s12] sm:$0xff]
  %v2373 = vsel %vm177, %v2366, 0
  %v2376 = vsel %vm177, %v2367, 0
  %2378 = vmatpush.msra.mxu0 0.0
  %2379 = vmatpush.msra.mxu0 0.0
  %2380 = vmatpush.msra.mxu0 0.0
  %2381 = vmatpush.msra.mxu0 0.0
  %2382 = vmatpush.msra.mxu0 0.0
  %2383 = vmatpush.msra.mxu0 0.0
  %2384 = vmatpush.msra.mxu0 0.0
  %2385 = vmatpush.msra.mxu0 0.0
  %2386 = vmatpush.msra.mxu0 0.0
  %2387 = vmatpush.msra.mxu0 0.0
  %2388 = vmatpush.msra.mxu0 0.0
  %2389 = vmatpush.msra.mxu0 0.0
  %2390 = vmatpush.msra.mxu0 0.0
  %2391 = vmatpush.msra.mxu0 0.0
  %2392 = vmatpush.msra.mxu0 0.0
  %2393 = vmatpush.msra.mxu0 %v2371
  %2394 = vmatmul.f32.gmra.mxu0 %v2373
  %v2395 = vpop.f32.mrf.mxu0
  %v2396 = vadd.f32 0.0, %v2395
  %2397 = vmatmul.f32.gmra.mxu0 %v2376
  %v2398 = vpop.f32.mrf.mxu0
  %v2399 = vadd.f32 0.0, %v2398
  %2400 = vdwg.mxu0
  %v2402 = vperm.slane %v2370, 0
  %v2404 = vadd.f32 %v2402, %v2396
  %v2405 = vadd.f32 %v2402, %v2399
  %v2406 = vld [vmem:[%s13] sm:$0xff]
  %v2407 = vld [vmem:[%s13 + $0x8] sm:$0xff]
  %v2408 = vld [vmem:[%s13 + $0x10] sm:$0xff]
  %v2409 = vld [vmem:[%s13 + $0x18] sm:$0xff]
  %v2410 = vld [vmem:[%s13 + $0x20] sm:$0xff]
  %v2411 = vld [vmem:[%s13 + $0x28] sm:$0xff]
  %v2412 = vld [vmem:[%s13 + $0x30] sm:$0xff]
  %v2413 = vld [vmem:[%s13 + $0x38] sm:$0xff]
  %v2414 = vld [vmem:[%s13 + $0x40] sm:$0xff]
  %v2415 = vld [vmem:[%s13 + $0x48] sm:$0xff]
  %v2416 = vld [vmem:[%s13 + $0x50] sm:$0xff]
  %v2417 = vld [vmem:[%s13 + $0x58] sm:$0xff]
  %v2418 = vld [vmem:[%s13 + $0x60] sm:$0xff]
  %v2419 = vld [vmem:[%s13 + $0x68] sm:$0xff]
  %v2420 = vld [vmem:[%s13 + $0x70] sm:$0xff]
  %v2421 = vld [vmem:[%s13 + $0x78] sm:$0xff]
  %2422 = vmatpush.msra.mxu0 %v2421
  %2423 = vmatpush.msra.mxu0 %v2420
  %2424 = vmatpush.msra.mxu0 %v2419
  %2425 = vmatpush.msra.mxu0 %v2418
  %2426 = vmatpush.msra.mxu0 %v2417
  %2427 = vmatpush.msra.mxu0 %v2416
  %2428 = vmatpush.msra.mxu0 %v2415
  %2429 = vmatpush.msra.mxu0 %v2414
  %2430 = vmatpush.msra.mxu0 %v2413
  %2431 = vmatpush.msra.mxu0 %v2412
  %2432 = vmatpush.msra.mxu0 %v2411
  %2433 = vmatpush.msra.mxu0 %v2410
  %2434 = vmatpush.msra.mxu0 %v2409
  %2435 = vmatpush.msra.mxu0 %v2408
  %2436 = vmatpush.msra.mxu0 %v2407
  %2437 = vmatpush.msra.mxu0 %v2406
  %2438 = vmatmul.f32.gmra.mxu0 %v2368
  %v2439 = vpop.f32.mrf.mxu0
  %v2440 = vadd.f32 0.0, %v2439
  %2441 = vmatmul.f32.gmra.mxu0 %v2369
  %v2442 = vpop.f32.mrf.mxu0
  %v2443 = vadd.f32 0.0, %v2442
  %2444 = vdwg.mxu0
  %v2445 = vadd.f32 %v2404, %v2440
  %v2446 = vadd.f32 %v2405, %v2443
  %v2447 = vld [vmem:[%s14] sm:$0xff]
  %v2448 = vld [vmem:[%s14 + $0x8] sm:$0xff]
  %v2449 = vld [vmem:[%s14 + $0x10] sm:$0xff]
  %v2450 = vld [vmem:[%s14 + $0x18] sm:$0xff]
  %v2451 = vld [vmem:[%s14 + $0x20] sm:$0xff]
  %v2452 = vld [vmem:[%s14 + $0x28] sm:$0xff]
  %v2453 = vld [vmem:[%s14 + $0x30] sm:$0xff]
  %v2454 = vld [vmem:[%s14 + $0x38] sm:$0xff]
  %v2455 = vld [vmem:[%s14 + $0x40] sm:$0xff]
  %v2456 = vld [vmem:[%s14 + $0x48] sm:$0xff]
  %v2457 = vld [vmem:[%s14 + $0x50] sm:$0xff]
  %v2458 = vld [vmem:[%s14 + $0x58] sm:$0xff]
  %v2459 = vld [vmem:[%s14 + $0x60] sm:$0xff]
  %v2460 = vld [vmem:[%s14 + $0x68] sm:$0xff]
  %v2461 = vld [vmem:[%s14 + $0x70] sm:$0xff]
  %v2462 = vld [vmem:[%s14 + $0x78] sm:$0xff]
  %2463 = vmatpush.msra.mxu0 %v2462
  %2464 = vmatpush.msra.mxu0 %v2461
  %2465 = vmatpush.msra.mxu0 %v2460
  %2466 = vmatpush.msra.mxu0 %v2459
  %2467 = vmatpush.msra.mxu0 %v2458
  %2468 = vmatpush.msra.mxu0 %v2457
  %2469 = vmatpush.msra.mxu0 %v2456
  %2470 = vmatpush.msra.mxu0 %v2455
  %2471 = vmatpush.msra.mxu0 %v2454
  %2472 = vmatpush.msra.mxu0 %v2453
  %2473 = vmatpush.msra.mxu0 %v2452
  %2474 = vmatpush.msra.mxu0 %v2451
  %2475 = vmatpush.msra.mxu0 %v2450
  %2476 = vmatpush.msra.mxu0 %v2449
  %2477 = vmatpush.msra.mxu0 %v2448
  %2478 = vmatpush.msra.mxu0 %v2447
  %2479 = vmatmul.f32.gmra.mxu0 %v56
  %v2480 = vpop.f32.mrf.mxu0
  %v2481 = vadd.f32 0.0, %v2480
  %2482 = vmatmul.f32.gmra.mxu0 %v57
  %v2483 = vpop.f32.mrf.mxu0
  %v2484 = vadd.f32 0.0, %v2483
  %2485 = vdwg.mxu0
  %v2486 = vadd.f32 %v2445, %v2481
  %v2487 = vadd.f32 %v2446, %v2484
  %v2488 = vld [vmem:[%s15] sm:$0xff]
  %v2489 = vld [vmem:[%s15 + $0x8] sm:$0xff]
  %v2490 = vld [vmem:[%s15 + $0x10] sm:$0xff]
  %v2491 = vld [vmem:[%s15 + $0x18] sm:$0xff]
  %v2492 = vld [vmem:[%s15 + $0x20] sm:$0xff]
  %v2493 = vld [vmem:[%s15 + $0x28] sm:$0xff]
  %v2494 = vld [vmem:[%s15 + $0x30] sm:$0xff]
  %v2495 = vld [vmem:[%s15 + $0x38] sm:$0xff]
  %v2496 = vld [vmem:[%s15 + $0x40] sm:$0xff]
  %v2497 = vld [vmem:[%s15 + $0x48] sm:$0xff]
  %v2498 = vld [vmem:[%s15 + $0x50] sm:$0xff]
  %v2499 = vld [vmem:[%s15 + $0x58] sm:$0xff]
  %v2500 = vld [vmem:[%s15 + $0x60] sm:$0xff]
  %v2501 = vld [vmem:[%s15 + $0x68] sm:$0xff]
  %v2502 = vld [vmem:[%s15 + $0x70] sm:$0xff]
  %v2503 = vld [vmem:[%s15 + $0x78] sm:$0xff]
  %2504 = vmatpush.msra.mxu0 %v2503
  %2505 = vmatpush.msra.mxu0 %v2502
  %2506 = vmatpush.msra.mxu0 %v2501
  %2507 = vmatpush.msra.mxu0 %v2500
  %2508 = vmatpush.msra.mxu0 %v2499
  %2509 = vmatpush.msra.mxu0 %v2498
  %2510 = vmatpush.msra.mxu0 %v2497
  %2511 = vmatpush.msra.mxu0 %v2496
  %2512 = vmatpush.msra.mxu0 %v2495
  %2513 = vmatpush.msra.mxu0 %v2494
  %2514 = vmatpush.msra.mxu0 %v2493
  %2515 = vmatpush.msra.mxu0 %v2492
  %2516 = vmatpush.msra.mxu0 %v2491
  %2517 = vmatpush.msra.mxu0 %v2490
  %2518 = vmatpush.msra.mxu0 %v2489
  %2519 = vmatpush.msra.mxu0 %v2488
  %2520 = vmatmul.f32.gmra.mxu0 %v2364
  %v2521 = vpop.f32.mrf.mxu0
  %v2522 = vadd.f32 0.0, %v2521
  %2523 = vmatmul.f32.gmra.mxu0 %v2365
  %v2524 = vpop.f32.mrf.mxu0
  %v2525 = vadd.f32 0.0, %v2524
  %2526 = vdwg.mxu0
  %v2527 = vadd.f32 %v2486, %v2522
  %v2528 = vadd.f32 %v2487, %v2525
  %vm2529 = vcmp.gt.f32.partialorder %v2527, 0.0
  %vm2530 = vcmp.gt.f32.partialorder %v2528, 0.0
  %v2531 = vmul.f32 %v2527, 1.442695
  %v2532 = vpow.pop %v2531
  %v2533 = vmul.f32 %v2528, 1.442695
  %v2534 = vpow.pop %v2533
  %v2535 = vsub.f32 %v2532, 1.0
  %v2536 = vsub.f32 %v2534, 1.0
  %v2537 = vsel %vm2529, %v2527, %v2535
  %v2538 = vsel %vm2530, %v2528, %v2536
  %2539 = vst [vmem:[%s17] sm:$0xff] %v2537
  %2540 = vst [vmem:[%s17 + $0x8] sm:$0xff] %v2538
  // Predicated region
  $region70: #{fpga_gnn_forward.8} parent=0 // pred_check
    _
  $region71: #{fpga_gnn_forward.8} parent=0 // pred_check_branch
    %2542 = sbr.rel (0) target = $region73
  $region72: #{fpga_gnn_forward.8} parent=0 // pred_region
    _
  $region73: #{fpga_gnn_forward.8} parent=0 // pred_fallthru
    _
  // Predicated region
  $region74: #{fpga_gnn_forward.8} parent=0 // pred_check
    _
  $region75: #{fpga_gnn_forward.8} parent=0 // pred_check_branch
    %2544 = sbr.rel (0) target = $region77
  $region76: #{fpga_gnn_forward.8} parent=0 // pred_region
    _
  $region77: #{fpga_gnn_forward.8} parent=0 // pred_fallthru
    _

// kernel: fpga_gnn_forward.9
$region0: #{fpga_gnn_forward.9}
  #allocation0 [shape = 'u32[]', space=smem, size = 0x4, offset = 0x4, fixed_abs, tag = 'smem constant byte address 0x4 - core index']
  #allocation1 [shape = 'u32[72,128]{1,0:T(1,128)}', space=vmem, size = 0x9000, scoped, tag = 'internal scratch']
  #allocation2 [shape = 'f32[1,1]{1,0:T(1,128)S(1)}', space=vmem, size = 0x200, scoped, tag = 'scoped memory for fpga_gnn_forward.9']
  %s0 = inlined_call_operand.vmem [shape: f32[16,128], index: 0, kind: input, shape index: {}]
  %s1 = inlined_call_operand.vmem [shape: f32[8,16], index: 1, kind: input, shape index: {}]
  %s2 = inlined_call_operand.vmem [shape: f32[8,8], index: 2, kind: input, shape index: {}]
  %s3 = inlined_call_operand.vmem [shape: f32[128,32], index: 3, kind: input, shape index: {}]
  %s4 = inlined_call_operand.vmem [shape: f32[1,32], index: 4, kind: input, shape index: {}]
  %s5 = inlined_call_operand.vmem [shape: f32[1,32], index: 5, kind: input, shape index: {}]
  %s6 = inlined_call_operand.<no memory space> [shape: f32[1,1], index: 6, kind: input, shape index: {}]
  %s7 = inlined_call_operand.vmem [shape: f32[32,64], index: 7, kind: input, shape index: {}]
  %s8 = inlined_call_operand.vmem [shape: f32[8,64], index: 8, kind: input, shape index: {}]
  %s9 = inlined_call_operand.vmem [shape: f32[1,64], index: 9, kind: input, shape index: {}]
  %s10 = inlined_call_operand.vmem [shape: f32[1,64], index: 10, kind: input, shape index: {}]
  %s11 = inlined_call_operand.vmem [shape: f32[1,64], index: 11, kind: input, shape index: {}]
  %s12 = inlined_call_operand.vmem [shape: f32[64,32], index: 12, kind: input, shape index: {}]
  %s13 = inlined_call_operand.vmem [shape: f32[1,32], index: 13, kind: input, shape index: {}]
  %s14 = inlined_call_operand.vmem [shape: f32[1,32], index: 14, kind: input, shape index: {}]
  %s15 = inlined_call_operand.vmem [shape: f32[1,32], index: 15, kind: input, shape index: {}]
  %s16 = inlined_call_operand.vmem [shape: f32[32,8], index: 16, kind: input, shape index: {}]
  %s17 = inlined_call_operand.vmem [shape: f32[1,8], index: 17, kind: input, shape index: {}]
  %s18 = inlined_call_operand.vmem [shape: f32[8,8], index: 18, kind: output, shape index: {}]
  %s19 = sld [smem:[#allocation0]]
  $region82: #{fpga_gnn_forward.9} parent=0
    _
  %s21 = ssub.s32 1, %s19
  %s22 = scalar_select 0, %s21, %s19
  %v23 = vstv %s6
  %24 = vst [vmem:[#allocation2] sm:$0x1] %v23
  // Predicated region
  $region2: #{fpga_gnn_forward.9} parent=0 // pred_check
    _
  $region3: #{fpga_gnn_forward.9} parent=0 // pred_check_branch
    %26 = sbr.rel (0) target = $region5
  $region4: #{fpga_gnn_forward.9} parent=0 // pred_region
    _
  $region5: #{fpga_gnn_forward.9} parent=0 // pred_fallthru
    _
  // Predicated region
  $region6: #{fpga_gnn_forward.9} parent=0 // pred_check
    _
  $region7: #{fpga_gnn_forward.9} parent=0 // pred_check_branch
    %28 = sbr.rel (0) target = $region9
  $region8: #{fpga_gnn_forward.9} parent=0 // pred_region
    _
  $region9: #{fpga_gnn_forward.9} parent=0 // pred_fallthru
    _
  // Predicated region
  $region10: #{fpga_gnn_forward.9} parent=0 // pred_check
    _
  $region11: #{fpga_gnn_forward.9} parent=0 // pred_check_branch
    %30 = sbr.rel (0) target = $region13
  $region12: #{fpga_gnn_forward.9} parent=0 // pred_region
    _
  $region13: #{fpga_gnn_forward.9} parent=0 // pred_fallthru
    _
  // Predicated region
  $region14: #{fpga_gnn_forward.9} parent=0 // pred_check
    _
  $region15: #{fpga_gnn_forward.9} parent=0 // pred_check_branch
    %32 = sbr.rel (0) target = $region17
  $region16: #{fpga_gnn_forward.9} parent=0 // pred_region
    _
  $region17: #{fpga_gnn_forward.9} parent=0 // pred_fallthru
    _
  // Predicated region
  $region18: #{fpga_gnn_forward.9} parent=0 // pred_check
    _
  $region19: #{fpga_gnn_forward.9} parent=0 // pred_check_branch
    %34 = sbr.rel (0) target = $region21
  $region20: #{fpga_gnn_forward.9} parent=0 // pred_region
    _
  $region21: #{fpga_gnn_forward.9} parent=0 // pred_fallthru
    _
  // Predicated region
  $region22: #{fpga_gnn_forward.9} parent=0 // pred_check
    _
  $region23: #{fpga_gnn_forward.9} parent=0 // pred_check_branch
    %36 = sbr.rel (0) target = $region25
  $region24: #{fpga_gnn_forward.9} parent=0 // pred_region
    _
  $region25: #{fpga_gnn_forward.9} parent=0 // pred_fallthru
    _
  // Predicated region
  $region26: #{fpga_gnn_forward.9} parent=0 // pred_check
    _
  $region27: #{fpga_gnn_forward.9} parent=0 // pred_check_branch
    %38 = sbr.rel (0) target = $region29
  $region28: #{fpga_gnn_forward.9} parent=0 // pred_region
    _
  $region29: #{fpga_gnn_forward.9} parent=0 // pred_fallthru
    _
  // Predicated region
  $region30: #{fpga_gnn_forward.9} parent=0 // pred_check
    _
  $region31: #{fpga_gnn_forward.9} parent=0 // pred_check_branch
    %40 = sbr.rel (0) target = $region33
  $region32: #{fpga_gnn_forward.9} parent=0 // pred_region
    _
  $region33: #{fpga_gnn_forward.9} parent=0 // pred_fallthru
    _
  // Predicated region
  $region34: #{fpga_gnn_forward.9} parent=0 // pred_check
    _
  $region35: #{fpga_gnn_forward.9} parent=0 // pred_check_branch
    %42 = sbr.rel (0) target = $region37
  $region36: #{fpga_gnn_forward.9} parent=0 // pred_region
    _
  $region37: #{fpga_gnn_forward.9} parent=0 // pred_fallthru
    _
  // Predicated region
  $region38: #{fpga_gnn_forward.9} parent=0 // pred_check
    _
  $region39: #{fpga_gnn_forward.9} parent=0 // pred_check_branch
    %44 = sbr.rel (0) target = $region41
  $region40: #{fpga_gnn_forward.9} parent=0 // pred_region
    _
  $region41: #{fpga_gnn_forward.9} parent=0 // pred_fallthru
    _
  // Predicated region
  $region42: #{fpga_gnn_forward.9} parent=0 // pred_check
    _
  $region43: #{fpga_gnn_forward.9} parent=0 // pred_check_branch
    %46 = sbr.rel (0) target = $region45
  $region44: #{fpga_gnn_forward.9} parent=0 // pred_region
    _
  $region45: #{fpga_gnn_forward.9} parent=0 // pred_fallthru
    _
  // Predicated region
  $region46: #{fpga_gnn_forward.9} parent=0 // pred_check
    _
  $region47: #{fpga_gnn_forward.9} parent=0 // pred_check_branch
    %48 = sbr.rel (0) target = $region49
  $region48: #{fpga_gnn_forward.9} parent=0 // pred_region
    _
  $region49: #{fpga_gnn_forward.9} parent=0 // pred_fallthru
    _
  // Predicated region
  $region50: #{fpga_gnn_forward.9} parent=0 // pred_check
    _
  $region51: #{fpga_gnn_forward.9} parent=0 // pred_check_branch
    %50 = sbr.rel (0) target = $region53
  $region52: #{fpga_gnn_forward.9} parent=0 // pred_region
    _
  $region53: #{fpga_gnn_forward.9} parent=0 // pred_fallthru
    _
  // Predicated region
  $region54: #{fpga_gnn_forward.9} parent=0 // pred_check
    _
  $region55: #{fpga_gnn_forward.9} parent=0 // pred_check_branch
    %52 = sbr.rel (0) target = $region57
  $region56: #{fpga_gnn_forward.9} parent=0 // pred_region
    _
  $region57: #{fpga_gnn_forward.9} parent=0 // pred_fallthru
    _
  // Predicated region
  $region58: #{fpga_gnn_forward.9} parent=0 // pred_check
    _
  $region59: #{fpga_gnn_forward.9} parent=0 // pred_check_branch
    %54 = sbr.rel (0) target = $region61
  $region60: #{fpga_gnn_forward.9} parent=0 // pred_region
    _
  $region61: #{fpga_gnn_forward.9} parent=0 // pred_fallthru
    _
  // Predicated region
  $region62: #{fpga_gnn_forward.9} parent=0 // pred_check
    _
  $region63: #{fpga_gnn_forward.9} parent=0 // pred_check_branch
    %56 = sbr.rel (0) target = $region65
  $region64: #{fpga_gnn_forward.9} parent=0 // pred_region
    _
  $region65: #{fpga_gnn_forward.9} parent=0 // pred_fallthru
    _
  // Predicated region
  $region66: #{fpga_gnn_forward.9} parent=0 // pred_check
    _
  $region67: #{fpga_gnn_forward.9} parent=0 // pred_check_branch
    %58 = sbr.rel (0) target = $region69
  $region68: #{fpga_gnn_forward.9} parent=0 // pred_region
    _
  $region69: #{fpga_gnn_forward.9} parent=0 // pred_fallthru
    _
  // Predicated region
  $region70: #{fpga_gnn_forward.9} parent=0 // pred_check
    _
  $region71: #{fpga_gnn_forward.9} parent=0 // pred_check_branch
    %60 = sbr.rel (0) target = $region73
  $region72: #{fpga_gnn_forward.9} parent=0 // pred_region
    _
  $region73: #{fpga_gnn_forward.9} parent=0 // pred_fallthru
    _
  %v61 = vld [vmem:[%s0] sm:$0xff]
  %v62 = vld [vmem:[%s0 + $0x8] sm:$0xff]
  %v63 = vld [vmem:[%s3] sm:$0xff]
  %v64 = vld [vmem:[%s3 + $0x8] sm:$0xff]
  %v65 = vld [vmem:[%s3 + $0x10] sm:$0xff]
  %v66 = vld [vmem:[%s3 + $0x18] sm:$0xff]
  %v67 = vld [vmem:[%s3 + $0x20] sm:$0xff]
  %v68 = vld [vmem:[%s3 + $0x28] sm:$0xff]
  %v69 = vld [vmem:[%s3 + $0x30] sm:$0xff]
  %v70 = vld [vmem:[%s3 + $0x38] sm:$0xff]
  %v71 = vld [vmem:[%s3 + $0x40] sm:$0xff]
  %v72 = vld [vmem:[%s3 + $0x48] sm:$0xff]
  %v73 = vld [vmem:[%s3 + $0x50] sm:$0xff]
  %v74 = vld [vmem:[%s3 + $0x58] sm:$0xff]
  %v75 = vld [vmem:[%s3 + $0x60] sm:$0xff]
  %v76 = vld [vmem:[%s3 + $0x68] sm:$0xff]
  %v77 = vld [vmem:[%s3 + $0x70] sm:$0xff]
  %v78 = vld [vmem:[%s3 + $0x78] sm:$0xff]
  %v79 = vld [vmem:[%s4] sm:$0x1]
  %v81 = vperm.slane %v79, 0
  %83 = vmatpush.msra.mxu0 %v78
  %84 = vmatpush.msra.mxu0 %v77
  %85 = vmatpush.msra.mxu0 %v76
  %86 = vmatpush.msra.mxu0 %v75
  %87 = vmatpush.msra.mxu0 %v74
  %88 = vmatpush.msra.mxu0 %v73
  %89 = vmatpush.msra.mxu0 %v72
  %90 = vmatpush.msra.mxu0 %v71
  %91 = vmatpush.msra.mxu0 %v70
  %92 = vmatpush.msra.mxu0 %v69
  %93 = vmatpush.msra.mxu0 %v68
  %94 = vmatpush.msra.mxu0 %v67
  %95 = vmatpush.msra.mxu0 %v66
  %96 = vmatpush.msra.mxu0 %v65
  %97 = vmatpush.msra.mxu0 %v64
  %98 = vmatpush.msra.mxu0 %v63
  %99 = vmatmul.f32.gmra.mxu0 %v61
  %v100 = vpop.f32.mrf.mxu0
  %v101 = vadd.f32 %v81, %v100
  %102 = vmatmul.f32.gmra.mxu0 %v62
  %v103 = vpop.f32.mrf.mxu0
  %v104 = vadd.f32 %v81, %v103
  %105 = vdwg.mxu0
  %v106 = vld [vmem:[%s5] sm:$0x1]
  %v108 = vperm.slane %v106, 0
  %v110 = vmul.f32 %v101, %v108
  %v111 = vmul.f32 %v104, %v108
  %vm112 = vcmask 261120
  %v113 = vsel %vm112, %v110, 0.0
  %114 = vadd.xlane.f32.xlu0 %v113
  %v115 = vpop.xlane.xlu0 %114
  %v116 = vsel %vm112, %v111, 0.0
  %117 = vadd.xlane.f32.xlu0 %v116
  %v118 = vpop.xlane.xlu0 %117
  %v119 = vld [vmem:[#allocation2] sm:$0x1]
  %v121 = vperm.slane %v119, 0
  %v123 = vadd.f32 %v115, %v121
  %v124 = vadd.f32 %v118, %v121
  %v125 = vtanh.pop %v123
  %v126 = vtanh.pop %v124
  %vm127 = vcmask 7168
  %v128 = vsel %vm127, %v125, -inf
  %v129 = vsel %vm127, %v126, -inf
  %v130 = vmax.f32 %v128, %v129
  %v131 = vrot.slane %v130, 4
  %v132 = vmax.f32 %v130, %v131
  %v133 = vrot.slane %v132, 2
  %v134 = vmax.f32 %v132, %v133
  %v135 = vrot.slane %v134, 1
  %v136 = vmax.f32 %v134, %v135
  %v137 = vsub.f32 %v125, %v136
  %v138 = vsub.f32 %v126, %v136
  %v139 = vmul.f32 %v137, 1.442695
  %v140 = vpow.pop %v139
  %v141 = vmul.f32 %v138, 1.442695
  %v142 = vpow.pop %v141
  %v143 = vsel %vm127, %v140, 0.0
  %v144 = vsel %vm127, %v142, 0.0
  %v145 = vadd.f32 %v143, %v144
  %v146 = vrot.slane %v145, 4
  %v147 = vadd.f32 %v145, %v146
  %v148 = vrot.slane %v147, 2
  %v149 = vadd.f32 %v147, %v148
  %v150 = vrot.slane %v149, 1
  %v151 = vadd.f32 %v149, %v150
  %v152 = vrcp.pop %v151
  %v153 = vmul.f32 %v151, %v152
  %v154 = vsub.f32 1.0, %v153
  %v155 = vmul.f32 %v152, %v154
  %v156 = vadd.f32 %v152, %v155
  %vm157 = vweird.f32 %v151
  %vm158 = vweird.f32 %v152
  %vm159 = vmor %vm157, %vm158
  %v160 = vsel %vm159, %v152, %v156
  %v161 = vand.u32 2147483647, %v151
  %vm162 = vcmp.eq.f32.partialorder %v161, 8.507059e+37
  %v163 = vand.u32 %v151, 2147483648
  %v164 = vor.u32 1.1754944e-38, %v163
  %v165 = vsel %vm162, %v164, %v160
  %v166 = vmul.f32 %v140, %v165
  %v167 = vmul.f32 %v142, %v165
  %v168 = vld [vmem:[%s1] sm:$0xff]
  %170 = vset.pattern.permute.xlu0 0
  %171 = vperm.xlu0 %170, %v166
  %v172 = vpop.permute.xlu0 %171
  %175 = vset.pattern.permute.xlu0 0
  %176 = vperm.xlu0 %175, %v167
  %v177 = vpop.permute.xlu0 %176
  %v179 = vmul.f32 %v101, %v172
  %v180 = vmul.f32 %v104, %v177
  %vm181 = vcmask 130048
  %v183 = vsel %vm181, %v168, 0
  %185 = vmatpush.msra.mxu0 0.0
  %186 = vmatpush.msra.mxu0 0.0
  %187 = vmatpush.msra.mxu0 0.0
  %188 = vmatpush.msra.mxu0 0.0
  %189 = vmatpush.msra.mxu0 0.0
  %190 = vmatpush.msra.mxu0 0.0
  %191 = vmatpush.msra.mxu0 0.0
  %192 = vmatpush.msra.mxu0 0.0
  %193 = vmatpush.msra.mxu0 0.0
  %194 = vmatpush.msra.mxu0 0.0
  %195 = vmatpush.msra.mxu0 0.0
  %196 = vmatpush.msra.mxu0 0.0
  %197 = vmatpush.msra.mxu0 0.0
  %198 = vmatpush.msra.mxu0 0.0
  %199 = vmatpush.msra.mxu0 %v180
  %200 = vmatpush.msra.mxu0 %v179
  %201 = vmatmul.f32.gmra.mxu0 %v183
  %v202 = vpop.f32.mrf.mxu0
  %v203 = vadd.f32 0.0, %v202
  %204 = vdwg.mxu0
  %v205 = vld [vmem:[%s7] sm:$0xff]
  %v206 = vld [vmem:[%s7 + $0x8] sm:$0xff]
  %v207 = vld [vmem:[%s7 + $0x10] sm:$0xff]
  %v208 = vld [vmem:[%s7 + $0x18] sm:$0xff]
  %v209 = vld [vmem:[%s2] sm:$0xff]
  %v210 = vld [vmem:[%s8] sm:$0xff]
  %vm211 = vcmask 64512
  %v213 = vsel %vm211, %v209, 0
  %215 = vmatpush.msra.mxu0 0.0
  %216 = vmatpush.msra.mxu0 0.0
  %217 = vmatpush.msra.mxu0 0.0
  %218 = vmatpush.msra.mxu0 0.0
  %219 = vmatpush.msra.mxu0 0.0
  %220 = vmatpush.msra.mxu0 0.0
  %221 = vmatpush.msra.mxu0 0.0
  %222 = vmatpush.msra.mxu0 0.0
  %223 = vmatpush.msra.mxu0 0.0
  %224 = vmatpush.msra.mxu0 0.0
  %225 = vmatpush.msra.mxu0 0.0
  %226 = vmatpush.msra.mxu0 0.0
  %227 = vmatpush.msra.mxu0 0.0
  %228 = vmatpush.msra.mxu0 0.0
  %229 = vmatpush.msra.mxu0 0.0
  %230 = vmatpush.msra.mxu0 %v210
  %231 = vmatmul.f32.gmra.mxu0 %v213
  %v232 = vpop.f32.mrf.mxu0
  %v233 = vadd.f32 0.0, %v232
  %234 = vdwg.mxu0
  %v236 = vsel %vm112, %v203, 0
  %238 = vmatpush.msra.mxu0 0.0
  %239 = vmatpush.msra.mxu0 0.0
  %240 = vmatpush.msra.mxu0 0.0
  %241 = vmatpush.msra.mxu0 0.0
  %242 = vmatpush.msra.mxu0 0.0
  %243 = vmatpush.msra.mxu0 0.0
  %244 = vmatpush.msra.mxu0 0.0
  %245 = vmatpush.msra.mxu0 0.0
  %246 = vmatpush.msra.mxu0 0.0
  %247 = vmatpush.msra.mxu0 0.0
  %248 = vmatpush.msra.mxu0 0.0
  %249 = vmatpush.msra.mxu0 0.0
  %250 = vmatpush.msra.mxu0 %v208
  %251 = vmatpush.msra.mxu0 %v207
  %252 = vmatpush.msra.mxu0 %v206
  %253 = vmatpush.msra.mxu0 %v205
  %254 = vmatmul.f32.gmra.mxu0 %v236
  %v255 = vpop.f32.mrf.mxu0
  %v256 = vadd.f32 %v233, %v255
  %257 = vdwg.mxu0
  %v258 = vld [vmem:[%s9] sm:$0x1]
  %v260 = vperm.slane %v258, 0
  %v262 = vadd.f32 %v256, %v260
  %v263 = vld [vmem:[%s10] sm:$0x1]
  %v264 = vld [vmem:[%s11] sm:$0x1]
  %vm265 = vcmask 523264
  %v266 = vsel %vm265, %v262, 0.0
  %267 = vadd.xlane.f32.xlu0 %v266
  %v268 = vpop.xlane.xlu0 %267
  %v269 = vrcp.pop 64.0
  %v270 = vmul.f32 64.0, %v269
  %v271 = vsub.f32 1.0, %v270
  %v272 = vmul.f32 %v269, %v271
  %v273 = vadd.f32 %v269, %v272
  %vm274 = vweird.f32 %v269
  %v275 = vsel %vm274, %v269, %v273
  %v276 = vmul.f32 %v268, %v275
  %v277 = vsub.f32 %v262, %v276
  %v278 = vmul.f32 %v277, %v277
  %v279 = vsel %vm265, %v278, 0.0
  %280 = vadd.xlane.f32.xlu0 %v279
  %v281 = vpop.xlane.xlu0 %280
  %v282 = vmul.f32 %v281, %v275
  %v283 = vadd.f32 %v282, 1e-05
  %v284 = vrsqrt.pop %v283
  %v285 = vmul.f32 %v284, %v283
  %v286 = vmul.f32 %v285, %v284
  %v287 = vmul.f32 0.5, %v286
  %v288 = vsub.f32 1.5, %v287
  %v289 = vmul.f32 %v284, %v288
  %vm290 = vweird.f32 %v283
  %vm291 = vweird.f32 %v284
  %vm292 = vmor %vm290, %vm291
  %v293 = vsel %vm292, %v284, %v289
  %v294 = vmul.f32 %v277, %v293
  %v296 = vperm.slane %v263, 0
  %v298 = vmul.f32 %v294, %v296
  %v300 = vperm.slane %v264, 0
  %v302 = vadd.f32 %v298, %v300
  %v303 = vmax.f32 %v302, 0.0
  %v304 = vld [vmem:[%s12] sm:$0xff]
  %v305 = vld [vmem:[%s12 + $0x8] sm:$0xff]
  %v306 = vld [vmem:[%s12 + $0x10] sm:$0xff]
  %v307 = vld [vmem:[%s12 + $0x18] sm:$0xff]
  %v308 = vld [vmem:[%s12 + $0x20] sm:$0xff]
  %v309 = vld [vmem:[%s12 + $0x28] sm:$0xff]
  %v310 = vld [vmem:[%s12 + $0x30] sm:$0xff]
  %v311 = vld [vmem:[%s12 + $0x38] sm:$0xff]
  %v312 = vld [vmem:[%s13] sm:$0x1]
  %v314 = vperm.slane %v312, 0
  %v317 = vsel %vm265, %v303, 0
  %319 = vmatpush.msra.mxu0 0.0
  %320 = vmatpush.msra.mxu0 0.0
  %321 = vmatpush.msra.mxu0 0.0
  %322 = vmatpush.msra.mxu0 0.0
  %323 = vmatpush.msra.mxu0 0.0
  %324 = vmatpush.msra.mxu0 0.0
  %325 = vmatpush.msra.mxu0 0.0
  %326 = vmatpush.msra.mxu0 0.0
  %327 = vmatpush.msra.mxu0 %v311
  %328 = vmatpush.msra.mxu0 %v310
  %329 = vmatpush.msra.mxu0 %v309
  %330 = vmatpush.msra.mxu0 %v308
  %331 = vmatpush.msra.mxu0 %v307
  %332 = vmatpush.msra.mxu0 %v306
  %333 = vmatpush.msra.mxu0 %v305
  %334 = vmatpush.msra.mxu0 %v304
  %335 = vmatmul.f32.gmra.mxu0 %v317
  %v336 = vpop.f32.mrf.mxu0
  %v337 = vadd.f32 %v314, %v336
  %338 = vdwg.mxu0
  %v339 = vld [vmem:[%s14] sm:$0x1]
  %v340 = vld [vmem:[%s15] sm:$0x1]
  %v341 = vsel %vm112, %v337, 0.0
  %342 = vadd.xlane.f32.xlu0 %v341
  %v343 = vpop.xlane.xlu0 %342
  %v344 = vrcp.pop 32.0
  %v345 = vmul.f32 32.0, %v344
  %v346 = vsub.f32 1.0, %v345
  %v347 = vmul.f32 %v344, %v346
  %v348 = vadd.f32 %v344, %v347
  %vm349 = vweird.f32 %v344
  %v350 = vsel %vm349, %v344, %v348
  %v351 = vmul.f32 %v343, %v350
  %v352 = vsub.f32 %v337, %v351
  %v353 = vmul.f32 %v352, %v352
  %v354 = vsel %vm112, %v353, 0.0
  %355 = vadd.xlane.f32.xlu0 %v354
  %v356 = vpop.xlane.xlu0 %355
  %v357 = vmul.f32 %v356, %v350
  %v358 = vadd.f32 %v357, 1e-05
  %v359 = vrsqrt.pop %v358
  %v360 = vmul.f32 %v359, %v358
  %v361 = vmul.f32 %v360, %v359
  %v362 = vmul.f32 0.5, %v361
  %v363 = vsub.f32 1.5, %v362
  %v364 = vmul.f32 %v359, %v363
  %vm365 = vweird.f32 %v358
  %vm366 = vweird.f32 %v359
  %vm367 = vmor %vm365, %vm366
  %v368 = vsel %vm367, %v359, %v364
  %v369 = vmul.f32 %v352, %v368
  %v371 = vperm.slane %v339, 0
  %v373 = vmul.f32 %v369, %v371
  %v375 = vperm.slane %v340, 0
  %v377 = vadd.f32 %v373, %v375
  %v378 = vmax.f32 %v377, 0.0
  %v379 = vld [vmem:[%s16] sm:$0xff]
  %v380 = vld [vmem:[%s16 + $0x8] sm:$0xff]
  %v381 = vld [vmem:[%s16 + $0x10] sm:$0xff]
  %v382 = vld [vmem:[%s16 + $0x18] sm:$0xff]
  %v383 = vld [vmem:[%s17] sm:$0x1]
  %v385 = vperm.slane %v383, 0
  %v388 = vsel %vm112, %v378, 0
  %390 = vmatpush.msra.mxu0 0.0
  %391 = vmatpush.msra.mxu0 0.0
  %392 = vmatpush.msra.mxu0 0.0
  %393 = vmatpush.msra.mxu0 0.0
  %394 = vmatpush.msra.mxu0 0.0
  %395 = vmatpush.msra.mxu0 0.0
  %396 = vmatpush.msra.mxu0 0.0
  %397 = vmatpush.msra.mxu0 0.0
  %398 = vmatpush.msra.mxu0 0.0
  %399 = vmatpush.msra.mxu0 0.0
  %400 = vmatpush.msra.mxu0 0.0
  %401 = vmatpush.msra.mxu0 0.0
  %402 = vmatpush.msra.mxu0 %v382
  %403 = vmatpush.msra.mxu0 %v381
  %404 = vmatpush.msra.mxu0 %v380
  %405 = vmatpush.msra.mxu0 %v379
  %406 = vmatmul.f32.gmra.mxu0 %v388
  %v407 = vpop.f32.mrf.mxu0
  %v408 = vadd.f32 %v385, %v407
  %409 = vdwg.mxu0
  %410 = vst.msk [vmem:[%s18] sm:$0xff] %vm211, %v408
  // Predicated region
  $region74: #{fpga_gnn_forward.9} parent=0 // pred_check
    _
  $region75: #{fpga_gnn_forward.9} parent=0 // pred_check_branch
    %412 = sbr.rel (0) target = $region77
  $region76: #{fpga_gnn_forward.9} parent=0 // pred_region
    _
  $region77: #{fpga_gnn_forward.9} parent=0 // pred_fallthru
    _
  // Predicated region
  $region78: #{fpga_gnn_forward.9} parent=0 // pred_check
    _
  $region79: #{fpga_gnn_forward.9} parent=0 // pred_check_branch
    %414 = sbr.rel (0) target = $region81
  $region80: #{fpga_gnn_forward.9} parent=0 // pred_region
    _
  $region81: #{fpga_gnn_forward.9} parent=0 // pred_fallthru
    _

</llo_original>
